<compile_context>
chip_gen: v5e
topology: v5e:2x2
jax: 0.10.0
libtpu: 0.0.40
codegen_flags: <defaults>
</compile_context>

<pallas_src>
import functools

import jax
import jax.numpy as jnp
import numpy as np
from jax import lax
from jax.experimental import pallas as pl
from jax.experimental.pallas import tpu as pltpu


# ---------------------------------------------------------------------------
# Fused bidirectional LSTM layer kernel:
#   per grid step (one time chunk): chunk input projection (per-gate matmuls,
#   f32 accumulation) into VMEM scratch + unrolled recurrence over the chunk.
#   Last layer additionally fuses concat(h_f, h_b) @ fc_w + fc_b.
# ---------------------------------------------------------------------------
def _bilstm_layer_kernel(*refs, n_streams, time_chunk, hidden, n_chunks,
                         fuse_fc):
    Tc, H = time_chunk, hidden

    i = 0
    lens_ref = refs[i]; i += 1
    xf_refs = refs[i:i + n_streams]; i += n_streams          # fwd x chunks
    xb_refs = refs[i:i + n_streams]; i += n_streams          # bwd x chunks
    wih_f_refs = refs[i:i + n_streams]; i += n_streams       # (4, Din_j, H)
    wih_b_refs = refs[i:i + n_streams]; i += n_streams
    bias_f_ref, bias_b_ref = refs[i:i + 2]; i += 2           # (4, 1, H)
    whh_f_ref, whh_b_ref = refs[i:i + 2]; i += 2             # (4, H, H)
    if fuse_fc:
        fcw_f_ref, fcw_b_ref, fcb_ref, logits_ref = refs[i:i + 4]; i += 4
        out_f_ref = out_b_ref = None
    else:
        out_f_ref, out_b_ref = refs[i:i + 2]; i += 2
    gpre_f, gpre_b, h_f, c_f, h_b, c_b = refs[i:i + 6]

    B = xf_refs[0].shape[1]
    c = pl.program_id(0)

    @pl.when(c == 0)
    def _():
        h_f[...] = jnp.zeros_like(h_f)
        c_f[...] = jnp.zeros_like(c_f)
        h_b[...] = jnp.zeros_like(h_b)
        c_b[...] = jnp.zeros_like(c_b)

    lens = lens_ref[...]                                     # (B, 1) int32

    # -- fused, chunk-hoisted input projection ------------------------------
    # gates_pre[k, t] = sum_j x_j[t] @ W_ih_j[k] + b[k]   (f32 accumulation;
    # per-gate weights -> no 4H lane slicing anywhere in the kernel).
    def project(x_refs, wih_refs, bias_ref, gpre_ref):
        xs2d = [r[...].reshape(Tc * B, r.shape[-1]) for r in x_refs]
        for k in range(4):                                   # i, f, g, o
            acc = jnp.dot(xs2d[0], wih_refs[0][k],
                          preferred_element_type=jnp.float32)
            for j in range(1, n_streams):
                acc = acc + jnp.dot(xs2d[j], wih_refs[j][k],
                                    preferred_element_type=jnp.float32)
            acc = acc + bias_ref[k].astype(jnp.float32)      # (1, H) broadcast
            gpre_ref[pl.ds(k * Tc, Tc)] = acc.reshape(Tc, B, H)

    project(xf_refs, wih_f_refs, bias_f_ref, gpre_f)
    project(xb_refs, wih_b_refs, bias_b_ref, gpre_b)

    # -- one LSTM cell, gate-by-gate (low vreg pressure, lane-aligned) ------
    def cell(gpre_ref, s, h_prev, c_prev, whh_ref):
        h_in = h_prev.astype(whh_ref.dtype)
        pre = [gpre_ref[k * Tc + s] +
               jnp.dot(h_in, whh_ref[k], preferred_element_type=jnp.float32)
               for k in range(4)]
        c_new = (jax.nn.sigmoid(pre[1]) * c_prev
                 + jax.nn.sigmoid(pre[0]) * jnp.tanh(pre[2]))
        h_new = jax.nn.sigmoid(pre[3]) * jnp.tanh(c_new)
        return h_new, c_new

    def step(s, carry):
        # ---- forward direction: global timestep t = c*Tc + s --------------
        t_f = c * Tc + s
        valid_f = jnp.broadcast_to(t_f < lens, (B, H))       # one mask, reused
        hf_prev, cf_prev = h_f[...], c_f[...]
        h_new, c_new = cell(gpre_f, s, hf_prev, cf_prev, whh_f_ref)
        h_f[...] = jnp.where(valid_f, h_new, hf_prev)        # packed-seq mask
        c_f[...] = jnp.where(valid_f, c_new, cf_prev)
        if out_f_ref is not None:
            out_f_ref[s] = jnp.where(valid_f, h_new, 0.0).astype(out_f_ref.dtype)

        # ---- backward direction: t = (nc-1-c)*Tc + (Tc-1-s) ----------------
        sb = Tc - 1 - s
        t_b = (n_chunks - 1 - c) * Tc + sb
        valid_b = jnp.broadcast_to(t_b < lens, (B, H))
        hb_prev, cb_prev = h_b[...], c_b[...]
        h_new, c_new = cell(gpre_b, sb, hb_prev, cb_prev, whh_b_ref)
        h_b[...] = jnp.where(valid_b, h_new, hb_prev)
        c_b[...] = jnp.where(valid_b, c_new, cb_prev)
        if out_b_ref is not None:
            out_b_ref[sb] = jnp.where(valid_b, h_new, 0.0).astype(out_b_ref.dtype)
        return carry

    lax.fori_loop(0, Tc, step, 0, unroll=True)

    if fuse_fc:
        # Final layer: concat(h_fwd, h_bwd) @ fc_w + fc_b as two K-split
        # matmuls (no 2H concat is ever materialized).
        # TODO(synk): self.dropout on hidden is identity (eval mode).
        # TODO(synk): on v7x, run the two directions on the two TensorCores
        # (size-2 "parallel" grid axis / core_map) instead of fusing them.
        @pl.when(c == n_chunks - 1)
        def _():
            logits_ref[...] = (
                jnp.dot(h_f[...].astype(fcw_f_ref.dtype), fcw_f_ref[...],
                        preferred_element_type=jnp.float32)
                + jnp.dot(h_b[...].astype(fcw_b_ref.dtype), fcw_b_ref[...],
                          preferred_element_type=jnp.float32)
                + fcb_ref[...].astype(jnp.float32))


def bilstm_layer(streams, lengths, wih_pieces_f, wih_pieces_b, bias_f, bias_b,
                 whh_f, whh_b, *, time_chunk, fc_w_f=None, fc_w_b=None,
                 fc_b=None, out_dtype=jnp.float32):
    """One fused fwd+bwd LSTM layer with in-kernel input projection.

    streams: list of (T, B, Din_j) arrays whose concat along -1 is the layer
    input (1 stream for the embedding layer, 2 for subsequent layers — this
    avoids materializing the concat).  If fc_w_* is given (last layer),
    returns logits (B, Dout); otherwise returns (out_fwd, out_bwd)."""
    T, B, _ = streams[0].shape
    H = whh_f.shape[-1]
    Tc = time_chunk
    assert T % Tc == 0
    nc = T // Tc
    fuse_fc = fc_w_f is not None
    n_streams = len(streams)
    lens2d = lengths.reshape(B, 1).astype(jnp.int32)

    in_specs = [pl.BlockSpec((B, 1), lambda c: (0, 0))]
    inputs = [lens2d]
    for x in streams:                                        # fwd chunks
        in_specs.append(pl.BlockSpec((Tc, B, x.shape[-1]), lambda c: (c, 0, 0)))
        inputs.append(x)
    for x in streams:                                        # bwd chunks
        in_specs.append(pl.BlockSpec((Tc, B, x.shape[-1]),
                                     lambda c: (nc - 1 - c, 0, 0)))
        inputs.append(x)
    for w in list(wih_pieces_f) + list(wih_pieces_b):        # (4, Din_j, H)
        in_specs.append(pl.BlockSpec(w.shape, lambda c: (0, 0, 0)))
        inputs.append(w)
    for b in (bias_f, bias_b):                               # (4, 1, H)
        in_specs.append(pl.BlockSpec(b.shape, lambda c: (0, 0, 0)))
        inputs.append(b)
    for w in (whh_f, whh_b):                                 # (4, H, H)
        in_specs.append(pl.BlockSpec(w.shape, lambda c: (0, 0, 0)))
        inputs.append(w)

    if fuse_fc:
        Dout = fc_w_f.shape[1]
        for w in (fc_w_f, fc_w_b):                           # (H, Dout)
            in_specs.append(pl.BlockSpec((H, Dout), lambda c: (0, 0)))
            inputs.append(w)
        in_specs.append(pl.BlockSpec((1, Dout), lambda c: (0, 0)))
        inputs.append(fc_b.reshape(1, Dout).astype(jnp.float32))
        out_shape = jax.ShapeDtypeStruct((B, Dout), jnp.float32)
        out_specs = pl.BlockSpec((B, Dout), lambda c: (0, 0))
    else:
        out_shape = (jax.ShapeDtypeStruct((T, B, H), out_dtype),
                     jax.ShapeDtypeStruct((T, B, H), out_dtype))
        out_specs = (pl.BlockSpec((Tc, B, H), lambda c: (c, 0, 0)),
                     pl.BlockSpec((Tc, B, H), lambda c: (nc - 1 - c, 0, 0)))

    kernel = functools.partial(_bilstm_layer_kernel, n_streams=n_streams,
                               time_chunk=Tc, hidden=H, n_chunks=nc,
                               fuse_fc=fuse_fc)
    # NOTE(v7x): 64 MiB physical / 32 MiB default scoped VMEM — for large
    # B/H/Tc use bf16 matmul operands and/or set vmem_limit_bytes explicitly.
    return pl.pallas_call(
        kernel,
        out_shape=out_shape,
        grid=(nc,),
        in_specs=in_specs,
        out_specs=out_specs,
        scratch_shapes=[pltpu.VMEM((4 * Tc, B, H), jnp.float32),  # gates fwd
                        pltpu.VMEM((4 * Tc, B, H), jnp.float32),  # gates bwd
                        pltpu.VMEM((B, H), jnp.float32),          # h_f
                        pltpu.VMEM((B, H), jnp.float32),          # c_f
                        pltpu.VMEM((B, H), jnp.float32),          # h_b
                        pltpu.VMEM((B, H), jnp.float32)],         # c_b
        compiler_params=pltpu.CompilerParams(
            dimension_semantics=("arbitrary",)),                  # sequential
    )(*inputs)


# ---------------------------------------------------------------------------
# Parameter re-layout helpers (plain JAX, one-time): per-gate weight pieces so
# the kernel never slices the 4H lane dimension.
# ---------------------------------------------------------------------------
def _split_wih(w_ih, splits, dtype):
    """(Din_total, 4H) -> list of per-stream (4, Din_j, H) gate-major pieces."""
    H = w_ih.shape[1] // 4
    w4 = w_ih.reshape(w_ih.shape[0], 4, H)
    pieces, off = [], 0
    for d in splits:
        pieces.append(jnp.transpose(w4[off:off + d], (1, 0, 2)).astype(dtype))
        off += d
    return pieces


def _split_whh(w_hh, dtype):
    H = w_hh.shape[0]
    return jnp.transpose(w_hh.reshape(H, 4, H), (1, 0, 2)).astype(dtype)


def _split_bias(b):
    H = b.shape[0] // 4
    return b.reshape(4, 1, H).astype(jnp.float32)


# ---------------------------------------------------------------------------
# Model forward (glue in plain JAX, hot path in Pallas)
# ---------------------------------------------------------------------------
def rnn_forward(params, text, text_lengths, *, mm_dtype=jnp.bfloat16,
                time_chunk=8):
    # Embedding lookup (gather) kept in plain JAX glue; pad_idx row is zero.
    x = params["embedding"][text]                      # (T, B, E) f32
    T, B, _ = x.shape
    Tc = min(time_chunk, T)
    T_pad = pl.cdiv(T, Tc) * Tc
    if T_pad != T:                                     # padded steps are masked
        x = jnp.pad(x, ((0, T_pad - T), (0, 0), (0, 0)))

    streams = [x.astype(mm_dtype)]
    n_layers = len(params["lstm"])
    for li, layer in enumerate(params["lstm"]):
        w_ih_f, w_hh_f, b_f = layer["fwd"]
        w_ih_b, w_hh_b, b_b = layer["bwd"]
        splits = [s.shape[-1] for s in streams]
        args = dict(
            wih_pieces_f=_split_wih(w_ih_f, splits, mm_dtype),
            wih_pieces_b=_split_wih(w_ih_b, splits, mm_dtype),
            bias_f=_split_bias(b_f), bias_b=_split_bias(b_b),
            whh_f=_split_whh(w_hh_f, mm_dtype),
            whh_b=_split_whh(w_hh_b, mm_dtype),
            time_chunk=Tc)
        if li == n_layers - 1:
            # Last layer: only the final hidden states matter -> fused fc,
            # no per-timestep output stores at all.
            H = w_hh_f.shape[0]
            return bilstm_layer(streams, text_lengths,
                                fc_w_f=params["fc_w"][:H].astype(mm_dtype),
                                fc_w_b=params["fc_w"][H:].astype(mm_dtype),
                                fc_b=params["fc_b"], **args)
        out_f, out_b = bilstm_layer(streams, text_lengths,
                                    out_dtype=mm_dtype, **args)
        streams = [out_f, out_b]       # no concat: next layer's projection is
        # gates = out_f @ W_ih[:H] + out_b @ W_ih[H:] + b.
        # TODO(synk): inter-layer LSTM dropout is identity (eval mode).


# ---------------------------------------------------------------------------
# Deterministic parameter init (shapes from the PyTorch __init__)
# ---------------------------------------------------------------------------
def init_params(key, vocab_size, embedding_dim, hidden_dim, output_dim,
                n_layers, pad_idx):
    keys = jax.random.split(key, 2 + 2 * n_layers)
    emb = jax.random.normal(keys[0], (vocab_size, embedding_dim), jnp.float32)
    emb = emb.at[pad_idx].set(0.0)

    k = 1.0 / (hidden_dim ** 0.5)
    layers = []
    kidx = 1
    for l in range(n_layers):
        din = embedding_dim if l == 0 else 2 * hidden_dim
        layer = {}
        for name in ("fwd", "bwd"):
            kk = jax.random.split(keys[kidx], 3)
            kidx += 1
            w_ih = jax.random.uniform(kk[0], (din, 4 * hidden_dim), jnp.float32, -k, k)
            w_hh = jax.random.uniform(kk[1], (hidden_dim, 4 * hidden_dim), jnp.float32, -k, k)
            # NOTE: PyTorch has two biases (b_ih + b_hh); a single bias is
            # mathematically equivalent in the forward pass (sum them when
            # loading a PyTorch checkpoint).
            bias = jax.random.uniform(kk[2], (4 * hidden_dim,), jnp.float32, -k, k)
            layer[name] = (w_ih, w_hh, bias)
        layers.append(layer)

    kfc = jax.random.split(keys[kidx], 2)
    kf = 1.0 / ((2 * hidden_dim) ** 0.5)
    fc_w = jax.random.uniform(kfc[0], (2 * hidden_dim, output_dim), jnp.float32, -kf, kf)
    fc_b = jax.random.uniform(kfc[1], (output_dim,), jnp.float32, -kf, kf)
    return {"embedding": emb, "lstm": layers, "fc_w": fc_w, "fc_b": fc_b}


# ---------------------------------------------------------------------------
# Pure-JAX reference (same math, f32) for correctness sanity check
# ---------------------------------------------------------------------------
def _lstm_dir_ref(x, lengths, w_ih, w_hh, b, reverse):
    T, B, _ = x.shape
    H = w_hh.shape[0]
    h = jnp.zeros((B, H), jnp.float32)
    c = jnp.zeros((B, H), jnp.float32)
    outs = [None] * T
    order = range(T - 1, -1, -1) if reverse else range(T)
    for t in order:
        gates = x[t] @ w_ih + h @ w_hh + b
        i = jax.nn.sigmoid(gates[:, :H])
        f = jax.nn.sigmoid(gates[:, H:2 * H])
        g = jnp.tanh(gates[:, 2 * H:3 * H])
        o = jax.nn.sigmoid(gates[:, 3 * H:])
        c_new = f * c + i * g
        h_new = o * jnp.tanh(c_new)
        valid = (t < lengths)[:, None]
        h = jnp.where(valid, h_new, h)
        c = jnp.where(valid, c_new, c)
        outs[t] = jnp.where(valid, h_new, 0.0)
    return jnp.stack(outs), h


def rnn_forward_ref(params, text, text_lengths):
    x = params["embedding"][text]
    h_f = h_b = None
    for layer in params["lstm"]:
        out_f, h_f = _lstm_dir_ref(x, text_lengths, *layer["fwd"], reverse=False)
        out_b, h_b = _lstm_dir_ref(x, text_lengths, *layer["bwd"], reverse=True)
        x = jnp.concatenate([out_f, out_b], axis=-1)
    hidden = jnp.concatenate([h_f, h_b], axis=1)
    return hidden @ params["fc_w"] + params["fc_b"]


# ---------------------------------------------------------------------------
if __name__ == "__main__":
    vocab_size, embedding_dim, hidden_dim, output_dim = 50, 32, 32, 4
    n_layers, pad_idx = 2, 0
    T, B = 10, 8

    key = jax.random.PRNGKey(0)
    k_params, k_tok = jax.random.split(key)
    params = init_params(k_params, vocab_size, embedding_dim, hidden_dim,
                         output_dim, n_layers, pad_idx)

    # lengths sorted descending (pack_padded_sequence default enforce_sorted)
    text_lengths = jnp.array([10, 9, 8, 7, 6, 5, 3, 2], dtype=jnp.int32)
    tokens = jax.random.randint(k_tok, (T, B), 1, vocab_size, dtype=jnp.int32)
    valid_mask = jnp.arange(T)[:, None] < text_lengths[None, :]
    text = jnp.where(valid_mask, tokens, pad_idx)          # (T, B)

    ref = rnn_forward_ref(params, text, text_lengths)

    # float32 matmul path (strict check vs. pure-JAX reference).
    out_f32 = rnn_forward(params, text, text_lengths,
                          mm_dtype=jnp.float32, time_chunk=8)
    jax.block_until_ready(out_f32)
    np.testing.assert_allclose(np.asarray(out_f32), np.asarray(ref),
                               rtol=1e-3, atol=1e-2)

    # bf16 matmul-operand path (recommended on v6e/v7x): weights / x /
    # inter-layer outputs in bf16, f32 accumulation, f32 gate scratch and
    # h/c carries -> slightly looser tolerance.
    out_bf16 = rnn_forward(params, text, text_lengths,
                           mm_dtype=jnp.bfloat16, time_chunk=8)
    jax.block_until_ready(out_bf16)
    np.testing.assert_allclose(np.asarray(out_bf16), np.asarray(ref),
                               rtol=5e-2, atol=5e-2)

    print("KERNEL_OK")
</pallas_src>

<mosaic_0001>
module attributes {stable_mosaic.version = 11 : i64} {
  func.func @_bilstm_layer_kernel(%arg0: i32, %arg1: memref<8x1xi32, #tpu.memory_space<vmem>>, %arg2: memref<8x8x32xf32, #tpu.memory_space<vmem>>, %arg3: memref<8x8x32xf32, #tpu.memory_space<vmem>>, %arg4: memref<4x32x32xf32, #tpu.memory_space<vmem>>, %arg5: memref<4x32x32xf32, #tpu.memory_space<vmem>>, %arg6: memref<4x1x32xf32, #tpu.memory_space<vmem>>, %arg7: memref<4x1x32xf32, #tpu.memory_space<vmem>>, %arg8: memref<4x32x32xf32, #tpu.memory_space<vmem>>, %arg9: memref<4x32x32xf32, #tpu.memory_space<vmem>>, %arg10: memref<8x8x32xf32, #tpu.memory_space<vmem>>, %arg11: memref<8x8x32xf32, #tpu.memory_space<vmem>>, %arg12: memref<32x8x32xf32, #tpu.memory_space<vmem>>, %arg13: memref<32x8x32xf32, #tpu.memory_space<vmem>>, %arg14: memref<8x32xf32, #tpu.memory_space<vmem>>, %arg15: memref<8x32xf32, #tpu.memory_space<vmem>>, %arg16: memref<8x32xf32, #tpu.memory_space<vmem>>, %arg17: memref<8x32xf32, #tpu.memory_space<vmem>>) attributes {dimension_semantics = [#tpu.dimension_semantics<arbitrary>], iteration_bounds = array<i64: 2>, scalar_prefetch = 0 : i64, scratch_operands = 6 : i64, tpu.core_type = #tpu.core_type<tc>, window_params = [{pipeline_mode = #tpu.pipeline_mode<synchronous>, transform_indices = @transform_0, window_bounds = array<i64: 8, 1>}, {transform_indices = @transform_1, window_bounds = array<i64: 8, 8, 32>}, {transform_indices = @transform_2, window_bounds = array<i64: 8, 8, 32>}, {pipeline_mode = #tpu.pipeline_mode<synchronous>, transform_indices = @transform_3, window_bounds = array<i64: 4, 32, 32>}, {pipeline_mode = #tpu.pipeline_mode<synchronous>, transform_indices = @transform_4, window_bounds = array<i64: 4, 32, 32>}, {pipeline_mode = #tpu.pipeline_mode<synchronous>, transform_indices = @transform_5, window_bounds = array<i64: 4, 1, 32>}, {pipeline_mode = #tpu.pipeline_mode<synchronous>, transform_indices = @transform_6, window_bounds = array<i64: 4, 1, 32>}, {pipeline_mode = #tpu.pipeline_mode<synchronous>, transform_indices = @transform_7, window_bounds = array<i64: 4, 32, 32>}, {pipeline_mode = #tpu.pipeline_mode<synchronous>, transform_indices = @transform_8, window_bounds = array<i64: 4, 32, 32>}, {transform_indices = @transform_9, window_bounds = array<i64: 8, 8, 32>}, {transform_indices = @transform_10, window_bounds = array<i64: 8, 8, 32>}]} {
    %c0_i32 = arith.constant 0 : i32
    %0 = arith.cmpi eq, %arg0, %c0_i32 : i32
    %1 = arith.extui %0 : i1 to i32
    %c0_i32_0 = arith.constant 0 : i32
    %2 = arith.cmpi ne, %1, %c0_i32_0 : i32
    scf.if %2 {
      %cst_784 = arith.constant 0.000000e+00 : f32
      %1232 = vector.broadcast %cst_784 : f32 to vector<8x32xf32>
      %c0_785 = arith.constant 0 : index
      %c0_786 = arith.constant 0 : index
      %1233 = vector.load %arg14[%c0_785, %c0_786] : memref<8x32xf32, #tpu.memory_space<vmem>>, vector<8x32xf32>
      tpu.vector_store %arg14[%c0_785, %c0_786], %1232 {strides = array<i32>} : memref<8x32xf32, #tpu.memory_space<vmem>>, vector<8x32xf32>,
      %cst_787 = arith.constant 0.000000e+00 : f32
      %1234 = vector.broadcast %cst_787 : f32 to vector<8x32xf32>
      %c0_788 = arith.constant 0 : index
      %c0_789 = arith.constant 0 : index
      %1235 = vector.load %arg15[%c0_788, %c0_789] : memref<8x32xf32, #tpu.memory_space<vmem>>, vector<8x32xf32>
      tpu.vector_store %arg15[%c0_788, %c0_789], %1234 {strides = array<i32>} : memref<8x32xf32, #tpu.memory_space<vmem>>, vector<8x32xf32>,
      %cst_790 = arith.constant 0.000000e+00 : f32
      %1236 = vector.broadcast %cst_790 : f32 to vector<8x32xf32>
      %c0_791 = arith.constant 0 : index
      %c0_792 = arith.constant 0 : index
      %1237 = vector.load %arg16[%c0_791, %c0_792] : memref<8x32xf32, #tpu.memory_space<vmem>>, vector<8x32xf32>
      tpu.vector_store %arg16[%c0_791, %c0_792], %1236 {strides = array<i32>} : memref<8x32xf32, #tpu.memory_space<vmem>>, vector<8x32xf32>,
      %cst_793 = arith.constant 0.000000e+00 : f32
      %1238 = vector.broadcast %cst_793 : f32 to vector<8x32xf32>
      %c0_794 = arith.constant 0 : index
      %c0_795 = arith.constant 0 : index
      %1239 = vector.load %arg17[%c0_794, %c0_795] : memref<8x32xf32, #tpu.memory_space<vmem>>, vector<8x32xf32>
      tpu.vector_store %arg17[%c0_794, %c0_795], %1238 {strides = array<i32>} : memref<8x32xf32, #tpu.memory_space<vmem>>, vector<8x32xf32>,
    } else {
    }
    %c0 = arith.constant 0 : index
    %c0_1 = arith.constant 0 : index
    %3 = vector.load %arg1[%c0, %c0_1] : memref<8x1xi32, #tpu.memory_space<vmem>>, vector<8x1xi32>
    %c0_2 = arith.constant 0 : index
    %c0_3 = arith.constant 0 : index
    %c0_4 = arith.constant 0 : index
    %4 = vector.load %arg2[%c0_2, %c0_3, %c0_4] : memref<8x8x32xf32, #tpu.memory_space<vmem>>, vector<8x8x32xf32>
    %5 = vector.shape_cast %4 : vector<8x8x32xf32> to vector<64x32xf32>
    %c0_5 = arith.constant 0 : index
    %c0_6 = arith.constant 0 : index
    %c0_7 = arith.constant 0 : index
    %6 = vector.load %arg4[%c0_5, %c0_6, %c0_7] : memref<4x32x32xf32, #tpu.memory_space<vmem>>, vector<1x32x32xf32>
    %7 = vector.shape_cast %6 : vector<1x32x32xf32> to vector<32x32xf32>
    %cst = arith.constant dense<0.000000e+00> : vector<64x32xf32>
    %8 = tpu.matmul %5, %7, %cst {dimension_numbers = #tpu.dot_dimension_numbers<[1], [0], [0], [1], [0, 0, 1, 1], [], []>} : vector<64x32xf32>, vector<32x32xf32>, vector<64x32xf32> -> vector<64x32xf32>
    %c0_8 = arith.constant 0 : index
    %c0_9 = arith.constant 0 : index
    %c0_10 = arith.constant 0 : index
    %9 = vector.load %arg6[%c0_8, %c0_9, %c0_10] : memref<4x1x32xf32, #tpu.memory_space<vmem>>, vector<1x1x32xf32>
    %10 = vector.shape_cast %9 : vector<1x1x32xf32> to vector<1x32xf32>
    %11 = vector.broadcast %10 : vector<1x32xf32> to vector<64x32xf32>
    %12 = arith.addf %8, %11 : vector<64x32xf32>
    %13 = vector.shape_cast %12 : vector<64x32xf32> to vector<8x8x32xf32>
    %c0_11 = arith.constant 0 : index
    %c0_12 = arith.constant 0 : index
    %c0_13 = arith.constant 0 : index
    %14 = vector.load %arg12[%c0_11, %c0_12, %c0_13] : memref<32x8x32xf32, #tpu.memory_space<vmem>>, vector<8x8x32xf32>
    tpu.vector_store %arg12[%c0_11, %c0_12, %c0_13], %13 {strides = array<i32>} : memref<32x8x32xf32, #tpu.memory_space<vmem>>, vector<8x8x32xf32>,
    %c1 = arith.constant 1 : index
    %c0_14 = arith.constant 0 : index
    %c0_15 = arith.constant 0 : index
    %15 = vector.load %arg4[%c1, %c0_14, %c0_15] : memref<4x32x32xf32, #tpu.memory_space<vmem>>, vector<1x32x32xf32>
    %16 = vector.shape_cast %15 : vector<1x32x32xf32> to vector<32x32xf32>
    %cst_16 = arith.constant dense<0.000000e+00> : vector<64x32xf32>
    %17 = tpu.matmul %5, %16, %cst_16 {dimension_numbers = #tpu.dot_dimension_numbers<[1], [0], [0], [1], [0, 0, 1, 1], [], []>} : vector<64x32xf32>, vector<32x32xf32>, vector<64x32xf32> -> vector<64x32xf32>
    %c1_17 = arith.constant 1 : index
    %c0_18 = arith.constant 0 : index
    %c0_19 = arith.constant 0 : index
    %18 = vector.load %arg6[%c1_17, %c0_18, %c0_19] : memref<4x1x32xf32, #tpu.memory_space<vmem>>, vector<1x1x32xf32>
    %19 = vector.shape_cast %18 : vector<1x1x32xf32> to vector<1x32xf32>
    %20 = vector.broadcast %19 : vector<1x32xf32> to vector<64x32xf32>
    %21 = arith.addf %17, %20 : vector<64x32xf32>
    %22 = vector.shape_cast %21 : vector<64x32xf32> to vector<8x8x32xf32>
    %c8 = arith.constant 8 : index
    %c0_20 = arith.constant 0 : index
    %c0_21 = arith.constant 0 : index
    %23 = vector.load %arg12[%c8, %c0_20, %c0_21] : memref<32x8x32xf32, #tpu.memory_space<vmem>>, vector<8x8x32xf32>
    tpu.vector_store %arg12[%c8, %c0_20, %c0_21], %22 {strides = array<i32>} : memref<32x8x32xf32, #tpu.memory_space<vmem>>, vector<8x8x32xf32>,
    %c2 = arith.constant 2 : index
    %c0_22 = arith.constant 0 : index
    %c0_23 = arith.constant 0 : index
    %24 = vector.load %arg4[%c2, %c0_22, %c0_23] : memref<4x32x32xf32, #tpu.memory_space<vmem>>, vector<1x32x32xf32>
    %25 = vector.shape_cast %24 : vector<1x32x32xf32> to vector<32x32xf32>
    %cst_24 = arith.constant dense<0.000000e+00> : vector<64x32xf32>
    %26 = tpu.matmul %5, %25, %cst_24 {dimension_numbers = #tpu.dot_dimension_numbers<[1], [0], [0], [1], [0, 0, 1, 1], [], []>} : vector<64x32xf32>, vector<32x32xf32>, vector<64x32xf32> -> vector<64x32xf32>
    %c2_25 = arith.constant 2 : index
    %c0_26 = arith.constant 0 : index
    %c0_27 = arith.constant 0 : index
    %27 = vector.load %arg6[%c2_25, %c0_26, %c0_27] : memref<4x1x32xf32, #tpu.memory_space<vmem>>, vector<1x1x32xf32>
    %28 = vector.shape_cast %27 : vector<1x1x32xf32> to vector<1x32xf32>
    %29 = vector.broadcast %28 : vector<1x32xf32> to vector<64x32xf32>
    %30 = arith.addf %26, %29 : vector<64x32xf32>
    %31 = vector.shape_cast %30 : vector<64x32xf32> to vector<8x8x32xf32>
    %c16 = arith.constant 16 : index
    %c0_28 = arith.constant 0 : index
    %c0_29 = arith.constant 0 : index
    %32 = vector.load %arg12[%c16, %c0_28, %c0_29] : memref<32x8x32xf32, #tpu.memory_space<vmem>>, vector<8x8x32xf32>
    tpu.vector_store %arg12[%c16, %c0_28, %c0_29], %31 {strides = array<i32>} : memref<32x8x32xf32, #tpu.memory_space<vmem>>, vector<8x8x32xf32>,
    %c3 = arith.constant 3 : index
    %c0_30 = arith.constant 0 : index
    %c0_31 = arith.constant 0 : index
    %33 = vector.load %arg4[%c3, %c0_30, %c0_31] : memref<4x32x32xf32, #tpu.memory_space<vmem>>, vector<1x32x32xf32>
    %34 = vector.shape_cast %33 : vector<1x32x32xf32> to vector<32x32xf32>
    %cst_32 = arith.constant dense<0.000000e+00> : vector<64x32xf32>
    %35 = tpu.matmul %5, %34, %cst_32 {dimension_numbers = #tpu.dot_dimension_numbers<[1], [0], [0], [1], [0, 0, 1, 1], [], []>} : vector<64x32xf32>, vector<32x32xf32>, vector<64x32xf32> -> vector<64x32xf32>
    %c3_33 = arith.constant 3 : index
    %c0_34 = arith.constant 0 : index
    %c0_35 = arith.constant 0 : index
    %36 = vector.load %arg6[%c3_33, %c0_34, %c0_35] : memref<4x1x32xf32, #tpu.memory_space<vmem>>, vector<1x1x32xf32>
    %37 = vector.shape_cast %36 : vector<1x1x32xf32> to vector<1x32xf32>
    %38 = vector.broadcast %37 : vector<1x32xf32> to vector<64x32xf32>
    %39 = arith.addf %35, %38 : vector<64x32xf32>
    %40 = vector.shape_cast %39 : vector<64x32xf32> to vector<8x8x32xf32>
    %c24 = arith.constant 24 : index
    %c0_36 = arith.constant 0 : index
    %c0_37 = arith.constant 0 : index
    %41 = vector.load %arg12[%c24, %c0_36, %c0_37] : memref<32x8x32xf32, #tpu.memory_space<vmem>>, vector<8x8x32xf32>
    tpu.vector_store %arg12[%c24, %c0_36, %c0_37], %40 {strides = array<i32>} : memref<32x8x32xf32, #tpu.memory_space<vmem>>, vector<8x8x32xf32>,
    %c0_38 = arith.constant 0 : index
    %c0_39 = arith.constant 0 : index
    %c0_40 = arith.constant 0 : index
    %42 = vector.load %arg3[%c0_38, %c0_39, %c0_40] : memref<8x8x32xf32, #tpu.memory_space<vmem>>, vector<8x8x32xf32>
    %43 = vector.shape_cast %42 : vector<8x8x32xf32> to vector<64x32xf32>
    %c0_41 = arith.constant 0 : index
    %c0_42 = arith.constant 0 : index
    %c0_43 = arith.constant 0 : index
    %44 = vector.load %arg5[%c0_41, %c0_42, %c0_43] : memref<4x32x32xf32, #tpu.memory_space<vmem>>, vector<1x32x32xf32>
    %45 = vector.shape_cast %44 : vector<1x32x32xf32> to vector<32x32xf32>
    %cst_44 = arith.constant dense<0.000000e+00> : vector<64x32xf32>
    %46 = tpu.matmul %43, %45, %cst_44 {dimension_numbers = #tpu.dot_dimension_numbers<[1], [0], [0], [1], [0, 0, 1, 1], [], []>} : vector<64x32xf32>, vector<32x32xf32>, vector<64x32xf32> -> vector<64x32xf32>
    %c0_45 = arith.constant 0 : index
    %c0_46 = arith.constant 0 : index
    %c0_47 = arith.constant 0 : index
    %47 = vector.load %arg7[%c0_45, %c0_46, %c0_47] : memref<4x1x32xf32, #tpu.memory_space<vmem>>, vector<1x1x32xf32>
    %48 = vector.shape_cast %47 : vector<1x1x32xf32> to vector<1x32xf32>
    %49 = vector.broadcast %48 : vector<1x32xf32> to vector<64x32xf32>
    %50 = arith.addf %46, %49 : vector<64x32xf32>
    %51 = vector.shape_cast %50 : vector<64x32xf32> to vector<8x8x32xf32>
    %c0_48 = arith.constant 0 : index
    %c0_49 = arith.constant 0 : index
    %c0_50 = arith.constant 0 : index
    %52 = vector.load %arg13[%c0_48, %c0_49, %c0_50] : memref<32x8x32xf32, #tpu.memory_space<vmem>>, vector<8x8x32xf32>
    tpu.vector_store %arg13[%c0_48, %c0_49, %c0_50], %51 {strides = array<i32>} : memref<32x8x32xf32, #tpu.memory_space<vmem>>, vector<8x8x32xf32>,
    %c1_51 = arith.constant 1 : index
    %c0_52 = arith.constant 0 : index
    %c0_53 = arith.constant 0 : index
    %53 = vector.load %arg5[%c1_51, %c0_52, %c0_53] : memref<4x32x32xf32, #tpu.memory_space<vmem>>, vector<1x32x32xf32>
    %54 = vector.shape_cast %53 : vector<1x32x32xf32> to vector<32x32xf32>
    %cst_54 = arith.constant dense<0.000000e+00> : vector<64x32xf32>
    %55 = tpu.matmul %43, %54, %cst_54 {dimension_numbers = #tpu.dot_dimension_numbers<[1], [0], [0], [1], [0, 0, 1, 1], [], []>} : vector<64x32xf32>, vector<32x32xf32>, vector<64x32xf32> -> vector<64x32xf32>
    %c1_55 = arith.constant 1 : index
    %c0_56 = arith.constant 0 : index
    %c0_57 = arith.constant 0 : index
    %56 = vector.load %arg7[%c1_55, %c0_56, %c0_57] : memref<4x1x32xf32, #tpu.memory_space<vmem>>, vector<1x1x32xf32>
    %57 = vector.shape_cast %56 : vector<1x1x32xf32> to vector<1x32xf32>
    %58 = vector.broadcast %57 : vector<1x32xf32> to vector<64x32xf32>
    %59 = arith.addf %55, %58 : vector<64x32xf32>
    %60 = vector.shape_cast %59 : vector<64x32xf32> to vector<8x8x32xf32>
    %c8_58 = arith.constant 8 : index
    %c0_59 = arith.constant 0 : index
    %c0_60 = arith.constant 0 : index
    %61 = vector.load %arg13[%c8_58, %c0_59, %c0_60] : memref<32x8x32xf32, #tpu.memory_space<vmem>>, vector<8x8x32xf32>
    tpu.vector_store %arg13[%c8_58, %c0_59, %c0_60], %60 {strides = array<i32>} : memref<32x8x32xf32, #tpu.memory_space<vmem>>, vector<8x8x32xf32>,
    %c2_61 = arith.constant 2 : index
    %c0_62 = arith.constant 0 : index
    %c0_63 = arith.constant 0 : index
    %62 = vector.load %arg5[%c2_61, %c0_62, %c0_63] : memref<4x32x32xf32, #tpu.memory_space<vmem>>, vector<1x32x32xf32>
    %63 = vector.shape_cast %62 : vector<1x32x32xf32> to vector<32x32xf32>
    %cst_64 = arith.constant dense<0.000000e+00> : vector<64x32xf32>
    %64 = tpu.matmul %43, %63, %cst_64 {dimension_numbers = #tpu.dot_dimension_numbers<[1], [0], [0], [1], [0, 0, 1, 1], [], []>} : vector<64x32xf32>, vector<32x32xf32>, vector<64x32xf32> -> vector<64x32xf32>
    %c2_65 = arith.constant 2 : index
    %c0_66 = arith.constant 0 : index
    %c0_67 = arith.constant 0 : index
    %65 = vector.load %arg7[%c2_65, %c0_66, %c0_67] : memref<4x1x32xf32, #tpu.memory_space<vmem>>, vector<1x1x32xf32>
    %66 = vector.shape_cast %65 : vector<1x1x32xf32> to vector<1x32xf32>
    %67 = vector.broadcast %66 : vector<1x32xf32> to vector<64x32xf32>
    %68 = arith.addf %64, %67 : vector<64x32xf32>
    %69 = vector.shape_cast %68 : vector<64x32xf32> to vector<8x8x32xf32>
    %c16_68 = arith.constant 16 : index
    %c0_69 = arith.constant 0 : index
    %c0_70 = arith.constant 0 : index
    %70 = vector.load %arg13[%c16_68, %c0_69, %c0_70] : memref<32x8x32xf32, #tpu.memory_space<vmem>>, vector<8x8x32xf32>
    tpu.vector_store %arg13[%c16_68, %c0_69, %c0_70], %69 {strides = array<i32>} : memref<32x8x32xf32, #tpu.memory_space<vmem>>, vector<8x8x32xf32>,
    %c3_71 = arith.constant 3 : index
    %c0_72 = arith.constant 0 : index
    %c0_73 = arith.constant 0 : index
    %71 = vector.load %arg5[%c3_71, %c0_72, %c0_73] : memref<4x32x32xf32, #tpu.memory_space<vmem>>, vector<1x32x32xf32>
    %72 = vector.shape_cast %71 : vector<1x32x32xf32> to vector<32x32xf32>
    %cst_74 = arith.constant dense<0.000000e+00> : vector<64x32xf32>
    %73 = tpu.matmul %43, %72, %cst_74 {dimension_numbers = #tpu.dot_dimension_numbers<[1], [0], [0], [1], [0, 0, 1, 1], [], []>} : vector<64x32xf32>, vector<32x32xf32>, vector<64x32xf32> -> vector<64x32xf32>
    %c3_75 = arith.constant 3 : index
    %c0_76 = arith.constant 0 : index
    %c0_77 = arith.constant 0 : index
    %74 = vector.load %arg7[%c3_75, %c0_76, %c0_77] : memref<4x1x32xf32, #tpu.memory_space<vmem>>, vector<1x1x32xf32>
    %75 = vector.shape_cast %74 : vector<1x1x32xf32> to vector<1x32xf32>
    %76 = vector.broadcast %75 : vector<1x32xf32> to vector<64x32xf32>
    %77 = arith.addf %73, %76 : vector<64x32xf32>
    %78 = vector.shape_cast %77 : vector<64x32xf32> to vector<8x8x32xf32>
    %c24_78 = arith.constant 24 : index
    %c0_79 = arith.constant 0 : index
    %c0_80 = arith.constant 0 : index
    %79 = vector.load %arg13[%c24_78, %c0_79, %c0_80] : memref<32x8x32xf32, #tpu.memory_space<vmem>>, vector<8x8x32xf32>
    tpu.vector_store %arg13[%c24_78, %c0_79, %c0_80], %78 {strides = array<i32>} : memref<32x8x32xf32, #tpu.memory_space<vmem>>, vector<8x8x32xf32>,
    %c0_i32_81 = arith.constant 0 : i32
    %c8_i32 = arith.constant 8 : i32
    %80 = arith.muli %arg0, %c8_i32 : i32
    %81 = arith.addi %80, %c0_i32_81 : i32
    %82 = vector.broadcast %81 : i32 to vector<8x1xi32>
    %83 = arith.cmpi slt, %82, %3 : vector<8x1xi32>
    %84 = vector.shape_cast %83 : vector<8x1xi1> to vector<8x1xi1>
    %85 = vector.broadcast %84 : vector<8x1xi1> to vector<8x32xi1>
    %c0_82 = arith.constant 0 : index
    %c0_83 = arith.constant 0 : index
    %86 = vector.load %arg14[%c0_82, %c0_83] : memref<8x32xf32, #tpu.memory_space<vmem>>, vector<8x32xf32>
    %c0_84 = arith.constant 0 : index
    %c0_85 = arith.constant 0 : index
    %87 = vector.load %arg15[%c0_84, %c0_85] : memref<8x32xf32, #tpu.memory_space<vmem>>, vector<8x32xf32>
    %c0_i32_86 = arith.constant 0 : i32
    %88 = arith.addi %c0_i32_86, %c0_i32_81 : i32
    %89 = arith.index_cast %88 : i32 to index
    %c0_87 = arith.constant 0 : index
    %c0_88 = arith.constant 0 : index
    %90 = vector.load %arg12[%89, %c0_87, %c0_88] : memref<32x8x32xf32, #tpu.memory_space<vmem>>, vector<1x8x32xf32>
    %91 = vector.shape_cast %90 : vector<1x8x32xf32> to vector<8x32xf32>
    %c0_89 = arith.constant 0 : index
    %c0_90 = arith.constant 0 : index
    %c0_91 = arith.constant 0 : index
    %92 = vector.load %arg8[%c0_89, %c0_90, %c0_91] : memref<4x32x32xf32, #tpu.memory_space<vmem>>, vector<1x32x32xf32>
    %93 = vector.shape_cast %92 : vector<1x32x32xf32> to vector<32x32xf32>
    %cst_92 = arith.constant dense<0.000000e+00> : vector<8x32xf32>
    %94 = tpu.matmul %86, %93, %cst_92 {dimension_numbers = #tpu.dot_dimension_numbers<[1], [0], [0], [1], [0, 0, 1, 1], [], []>} : vector<8x32xf32>, vector<32x32xf32>, vector<8x32xf32> -> vector<8x32xf32>
    %95 = arith.addf %91, %94 : vector<8x32xf32>
    %c8_i32_93 = arith.constant 8 : i32
    %96 = arith.addi %c8_i32_93, %c0_i32_81 : i32
    %97 = arith.index_cast %96 : i32 to index
    %c0_94 = arith.constant 0 : index
    %c0_95 = arith.constant 0 : index
    %98 = vector.load %arg12[%97, %c0_94, %c0_95] : memref<32x8x32xf32, #tpu.memory_space<vmem>>, vector<1x8x32xf32>
    %99 = vector.shape_cast %98 : vector<1x8x32xf32> to vector<8x32xf32>
    %c1_96 = arith.constant 1 : index
    %c0_97 = arith.constant 0 : index
    %c0_98 = arith.constant 0 : index
    %100 = vector.load %arg8[%c1_96, %c0_97, %c0_98] : memref<4x32x32xf32, #tpu.memory_space<vmem>>, vector<1x32x32xf32>
    %101 = vector.shape_cast %100 : vector<1x32x32xf32> to vector<32x32xf32>
    %cst_99 = arith.constant dense<0.000000e+00> : vector<8x32xf32>
    %102 = tpu.matmul %86, %101, %cst_99 {dimension_numbers = #tpu.dot_dimension_numbers<[1], [0], [0], [1], [0, 0, 1, 1], [], []>} : vector<8x32xf32>, vector<32x32xf32>, vector<8x32xf32> -> vector<8x32xf32>
    %103 = arith.addf %99, %102 : vector<8x32xf32>
    %c16_i32 = arith.constant 16 : i32
    %104 = arith.addi %c16_i32, %c0_i32_81 : i32
    %105 = arith.index_cast %104 : i32 to index
    %c0_100 = arith.constant 0 : index
    %c0_101 = arith.constant 0 : index
    %106 = vector.load %arg12[%105, %c0_100, %c0_101] : memref<32x8x32xf32, #tpu.memory_space<vmem>>, vector<1x8x32xf32>
    %107 = vector.shape_cast %106 : vector<1x8x32xf32> to vector<8x32xf32>
    %c2_102 = arith.constant 2 : index
    %c0_103 = arith.constant 0 : index
    %c0_104 = arith.constant 0 : index
    %108 = vector.load %arg8[%c2_102, %c0_103, %c0_104] : memref<4x32x32xf32, #tpu.memory_space<vmem>>, vector<1x32x32xf32>
    %109 = vector.shape_cast %108 : vector<1x32x32xf32> to vector<32x32xf32>
    %cst_105 = arith.constant dense<0.000000e+00> : vector<8x32xf32>
    %110 = tpu.matmul %86, %109, %cst_105 {dimension_numbers = #tpu.dot_dimension_numbers<[1], [0], [0], [1], [0, 0, 1, 1], [], []>} : vector<8x32xf32>, vector<32x32xf32>, vector<8x32xf32> -> vector<8x32xf32>
    %111 = arith.addf %107, %110 : vector<8x32xf32>
    %c24_i32 = arith.constant 24 : i32
    %112 = arith.addi %c24_i32, %c0_i32_81 : i32
    %113 = arith.index_cast %112 : i32 to index
    %c0_106 = arith.constant 0 : index
    %c0_107 = arith.constant 0 : index
    %114 = vector.load %arg12[%113, %c0_106, %c0_107] : memref<32x8x32xf32, #tpu.memory_space<vmem>>, vector<1x8x32xf32>
    %115 = vector.shape_cast %114 : vector<1x8x32xf32> to vector<8x32xf32>
    %c3_108 = arith.constant 3 : index
    %c0_109 = arith.constant 0 : index
    %c0_110 = arith.constant 0 : index
    %116 = vector.load %arg8[%c3_108, %c0_109, %c0_110] : memref<4x32x32xf32, #tpu.memory_space<vmem>>, vector<1x32x32xf32>
    %117 = vector.shape_cast %116 : vector<1x32x32xf32> to vector<32x32xf32>
    %cst_111 = arith.constant dense<0.000000e+00> : vector<8x32xf32>
    %118 = tpu.matmul %86, %117, %cst_111 {dimension_numbers = #tpu.dot_dimension_numbers<[1], [0], [0], [1], [0, 0, 1, 1], [], []>} : vector<8x32xf32>, vector<32x32xf32>, vector<8x32xf32> -> vector<8x32xf32>
    %119 = arith.addf %115, %118 : vector<8x32xf32>
    %120 = arith.negf %103 : vector<8x32xf32>
    %121 = math.exp %120 : vector<8x32xf32>
    %cst_112 = arith.constant 1.000000e+00 : f32
    %122 = vector.broadcast %cst_112 : f32 to vector<8x32xf32>
    %123 = arith.addf %122, %121 : vector<8x32xf32>
    %124 = arith.divf %122, %123 : vector<8x32xf32>
    %125 = arith.mulf %124, %87 : vector<8x32xf32>
    %126 = arith.negf %95 : vector<8x32xf32>
    %127 = math.exp %126 : vector<8x32xf32>
    %cst_113 = arith.constant 1.000000e+00 : f32
    %128 = vector.broadcast %cst_113 : f32 to vector<8x32xf32>
    %129 = arith.addf %128, %127 : vector<8x32xf32>
    %130 = arith.divf %128, %129 : vector<8x32xf32>
    %131 = math.tanh %111 : vector<8x32xf32>
    %132 = arith.mulf %130, %131 : vector<8x32xf32>
    %133 = arith.addf %125, %132 : vector<8x32xf32>
    %134 = arith.negf %119 : vector<8x32xf32>
    %135 = math.exp %134 : vector<8x32xf32>
    %cst_114 = arith.constant 1.000000e+00 : f32
    %136 = vector.broadcast %cst_114 : f32 to vector<8x32xf32>
    %137 = arith.addf %136, %135 : vector<8x32xf32>
    %138 = arith.divf %136, %137 : vector<8x32xf32>
    %139 = math.tanh %133 : vector<8x32xf32>
    %140 = arith.mulf %138, %139 : vector<8x32xf32>
    %141 = arith.select %85, %140, %86 : vector<8x32xi1>, vector<8x32xf32>
    %c0_115 = arith.constant 0 : index
    %c0_116 = arith.constant 0 : index
    %142 = vector.load %arg14[%c0_115, %c0_116] : memref<8x32xf32, #tpu.memory_space<vmem>>, vector<8x32xf32>
    tpu.vector_store %arg14[%c0_115, %c0_116], %141 {strides = array<i32>} : memref<8x32xf32, #tpu.memory_space<vmem>>, vector<8x32xf32>,
    %143 = arith.select %85, %133, %87 : vector<8x32xi1>, vector<8x32xf32>
    %c0_117 = arith.constant 0 : index
    %c0_118 = arith.constant 0 : index
    %144 = vector.load %arg15[%c0_117, %c0_118] : memref<8x32xf32, #tpu.memory_space<vmem>>, vector<8x32xf32>
    tpu.vector_store %arg15[%c0_117, %c0_118], %143 {strides = array<i32>} : memref<8x32xf32, #tpu.memory_space<vmem>>, vector<8x32xf32>,
    %cst_119 = arith.constant 0.000000e+00 : f32
    %145 = vector.broadcast %cst_119 : f32 to vector<8x32xf32>
    %146 = arith.select %85, %140, %145 : vector<8x32xi1>, vector<8x32xf32>
    %147 = arith.index_cast %c0_i32_81 : i32 to index
    %c0_120 = arith.constant 0 : index
    %c0_121 = arith.constant 0 : index
    %148 = vector.load %arg10[%147, %c0_120, %c0_121] : memref<8x8x32xf32, #tpu.memory_space<vmem>>, vector<1x8x32xf32>
    %149 = vector.shape_cast %148 : vector<1x8x32xf32> to vector<8x32xf32>
    %150 = vector.shape_cast %146 : vector<8x32xf32> to vector<1x8x32xf32>
    tpu.vector_store %arg10[%147, %c0_120, %c0_121], %150 {strides = array<i32>} : memref<8x8x32xf32, #tpu.memory_space<vmem>>, vector<1x8x32xf32>,
    %c7_i32 = arith.constant 7 : i32
    %151 = arith.subi %c7_i32, %c0_i32_81 : i32
    %c1_i32 = arith.constant 1 : i32
    %152 = arith.subi %c1_i32, %arg0 : i32
    %c8_i32_122 = arith.constant 8 : i32
    %153 = arith.muli %152, %c8_i32_122 : i32
    %154 = arith.addi %153, %151 : i32
    %155 = vector.broadcast %154 : i32 to vector<8x1xi32>
    %156 = arith.cmpi slt, %155, %3 : vector<8x1xi32>
    %157 = vector.shape_cast %156 : vector<8x1xi1> to vector<8x1xi1>
    %158 = vector.broadcast %157 : vector<8x1xi1> to vector<8x32xi1>
    %c0_123 = arith.constant 0 : index
    %c0_124 = arith.constant 0 : index
    %159 = vector.load %arg16[%c0_123, %c0_124] : memref<8x32xf32, #tpu.memory_space<vmem>>, vector<8x32xf32>
    %c0_125 = arith.constant 0 : index
    %c0_126 = arith.constant 0 : index
    %160 = vector.load %arg17[%c0_125, %c0_126] : memref<8x32xf32, #tpu.memory_space<vmem>>, vector<8x32xf32>
    %c0_i32_127 = arith.constant 0 : i32
    %161 = arith.addi %c0_i32_127, %151 : i32
    %162 = arith.index_cast %161 : i32 to index
    %c0_128 = arith.constant 0 : index
    %c0_129 = arith.constant 0 : index
    %163 = vector.load %arg13[%162, %c0_128, %c0_129] : memref<32x8x32xf32, #tpu.memory_space<vmem>>, vector<1x8x32xf32>
    %164 = vector.shape_cast %163 : vector<1x8x32xf32> to vector<8x32xf32>
    %c0_130 = arith.constant 0 : index
    %c0_131 = arith.constant 0 : index
    %c0_132 = arith.constant 0 : index
    %165 = vector.load %arg9[%c0_130, %c0_131, %c0_132] : memref<4x32x32xf32, #tpu.memory_space<vmem>>, vector<1x32x32xf32>
    %166 = vector.shape_cast %165 : vector<1x32x32xf32> to vector<32x32xf32>
    %cst_133 = arith.constant dense<0.000000e+00> : vector<8x32xf32>
    %167 = tpu.matmul %159, %166, %cst_133 {dimension_numbers = #tpu.dot_dimension_numbers<[1], [0], [0], [1], [0, 0, 1, 1], [], []>} : vector<8x32xf32>, vector<32x32xf32>, vector<8x32xf32> -> vector<8x32xf32>
    %168 = arith.addf %164, %167 : vector<8x32xf32>
    %c8_i32_134 = arith.constant 8 : i32
    %169 = arith.addi %c8_i32_134, %151 : i32
    %170 = arith.index_cast %169 : i32 to index
    %c0_135 = arith.constant 0 : index
    %c0_136 = arith.constant 0 : index
    %171 = vector.load %arg13[%170, %c0_135, %c0_136] : memref<32x8x32xf32, #tpu.memory_space<vmem>>, vector<1x8x32xf32>
    %172 = vector.shape_cast %171 : vector<1x8x32xf32> to vector<8x32xf32>
    %c1_137 = arith.constant 1 : index
    %c0_138 = arith.constant 0 : index
    %c0_139 = arith.constant 0 : index
    %173 = vector.load %arg9[%c1_137, %c0_138, %c0_139] : memref<4x32x32xf32, #tpu.memory_space<vmem>>, vector<1x32x32xf32>
    %174 = vector.shape_cast %173 : vector<1x32x32xf32> to vector<32x32xf32>
    %cst_140 = arith.constant dense<0.000000e+00> : vector<8x32xf32>
    %175 = tpu.matmul %159, %174, %cst_140 {dimension_numbers = #tpu.dot_dimension_numbers<[1], [0], [0], [1], [0, 0, 1, 1], [], []>} : vector<8x32xf32>, vector<32x32xf32>, vector<8x32xf32> -> vector<8x32xf32>
    %176 = arith.addf %172, %175 : vector<8x32xf32>
    %c16_i32_141 = arith.constant 16 : i32
    %177 = arith.addi %c16_i32_141, %151 : i32
    %178 = arith.index_cast %177 : i32 to index
    %c0_142 = arith.constant 0 : index
    %c0_143 = arith.constant 0 : index
    %179 = vector.load %arg13[%178, %c0_142, %c0_143] : memref<32x8x32xf32, #tpu.memory_space<vmem>>, vector<1x8x32xf32>
    %180 = vector.shape_cast %179 : vector<1x8x32xf32> to vector<8x32xf32>
    %c2_144 = arith.constant 2 : index
    %c0_145 = arith.constant 0 : index
    %c0_146 = arith.constant 0 : index
    %181 = vector.load %arg9[%c2_144, %c0_145, %c0_146] : memref<4x32x32xf32, #tpu.memory_space<vmem>>, vector<1x32x32xf32>
    %182 = vector.shape_cast %181 : vector<1x32x32xf32> to vector<32x32xf32>
    %cst_147 = arith.constant dense<0.000000e+00> : vector<8x32xf32>
    %183 = tpu.matmul %159, %182, %cst_147 {dimension_numbers = #tpu.dot_dimension_numbers<[1], [0], [0], [1], [0, 0, 1, 1], [], []>} : vector<8x32xf32>, vector<32x32xf32>, vector<8x32xf32> -> vector<8x32xf32>
    %184 = arith.addf %180, %183 : vector<8x32xf32>
    %c24_i32_148 = arith.constant 24 : i32
    %185 = arith.addi %c24_i32_148, %151 : i32
    %186 = arith.index_cast %185 : i32 to index
    %c0_149 = arith.constant 0 : index
    %c0_150 = arith.constant 0 : index
    %187 = vector.load %arg13[%186, %c0_149, %c0_150] : memref<32x8x32xf32, #tpu.memory_space<vmem>>, vector<1x8x32xf32>
    %188 = vector.shape_cast %187 : vector<1x8x32xf32> to vector<8x32xf32>
    %c3_151 = arith.constant 3 : index
    %c0_152 = arith.constant 0 : index
    %c0_153 = arith.constant 0 : index
    %189 = vector.load %arg9[%c3_151, %c0_152, %c0_153] : memref<4x32x32xf32, #tpu.memory_space<vmem>>, vector<1x32x32xf32>
    %190 = vector.shape_cast %189 : vector<1x32x32xf32> to vector<32x32xf32>
    %cst_154 = arith.constant dense<0.000000e+00> : vector<8x32xf32>
    %191 = tpu.matmul %159, %190, %cst_154 {dimension_numbers = #tpu.dot_dimension_numbers<[1], [0], [0], [1], [0, 0, 1, 1], [], []>} : vector<8x32xf32>, vector<32x32xf32>, vector<8x32xf32> -> vector<8x32xf32>
    %192 = arith.addf %188, %191 : vector<8x32xf32>
    %193 = arith.negf %176 : vector<8x32xf32>
    %194 = math.exp %193 : vector<8x32xf32>
    %cst_155 = arith.constant 1.000000e+00 : f32
    %195 = vector.broadcast %cst_155 : f32 to vector<8x32xf32>
    %196 = arith.addf %195, %194 : vector<8x32xf32>
    %197 = arith.divf %195, %196 : vector<8x32xf32>
    %198 = arith.mulf %197, %160 : vector<8x32xf32>
    %199 = arith.negf %168 : vector<8x32xf32>
    %200 = math.exp %199 : vector<8x32xf32>
    %cst_156 = arith.constant 1.000000e+00 : f32
    %201 = vector.broadcast %cst_156 : f32 to vector<8x32xf32>
    %202 = arith.addf %201, %200 : vector<8x32xf32>
    %203 = arith.divf %201, %202 : vector<8x32xf32>
    %204 = math.tanh %184 : vector<8x32xf32>
    %205 = arith.mulf %203, %204 : vector<8x32xf32>
    %206 = arith.addf %198, %205 : vector<8x32xf32>
    %207 = arith.negf %192 : vector<8x32xf32>
    %208 = math.exp %207 : vector<8x32xf32>
    %cst_157 = arith.constant 1.000000e+00 : f32
    %209 = vector.broadcast %cst_157 : f32 to vector<8x32xf32>
    %210 = arith.addf %209, %208 : vector<8x32xf32>
    %211 = arith.divf %209, %210 : vector<8x32xf32>
    %212 = math.tanh %206 : vector<8x32xf32>
    %213 = arith.mulf %211, %212 : vector<8x32xf32>
    %214 = arith.select %158, %213, %159 : vector<8x32xi1>, vector<8x32xf32>
    %c0_158 = arith.constant 0 : index
    %c0_159 = arith.constant 0 : index
    %215 = vector.load %arg16[%c0_158, %c0_159] : memref<8x32xf32, #tpu.memory_space<vmem>>, vector<8x32xf32>
    tpu.vector_store %arg16[%c0_158, %c0_159], %214 {strides = array<i32>} : memref<8x32xf32, #tpu.memory_space<vmem>>, vector<8x32xf32>,
    %216 = arith.select %158, %206, %160 : vector<8x32xi1>, vector<8x32xf32>
    %c0_160 = arith.constant 0 : index
    %c0_161 = arith.constant 0 : index
    %217 = vector.load %arg17[%c0_160, %c0_161] : memref<8x32xf32, #tpu.memory_space<vmem>>, vector<8x32xf32>
    tpu.vector_store %arg17[%c0_160, %c0_161], %216 {strides = array<i32>} : memref<8x32xf32, #tpu.memory_space<vmem>>, vector<8x32xf32>,
    %cst_162 = arith.constant 0.000000e+00 : f32
    %218 = vector.broadcast %cst_162 : f32 to vector<8x32xf32>
    %219 = arith.select %158, %213, %218 : vector<8x32xi1>, vector<8x32xf32>
    %220 = arith.index_cast %151 : i32 to index
    %c0_163 = arith.constant 0 : index
    %c0_164 = arith.constant 0 : index
    %221 = vector.load %arg11[%220, %c0_163, %c0_164] : memref<8x8x32xf32, #tpu.memory_space<vmem>>, vector<1x8x32xf32>
    %222 = vector.shape_cast %221 : vector<1x8x32xf32> to vector<8x32xf32>
    %223 = vector.shape_cast %219 : vector<8x32xf32> to vector<1x8x32xf32>
    tpu.vector_store %arg11[%220, %c0_163, %c0_164], %223 {strides = array<i32>} : memref<8x8x32xf32, #tpu.memory_space<vmem>>, vector<1x8x32xf32>,
    %c1_i32_165 = arith.constant 1 : i32
    %c8_i32_166 = arith.constant 8 : i32
    %224 = arith.muli %arg0, %c8_i32_166 : i32
    %225 = arith.addi %224, %c1_i32_165 : i32
    %226 = vector.broadcast %225 : i32 to vector<8x1xi32>
    %227 = arith.cmpi slt, %226, %3 : vector<8x1xi32>
    %228 = vector.shape_cast %227 : vector<8x1xi1> to vector<8x1xi1>
    %229 = vector.broadcast %228 : vector<8x1xi1> to vector<8x32xi1>
    %c0_167 = arith.constant 0 : index
    %c0_168 = arith.constant 0 : index
    %230 = vector.load %arg14[%c0_167, %c0_168] : memref<8x32xf32, #tpu.memory_space<vmem>>, vector<8x32xf32>
    %c0_169 = arith.constant 0 : index
    %c0_170 = arith.constant 0 : index
    %231 = vector.load %arg15[%c0_169, %c0_170] : memref<8x32xf32, #tpu.memory_space<vmem>>, vector<8x32xf32>
    %c0_i32_171 = arith.constant 0 : i32
    %232 = arith.addi %c0_i32_171, %c1_i32_165 : i32
    %233 = arith.index_cast %232 : i32 to index
    %c0_172 = arith.constant 0 : index
    %c0_173 = arith.constant 0 : index
    %234 = vector.load %arg12[%233, %c0_172, %c0_173] : memref<32x8x32xf32, #tpu.memory_space<vmem>>, vector<1x8x32xf32>
    %235 = vector.shape_cast %234 : vector<1x8x32xf32> to vector<8x32xf32>
    %c0_174 = arith.constant 0 : index
    %c0_175 = arith.constant 0 : index
    %c0_176 = arith.constant 0 : index
    %236 = vector.load %arg8[%c0_174, %c0_175, %c0_176] : memref<4x32x32xf32, #tpu.memory_space<vmem>>, vector<1x32x32xf32>
    %237 = vector.shape_cast %236 : vector<1x32x32xf32> to vector<32x32xf32>
    %cst_177 = arith.constant dense<0.000000e+00> : vector<8x32xf32>
    %238 = tpu.matmul %230, %237, %cst_177 {dimension_numbers = #tpu.dot_dimension_numbers<[1], [0], [0], [1], [0, 0, 1, 1], [], []>} : vector<8x32xf32>, vector<32x32xf32>, vector<8x32xf32> -> vector<8x32xf32>
    %239 = arith.addf %235, %238 : vector<8x32xf32>
    %c8_i32_178 = arith.constant 8 : i32
    %240 = arith.addi %c8_i32_178, %c1_i32_165 : i32
    %241 = arith.index_cast %240 : i32 to index
    %c0_179 = arith.constant 0 : index
    %c0_180 = arith.constant 0 : index
    %242 = vector.load %arg12[%241, %c0_179, %c0_180] : memref<32x8x32xf32, #tpu.memory_space<vmem>>, vector<1x8x32xf32>
    %243 = vector.shape_cast %242 : vector<1x8x32xf32> to vector<8x32xf32>
    %c1_181 = arith.constant 1 : index
    %c0_182 = arith.constant 0 : index
    %c0_183 = arith.constant 0 : index
    %244 = vector.load %arg8[%c1_181, %c0_182, %c0_183] : memref<4x32x32xf32, #tpu.memory_space<vmem>>, vector<1x32x32xf32>
    %245 = vector.shape_cast %244 : vector<1x32x32xf32> to vector<32x32xf32>
    %cst_184 = arith.constant dense<0.000000e+00> : vector<8x32xf32>
    %246 = tpu.matmul %230, %245, %cst_184 {dimension_numbers = #tpu.dot_dimension_numbers<[1], [0], [0], [1], [0, 0, 1, 1], [], []>} : vector<8x32xf32>, vector<32x32xf32>, vector<8x32xf32> -> vector<8x32xf32>
    %247 = arith.addf %243, %246 : vector<8x32xf32>
    %c16_i32_185 = arith.constant 16 : i32
    %248 = arith.addi %c16_i32_185, %c1_i32_165 : i32
    %249 = arith.index_cast %248 : i32 to index
    %c0_186 = arith.constant 0 : index
    %c0_187 = arith.constant 0 : index
    %250 = vector.load %arg12[%249, %c0_186, %c0_187] : memref<32x8x32xf32, #tpu.memory_space<vmem>>, vector<1x8x32xf32>
    %251 = vector.shape_cast %250 : vector<1x8x32xf32> to vector<8x32xf32>
    %c2_188 = arith.constant 2 : index
    %c0_189 = arith.constant 0 : index
    %c0_190 = arith.constant 0 : index
    %252 = vector.load %arg8[%c2_188, %c0_189, %c0_190] : memref<4x32x32xf32, #tpu.memory_space<vmem>>, vector<1x32x32xf32>
    %253 = vector.shape_cast %252 : vector<1x32x32xf32> to vector<32x32xf32>
    %cst_191 = arith.constant dense<0.000000e+00> : vector<8x32xf32>
    %254 = tpu.matmul %230, %253, %cst_191 {dimension_numbers = #tpu.dot_dimension_numbers<[1], [0], [0], [1], [0, 0, 1, 1], [], []>} : vector<8x32xf32>, vector<32x32xf32>, vector<8x32xf32> -> vector<8x32xf32>
    %255 = arith.addf %251, %254 : vector<8x32xf32>
    %c24_i32_192 = arith.constant 24 : i32
    %256 = arith.addi %c24_i32_192, %c1_i32_165 : i32
    %257 = arith.index_cast %256 : i32 to index
    %c0_193 = arith.constant 0 : index
    %c0_194 = arith.constant 0 : index
    %258 = vector.load %arg12[%257, %c0_193, %c0_194] : memref<32x8x32xf32, #tpu.memory_space<vmem>>, vector<1x8x32xf32>
    %259 = vector.shape_cast %258 : vector<1x8x32xf32> to vector<8x32xf32>
    %c3_195 = arith.constant 3 : index
    %c0_196 = arith.constant 0 : index
    %c0_197 = arith.constant 0 : index
    %260 = vector.load %arg8[%c3_195, %c0_196, %c0_197] : memref<4x32x32xf32, #tpu.memory_space<vmem>>, vector<1x32x32xf32>
    %261 = vector.shape_cast %260 : vector<1x32x32xf32> to vector<32x32xf32>
    %cst_198 = arith.constant dense<0.000000e+00> : vector<8x32xf32>
    %262 = tpu.matmul %230, %261, %cst_198 {dimension_numbers = #tpu.dot_dimension_numbers<[1], [0], [0], [1], [0, 0, 1, 1], [], []>} : vector<8x32xf32>, vector<32x32xf32>, vector<8x32xf32> -> vector<8x32xf32>
    %263 = arith.addf %259, %262 : vector<8x32xf32>
    %264 = arith.negf %247 : vector<8x32xf32>
    %265 = math.exp %264 : vector<8x32xf32>
    %cst_199 = arith.constant 1.000000e+00 : f32
    %266 = vector.broadcast %cst_199 : f32 to vector<8x32xf32>
    %267 = arith.addf %266, %265 : vector<8x32xf32>
    %268 = arith.divf %266, %267 : vector<8x32xf32>
    %269 = arith.mulf %268, %231 : vector<8x32xf32>
    %270 = arith.negf %239 : vector<8x32xf32>
    %271 = math.exp %270 : vector<8x32xf32>
    %cst_200 = arith.constant 1.000000e+00 : f32
    %272 = vector.broadcast %cst_200 : f32 to vector<8x32xf32>
    %273 = arith.addf %272, %271 : vector<8x32xf32>
    %274 = arith.divf %272, %273 : vector<8x32xf32>
    %275 = math.tanh %255 : vector<8x32xf32>
    %276 = arith.mulf %274, %275 : vector<8x32xf32>
    %277 = arith.addf %269, %276 : vector<8x32xf32>
    %278 = arith.negf %263 : vector<8x32xf32>
    %279 = math.exp %278 : vector<8x32xf32>
    %cst_201 = arith.constant 1.000000e+00 : f32
    %280 = vector.broadcast %cst_201 : f32 to vector<8x32xf32>
    %281 = arith.addf %280, %279 : vector<8x32xf32>
    %282 = arith.divf %280, %281 : vector<8x32xf32>
    %283 = math.tanh %277 : vector<8x32xf32>
    %284 = arith.mulf %282, %283 : vector<8x32xf32>
    %285 = arith.select %229, %284, %230 : vector<8x32xi1>, vector<8x32xf32>
    %c0_202 = arith.constant 0 : index
    %c0_203 = arith.constant 0 : index
    %286 = vector.load %arg14[%c0_202, %c0_203] : memref<8x32xf32, #tpu.memory_space<vmem>>, vector<8x32xf32>
    tpu.vector_store %arg14[%c0_202, %c0_203], %285 {strides = array<i32>} : memref<8x32xf32, #tpu.memory_space<vmem>>, vector<8x32xf32>,
    %287 = arith.select %229, %277, %231 : vector<8x32xi1>, vector<8x32xf32>
    %c0_204 = arith.constant 0 : index
    %c0_205 = arith.constant 0 : index
    %288 = vector.load %arg15[%c0_204, %c0_205] : memref<8x32xf32, #tpu.memory_space<vmem>>, vector<8x32xf32>
    tpu.vector_store %arg15[%c0_204, %c0_205], %287 {strides = array<i32>} : memref<8x32xf32, #tpu.memory_space<vmem>>, vector<8x32xf32>,
    %cst_206 = arith.constant 0.000000e+00 : f32
    %289 = vector.broadcast %cst_206 : f32 to vector<8x32xf32>
    %290 = arith.select %229, %284, %289 : vector<8x32xi1>, vector<8x32xf32>
    %291 = arith.index_cast %c1_i32_165 : i32 to index
    %c0_207 = arith.constant 0 : index
    %c0_208 = arith.constant 0 : index
    %292 = vector.load %arg10[%291, %c0_207, %c0_208] : memref<8x8x32xf32, #tpu.memory_space<vmem>>, vector<1x8x32xf32>
    %293 = vector.shape_cast %292 : vector<1x8x32xf32> to vector<8x32xf32>
    %294 = vector.shape_cast %290 : vector<8x32xf32> to vector<1x8x32xf32>
    tpu.vector_store %arg10[%291, %c0_207, %c0_208], %294 {strides = array<i32>} : memref<8x8x32xf32, #tpu.memory_space<vmem>>, vector<1x8x32xf32>,
    %c7_i32_209 = arith.constant 7 : i32
    %295 = arith.subi %c7_i32_209, %c1_i32_165 : i32
    %c1_i32_210 = arith.constant 1 : i32
    %296 = arith.subi %c1_i32_210, %arg0 : i32
    %c8_i32_211 = arith.constant 8 : i32
    %297 = arith.muli %296, %c8_i32_211 : i32
    %298 = arith.addi %297, %295 : i32
    %299 = vector.broadcast %298 : i32 to vector<8x1xi32>
    %300 = arith.cmpi slt, %299, %3 : vector<8x1xi32>
    %301 = vector.shape_cast %300 : vector<8x1xi1> to vector<8x1xi1>
    %302 = vector.broadcast %301 : vector<8x1xi1> to vector<8x32xi1>
    %c0_212 = arith.constant 0 : index
    %c0_213 = arith.constant 0 : index
    %303 = vector.load %arg16[%c0_212, %c0_213] : memref<8x32xf32, #tpu.memory_space<vmem>>, vector<8x32xf32>
    %c0_214 = arith.constant 0 : index
    %c0_215 = arith.constant 0 : index
    %304 = vector.load %arg17[%c0_214, %c0_215] : memref<8x32xf32, #tpu.memory_space<vmem>>, vector<8x32xf32>
    %c0_i32_216 = arith.constant 0 : i32
    %305 = arith.addi %c0_i32_216, %295 : i32
    %306 = arith.index_cast %305 : i32 to index
    %c0_217 = arith.constant 0 : index
    %c0_218 = arith.constant 0 : index
    %307 = vector.load %arg13[%306, %c0_217, %c0_218] : memref<32x8x32xf32, #tpu.memory_space<vmem>>, vector<1x8x32xf32>
    %308 = vector.shape_cast %307 : vector<1x8x32xf32> to vector<8x32xf32>
    %c0_219 = arith.constant 0 : index
    %c0_220 = arith.constant 0 : index
    %c0_221 = arith.constant 0 : index
    %309 = vector.load %arg9[%c0_219, %c0_220, %c0_221] : memref<4x32x32xf32, #tpu.memory_space<vmem>>, vector<1x32x32xf32>
    %310 = vector.shape_cast %309 : vector<1x32x32xf32> to vector<32x32xf32>
    %cst_222 = arith.constant dense<0.000000e+00> : vector<8x32xf32>
    %311 = tpu.matmul %303, %310, %cst_222 {dimension_numbers = #tpu.dot_dimension_numbers<[1], [0], [0], [1], [0, 0, 1, 1], [], []>} : vector<8x32xf32>, vector<32x32xf32>, vector<8x32xf32> -> vector<8x32xf32>
    %312 = arith.addf %308, %311 : vector<8x32xf32>
    %c8_i32_223 = arith.constant 8 : i32
    %313 = arith.addi %c8_i32_223, %295 : i32
    %314 = arith.index_cast %313 : i32 to index
    %c0_224 = arith.constant 0 : index
    %c0_225 = arith.constant 0 : index
    %315 = vector.load %arg13[%314, %c0_224, %c0_225] : memref<32x8x32xf32, #tpu.memory_space<vmem>>, vector<1x8x32xf32>
    %316 = vector.shape_cast %315 : vector<1x8x32xf32> to vector<8x32xf32>
    %c1_226 = arith.constant 1 : index
    %c0_227 = arith.constant 0 : index
    %c0_228 = arith.constant 0 : index
    %317 = vector.load %arg9[%c1_226, %c0_227, %c0_228] : memref<4x32x32xf32, #tpu.memory_space<vmem>>, vector<1x32x32xf32>
    %318 = vector.shape_cast %317 : vector<1x32x32xf32> to vector<32x32xf32>
    %cst_229 = arith.constant dense<0.000000e+00> : vector<8x32xf32>
    %319 = tpu.matmul %303, %318, %cst_229 {dimension_numbers = #tpu.dot_dimension_numbers<[1], [0], [0], [1], [0, 0, 1, 1], [], []>} : vector<8x32xf32>, vector<32x32xf32>, vector<8x32xf32> -> vector<8x32xf32>
    %320 = arith.addf %316, %319 : vector<8x32xf32>
    %c16_i32_230 = arith.constant 16 : i32
    %321 = arith.addi %c16_i32_230, %295 : i32
    %322 = arith.index_cast %321 : i32 to index
    %c0_231 = arith.constant 0 : index
    %c0_232 = arith.constant 0 : index
    %323 = vector.load %arg13[%322, %c0_231, %c0_232] : memref<32x8x32xf32, #tpu.memory_space<vmem>>, vector<1x8x32xf32>
    %324 = vector.shape_cast %323 : vector<1x8x32xf32> to vector<8x32xf32>
    %c2_233 = arith.constant 2 : index
    %c0_234 = arith.constant 0 : index
    %c0_235 = arith.constant 0 : index
    %325 = vector.load %arg9[%c2_233, %c0_234, %c0_235] : memref<4x32x32xf32, #tpu.memory_space<vmem>>, vector<1x32x32xf32>
    %326 = vector.shape_cast %325 : vector<1x32x32xf32> to vector<32x32xf32>
    %cst_236 = arith.constant dense<0.000000e+00> : vector<8x32xf32>
    %327 = tpu.matmul %303, %326, %cst_236 {dimension_numbers = #tpu.dot_dimension_numbers<[1], [0], [0], [1], [0, 0, 1, 1], [], []>} : vector<8x32xf32>, vector<32x32xf32>, vector<8x32xf32> -> vector<8x32xf32>
    %328 = arith.addf %324, %327 : vector<8x32xf32>
    %c24_i32_237 = arith.constant 24 : i32
    %329 = arith.addi %c24_i32_237, %295 : i32
    %330 = arith.index_cast %329 : i32 to index
    %c0_238 = arith.constant 0 : index
    %c0_239 = arith.constant 0 : index
    %331 = vector.load %arg13[%330, %c0_238, %c0_239] : memref<32x8x32xf32, #tpu.memory_space<vmem>>, vector<1x8x32xf32>
    %332 = vector.shape_cast %331 : vector<1x8x32xf32> to vector<8x32xf32>
    %c3_240 = arith.constant 3 : index
    %c0_241 = arith.constant 0 : index
    %c0_242 = arith.constant 0 : index
    %333 = vector.load %arg9[%c3_240, %c0_241, %c0_242] : memref<4x32x32xf32, #tpu.memory_space<vmem>>, vector<1x32x32xf32>
    %334 = vector.shape_cast %333 : vector<1x32x32xf32> to vector<32x32xf32>
    %cst_243 = arith.constant dense<0.000000e+00> : vector<8x32xf32>
    %335 = tpu.matmul %303, %334, %cst_243 {dimension_numbers = #tpu.dot_dimension_numbers<[1], [0], [0], [1], [0, 0, 1, 1], [], []>} : vector<8x32xf32>, vector<32x32xf32>, vector<8x32xf32> -> vector<8x32xf32>
    %336 = arith.addf %332, %335 : vector<8x32xf32>
    %337 = arith.negf %320 : vector<8x32xf32>
    %338 = math.exp %337 : vector<8x32xf32>
    %cst_244 = arith.constant 1.000000e+00 : f32
    %339 = vector.broadcast %cst_244 : f32 to vector<8x32xf32>
    %340 = arith.addf %339, %338 : vector<8x32xf32>
    %341 = arith.divf %339, %340 : vector<8x32xf32>
    %342 = arith.mulf %341, %304 : vector<8x32xf32>
    %343 = arith.negf %312 : vector<8x32xf32>
    %344 = math.exp %343 : vector<8x32xf32>
    %cst_245 = arith.constant 1.000000e+00 : f32
    %345 = vector.broadcast %cst_245 : f32 to vector<8x32xf32>
    %346 = arith.addf %345, %344 : vector<8x32xf32>
    %347 = arith.divf %345, %346 : vector<8x32xf32>
    %348 = math.tanh %328 : vector<8x32xf32>
    %349 = arith.mulf %347, %348 : vector<8x32xf32>
    %350 = arith.addf %342, %349 : vector<8x32xf32>
    %351 = arith.negf %336 : vector<8x32xf32>
    %352 = math.exp %351 : vector<8x32xf32>
    %cst_246 = arith.constant 1.000000e+00 : f32
    %353 = vector.broadcast %cst_246 : f32 to vector<8x32xf32>
    %354 = arith.addf %353, %352 : vector<8x32xf32>
    %355 = arith.divf %353, %354 : vector<8x32xf32>
    %356 = math.tanh %350 : vector<8x32xf32>
    %357 = arith.mulf %355, %356 : vector<8x32xf32>
    %358 = arith.select %302, %357, %303 : vector<8x32xi1>, vector<8x32xf32>
    %c0_247 = arith.constant 0 : index
    %c0_248 = arith.constant 0 : index
    %359 = vector.load %arg16[%c0_247, %c0_248] : memref<8x32xf32, #tpu.memory_space<vmem>>, vector<8x32xf32>
    tpu.vector_store %arg16[%c0_247, %c0_248], %358 {strides = array<i32>} : memref<8x32xf32, #tpu.memory_space<vmem>>, vector<8x32xf32>,
    %360 = arith.select %302, %350, %304 : vector<8x32xi1>, vector<8x32xf32>
    %c0_249 = arith.constant 0 : index
    %c0_250 = arith.constant 0 : index
    %361 = vector.load %arg17[%c0_249, %c0_250] : memref<8x32xf32, #tpu.memory_space<vmem>>, vector<8x32xf32>
    tpu.vector_store %arg17[%c0_249, %c0_250], %360 {strides = array<i32>} : memref<8x32xf32, #tpu.memory_space<vmem>>, vector<8x32xf32>,
    %cst_251 = arith.constant 0.000000e+00 : f32
    %362 = vector.broadcast %cst_251 : f32 to vector<8x32xf32>
    %363 = arith.select %302, %357, %362 : vector<8x32xi1>, vector<8x32xf32>
    %364 = arith.index_cast %295 : i32 to index
    %c0_252 = arith.constant 0 : index
    %c0_253 = arith.constant 0 : index
    %365 = vector.load %arg11[%364, %c0_252, %c0_253] : memref<8x8x32xf32, #tpu.memory_space<vmem>>, vector<1x8x32xf32>
    %366 = vector.shape_cast %365 : vector<1x8x32xf32> to vector<8x32xf32>
    %367 = vector.shape_cast %363 : vector<8x32xf32> to vector<1x8x32xf32>
    tpu.vector_store %arg11[%364, %c0_252, %c0_253], %367 {strides = array<i32>} : memref<8x8x32xf32, #tpu.memory_space<vmem>>, vector<1x8x32xf32>,
    %c2_i32 = arith.constant 2 : i32
    %c8_i32_254 = arith.constant 8 : i32
    %368 = arith.muli %arg0, %c8_i32_254 : i32
    %369 = arith.addi %368, %c2_i32 : i32
    %370 = vector.broadcast %369 : i32 to vector<8x1xi32>
    %371 = arith.cmpi slt, %370, %3 : vector<8x1xi32>
    %372 = vector.shape_cast %371 : vector<8x1xi1> to vector<8x1xi1>
    %373 = vector.broadcast %372 : vector<8x1xi1> to vector<8x32xi1>
    %c0_255 = arith.constant 0 : index
    %c0_256 = arith.constant 0 : index
    %374 = vector.load %arg14[%c0_255, %c0_256] : memref<8x32xf32, #tpu.memory_space<vmem>>, vector<8x32xf32>
    %c0_257 = arith.constant 0 : index
    %c0_258 = arith.constant 0 : index
    %375 = vector.load %arg15[%c0_257, %c0_258] : memref<8x32xf32, #tpu.memory_space<vmem>>, vector<8x32xf32>
    %c0_i32_259 = arith.constant 0 : i32
    %376 = arith.addi %c0_i32_259, %c2_i32 : i32
    %377 = arith.index_cast %376 : i32 to index
    %c0_260 = arith.constant 0 : index
    %c0_261 = arith.constant 0 : index
    %378 = vector.load %arg12[%377, %c0_260, %c0_261] : memref<32x8x32xf32, #tpu.memory_space<vmem>>, vector<1x8x32xf32>
    %379 = vector.shape_cast %378 : vector<1x8x32xf32> to vector<8x32xf32>
    %c0_262 = arith.constant 0 : index
    %c0_263 = arith.constant 0 : index
    %c0_264 = arith.constant 0 : index
    %380 = vector.load %arg8[%c0_262, %c0_263, %c0_264] : memref<4x32x32xf32, #tpu.memory_space<vmem>>, vector<1x32x32xf32>
    %381 = vector.shape_cast %380 : vector<1x32x32xf32> to vector<32x32xf32>
    %cst_265 = arith.constant dense<0.000000e+00> : vector<8x32xf32>
    %382 = tpu.matmul %374, %381, %cst_265 {dimension_numbers = #tpu.dot_dimension_numbers<[1], [0], [0], [1], [0, 0, 1, 1], [], []>} : vector<8x32xf32>, vector<32x32xf32>, vector<8x32xf32> -> vector<8x32xf32>
    %383 = arith.addf %379, %382 : vector<8x32xf32>
    %c8_i32_266 = arith.constant 8 : i32
    %384 = arith.addi %c8_i32_266, %c2_i32 : i32
    %385 = arith.index_cast %384 : i32 to index
    %c0_267 = arith.constant 0 : index
    %c0_268 = arith.constant 0 : index
    %386 = vector.load %arg12[%385, %c0_267, %c0_268] : memref<32x8x32xf32, #tpu.memory_space<vmem>>, vector<1x8x32xf32>
    %387 = vector.shape_cast %386 : vector<1x8x32xf32> to vector<8x32xf32>
    %c1_269 = arith.constant 1 : index
    %c0_270 = arith.constant 0 : index
    %c0_271 = arith.constant 0 : index
    %388 = vector.load %arg8[%c1_269, %c0_270, %c0_271] : memref<4x32x32xf32, #tpu.memory_space<vmem>>, vector<1x32x32xf32>
    %389 = vector.shape_cast %388 : vector<1x32x32xf32> to vector<32x32xf32>
    %cst_272 = arith.constant dense<0.000000e+00> : vector<8x32xf32>
    %390 = tpu.matmul %374, %389, %cst_272 {dimension_numbers = #tpu.dot_dimension_numbers<[1], [0], [0], [1], [0, 0, 1, 1], [], []>} : vector<8x32xf32>, vector<32x32xf32>, vector<8x32xf32> -> vector<8x32xf32>
    %391 = arith.addf %387, %390 : vector<8x32xf32>
    %c16_i32_273 = arith.constant 16 : i32
    %392 = arith.addi %c16_i32_273, %c2_i32 : i32
    %393 = arith.index_cast %392 : i32 to index
    %c0_274 = arith.constant 0 : index
    %c0_275 = arith.constant 0 : index
    %394 = vector.load %arg12[%393, %c0_274, %c0_275] : memref<32x8x32xf32, #tpu.memory_space<vmem>>, vector<1x8x32xf32>
    %395 = vector.shape_cast %394 : vector<1x8x32xf32> to vector<8x32xf32>
    %c2_276 = arith.constant 2 : index
    %c0_277 = arith.constant 0 : index
    %c0_278 = arith.constant 0 : index
    %396 = vector.load %arg8[%c2_276, %c0_277, %c0_278] : memref<4x32x32xf32, #tpu.memory_space<vmem>>, vector<1x32x32xf32>
    %397 = vector.shape_cast %396 : vector<1x32x32xf32> to vector<32x32xf32>
    %cst_279 = arith.constant dense<0.000000e+00> : vector<8x32xf32>
    %398 = tpu.matmul %374, %397, %cst_279 {dimension_numbers = #tpu.dot_dimension_numbers<[1], [0], [0], [1], [0, 0, 1, 1], [], []>} : vector<8x32xf32>, vector<32x32xf32>, vector<8x32xf32> -> vector<8x32xf32>
    %399 = arith.addf %395, %398 : vector<8x32xf32>
    %c24_i32_280 = arith.constant 24 : i32
    %400 = arith.addi %c24_i32_280, %c2_i32 : i32
    %401 = arith.index_cast %400 : i32 to index
    %c0_281 = arith.constant 0 : index
    %c0_282 = arith.constant 0 : index
    %402 = vector.load %arg12[%401, %c0_281, %c0_282] : memref<32x8x32xf32, #tpu.memory_space<vmem>>, vector<1x8x32xf32>
    %403 = vector.shape_cast %402 : vector<1x8x32xf32> to vector<8x32xf32>
    %c3_283 = arith.constant 3 : index
    %c0_284 = arith.constant 0 : index
    %c0_285 = arith.constant 0 : index
    %404 = vector.load %arg8[%c3_283, %c0_284, %c0_285] : memref<4x32x32xf32, #tpu.memory_space<vmem>>, vector<1x32x32xf32>
    %405 = vector.shape_cast %404 : vector<1x32x32xf32> to vector<32x32xf32>
    %cst_286 = arith.constant dense<0.000000e+00> : vector<8x32xf32>
    %406 = tpu.matmul %374, %405, %cst_286 {dimension_numbers = #tpu.dot_dimension_numbers<[1], [0], [0], [1], [0, 0, 1, 1], [], []>} : vector<8x32xf32>, vector<32x32xf32>, vector<8x32xf32> -> vector<8x32xf32>
    %407 = arith.addf %403, %406 : vector<8x32xf32>
    %408 = arith.negf %391 : vector<8x32xf32>
    %409 = math.exp %408 : vector<8x32xf32>
    %cst_287 = arith.constant 1.000000e+00 : f32
    %410 = vector.broadcast %cst_287 : f32 to vector<8x32xf32>
    %411 = arith.addf %410, %409 : vector<8x32xf32>
    %412 = arith.divf %410, %411 : vector<8x32xf32>
    %413 = arith.mulf %412, %375 : vector<8x32xf32>
    %414 = arith.negf %383 : vector<8x32xf32>
    %415 = math.exp %414 : vector<8x32xf32>
    %cst_288 = arith.constant 1.000000e+00 : f32
    %416 = vector.broadcast %cst_288 : f32 to vector<8x32xf32>
    %417 = arith.addf %416, %415 : vector<8x32xf32>
    %418 = arith.divf %416, %417 : vector<8x32xf32>
    %419 = math.tanh %399 : vector<8x32xf32>
    %420 = arith.mulf %418, %419 : vector<8x32xf32>
    %421 = arith.addf %413, %420 : vector<8x32xf32>
    %422 = arith.negf %407 : vector<8x32xf32>
    %423 = math.exp %422 : vector<8x32xf32>
    %cst_289 = arith.constant 1.000000e+00 : f32
    %424 = vector.broadcast %cst_289 : f32 to vector<8x32xf32>
    %425 = arith.addf %424, %423 : vector<8x32xf32>
    %426 = arith.divf %424, %425 : vector<8x32xf32>
    %427 = math.tanh %421 : vector<8x32xf32>
    %428 = arith.mulf %426, %427 : vector<8x32xf32>
    %429 = arith.select %373, %428, %374 : vector<8x32xi1>, vector<8x32xf32>
    %c0_290 = arith.constant 0 : index
    %c0_291 = arith.constant 0 : index
    %430 = vector.load %arg14[%c0_290, %c0_291] : memref<8x32xf32, #tpu.memory_space<vmem>>, vector<8x32xf32>
    tpu.vector_store %arg14[%c0_290, %c0_291], %429 {strides = array<i32>} : memref<8x32xf32, #tpu.memory_space<vmem>>, vector<8x32xf32>,
    %431 = arith.select %373, %421, %375 : vector<8x32xi1>, vector<8x32xf32>
    %c0_292 = arith.constant 0 : index
    %c0_293 = arith.constant 0 : index
    %432 = vector.load %arg15[%c0_292, %c0_293] : memref<8x32xf32, #tpu.memory_space<vmem>>, vector<8x32xf32>
    tpu.vector_store %arg15[%c0_292, %c0_293], %431 {strides = array<i32>} : memref<8x32xf32, #tpu.memory_space<vmem>>, vector<8x32xf32>,
    %cst_294 = arith.constant 0.000000e+00 : f32
    %433 = vector.broadcast %cst_294 : f32 to vector<8x32xf32>
    %434 = arith.select %373, %428, %433 : vector<8x32xi1>, vector<8x32xf32>
    %435 = arith.index_cast %c2_i32 : i32 to index
    %c0_295 = arith.constant 0 : index
    %c0_296 = arith.constant 0 : index
    %436 = vector.load %arg10[%435, %c0_295, %c0_296] : memref<8x8x32xf32, #tpu.memory_space<vmem>>, vector<1x8x32xf32>
    %437 = vector.shape_cast %436 : vector<1x8x32xf32> to vector<8x32xf32>
    %438 = vector.shape_cast %434 : vector<8x32xf32> to vector<1x8x32xf32>
    tpu.vector_store %arg10[%435, %c0_295, %c0_296], %438 {strides = array<i32>} : memref<8x8x32xf32, #tpu.memory_space<vmem>>, vector<1x8x32xf32>,
    %c7_i32_297 = arith.constant 7 : i32
    %439 = arith.subi %c7_i32_297, %c2_i32 : i32
    %c1_i32_298 = arith.constant 1 : i32
    %440 = arith.subi %c1_i32_298, %arg0 : i32
    %c8_i32_299 = arith.constant 8 : i32
    %441 = arith.muli %440, %c8_i32_299 : i32
    %442 = arith.addi %441, %439 : i32
    %443 = vector.broadcast %442 : i32 to vector<8x1xi32>
    %444 = arith.cmpi slt, %443, %3 : vector<8x1xi32>
    %445 = vector.shape_cast %444 : vector<8x1xi1> to vector<8x1xi1>
    %446 = vector.broadcast %445 : vector<8x1xi1> to vector<8x32xi1>
    %c0_300 = arith.constant 0 : index
    %c0_301 = arith.constant 0 : index
    %447 = vector.load %arg16[%c0_300, %c0_301] : memref<8x32xf32, #tpu.memory_space<vmem>>, vector<8x32xf32>
    %c0_302 = arith.constant 0 : index
    %c0_303 = arith.constant 0 : index
    %448 = vector.load %arg17[%c0_302, %c0_303] : memref<8x32xf32, #tpu.memory_space<vmem>>, vector<8x32xf32>
    %c0_i32_304 = arith.constant 0 : i32
    %449 = arith.addi %c0_i32_304, %439 : i32
    %450 = arith.index_cast %449 : i32 to index
    %c0_305 = arith.constant 0 : index
    %c0_306 = arith.constant 0 : index
    %451 = vector.load %arg13[%450, %c0_305, %c0_306] : memref<32x8x32xf32, #tpu.memory_space<vmem>>, vector<1x8x32xf32>
    %452 = vector.shape_cast %451 : vector<1x8x32xf32> to vector<8x32xf32>
    %c0_307 = arith.constant 0 : index
    %c0_308 = arith.constant 0 : index
    %c0_309 = arith.constant 0 : index
    %453 = vector.load %arg9[%c0_307, %c0_308, %c0_309] : memref<4x32x32xf32, #tpu.memory_space<vmem>>, vector<1x32x32xf32>
    %454 = vector.shape_cast %453 : vector<1x32x32xf32> to vector<32x32xf32>
    %cst_310 = arith.constant dense<0.000000e+00> : vector<8x32xf32>
    %455 = tpu.matmul %447, %454, %cst_310 {dimension_numbers = #tpu.dot_dimension_numbers<[1], [0], [0], [1], [0, 0, 1, 1], [], []>} : vector<8x32xf32>, vector<32x32xf32>, vector<8x32xf32> -> vector<8x32xf32>
    %456 = arith.addf %452, %455 : vector<8x32xf32>
    %c8_i32_311 = arith.constant 8 : i32
    %457 = arith.addi %c8_i32_311, %439 : i32
    %458 = arith.index_cast %457 : i32 to index
    %c0_312 = arith.constant 0 : index
    %c0_313 = arith.constant 0 : index
    %459 = vector.load %arg13[%458, %c0_312, %c0_313] : memref<32x8x32xf32, #tpu.memory_space<vmem>>, vector<1x8x32xf32>
    %460 = vector.shape_cast %459 : vector<1x8x32xf32> to vector<8x32xf32>
    %c1_314 = arith.constant 1 : index
    %c0_315 = arith.constant 0 : index
    %c0_316 = arith.constant 0 : index
    %461 = vector.load %arg9[%c1_314, %c0_315, %c0_316] : memref<4x32x32xf32, #tpu.memory_space<vmem>>, vector<1x32x32xf32>
    %462 = vector.shape_cast %461 : vector<1x32x32xf32> to vector<32x32xf32>
    %cst_317 = arith.constant dense<0.000000e+00> : vector<8x32xf32>
    %463 = tpu.matmul %447, %462, %cst_317 {dimension_numbers = #tpu.dot_dimension_numbers<[1], [0], [0], [1], [0, 0, 1, 1], [], []>} : vector<8x32xf32>, vector<32x32xf32>, vector<8x32xf32> -> vector<8x32xf32>
    %464 = arith.addf %460, %463 : vector<8x32xf32>
    %c16_i32_318 = arith.constant 16 : i32
    %465 = arith.addi %c16_i32_318, %439 : i32
    %466 = arith.index_cast %465 : i32 to index
    %c0_319 = arith.constant 0 : index
    %c0_320 = arith.constant 0 : index
    %467 = vector.load %arg13[%466, %c0_319, %c0_320] : memref<32x8x32xf32, #tpu.memory_space<vmem>>, vector<1x8x32xf32>
    %468 = vector.shape_cast %467 : vector<1x8x32xf32> to vector<8x32xf32>
    %c2_321 = arith.constant 2 : index
    %c0_322 = arith.constant 0 : index
    %c0_323 = arith.constant 0 : index
    %469 = vector.load %arg9[%c2_321, %c0_322, %c0_323] : memref<4x32x32xf32, #tpu.memory_space<vmem>>, vector<1x32x32xf32>
    %470 = vector.shape_cast %469 : vector<1x32x32xf32> to vector<32x32xf32>
    %cst_324 = arith.constant dense<0.000000e+00> : vector<8x32xf32>
    %471 = tpu.matmul %447, %470, %cst_324 {dimension_numbers = #tpu.dot_dimension_numbers<[1], [0], [0], [1], [0, 0, 1, 1], [], []>} : vector<8x32xf32>, vector<32x32xf32>, vector<8x32xf32> -> vector<8x32xf32>
    %472 = arith.addf %468, %471 : vector<8x32xf32>
    %c24_i32_325 = arith.constant 24 : i32
    %473 = arith.addi %c24_i32_325, %439 : i32
    %474 = arith.index_cast %473 : i32 to index
    %c0_326 = arith.constant 0 : index
    %c0_327 = arith.constant 0 : index
    %475 = vector.load %arg13[%474, %c0_326, %c0_327] : memref<32x8x32xf32, #tpu.memory_space<vmem>>, vector<1x8x32xf32>
    %476 = vector.shape_cast %475 : vector<1x8x32xf32> to vector<8x32xf32>
    %c3_328 = arith.constant 3 : index
    %c0_329 = arith.constant 0 : index
    %c0_330 = arith.constant 0 : index
    %477 = vector.load %arg9[%c3_328, %c0_329, %c0_330] : memref<4x32x32xf32, #tpu.memory_space<vmem>>, vector<1x32x32xf32>
    %478 = vector.shape_cast %477 : vector<1x32x32xf32> to vector<32x32xf32>
    %cst_331 = arith.constant dense<0.000000e+00> : vector<8x32xf32>
    %479 = tpu.matmul %447, %478, %cst_331 {dimension_numbers = #tpu.dot_dimension_numbers<[1], [0], [0], [1], [0, 0, 1, 1], [], []>} : vector<8x32xf32>, vector<32x32xf32>, vector<8x32xf32> -> vector<8x32xf32>
    %480 = arith.addf %476, %479 : vector<8x32xf32>
    %481 = arith.negf %464 : vector<8x32xf32>
    %482 = math.exp %481 : vector<8x32xf32>
    %cst_332 = arith.constant 1.000000e+00 : f32
    %483 = vector.broadcast %cst_332 : f32 to vector<8x32xf32>
    %484 = arith.addf %483, %482 : vector<8x32xf32>
    %485 = arith.divf %483, %484 : vector<8x32xf32>
    %486 = arith.mulf %485, %448 : vector<8x32xf32>
    %487 = arith.negf %456 : vector<8x32xf32>
    %488 = math.exp %487 : vector<8x32xf32>
    %cst_333 = arith.constant 1.000000e+00 : f32
    %489 = vector.broadcast %cst_333 : f32 to vector<8x32xf32>
    %490 = arith.addf %489, %488 : vector<8x32xf32>
    %491 = arith.divf %489, %490 : vector<8x32xf32>
    %492 = math.tanh %472 : vector<8x32xf32>
    %493 = arith.mulf %491, %492 : vector<8x32xf32>
    %494 = arith.addf %486, %493 : vector<8x32xf32>
    %495 = arith.negf %480 : vector<8x32xf32>
    %496 = math.exp %495 : vector<8x32xf32>
    %cst_334 = arith.constant 1.000000e+00 : f32
    %497 = vector.broadcast %cst_334 : f32 to vector<8x32xf32>
    %498 = arith.addf %497, %496 : vector<8x32xf32>
    %499 = arith.divf %497, %498 : vector<8x32xf32>
    %500 = math.tanh %494 : vector<8x32xf32>
    %501 = arith.mulf %499, %500 : vector<8x32xf32>
    %502 = arith.select %446, %501, %447 : vector<8x32xi1>, vector<8x32xf32>
    %c0_335 = arith.constant 0 : index
    %c0_336 = arith.constant 0 : index
    %503 = vector.load %arg16[%c0_335, %c0_336] : memref<8x32xf32, #tpu.memory_space<vmem>>, vector<8x32xf32>
    tpu.vector_store %arg16[%c0_335, %c0_336], %502 {strides = array<i32>} : memref<8x32xf32, #tpu.memory_space<vmem>>, vector<8x32xf32>,
    %504 = arith.select %446, %494, %448 : vector<8x32xi1>, vector<8x32xf32>
    %c0_337 = arith.constant 0 : index
    %c0_338 = arith.constant 0 : index
    %505 = vector.load %arg17[%c0_337, %c0_338] : memref<8x32xf32, #tpu.memory_space<vmem>>, vector<8x32xf32>
    tpu.vector_store %arg17[%c0_337, %c0_338], %504 {strides = array<i32>} : memref<8x32xf32, #tpu.memory_space<vmem>>, vector<8x32xf32>,
    %cst_339 = arith.constant 0.000000e+00 : f32
    %506 = vector.broadcast %cst_339 : f32 to vector<8x32xf32>
    %507 = arith.select %446, %501, %506 : vector<8x32xi1>, vector<8x32xf32>
    %508 = arith.index_cast %439 : i32 to index
    %c0_340 = arith.constant 0 : index
    %c0_341 = arith.constant 0 : index
    %509 = vector.load %arg11[%508, %c0_340, %c0_341] : memref<8x8x32xf32, #tpu.memory_space<vmem>>, vector<1x8x32xf32>
    %510 = vector.shape_cast %509 : vector<1x8x32xf32> to vector<8x32xf32>
    %511 = vector.shape_cast %507 : vector<8x32xf32> to vector<1x8x32xf32>
    tpu.vector_store %arg11[%508, %c0_340, %c0_341], %511 {strides = array<i32>} : memref<8x8x32xf32, #tpu.memory_space<vmem>>, vector<1x8x32xf32>,
    %c3_i32 = arith.constant 3 : i32
    %c8_i32_342 = arith.constant 8 : i32
    %512 = arith.muli %arg0, %c8_i32_342 : i32
    %513 = arith.addi %512, %c3_i32 : i32
    %514 = vector.broadcast %513 : i32 to vector<8x1xi32>
    %515 = arith.cmpi slt, %514, %3 : vector<8x1xi32>
    %516 = vector.shape_cast %515 : vector<8x1xi1> to vector<8x1xi1>
    %517 = vector.broadcast %516 : vector<8x1xi1> to vector<8x32xi1>
    %c0_343 = arith.constant 0 : index
    %c0_344 = arith.constant 0 : index
    %518 = vector.load %arg14[%c0_343, %c0_344] : memref<8x32xf32, #tpu.memory_space<vmem>>, vector<8x32xf32>
    %c0_345 = arith.constant 0 : index
    %c0_346 = arith.constant 0 : index
    %519 = vector.load %arg15[%c0_345, %c0_346] : memref<8x32xf32, #tpu.memory_space<vmem>>, vector<8x32xf32>
    %c0_i32_347 = arith.constant 0 : i32
    %520 = arith.addi %c0_i32_347, %c3_i32 : i32
    %521 = arith.index_cast %520 : i32 to index
    %c0_348 = arith.constant 0 : index
    %c0_349 = arith.constant 0 : index
    %522 = vector.load %arg12[%521, %c0_348, %c0_349] : memref<32x8x32xf32, #tpu.memory_space<vmem>>, vector<1x8x32xf32>
    %523 = vector.shape_cast %522 : vector<1x8x32xf32> to vector<8x32xf32>
    %c0_350 = arith.constant 0 : index
    %c0_351 = arith.constant 0 : index
    %c0_352 = arith.constant 0 : index
    %524 = vector.load %arg8[%c0_350, %c0_351, %c0_352] : memref<4x32x32xf32, #tpu.memory_space<vmem>>, vector<1x32x32xf32>
    %525 = vector.shape_cast %524 : vector<1x32x32xf32> to vector<32x32xf32>
    %cst_353 = arith.constant dense<0.000000e+00> : vector<8x32xf32>
    %526 = tpu.matmul %518, %525, %cst_353 {dimension_numbers = #tpu.dot_dimension_numbers<[1], [0], [0], [1], [0, 0, 1, 1], [], []>} : vector<8x32xf32>, vector<32x32xf32>, vector<8x32xf32> -> vector<8x32xf32>
    %527 = arith.addf %523, %526 : vector<8x32xf32>
    %c8_i32_354 = arith.constant 8 : i32
    %528 = arith.addi %c8_i32_354, %c3_i32 : i32
    %529 = arith.index_cast %528 : i32 to index
    %c0_355 = arith.constant 0 : index
    %c0_356 = arith.constant 0 : index
    %530 = vector.load %arg12[%529, %c0_355, %c0_356] : memref<32x8x32xf32, #tpu.memory_space<vmem>>, vector<1x8x32xf32>
    %531 = vector.shape_cast %530 : vector<1x8x32xf32> to vector<8x32xf32>
    %c1_357 = arith.constant 1 : index
    %c0_358 = arith.constant 0 : index
    %c0_359 = arith.constant 0 : index
    %532 = vector.load %arg8[%c1_357, %c0_358, %c0_359] : memref<4x32x32xf32, #tpu.memory_space<vmem>>, vector<1x32x32xf32>
    %533 = vector.shape_cast %532 : vector<1x32x32xf32> to vector<32x32xf32>
    %cst_360 = arith.constant dense<0.000000e+00> : vector<8x32xf32>
    %534 = tpu.matmul %518, %533, %cst_360 {dimension_numbers = #tpu.dot_dimension_numbers<[1], [0], [0], [1], [0, 0, 1, 1], [], []>} : vector<8x32xf32>, vector<32x32xf32>, vector<8x32xf32> -> vector<8x32xf32>
    %535 = arith.addf %531, %534 : vector<8x32xf32>
    %c16_i32_361 = arith.constant 16 : i32
    %536 = arith.addi %c16_i32_361, %c3_i32 : i32
    %537 = arith.index_cast %536 : i32 to index
    %c0_362 = arith.constant 0 : index
    %c0_363 = arith.constant 0 : index
    %538 = vector.load %arg12[%537, %c0_362, %c0_363] : memref<32x8x32xf32, #tpu.memory_space<vmem>>, vector<1x8x32xf32>
    %539 = vector.shape_cast %538 : vector<1x8x32xf32> to vector<8x32xf32>
    %c2_364 = arith.constant 2 : index
    %c0_365 = arith.constant 0 : index
    %c0_366 = arith.constant 0 : index
    %540 = vector.load %arg8[%c2_364, %c0_365, %c0_366] : memref<4x32x32xf32, #tpu.memory_space<vmem>>, vector<1x32x32xf32>
    %541 = vector.shape_cast %540 : vector<1x32x32xf32> to vector<32x32xf32>
    %cst_367 = arith.constant dense<0.000000e+00> : vector<8x32xf32>
    %542 = tpu.matmul %518, %541, %cst_367 {dimension_numbers = #tpu.dot_dimension_numbers<[1], [0], [0], [1], [0, 0, 1, 1], [], []>} : vector<8x32xf32>, vector<32x32xf32>, vector<8x32xf32> -> vector<8x32xf32>
    %543 = arith.addf %539, %542 : vector<8x32xf32>
    %c24_i32_368 = arith.constant 24 : i32
    %544 = arith.addi %c24_i32_368, %c3_i32 : i32
    %545 = arith.index_cast %544 : i32 to index
    %c0_369 = arith.constant 0 : index
    %c0_370 = arith.constant 0 : index
    %546 = vector.load %arg12[%545, %c0_369, %c0_370] : memref<32x8x32xf32, #tpu.memory_space<vmem>>, vector<1x8x32xf32>
    %547 = vector.shape_cast %546 : vector<1x8x32xf32> to vector<8x32xf32>
    %c3_371 = arith.constant 3 : index
    %c0_372 = arith.constant 0 : index
    %c0_373 = arith.constant 0 : index
    %548 = vector.load %arg8[%c3_371, %c0_372, %c0_373] : memref<4x32x32xf32, #tpu.memory_space<vmem>>, vector<1x32x32xf32>
    %549 = vector.shape_cast %548 : vector<1x32x32xf32> to vector<32x32xf32>
    %cst_374 = arith.constant dense<0.000000e+00> : vector<8x32xf32>
    %550 = tpu.matmul %518, %549, %cst_374 {dimension_numbers = #tpu.dot_dimension_numbers<[1], [0], [0], [1], [0, 0, 1, 1], [], []>} : vector<8x32xf32>, vector<32x32xf32>, vector<8x32xf32> -> vector<8x32xf32>
    %551 = arith.addf %547, %550 : vector<8x32xf32>
    %552 = arith.negf %535 : vector<8x32xf32>
    %553 = math.exp %552 : vector<8x32xf32>
    %cst_375 = arith.constant 1.000000e+00 : f32
    %554 = vector.broadcast %cst_375 : f32 to vector<8x32xf32>
    %555 = arith.addf %554, %553 : vector<8x32xf32>
    %556 = arith.divf %554, %555 : vector<8x32xf32>
    %557 = arith.mulf %556, %519 : vector<8x32xf32>
    %558 = arith.negf %527 : vector<8x32xf32>
    %559 = math.exp %558 : vector<8x32xf32>
    %cst_376 = arith.constant 1.000000e+00 : f32
    %560 = vector.broadcast %cst_376 : f32 to vector<8x32xf32>
    %561 = arith.addf %560, %559 : vector<8x32xf32>
    %562 = arith.divf %560, %561 : vector<8x32xf32>
    %563 = math.tanh %543 : vector<8x32xf32>
    %564 = arith.mulf %562, %563 : vector<8x32xf32>
    %565 = arith.addf %557, %564 : vector<8x32xf32>
    %566 = arith.negf %551 : vector<8x32xf32>
    %567 = math.exp %566 : vector<8x32xf32>
    %cst_377 = arith.constant 1.000000e+00 : f32
    %568 = vector.broadcast %cst_377 : f32 to vector<8x32xf32>
    %569 = arith.addf %568, %567 : vector<8x32xf32>
    %570 = arith.divf %568, %569 : vector<8x32xf32>
    %571 = math.tanh %565 : vector<8x32xf32>
    %572 = arith.mulf %570, %571 : vector<8x32xf32>
    %573 = arith.select %517, %572, %518 : vector<8x32xi1>, vector<8x32xf32>
    %c0_378 = arith.constant 0 : index
    %c0_379 = arith.constant 0 : index
    %574 = vector.load %arg14[%c0_378, %c0_379] : memref<8x32xf32, #tpu.memory_space<vmem>>, vector<8x32xf32>
    tpu.vector_store %arg14[%c0_378, %c0_379], %573 {strides = array<i32>} : memref<8x32xf32, #tpu.memory_space<vmem>>, vector<8x32xf32>,
    %575 = arith.select %517, %565, %519 : vector<8x32xi1>, vector<8x32xf32>
    %c0_380 = arith.constant 0 : index
    %c0_381 = arith.constant 0 : index
    %576 = vector.load %arg15[%c0_380, %c0_381] : memref<8x32xf32, #tpu.memory_space<vmem>>, vector<8x32xf32>
    tpu.vector_store %arg15[%c0_380, %c0_381], %575 {strides = array<i32>} : memref<8x32xf32, #tpu.memory_space<vmem>>, vector<8x32xf32>,
    %cst_382 = arith.constant 0.000000e+00 : f32
    %577 = vector.broadcast %cst_382 : f32 to vector<8x32xf32>
    %578 = arith.select %517, %572, %577 : vector<8x32xi1>, vector<8x32xf32>
    %579 = arith.index_cast %c3_i32 : i32 to index
    %c0_383 = arith.constant 0 : index
    %c0_384 = arith.constant 0 : index
    %580 = vector.load %arg10[%579, %c0_383, %c0_384] : memref<8x8x32xf32, #tpu.memory_space<vmem>>, vector<1x8x32xf32>
    %581 = vector.shape_cast %580 : vector<1x8x32xf32> to vector<8x32xf32>
    %582 = vector.shape_cast %578 : vector<8x32xf32> to vector<1x8x32xf32>
    tpu.vector_store %arg10[%579, %c0_383, %c0_384], %582 {strides = array<i32>} : memref<8x8x32xf32, #tpu.memory_space<vmem>>, vector<1x8x32xf32>,
    %c7_i32_385 = arith.constant 7 : i32
    %583 = arith.subi %c7_i32_385, %c3_i32 : i32
    %c1_i32_386 = arith.constant 1 : i32
    %584 = arith.subi %c1_i32_386, %arg0 : i32
    %c8_i32_387 = arith.constant 8 : i32
    %585 = arith.muli %584, %c8_i32_387 : i32
    %586 = arith.addi %585, %583 : i32
    %587 = vector.broadcast %586 : i32 to vector<8x1xi32>
    %588 = arith.cmpi slt, %587, %3 : vector<8x1xi32>
    %589 = vector.shape_cast %588 : vector<8x1xi1> to vector<8x1xi1>
    %590 = vector.broadcast %589 : vector<8x1xi1> to vector<8x32xi1>
    %c0_388 = arith.constant 0 : index
    %c0_389 = arith.constant 0 : index
    %591 = vector.load %arg16[%c0_388, %c0_389] : memref<8x32xf32, #tpu.memory_space<vmem>>, vector<8x32xf32>
    %c0_390 = arith.constant 0 : index
    %c0_391 = arith.constant 0 : index
    %592 = vector.load %arg17[%c0_390, %c0_391] : memref<8x32xf32, #tpu.memory_space<vmem>>, vector<8x32xf32>
    %c0_i32_392 = arith.constant 0 : i32
    %593 = arith.addi %c0_i32_392, %583 : i32
    %594 = arith.index_cast %593 : i32 to index
    %c0_393 = arith.constant 0 : index
    %c0_394 = arith.constant 0 : index
    %595 = vector.load %arg13[%594, %c0_393, %c0_394] : memref<32x8x32xf32, #tpu.memory_space<vmem>>, vector<1x8x32xf32>
    %596 = vector.shape_cast %595 : vector<1x8x32xf32> to vector<8x32xf32>
    %c0_395 = arith.constant 0 : index
    %c0_396 = arith.constant 0 : index
    %c0_397 = arith.constant 0 : index
    %597 = vector.load %arg9[%c0_395, %c0_396, %c0_397] : memref<4x32x32xf32, #tpu.memory_space<vmem>>, vector<1x32x32xf32>
    %598 = vector.shape_cast %597 : vector<1x32x32xf32> to vector<32x32xf32>
    %cst_398 = arith.constant dense<0.000000e+00> : vector<8x32xf32>
    %599 = tpu.matmul %591, %598, %cst_398 {dimension_numbers = #tpu.dot_dimension_numbers<[1], [0], [0], [1], [0, 0, 1, 1], [], []>} : vector<8x32xf32>, vector<32x32xf32>, vector<8x32xf32> -> vector<8x32xf32>
    %600 = arith.addf %596, %599 : vector<8x32xf32>
    %c8_i32_399 = arith.constant 8 : i32
    %601 = arith.addi %c8_i32_399, %583 : i32
    %602 = arith.index_cast %601 : i32 to index
    %c0_400 = arith.constant 0 : index
    %c0_401 = arith.constant 0 : index
    %603 = vector.load %arg13[%602, %c0_400, %c0_401] : memref<32x8x32xf32, #tpu.memory_space<vmem>>, vector<1x8x32xf32>
    %604 = vector.shape_cast %603 : vector<1x8x32xf32> to vector<8x32xf32>
    %c1_402 = arith.constant 1 : index
    %c0_403 = arith.constant 0 : index
    %c0_404 = arith.constant 0 : index
    %605 = vector.load %arg9[%c1_402, %c0_403, %c0_404] : memref<4x32x32xf32, #tpu.memory_space<vmem>>, vector<1x32x32xf32>
    %606 = vector.shape_cast %605 : vector<1x32x32xf32> to vector<32x32xf32>
    %cst_405 = arith.constant dense<0.000000e+00> : vector<8x32xf32>
    %607 = tpu.matmul %591, %606, %cst_405 {dimension_numbers = #tpu.dot_dimension_numbers<[1], [0], [0], [1], [0, 0, 1, 1], [], []>} : vector<8x32xf32>, vector<32x32xf32>, vector<8x32xf32> -> vector<8x32xf32>
    %608 = arith.addf %604, %607 : vector<8x32xf32>
    %c16_i32_406 = arith.constant 16 : i32
    %609 = arith.addi %c16_i32_406, %583 : i32
    %610 = arith.index_cast %609 : i32 to index
    %c0_407 = arith.constant 0 : index
    %c0_408 = arith.constant 0 : index
    %611 = vector.load %arg13[%610, %c0_407, %c0_408] : memref<32x8x32xf32, #tpu.memory_space<vmem>>, vector<1x8x32xf32>
    %612 = vector.shape_cast %611 : vector<1x8x32xf32> to vector<8x32xf32>
    %c2_409 = arith.constant 2 : index
    %c0_410 = arith.constant 0 : index
    %c0_411 = arith.constant 0 : index
    %613 = vector.load %arg9[%c2_409, %c0_410, %c0_411] : memref<4x32x32xf32, #tpu.memory_space<vmem>>, vector<1x32x32xf32>
    %614 = vector.shape_cast %613 : vector<1x32x32xf32> to vector<32x32xf32>
    %cst_412 = arith.constant dense<0.000000e+00> : vector<8x32xf32>
    %615 = tpu.matmul %591, %614, %cst_412 {dimension_numbers = #tpu.dot_dimension_numbers<[1], [0], [0], [1], [0, 0, 1, 1], [], []>} : vector<8x32xf32>, vector<32x32xf32>, vector<8x32xf32> -> vector<8x32xf32>
    %616 = arith.addf %612, %615 : vector<8x32xf32>
    %c24_i32_413 = arith.constant 24 : i32
    %617 = arith.addi %c24_i32_413, %583 : i32
    %618 = arith.index_cast %617 : i32 to index
    %c0_414 = arith.constant 0 : index
    %c0_415 = arith.constant 0 : index
    %619 = vector.load %arg13[%618, %c0_414, %c0_415] : memref<32x8x32xf32, #tpu.memory_space<vmem>>, vector<1x8x32xf32>
    %620 = vector.shape_cast %619 : vector<1x8x32xf32> to vector<8x32xf32>
    %c3_416 = arith.constant 3 : index
    %c0_417 = arith.constant 0 : index
    %c0_418 = arith.constant 0 : index
    %621 = vector.load %arg9[%c3_416, %c0_417, %c0_418] : memref<4x32x32xf32, #tpu.memory_space<vmem>>, vector<1x32x32xf32>
    %622 = vector.shape_cast %621 : vector<1x32x32xf32> to vector<32x32xf32>
    %cst_419 = arith.constant dense<0.000000e+00> : vector<8x32xf32>
    %623 = tpu.matmul %591, %622, %cst_419 {dimension_numbers = #tpu.dot_dimension_numbers<[1], [0], [0], [1], [0, 0, 1, 1], [], []>} : vector<8x32xf32>, vector<32x32xf32>, vector<8x32xf32> -> vector<8x32xf32>
    %624 = arith.addf %620, %623 : vector<8x32xf32>
    %625 = arith.negf %608 : vector<8x32xf32>
    %626 = math.exp %625 : vector<8x32xf32>
    %cst_420 = arith.constant 1.000000e+00 : f32
    %627 = vector.broadcast %cst_420 : f32 to vector<8x32xf32>
    %628 = arith.addf %627, %626 : vector<8x32xf32>
    %629 = arith.divf %627, %628 : vector<8x32xf32>
    %630 = arith.mulf %629, %592 : vector<8x32xf32>
    %631 = arith.negf %600 : vector<8x32xf32>
    %632 = math.exp %631 : vector<8x32xf32>
    %cst_421 = arith.constant 1.000000e+00 : f32
    %633 = vector.broadcast %cst_421 : f32 to vector<8x32xf32>
    %634 = arith.addf %633, %632 : vector<8x32xf32>
    %635 = arith.divf %633, %634 : vector<8x32xf32>
    %636 = math.tanh %616 : vector<8x32xf32>
    %637 = arith.mulf %635, %636 : vector<8x32xf32>
    %638 = arith.addf %630, %637 : vector<8x32xf32>
    %639 = arith.negf %624 : vector<8x32xf32>
    %640 = math.exp %639 : vector<8x32xf32>
    %cst_422 = arith.constant 1.000000e+00 : f32
    %641 = vector.broadcast %cst_422 : f32 to vector<8x32xf32>
    %642 = arith.addf %641, %640 : vector<8x32xf32>
    %643 = arith.divf %641, %642 : vector<8x32xf32>
    %644 = math.tanh %638 : vector<8x32xf32>
    %645 = arith.mulf %643, %644 : vector<8x32xf32>
    %646 = arith.select %590, %645, %591 : vector<8x32xi1>, vector<8x32xf32>
    %c0_423 = arith.constant 0 : index
    %c0_424 = arith.constant 0 : index
    %647 = vector.load %arg16[%c0_423, %c0_424] : memref<8x32xf32, #tpu.memory_space<vmem>>, vector<8x32xf32>
    tpu.vector_store %arg16[%c0_423, %c0_424], %646 {strides = array<i32>} : memref<8x32xf32, #tpu.memory_space<vmem>>, vector<8x32xf32>,
    %648 = arith.select %590, %638, %592 : vector<8x32xi1>, vector<8x32xf32>
    %c0_425 = arith.constant 0 : index
    %c0_426 = arith.constant 0 : index
    %649 = vector.load %arg17[%c0_425, %c0_426] : memref<8x32xf32, #tpu.memory_space<vmem>>, vector<8x32xf32>
    tpu.vector_store %arg17[%c0_425, %c0_426], %648 {strides = array<i32>} : memref<8x32xf32, #tpu.memory_space<vmem>>, vector<8x32xf32>,
    %cst_427 = arith.constant 0.000000e+00 : f32
    %650 = vector.broadcast %cst_427 : f32 to vector<8x32xf32>
    %651 = arith.select %590, %645, %650 : vector<8x32xi1>, vector<8x32xf32>
    %652 = arith.index_cast %583 : i32 to index
    %c0_428 = arith.constant 0 : index
    %c0_429 = arith.constant 0 : index
    %653 = vector.load %arg11[%652, %c0_428, %c0_429] : memref<8x8x32xf32, #tpu.memory_space<vmem>>, vector<1x8x32xf32>
    %654 = vector.shape_cast %653 : vector<1x8x32xf32> to vector<8x32xf32>
    %655 = vector.shape_cast %651 : vector<8x32xf32> to vector<1x8x32xf32>
    tpu.vector_store %arg11[%652, %c0_428, %c0_429], %655 {strides = array<i32>} : memref<8x8x32xf32, #tpu.memory_space<vmem>>, vector<1x8x32xf32>,
    %c4_i32 = arith.constant 4 : i32
    %c8_i32_430 = arith.constant 8 : i32
    %656 = arith.muli %arg0, %c8_i32_430 : i32
    %657 = arith.addi %656, %c4_i32 : i32
    %658 = vector.broadcast %657 : i32 to vector<8x1xi32>
    %659 = arith.cmpi slt, %658, %3 : vector<8x1xi32>
    %660 = vector.shape_cast %659 : vector<8x1xi1> to vector<8x1xi1>
    %661 = vector.broadcast %660 : vector<8x1xi1> to vector<8x32xi1>
    %c0_431 = arith.constant 0 : index
    %c0_432 = arith.constant 0 : index
    %662 = vector.load %arg14[%c0_431, %c0_432] : memref<8x32xf32, #tpu.memory_space<vmem>>, vector<8x32xf32>
    %c0_433 = arith.constant 0 : index
    %c0_434 = arith.constant 0 : index
    %663 = vector.load %arg15[%c0_433, %c0_434] : memref<8x32xf32, #tpu.memory_space<vmem>>, vector<8x32xf32>
    %c0_i32_435 = arith.constant 0 : i32
    %664 = arith.addi %c0_i32_435, %c4_i32 : i32
    %665 = arith.index_cast %664 : i32 to index
    %c0_436 = arith.constant 0 : index
    %c0_437 = arith.constant 0 : index
    %666 = vector.load %arg12[%665, %c0_436, %c0_437] : memref<32x8x32xf32, #tpu.memory_space<vmem>>, vector<1x8x32xf32>
    %667 = vector.shape_cast %666 : vector<1x8x32xf32> to vector<8x32xf32>
    %c0_438 = arith.constant 0 : index
    %c0_439 = arith.constant 0 : index
    %c0_440 = arith.constant 0 : index
    %668 = vector.load %arg8[%c0_438, %c0_439, %c0_440] : memref<4x32x32xf32, #tpu.memory_space<vmem>>, vector<1x32x32xf32>
    %669 = vector.shape_cast %668 : vector<1x32x32xf32> to vector<32x32xf32>
    %cst_441 = arith.constant dense<0.000000e+00> : vector<8x32xf32>
    %670 = tpu.matmul %662, %669, %cst_441 {dimension_numbers = #tpu.dot_dimension_numbers<[1], [0], [0], [1], [0, 0, 1, 1], [], []>} : vector<8x32xf32>, vector<32x32xf32>, vector<8x32xf32> -> vector<8x32xf32>
    %671 = arith.addf %667, %670 : vector<8x32xf32>
    %c8_i32_442 = arith.constant 8 : i32
    %672 = arith.addi %c8_i32_442, %c4_i32 : i32
    %673 = arith.index_cast %672 : i32 to index
    %c0_443 = arith.constant 0 : index
    %c0_444 = arith.constant 0 : index
    %674 = vector.load %arg12[%673, %c0_443, %c0_444] : memref<32x8x32xf32, #tpu.memory_space<vmem>>, vector<1x8x32xf32>
    %675 = vector.shape_cast %674 : vector<1x8x32xf32> to vector<8x32xf32>
    %c1_445 = arith.constant 1 : index
    %c0_446 = arith.constant 0 : index
    %c0_447 = arith.constant 0 : index
    %676 = vector.load %arg8[%c1_445, %c0_446, %c0_447] : memref<4x32x32xf32, #tpu.memory_space<vmem>>, vector<1x32x32xf32>
    %677 = vector.shape_cast %676 : vector<1x32x32xf32> to vector<32x32xf32>
    %cst_448 = arith.constant dense<0.000000e+00> : vector<8x32xf32>
    %678 = tpu.matmul %662, %677, %cst_448 {dimension_numbers = #tpu.dot_dimension_numbers<[1], [0], [0], [1], [0, 0, 1, 1], [], []>} : vector<8x32xf32>, vector<32x32xf32>, vector<8x32xf32> -> vector<8x32xf32>
    %679 = arith.addf %675, %678 : vector<8x32xf32>
    %c16_i32_449 = arith.constant 16 : i32
    %680 = arith.addi %c16_i32_449, %c4_i32 : i32
    %681 = arith.index_cast %680 : i32 to index
    %c0_450 = arith.constant 0 : index
    %c0_451 = arith.constant 0 : index
    %682 = vector.load %arg12[%681, %c0_450, %c0_451] : memref<32x8x32xf32, #tpu.memory_space<vmem>>, vector<1x8x32xf32>
    %683 = vector.shape_cast %682 : vector<1x8x32xf32> to vector<8x32xf32>
    %c2_452 = arith.constant 2 : index
    %c0_453 = arith.constant 0 : index
    %c0_454 = arith.constant 0 : index
    %684 = vector.load %arg8[%c2_452, %c0_453, %c0_454] : memref<4x32x32xf32, #tpu.memory_space<vmem>>, vector<1x32x32xf32>
    %685 = vector.shape_cast %684 : vector<1x32x32xf32> to vector<32x32xf32>
    %cst_455 = arith.constant dense<0.000000e+00> : vector<8x32xf32>
    %686 = tpu.matmul %662, %685, %cst_455 {dimension_numbers = #tpu.dot_dimension_numbers<[1], [0], [0], [1], [0, 0, 1, 1], [], []>} : vector<8x32xf32>, vector<32x32xf32>, vector<8x32xf32> -> vector<8x32xf32>
    %687 = arith.addf %683, %686 : vector<8x32xf32>
    %c24_i32_456 = arith.constant 24 : i32
    %688 = arith.addi %c24_i32_456, %c4_i32 : i32
    %689 = arith.index_cast %688 : i32 to index
    %c0_457 = arith.constant 0 : index
    %c0_458 = arith.constant 0 : index
    %690 = vector.load %arg12[%689, %c0_457, %c0_458] : memref<32x8x32xf32, #tpu.memory_space<vmem>>, vector<1x8x32xf32>
    %691 = vector.shape_cast %690 : vector<1x8x32xf32> to vector<8x32xf32>
    %c3_459 = arith.constant 3 : index
    %c0_460 = arith.constant 0 : index
    %c0_461 = arith.constant 0 : index
    %692 = vector.load %arg8[%c3_459, %c0_460, %c0_461] : memref<4x32x32xf32, #tpu.memory_space<vmem>>, vector<1x32x32xf32>
    %693 = vector.shape_cast %692 : vector<1x32x32xf32> to vector<32x32xf32>
    %cst_462 = arith.constant dense<0.000000e+00> : vector<8x32xf32>
    %694 = tpu.matmul %662, %693, %cst_462 {dimension_numbers = #tpu.dot_dimension_numbers<[1], [0], [0], [1], [0, 0, 1, 1], [], []>} : vector<8x32xf32>, vector<32x32xf32>, vector<8x32xf32> -> vector<8x32xf32>
    %695 = arith.addf %691, %694 : vector<8x32xf32>
    %696 = arith.negf %679 : vector<8x32xf32>
    %697 = math.exp %696 : vector<8x32xf32>
    %cst_463 = arith.constant 1.000000e+00 : f32
    %698 = vector.broadcast %cst_463 : f32 to vector<8x32xf32>
    %699 = arith.addf %698, %697 : vector<8x32xf32>
    %700 = arith.divf %698, %699 : vector<8x32xf32>
    %701 = arith.mulf %700, %663 : vector<8x32xf32>
    %702 = arith.negf %671 : vector<8x32xf32>
    %703 = math.exp %702 : vector<8x32xf32>
    %cst_464 = arith.constant 1.000000e+00 : f32
    %704 = vector.broadcast %cst_464 : f32 to vector<8x32xf32>
    %705 = arith.addf %704, %703 : vector<8x32xf32>
    %706 = arith.divf %704, %705 : vector<8x32xf32>
    %707 = math.tanh %687 : vector<8x32xf32>
    %708 = arith.mulf %706, %707 : vector<8x32xf32>
    %709 = arith.addf %701, %708 : vector<8x32xf32>
    %710 = arith.negf %695 : vector<8x32xf32>
    %711 = math.exp %710 : vector<8x32xf32>
    %cst_465 = arith.constant 1.000000e+00 : f32
    %712 = vector.broadcast %cst_465 : f32 to vector<8x32xf32>
    %713 = arith.addf %712, %711 : vector<8x32xf32>
    %714 = arith.divf %712, %713 : vector<8x32xf32>
    %715 = math.tanh %709 : vector<8x32xf32>
    %716 = arith.mulf %714, %715 : vector<8x32xf32>
    %717 = arith.select %661, %716, %662 : vector<8x32xi1>, vector<8x32xf32>
    %c0_466 = arith.constant 0 : index
    %c0_467 = arith.constant 0 : index
    %718 = vector.load %arg14[%c0_466, %c0_467] : memref<8x32xf32, #tpu.memory_space<vmem>>, vector<8x32xf32>
    tpu.vector_store %arg14[%c0_466, %c0_467], %717 {strides = array<i32>} : memref<8x32xf32, #tpu.memory_space<vmem>>, vector<8x32xf32>,
    %719 = arith.select %661, %709, %663 : vector<8x32xi1>, vector<8x32xf32>
    %c0_468 = arith.constant 0 : index
    %c0_469 = arith.constant 0 : index
    %720 = vector.load %arg15[%c0_468, %c0_469] : memref<8x32xf32, #tpu.memory_space<vmem>>, vector<8x32xf32>
    tpu.vector_store %arg15[%c0_468, %c0_469], %719 {strides = array<i32>} : memref<8x32xf32, #tpu.memory_space<vmem>>, vector<8x32xf32>,
    %cst_470 = arith.constant 0.000000e+00 : f32
    %721 = vector.broadcast %cst_470 : f32 to vector<8x32xf32>
    %722 = arith.select %661, %716, %721 : vector<8x32xi1>, vector<8x32xf32>
    %723 = arith.index_cast %c4_i32 : i32 to index
    %c0_471 = arith.constant 0 : index
    %c0_472 = arith.constant 0 : index
    %724 = vector.load %arg10[%723, %c0_471, %c0_472] : memref<8x8x32xf32, #tpu.memory_space<vmem>>, vector<1x8x32xf32>
    %725 = vector.shape_cast %724 : vector<1x8x32xf32> to vector<8x32xf32>
    %726 = vector.shape_cast %722 : vector<8x32xf32> to vector<1x8x32xf32>
    tpu.vector_store %arg10[%723, %c0_471, %c0_472], %726 {strides = array<i32>} : memref<8x8x32xf32, #tpu.memory_space<vmem>>, vector<1x8x32xf32>,
    %c7_i32_473 = arith.constant 7 : i32
    %727 = arith.subi %c7_i32_473, %c4_i32 : i32
    %c1_i32_474 = arith.constant 1 : i32
    %728 = arith.subi %c1_i32_474, %arg0 : i32
    %c8_i32_475 = arith.constant 8 : i32
    %729 = arith.muli %728, %c8_i32_475 : i32
    %730 = arith.addi %729, %727 : i32
    %731 = vector.broadcast %730 : i32 to vector<8x1xi32>
    %732 = arith.cmpi slt, %731, %3 : vector<8x1xi32>
    %733 = vector.shape_cast %732 : vector<8x1xi1> to vector<8x1xi1>
    %734 = vector.broadcast %733 : vector<8x1xi1> to vector<8x32xi1>
    %c0_476 = arith.constant 0 : index
    %c0_477 = arith.constant 0 : index
    %735 = vector.load %arg16[%c0_476, %c0_477] : memref<8x32xf32, #tpu.memory_space<vmem>>, vector<8x32xf32>
    %c0_478 = arith.constant 0 : index
    %c0_479 = arith.constant 0 : index
    %736 = vector.load %arg17[%c0_478, %c0_479] : memref<8x32xf32, #tpu.memory_space<vmem>>, vector<8x32xf32>
    %c0_i32_480 = arith.constant 0 : i32
    %737 = arith.addi %c0_i32_480, %727 : i32
    %738 = arith.index_cast %737 : i32 to index
    %c0_481 = arith.constant 0 : index
    %c0_482 = arith.constant 0 : index
    %739 = vector.load %arg13[%738, %c0_481, %c0_482] : memref<32x8x32xf32, #tpu.memory_space<vmem>>, vector<1x8x32xf32>
    %740 = vector.shape_cast %739 : vector<1x8x32xf32> to vector<8x32xf32>
    %c0_483 = arith.constant 0 : index
    %c0_484 = arith.constant 0 : index
    %c0_485 = arith.constant 0 : index
    %741 = vector.load %arg9[%c0_483, %c0_484, %c0_485] : memref<4x32x32xf32, #tpu.memory_space<vmem>>, vector<1x32x32xf32>
    %742 = vector.shape_cast %741 : vector<1x32x32xf32> to vector<32x32xf32>
    %cst_486 = arith.constant dense<0.000000e+00> : vector<8x32xf32>
    %743 = tpu.matmul %735, %742, %cst_486 {dimension_numbers = #tpu.dot_dimension_numbers<[1], [0], [0], [1], [0, 0, 1, 1], [], []>} : vector<8x32xf32>, vector<32x32xf32>, vector<8x32xf32> -> vector<8x32xf32>
    %744 = arith.addf %740, %743 : vector<8x32xf32>
    %c8_i32_487 = arith.constant 8 : i32
    %745 = arith.addi %c8_i32_487, %727 : i32
    %746 = arith.index_cast %745 : i32 to index
    %c0_488 = arith.constant 0 : index
    %c0_489 = arith.constant 0 : index
    %747 = vector.load %arg13[%746, %c0_488, %c0_489] : memref<32x8x32xf32, #tpu.memory_space<vmem>>, vector<1x8x32xf32>
    %748 = vector.shape_cast %747 : vector<1x8x32xf32> to vector<8x32xf32>
    %c1_490 = arith.constant 1 : index
    %c0_491 = arith.constant 0 : index
    %c0_492 = arith.constant 0 : index
    %749 = vector.load %arg9[%c1_490, %c0_491, %c0_492] : memref<4x32x32xf32, #tpu.memory_space<vmem>>, vector<1x32x32xf32>
    %750 = vector.shape_cast %749 : vector<1x32x32xf32> to vector<32x32xf32>
    %cst_493 = arith.constant dense<0.000000e+00> : vector<8x32xf32>
    %751 = tpu.matmul %735, %750, %cst_493 {dimension_numbers = #tpu.dot_dimension_numbers<[1], [0], [0], [1], [0, 0, 1, 1], [], []>} : vector<8x32xf32>, vector<32x32xf32>, vector<8x32xf32> -> vector<8x32xf32>
    %752 = arith.addf %748, %751 : vector<8x32xf32>
    %c16_i32_494 = arith.constant 16 : i32
    %753 = arith.addi %c16_i32_494, %727 : i32
    %754 = arith.index_cast %753 : i32 to index
    %c0_495 = arith.constant 0 : index
    %c0_496 = arith.constant 0 : index
    %755 = vector.load %arg13[%754, %c0_495, %c0_496] : memref<32x8x32xf32, #tpu.memory_space<vmem>>, vector<1x8x32xf32>
    %756 = vector.shape_cast %755 : vector<1x8x32xf32> to vector<8x32xf32>
    %c2_497 = arith.constant 2 : index
    %c0_498 = arith.constant 0 : index
    %c0_499 = arith.constant 0 : index
    %757 = vector.load %arg9[%c2_497, %c0_498, %c0_499] : memref<4x32x32xf32, #tpu.memory_space<vmem>>, vector<1x32x32xf32>
    %758 = vector.shape_cast %757 : vector<1x32x32xf32> to vector<32x32xf32>
    %cst_500 = arith.constant dense<0.000000e+00> : vector<8x32xf32>
    %759 = tpu.matmul %735, %758, %cst_500 {dimension_numbers = #tpu.dot_dimension_numbers<[1], [0], [0], [1], [0, 0, 1, 1], [], []>} : vector<8x32xf32>, vector<32x32xf32>, vector<8x32xf32> -> vector<8x32xf32>
    %760 = arith.addf %756, %759 : vector<8x32xf32>
    %c24_i32_501 = arith.constant 24 : i32
    %761 = arith.addi %c24_i32_501, %727 : i32
    %762 = arith.index_cast %761 : i32 to index
    %c0_502 = arith.constant 0 : index
    %c0_503 = arith.constant 0 : index
    %763 = vector.load %arg13[%762, %c0_502, %c0_503] : memref<32x8x32xf32, #tpu.memory_space<vmem>>, vector<1x8x32xf32>
    %764 = vector.shape_cast %763 : vector<1x8x32xf32> to vector<8x32xf32>
    %c3_504 = arith.constant 3 : index
    %c0_505 = arith.constant 0 : index
    %c0_506 = arith.constant 0 : index
    %765 = vector.load %arg9[%c3_504, %c0_505, %c0_506] : memref<4x32x32xf32, #tpu.memory_space<vmem>>, vector<1x32x32xf32>
    %766 = vector.shape_cast %765 : vector<1x32x32xf32> to vector<32x32xf32>
    %cst_507 = arith.constant dense<0.000000e+00> : vector<8x32xf32>
    %767 = tpu.matmul %735, %766, %cst_507 {dimension_numbers = #tpu.dot_dimension_numbers<[1], [0], [0], [1], [0, 0, 1, 1], [], []>} : vector<8x32xf32>, vector<32x32xf32>, vector<8x32xf32> -> vector<8x32xf32>
    %768 = arith.addf %764, %767 : vector<8x32xf32>
    %769 = arith.negf %752 : vector<8x32xf32>
    %770 = math.exp %769 : vector<8x32xf32>
    %cst_508 = arith.constant 1.000000e+00 : f32
    %771 = vector.broadcast %cst_508 : f32 to vector<8x32xf32>
    %772 = arith.addf %771, %770 : vector<8x32xf32>
    %773 = arith.divf %771, %772 : vector<8x32xf32>
    %774 = arith.mulf %773, %736 : vector<8x32xf32>
    %775 = arith.negf %744 : vector<8x32xf32>
    %776 = math.exp %775 : vector<8x32xf32>
    %cst_509 = arith.constant 1.000000e+00 : f32
    %777 = vector.broadcast %cst_509 : f32 to vector<8x32xf32>
    %778 = arith.addf %777, %776 : vector<8x32xf32>
    %779 = arith.divf %777, %778 : vector<8x32xf32>
    %780 = math.tanh %760 : vector<8x32xf32>
    %781 = arith.mulf %779, %780 : vector<8x32xf32>
    %782 = arith.addf %774, %781 : vector<8x32xf32>
    %783 = arith.negf %768 : vector<8x32xf32>
    %784 = math.exp %783 : vector<8x32xf32>
    %cst_510 = arith.constant 1.000000e+00 : f32
    %785 = vector.broadcast %cst_510 : f32 to vector<8x32xf32>
    %786 = arith.addf %785, %784 : vector<8x32xf32>
    %787 = arith.divf %785, %786 : vector<8x32xf32>
    %788 = math.tanh %782 : vector<8x32xf32>
    %789 = arith.mulf %787, %788 : vector<8x32xf32>
    %790 = arith.select %734, %789, %735 : vector<8x32xi1>, vector<8x32xf32>
    %c0_511 = arith.constant 0 : index
    %c0_512 = arith.constant 0 : index
    %791 = vector.load %arg16[%c0_511, %c0_512] : memref<8x32xf32, #tpu.memory_space<vmem>>, vector<8x32xf32>
    tpu.vector_store %arg16[%c0_511, %c0_512], %790 {strides = array<i32>} : memref<8x32xf32, #tpu.memory_space<vmem>>, vector<8x32xf32>,
    %792 = arith.select %734, %782, %736 : vector<8x32xi1>, vector<8x32xf32>
    %c0_513 = arith.constant 0 : index
    %c0_514 = arith.constant 0 : index
    %793 = vector.load %arg17[%c0_513, %c0_514] : memref<8x32xf32, #tpu.memory_space<vmem>>, vector<8x32xf32>
    tpu.vector_store %arg17[%c0_513, %c0_514], %792 {strides = array<i32>} : memref<8x32xf32, #tpu.memory_space<vmem>>, vector<8x32xf32>,
    %cst_515 = arith.constant 0.000000e+00 : f32
    %794 = vector.broadcast %cst_515 : f32 to vector<8x32xf32>
    %795 = arith.select %734, %789, %794 : vector<8x32xi1>, vector<8x32xf32>
    %796 = arith.index_cast %727 : i32 to index
    %c0_516 = arith.constant 0 : index
    %c0_517 = arith.constant 0 : index
    %797 = vector.load %arg11[%796, %c0_516, %c0_517] : memref<8x8x32xf32, #tpu.memory_space<vmem>>, vector<1x8x32xf32>
    %798 = vector.shape_cast %797 : vector<1x8x32xf32> to vector<8x32xf32>
    %799 = vector.shape_cast %795 : vector<8x32xf32> to vector<1x8x32xf32>
    tpu.vector_store %arg11[%796, %c0_516, %c0_517], %799 {strides = array<i32>} : memref<8x8x32xf32, #tpu.memory_space<vmem>>, vector<1x8x32xf32>,
    %c5_i32 = arith.constant 5 : i32
    %c8_i32_518 = arith.constant 8 : i32
    %800 = arith.muli %arg0, %c8_i32_518 : i32
    %801 = arith.addi %800, %c5_i32 : i32
    %802 = vector.broadcast %801 : i32 to vector<8x1xi32>
    %803 = arith.cmpi slt, %802, %3 : vector<8x1xi32>
    %804 = vector.shape_cast %803 : vector<8x1xi1> to vector<8x1xi1>
    %805 = vector.broadcast %804 : vector<8x1xi1> to vector<8x32xi1>
    %c0_519 = arith.constant 0 : index
    %c0_520 = arith.constant 0 : index
    %806 = vector.load %arg14[%c0_519, %c0_520] : memref<8x32xf32, #tpu.memory_space<vmem>>, vector<8x32xf32>
    %c0_521 = arith.constant 0 : index
    %c0_522 = arith.constant 0 : index
    %807 = vector.load %arg15[%c0_521, %c0_522] : memref<8x32xf32, #tpu.memory_space<vmem>>, vector<8x32xf32>
    %c0_i32_523 = arith.constant 0 : i32
    %808 = arith.addi %c0_i32_523, %c5_i32 : i32
    %809 = arith.index_cast %808 : i32 to index
    %c0_524 = arith.constant 0 : index
    %c0_525 = arith.constant 0 : index
    %810 = vector.load %arg12[%809, %c0_524, %c0_525] : memref<32x8x32xf32, #tpu.memory_space<vmem>>, vector<1x8x32xf32>
    %811 = vector.shape_cast %810 : vector<1x8x32xf32> to vector<8x32xf32>
    %c0_526 = arith.constant 0 : index
    %c0_527 = arith.constant 0 : index
    %c0_528 = arith.constant 0 : index
    %812 = vector.load %arg8[%c0_526, %c0_527, %c0_528] : memref<4x32x32xf32, #tpu.memory_space<vmem>>, vector<1x32x32xf32>
    %813 = vector.shape_cast %812 : vector<1x32x32xf32> to vector<32x32xf32>
    %cst_529 = arith.constant dense<0.000000e+00> : vector<8x32xf32>
    %814 = tpu.matmul %806, %813, %cst_529 {dimension_numbers = #tpu.dot_dimension_numbers<[1], [0], [0], [1], [0, 0, 1, 1], [], []>} : vector<8x32xf32>, vector<32x32xf32>, vector<8x32xf32> -> vector<8x32xf32>
    %815 = arith.addf %811, %814 : vector<8x32xf32>
    %c8_i32_530 = arith.constant 8 : i32
    %816 = arith.addi %c8_i32_530, %c5_i32 : i32
    %817 = arith.index_cast %816 : i32 to index
    %c0_531 = arith.constant 0 : index
    %c0_532 = arith.constant 0 : index
    %818 = vector.load %arg12[%817, %c0_531, %c0_532] : memref<32x8x32xf32, #tpu.memory_space<vmem>>, vector<1x8x32xf32>
    %819 = vector.shape_cast %818 : vector<1x8x32xf32> to vector<8x32xf32>
    %c1_533 = arith.constant 1 : index
    %c0_534 = arith.constant 0 : index
    %c0_535 = arith.constant 0 : index
    %820 = vector.load %arg8[%c1_533, %c0_534, %c0_535] : memref<4x32x32xf32, #tpu.memory_space<vmem>>, vector<1x32x32xf32>
    %821 = vector.shape_cast %820 : vector<1x32x32xf32> to vector<32x32xf32>
    %cst_536 = arith.constant dense<0.000000e+00> : vector<8x32xf32>
    %822 = tpu.matmul %806, %821, %cst_536 {dimension_numbers = #tpu.dot_dimension_numbers<[1], [0], [0], [1], [0, 0, 1, 1], [], []>} : vector<8x32xf32>, vector<32x32xf32>, vector<8x32xf32> -> vector<8x32xf32>
    %823 = arith.addf %819, %822 : vector<8x32xf32>
    %c16_i32_537 = arith.constant 16 : i32
    %824 = arith.addi %c16_i32_537, %c5_i32 : i32
    %825 = arith.index_cast %824 : i32 to index
    %c0_538 = arith.constant 0 : index
    %c0_539 = arith.constant 0 : index
    %826 = vector.load %arg12[%825, %c0_538, %c0_539] : memref<32x8x32xf32, #tpu.memory_space<vmem>>, vector<1x8x32xf32>
    %827 = vector.shape_cast %826 : vector<1x8x32xf32> to vector<8x32xf32>
    %c2_540 = arith.constant 2 : index
    %c0_541 = arith.constant 0 : index
    %c0_542 = arith.constant 0 : index
    %828 = vector.load %arg8[%c2_540, %c0_541, %c0_542] : memref<4x32x32xf32, #tpu.memory_space<vmem>>, vector<1x32x32xf32>
    %829 = vector.shape_cast %828 : vector<1x32x32xf32> to vector<32x32xf32>
    %cst_543 = arith.constant dense<0.000000e+00> : vector<8x32xf32>
    %830 = tpu.matmul %806, %829, %cst_543 {dimension_numbers = #tpu.dot_dimension_numbers<[1], [0], [0], [1], [0, 0, 1, 1], [], []>} : vector<8x32xf32>, vector<32x32xf32>, vector<8x32xf32> -> vector<8x32xf32>
    %831 = arith.addf %827, %830 : vector<8x32xf32>
    %c24_i32_544 = arith.constant 24 : i32
    %832 = arith.addi %c24_i32_544, %c5_i32 : i32
    %833 = arith.index_cast %832 : i32 to index
    %c0_545 = arith.constant 0 : index
    %c0_546 = arith.constant 0 : index
    %834 = vector.load %arg12[%833, %c0_545, %c0_546] : memref<32x8x32xf32, #tpu.memory_space<vmem>>, vector<1x8x32xf32>
    %835 = vector.shape_cast %834 : vector<1x8x32xf32> to vector<8x32xf32>
    %c3_547 = arith.constant 3 : index
    %c0_548 = arith.constant 0 : index
    %c0_549 = arith.constant 0 : index
    %836 = vector.load %arg8[%c3_547, %c0_548, %c0_549] : memref<4x32x32xf32, #tpu.memory_space<vmem>>, vector<1x32x32xf32>
    %837 = vector.shape_cast %836 : vector<1x32x32xf32> to vector<32x32xf32>
    %cst_550 = arith.constant dense<0.000000e+00> : vector<8x32xf32>
    %838 = tpu.matmul %806, %837, %cst_550 {dimension_numbers = #tpu.dot_dimension_numbers<[1], [0], [0], [1], [0, 0, 1, 1], [], []>} : vector<8x32xf32>, vector<32x32xf32>, vector<8x32xf32> -> vector<8x32xf32>
    %839 = arith.addf %835, %838 : vector<8x32xf32>
    %840 = arith.negf %823 : vector<8x32xf32>
    %841 = math.exp %840 : vector<8x32xf32>
    %cst_551 = arith.constant 1.000000e+00 : f32
    %842 = vector.broadcast %cst_551 : f32 to vector<8x32xf32>
    %843 = arith.addf %842, %841 : vector<8x32xf32>
    %844 = arith.divf %842, %843 : vector<8x32xf32>
    %845 = arith.mulf %844, %807 : vector<8x32xf32>
    %846 = arith.negf %815 : vector<8x32xf32>
    %847 = math.exp %846 : vector<8x32xf32>
    %cst_552 = arith.constant 1.000000e+00 : f32
    %848 = vector.broadcast %cst_552 : f32 to vector<8x32xf32>
    %849 = arith.addf %848, %847 : vector<8x32xf32>
    %850 = arith.divf %848, %849 : vector<8x32xf32>
    %851 = math.tanh %831 : vector<8x32xf32>
    %852 = arith.mulf %850, %851 : vector<8x32xf32>
    %853 = arith.addf %845, %852 : vector<8x32xf32>
    %854 = arith.negf %839 : vector<8x32xf32>
    %855 = math.exp %854 : vector<8x32xf32>
    %cst_553 = arith.constant 1.000000e+00 : f32
    %856 = vector.broadcast %cst_553 : f32 to vector<8x32xf32>
    %857 = arith.addf %856, %855 : vector<8x32xf32>
    %858 = arith.divf %856, %857 : vector<8x32xf32>
    %859 = math.tanh %853 : vector<8x32xf32>
    %860 = arith.mulf %858, %859 : vector<8x32xf32>
    %861 = arith.select %805, %860, %806 : vector<8x32xi1>, vector<8x32xf32>
    %c0_554 = arith.constant 0 : index
    %c0_555 = arith.constant 0 : index
    %862 = vector.load %arg14[%c0_554, %c0_555] : memref<8x32xf32, #tpu.memory_space<vmem>>, vector<8x32xf32>
    tpu.vector_store %arg14[%c0_554, %c0_555], %861 {strides = array<i32>} : memref<8x32xf32, #tpu.memory_space<vmem>>, vector<8x32xf32>,
    %863 = arith.select %805, %853, %807 : vector<8x32xi1>, vector<8x32xf32>
    %c0_556 = arith.constant 0 : index
    %c0_557 = arith.constant 0 : index
    %864 = vector.load %arg15[%c0_556, %c0_557] : memref<8x32xf32, #tpu.memory_space<vmem>>, vector<8x32xf32>
    tpu.vector_store %arg15[%c0_556, %c0_557], %863 {strides = array<i32>} : memref<8x32xf32, #tpu.memory_space<vmem>>, vector<8x32xf32>,
    %cst_558 = arith.constant 0.000000e+00 : f32
    %865 = vector.broadcast %cst_558 : f32 to vector<8x32xf32>
    %866 = arith.select %805, %860, %865 : vector<8x32xi1>, vector<8x32xf32>
    %867 = arith.index_cast %c5_i32 : i32 to index
    %c0_559 = arith.constant 0 : index
    %c0_560 = arith.constant 0 : index
    %868 = vector.load %arg10[%867, %c0_559, %c0_560] : memref<8x8x32xf32, #tpu.memory_space<vmem>>, vector<1x8x32xf32>
    %869 = vector.shape_cast %868 : vector<1x8x32xf32> to vector<8x32xf32>
    %870 = vector.shape_cast %866 : vector<8x32xf32> to vector<1x8x32xf32>
    tpu.vector_store %arg10[%867, %c0_559, %c0_560], %870 {strides = array<i32>} : memref<8x8x32xf32, #tpu.memory_space<vmem>>, vector<1x8x32xf32>,
    %c7_i32_561 = arith.constant 7 : i32
    %871 = arith.subi %c7_i32_561, %c5_i32 : i32
    %c1_i32_562 = arith.constant 1 : i32
    %872 = arith.subi %c1_i32_562, %arg0 : i32
    %c8_i32_563 = arith.constant 8 : i32
    %873 = arith.muli %872, %c8_i32_563 : i32
    %874 = arith.addi %873, %871 : i32
    %875 = vector.broadcast %874 : i32 to vector<8x1xi32>
    %876 = arith.cmpi slt, %875, %3 : vector<8x1xi32>
    %877 = vector.shape_cast %876 : vector<8x1xi1> to vector<8x1xi1>
    %878 = vector.broadcast %877 : vector<8x1xi1> to vector<8x32xi1>
    %c0_564 = arith.constant 0 : index
    %c0_565 = arith.constant 0 : index
    %879 = vector.load %arg16[%c0_564, %c0_565] : memref<8x32xf32, #tpu.memory_space<vmem>>, vector<8x32xf32>
    %c0_566 = arith.constant 0 : index
    %c0_567 = arith.constant 0 : index
    %880 = vector.load %arg17[%c0_566, %c0_567] : memref<8x32xf32, #tpu.memory_space<vmem>>, vector<8x32xf32>
    %c0_i32_568 = arith.constant 0 : i32
    %881 = arith.addi %c0_i32_568, %871 : i32
    %882 = arith.index_cast %881 : i32 to index
    %c0_569 = arith.constant 0 : index
    %c0_570 = arith.constant 0 : index
    %883 = vector.load %arg13[%882, %c0_569, %c0_570] : memref<32x8x32xf32, #tpu.memory_space<vmem>>, vector<1x8x32xf32>
    %884 = vector.shape_cast %883 : vector<1x8x32xf32> to vector<8x32xf32>
    %c0_571 = arith.constant 0 : index
    %c0_572 = arith.constant 0 : index
    %c0_573 = arith.constant 0 : index
    %885 = vector.load %arg9[%c0_571, %c0_572, %c0_573] : memref<4x32x32xf32, #tpu.memory_space<vmem>>, vector<1x32x32xf32>
    %886 = vector.shape_cast %885 : vector<1x32x32xf32> to vector<32x32xf32>
    %cst_574 = arith.constant dense<0.000000e+00> : vector<8x32xf32>
    %887 = tpu.matmul %879, %886, %cst_574 {dimension_numbers = #tpu.dot_dimension_numbers<[1], [0], [0], [1], [0, 0, 1, 1], [], []>} : vector<8x32xf32>, vector<32x32xf32>, vector<8x32xf32> -> vector<8x32xf32>
    %888 = arith.addf %884, %887 : vector<8x32xf32>
    %c8_i32_575 = arith.constant 8 : i32
    %889 = arith.addi %c8_i32_575, %871 : i32
    %890 = arith.index_cast %889 : i32 to index
    %c0_576 = arith.constant 0 : index
    %c0_577 = arith.constant 0 : index
    %891 = vector.load %arg13[%890, %c0_576, %c0_577] : memref<32x8x32xf32, #tpu.memory_space<vmem>>, vector<1x8x32xf32>
    %892 = vector.shape_cast %891 : vector<1x8x32xf32> to vector<8x32xf32>
    %c1_578 = arith.constant 1 : index
    %c0_579 = arith.constant 0 : index
    %c0_580 = arith.constant 0 : index
    %893 = vector.load %arg9[%c1_578, %c0_579, %c0_580] : memref<4x32x32xf32, #tpu.memory_space<vmem>>, vector<1x32x32xf32>
    %894 = vector.shape_cast %893 : vector<1x32x32xf32> to vector<32x32xf32>
    %cst_581 = arith.constant dense<0.000000e+00> : vector<8x32xf32>
    %895 = tpu.matmul %879, %894, %cst_581 {dimension_numbers = #tpu.dot_dimension_numbers<[1], [0], [0], [1], [0, 0, 1, 1], [], []>} : vector<8x32xf32>, vector<32x32xf32>, vector<8x32xf32> -> vector<8x32xf32>
    %896 = arith.addf %892, %895 : vector<8x32xf32>
    %c16_i32_582 = arith.constant 16 : i32
    %897 = arith.addi %c16_i32_582, %871 : i32
    %898 = arith.index_cast %897 : i32 to index
    %c0_583 = arith.constant 0 : index
    %c0_584 = arith.constant 0 : index
    %899 = vector.load %arg13[%898, %c0_583, %c0_584] : memref<32x8x32xf32, #tpu.memory_space<vmem>>, vector<1x8x32xf32>
    %900 = vector.shape_cast %899 : vector<1x8x32xf32> to vector<8x32xf32>
    %c2_585 = arith.constant 2 : index
    %c0_586 = arith.constant 0 : index
    %c0_587 = arith.constant 0 : index
    %901 = vector.load %arg9[%c2_585, %c0_586, %c0_587] : memref<4x32x32xf32, #tpu.memory_space<vmem>>, vector<1x32x32xf32>
    %902 = vector.shape_cast %901 : vector<1x32x32xf32> to vector<32x32xf32>
    %cst_588 = arith.constant dense<0.000000e+00> : vector<8x32xf32>
    %903 = tpu.matmul %879, %902, %cst_588 {dimension_numbers = #tpu.dot_dimension_numbers<[1], [0], [0], [1], [0, 0, 1, 1], [], []>} : vector<8x32xf32>, vector<32x32xf32>, vector<8x32xf32> -> vector<8x32xf32>
    %904 = arith.addf %900, %903 : vector<8x32xf32>
    %c24_i32_589 = arith.constant 24 : i32
    %905 = arith.addi %c24_i32_589, %871 : i32
    %906 = arith.index_cast %905 : i32 to index
    %c0_590 = arith.constant 0 : index
    %c0_591 = arith.constant 0 : index
    %907 = vector.load %arg13[%906, %c0_590, %c0_591] : memref<32x8x32xf32, #tpu.memory_space<vmem>>, vector<1x8x32xf32>
    %908 = vector.shape_cast %907 : vector<1x8x32xf32> to vector<8x32xf32>
    %c3_592 = arith.constant 3 : index
    %c0_593 = arith.constant 0 : index
    %c0_594 = arith.constant 0 : index
    %909 = vector.load %arg9[%c3_592, %c0_593, %c0_594] : memref<4x32x32xf32, #tpu.memory_space<vmem>>, vector<1x32x32xf32>
    %910 = vector.shape_cast %909 : vector<1x32x32xf32> to vector<32x32xf32>
    %cst_595 = arith.constant dense<0.000000e+00> : vector<8x32xf32>
    %911 = tpu.matmul %879, %910, %cst_595 {dimension_numbers = #tpu.dot_dimension_numbers<[1], [0], [0], [1], [0, 0, 1, 1], [], []>} : vector<8x32xf32>, vector<32x32xf32>, vector<8x32xf32> -> vector<8x32xf32>
    %912 = arith.addf %908, %911 : vector<8x32xf32>
    %913 = arith.negf %896 : vector<8x32xf32>
    %914 = math.exp %913 : vector<8x32xf32>
    %cst_596 = arith.constant 1.000000e+00 : f32
    %915 = vector.broadcast %cst_596 : f32 to vector<8x32xf32>
    %916 = arith.addf %915, %914 : vector<8x32xf32>
    %917 = arith.divf %915, %916 : vector<8x32xf32>
    %918 = arith.mulf %917, %880 : vector<8x32xf32>
    %919 = arith.negf %888 : vector<8x32xf32>
    %920 = math.exp %919 : vector<8x32xf32>
    %cst_597 = arith.constant 1.000000e+00 : f32
    %921 = vector.broadcast %cst_597 : f32 to vector<8x32xf32>
    %922 = arith.addf %921, %920 : vector<8x32xf32>
    %923 = arith.divf %921, %922 : vector<8x32xf32>
    %924 = math.tanh %904 : vector<8x32xf32>
    %925 = arith.mulf %923, %924 : vector<8x32xf32>
    %926 = arith.addf %918, %925 : vector<8x32xf32>
    %927 = arith.negf %912 : vector<8x32xf32>
    %928 = math.exp %927 : vector<8x32xf32>
    %cst_598 = arith.constant 1.000000e+00 : f32
    %929 = vector.broadcast %cst_598 : f32 to vector<8x32xf32>
    %930 = arith.addf %929, %928 : vector<8x32xf32>
    %931 = arith.divf %929, %930 : vector<8x32xf32>
    %932 = math.tanh %926 : vector<8x32xf32>
    %933 = arith.mulf %931, %932 : vector<8x32xf32>
    %934 = arith.select %878, %933, %879 : vector<8x32xi1>, vector<8x32xf32>
    %c0_599 = arith.constant 0 : index
    %c0_600 = arith.constant 0 : index
    %935 = vector.load %arg16[%c0_599, %c0_600] : memref<8x32xf32, #tpu.memory_space<vmem>>, vector<8x32xf32>
    tpu.vector_store %arg16[%c0_599, %c0_600], %934 {strides = array<i32>} : memref<8x32xf32, #tpu.memory_space<vmem>>, vector<8x32xf32>,
    %936 = arith.select %878, %926, %880 : vector<8x32xi1>, vector<8x32xf32>
    %c0_601 = arith.constant 0 : index
    %c0_602 = arith.constant 0 : index
    %937 = vector.load %arg17[%c0_601, %c0_602] : memref<8x32xf32, #tpu.memory_space<vmem>>, vector<8x32xf32>
    tpu.vector_store %arg17[%c0_601, %c0_602], %936 {strides = array<i32>} : memref<8x32xf32, #tpu.memory_space<vmem>>, vector<8x32xf32>,
    %cst_603 = arith.constant 0.000000e+00 : f32
    %938 = vector.broadcast %cst_603 : f32 to vector<8x32xf32>
    %939 = arith.select %878, %933, %938 : vector<8x32xi1>, vector<8x32xf32>
    %940 = arith.index_cast %871 : i32 to index
    %c0_604 = arith.constant 0 : index
    %c0_605 = arith.constant 0 : index
    %941 = vector.load %arg11[%940, %c0_604, %c0_605] : memref<8x8x32xf32, #tpu.memory_space<vmem>>, vector<1x8x32xf32>
    %942 = vector.shape_cast %941 : vector<1x8x32xf32> to vector<8x32xf32>
    %943 = vector.shape_cast %939 : vector<8x32xf32> to vector<1x8x32xf32>
    tpu.vector_store %arg11[%940, %c0_604, %c0_605], %943 {strides = array<i32>} : memref<8x8x32xf32, #tpu.memory_space<vmem>>, vector<1x8x32xf32>,
    %c6_i32 = arith.constant 6 : i32
    %c8_i32_606 = arith.constant 8 : i32
    %944 = arith.muli %arg0, %c8_i32_606 : i32
    %945 = arith.addi %944, %c6_i32 : i32
    %946 = vector.broadcast %945 : i32 to vector<8x1xi32>
    %947 = arith.cmpi slt, %946, %3 : vector<8x1xi32>
    %948 = vector.shape_cast %947 : vector<8x1xi1> to vector<8x1xi1>
    %949 = vector.broadcast %948 : vector<8x1xi1> to vector<8x32xi1>
    %c0_607 = arith.constant 0 : index
    %c0_608 = arith.constant 0 : index
    %950 = vector.load %arg14[%c0_607, %c0_608] : memref<8x32xf32, #tpu.memory_space<vmem>>, vector<8x32xf32>
    %c0_609 = arith.constant 0 : index
    %c0_610 = arith.constant 0 : index
    %951 = vector.load %arg15[%c0_609, %c0_610] : memref<8x32xf32, #tpu.memory_space<vmem>>, vector<8x32xf32>
    %c0_i32_611 = arith.constant 0 : i32
    %952 = arith.addi %c0_i32_611, %c6_i32 : i32
    %953 = arith.index_cast %952 : i32 to index
    %c0_612 = arith.constant 0 : index
    %c0_613 = arith.constant 0 : index
    %954 = vector.load %arg12[%953, %c0_612, %c0_613] : memref<32x8x32xf32, #tpu.memory_space<vmem>>, vector<1x8x32xf32>
    %955 = vector.shape_cast %954 : vector<1x8x32xf32> to vector<8x32xf32>
    %c0_614 = arith.constant 0 : index
    %c0_615 = arith.constant 0 : index
    %c0_616 = arith.constant 0 : index
    %956 = vector.load %arg8[%c0_614, %c0_615, %c0_616] : memref<4x32x32xf32, #tpu.memory_space<vmem>>, vector<1x32x32xf32>
    %957 = vector.shape_cast %956 : vector<1x32x32xf32> to vector<32x32xf32>
    %cst_617 = arith.constant dense<0.000000e+00> : vector<8x32xf32>
    %958 = tpu.matmul %950, %957, %cst_617 {dimension_numbers = #tpu.dot_dimension_numbers<[1], [0], [0], [1], [0, 0, 1, 1], [], []>} : vector<8x32xf32>, vector<32x32xf32>, vector<8x32xf32> -> vector<8x32xf32>
    %959 = arith.addf %955, %958 : vector<8x32xf32>
    %c8_i32_618 = arith.constant 8 : i32
    %960 = arith.addi %c8_i32_618, %c6_i32 : i32
    %961 = arith.index_cast %960 : i32 to index
    %c0_619 = arith.constant 0 : index
    %c0_620 = arith.constant 0 : index
    %962 = vector.load %arg12[%961, %c0_619, %c0_620] : memref<32x8x32xf32, #tpu.memory_space<vmem>>, vector<1x8x32xf32>
    %963 = vector.shape_cast %962 : vector<1x8x32xf32> to vector<8x32xf32>
    %c1_621 = arith.constant 1 : index
    %c0_622 = arith.constant 0 : index
    %c0_623 = arith.constant 0 : index
    %964 = vector.load %arg8[%c1_621, %c0_622, %c0_623] : memref<4x32x32xf32, #tpu.memory_space<vmem>>, vector<1x32x32xf32>
    %965 = vector.shape_cast %964 : vector<1x32x32xf32> to vector<32x32xf32>
    %cst_624 = arith.constant dense<0.000000e+00> : vector<8x32xf32>
    %966 = tpu.matmul %950, %965, %cst_624 {dimension_numbers = #tpu.dot_dimension_numbers<[1], [0], [0], [1], [0, 0, 1, 1], [], []>} : vector<8x32xf32>, vector<32x32xf32>, vector<8x32xf32> -> vector<8x32xf32>
    %967 = arith.addf %963, %966 : vector<8x32xf32>
    %c16_i32_625 = arith.constant 16 : i32
    %968 = arith.addi %c16_i32_625, %c6_i32 : i32
    %969 = arith.index_cast %968 : i32 to index
    %c0_626 = arith.constant 0 : index
    %c0_627 = arith.constant 0 : index
    %970 = vector.load %arg12[%969, %c0_626, %c0_627] : memref<32x8x32xf32, #tpu.memory_space<vmem>>, vector<1x8x32xf32>
    %971 = vector.shape_cast %970 : vector<1x8x32xf32> to vector<8x32xf32>
    %c2_628 = arith.constant 2 : index
    %c0_629 = arith.constant 0 : index
    %c0_630 = arith.constant 0 : index
    %972 = vector.load %arg8[%c2_628, %c0_629, %c0_630] : memref<4x32x32xf32, #tpu.memory_space<vmem>>, vector<1x32x32xf32>
    %973 = vector.shape_cast %972 : vector<1x32x32xf32> to vector<32x32xf32>
    %cst_631 = arith.constant dense<0.000000e+00> : vector<8x32xf32>
    %974 = tpu.matmul %950, %973, %cst_631 {dimension_numbers = #tpu.dot_dimension_numbers<[1], [0], [0], [1], [0, 0, 1, 1], [], []>} : vector<8x32xf32>, vector<32x32xf32>, vector<8x32xf32> -> vector<8x32xf32>
    %975 = arith.addf %971, %974 : vector<8x32xf32>
    %c24_i32_632 = arith.constant 24 : i32
    %976 = arith.addi %c24_i32_632, %c6_i32 : i32
    %977 = arith.index_cast %976 : i32 to index
    %c0_633 = arith.constant 0 : index
    %c0_634 = arith.constant 0 : index
    %978 = vector.load %arg12[%977, %c0_633, %c0_634] : memref<32x8x32xf32, #tpu.memory_space<vmem>>, vector<1x8x32xf32>
    %979 = vector.shape_cast %978 : vector<1x8x32xf32> to vector<8x32xf32>
    %c3_635 = arith.constant 3 : index
    %c0_636 = arith.constant 0 : index
    %c0_637 = arith.constant 0 : index
    %980 = vector.load %arg8[%c3_635, %c0_636, %c0_637] : memref<4x32x32xf32, #tpu.memory_space<vmem>>, vector<1x32x32xf32>
    %981 = vector.shape_cast %980 : vector<1x32x32xf32> to vector<32x32xf32>
    %cst_638 = arith.constant dense<0.000000e+00> : vector<8x32xf32>
    %982 = tpu.matmul %950, %981, %cst_638 {dimension_numbers = #tpu.dot_dimension_numbers<[1], [0], [0], [1], [0, 0, 1, 1], [], []>} : vector<8x32xf32>, vector<32x32xf32>, vector<8x32xf32> -> vector<8x32xf32>
    %983 = arith.addf %979, %982 : vector<8x32xf32>
    %984 = arith.negf %967 : vector<8x32xf32>
    %985 = math.exp %984 : vector<8x32xf32>
    %cst_639 = arith.constant 1.000000e+00 : f32
    %986 = vector.broadcast %cst_639 : f32 to vector<8x32xf32>
    %987 = arith.addf %986, %985 : vector<8x32xf32>
    %988 = arith.divf %986, %987 : vector<8x32xf32>
    %989 = arith.mulf %988, %951 : vector<8x32xf32>
    %990 = arith.negf %959 : vector<8x32xf32>
    %991 = math.exp %990 : vector<8x32xf32>
    %cst_640 = arith.constant 1.000000e+00 : f32
    %992 = vector.broadcast %cst_640 : f32 to vector<8x32xf32>
    %993 = arith.addf %992, %991 : vector<8x32xf32>
    %994 = arith.divf %992, %993 : vector<8x32xf32>
    %995 = math.tanh %975 : vector<8x32xf32>
    %996 = arith.mulf %994, %995 : vector<8x32xf32>
    %997 = arith.addf %989, %996 : vector<8x32xf32>
    %998 = arith.negf %983 : vector<8x32xf32>
    %999 = math.exp %998 : vector<8x32xf32>
    %cst_641 = arith.constant 1.000000e+00 : f32
    %1000 = vector.broadcast %cst_641 : f32 to vector<8x32xf32>
    %1001 = arith.addf %1000, %999 : vector<8x32xf32>
    %1002 = arith.divf %1000, %1001 : vector<8x32xf32>
    %1003 = math.tanh %997 : vector<8x32xf32>
    %1004 = arith.mulf %1002, %1003 : vector<8x32xf32>
    %1005 = arith.select %949, %1004, %950 : vector<8x32xi1>, vector<8x32xf32>
    %c0_642 = arith.constant 0 : index
    %c0_643 = arith.constant 0 : index
    %1006 = vector.load %arg14[%c0_642, %c0_643] : memref<8x32xf32, #tpu.memory_space<vmem>>, vector<8x32xf32>
    tpu.vector_store %arg14[%c0_642, %c0_643], %1005 {strides = array<i32>} : memref<8x32xf32, #tpu.memory_space<vmem>>, vector<8x32xf32>,
    %1007 = arith.select %949, %997, %951 : vector<8x32xi1>, vector<8x32xf32>
    %c0_644 = arith.constant 0 : index
    %c0_645 = arith.constant 0 : index
    %1008 = vector.load %arg15[%c0_644, %c0_645] : memref<8x32xf32, #tpu.memory_space<vmem>>, vector<8x32xf32>
    tpu.vector_store %arg15[%c0_644, %c0_645], %1007 {strides = array<i32>} : memref<8x32xf32, #tpu.memory_space<vmem>>, vector<8x32xf32>,
    %cst_646 = arith.constant 0.000000e+00 : f32
    %1009 = vector.broadcast %cst_646 : f32 to vector<8x32xf32>
    %1010 = arith.select %949, %1004, %1009 : vector<8x32xi1>, vector<8x32xf32>
    %1011 = arith.index_cast %c6_i32 : i32 to index
    %c0_647 = arith.constant 0 : index
    %c0_648 = arith.constant 0 : index
    %1012 = vector.load %arg10[%1011, %c0_647, %c0_648] : memref<8x8x32xf32, #tpu.memory_space<vmem>>, vector<1x8x32xf32>
    %1013 = vector.shape_cast %1012 : vector<1x8x32xf32> to vector<8x32xf32>
    %1014 = vector.shape_cast %1010 : vector<8x32xf32> to vector<1x8x32xf32>
    tpu.vector_store %arg10[%1011, %c0_647, %c0_648], %1014 {strides = array<i32>} : memref<8x8x32xf32, #tpu.memory_space<vmem>>, vector<1x8x32xf32>,
    %c7_i32_649 = arith.constant 7 : i32
    %1015 = arith.subi %c7_i32_649, %c6_i32 : i32
    %c1_i32_650 = arith.constant 1 : i32
    %1016 = arith.subi %c1_i32_650, %arg0 : i32
    %c8_i32_651 = arith.constant 8 : i32
    %1017 = arith.muli %1016, %c8_i32_651 : i32
    %1018 = arith.addi %1017, %1015 : i32
    %1019 = vector.broadcast %1018 : i32 to vector<8x1xi32>
    %1020 = arith.cmpi slt, %1019, %3 : vector<8x1xi32>
    %1021 = vector.shape_cast %1020 : vector<8x1xi1> to vector<8x1xi1>
    %1022 = vector.broadcast %1021 : vector<8x1xi1> to vector<8x32xi1>
    %c0_652 = arith.constant 0 : index
    %c0_653 = arith.constant 0 : index
    %1023 = vector.load %arg16[%c0_652, %c0_653] : memref<8x32xf32, #tpu.memory_space<vmem>>, vector<8x32xf32>
    %c0_654 = arith.constant 0 : index
    %c0_655 = arith.constant 0 : index
    %1024 = vector.load %arg17[%c0_654, %c0_655] : memref<8x32xf32, #tpu.memory_space<vmem>>, vector<8x32xf32>
    %c0_i32_656 = arith.constant 0 : i32
    %1025 = arith.addi %c0_i32_656, %1015 : i32
    %1026 = arith.index_cast %1025 : i32 to index
    %c0_657 = arith.constant 0 : index
    %c0_658 = arith.constant 0 : index
    %1027 = vector.load %arg13[%1026, %c0_657, %c0_658] : memref<32x8x32xf32, #tpu.memory_space<vmem>>, vector<1x8x32xf32>
    %1028 = vector.shape_cast %1027 : vector<1x8x32xf32> to vector<8x32xf32>
    %c0_659 = arith.constant 0 : index
    %c0_660 = arith.constant 0 : index
    %c0_661 = arith.constant 0 : index
    %1029 = vector.load %arg9[%c0_659, %c0_660, %c0_661] : memref<4x32x32xf32, #tpu.memory_space<vmem>>, vector<1x32x32xf32>
    %1030 = vector.shape_cast %1029 : vector<1x32x32xf32> to vector<32x32xf32>
    %cst_662 = arith.constant dense<0.000000e+00> : vector<8x32xf32>
    %1031 = tpu.matmul %1023, %1030, %cst_662 {dimension_numbers = #tpu.dot_dimension_numbers<[1], [0], [0], [1], [0, 0, 1, 1], [], []>} : vector<8x32xf32>, vector<32x32xf32>, vector<8x32xf32> -> vector<8x32xf32>
    %1032 = arith.addf %1028, %1031 : vector<8x32xf32>
    %c8_i32_663 = arith.constant 8 : i32
    %1033 = arith.addi %c8_i32_663, %1015 : i32
    %1034 = arith.index_cast %1033 : i32 to index
    %c0_664 = arith.constant 0 : index
    %c0_665 = arith.constant 0 : index
    %1035 = vector.load %arg13[%1034, %c0_664, %c0_665] : memref<32x8x32xf32, #tpu.memory_space<vmem>>, vector<1x8x32xf32>
    %1036 = vector.shape_cast %1035 : vector<1x8x32xf32> to vector<8x32xf32>
    %c1_666 = arith.constant 1 : index
    %c0_667 = arith.constant 0 : index
    %c0_668 = arith.constant 0 : index
    %1037 = vector.load %arg9[%c1_666, %c0_667, %c0_668] : memref<4x32x32xf32, #tpu.memory_space<vmem>>, vector<1x32x32xf32>
    %1038 = vector.shape_cast %1037 : vector<1x32x32xf32> to vector<32x32xf32>
    %cst_669 = arith.constant dense<0.000000e+00> : vector<8x32xf32>
    %1039 = tpu.matmul %1023, %1038, %cst_669 {dimension_numbers = #tpu.dot_dimension_numbers<[1], [0], [0], [1], [0, 0, 1, 1], [], []>} : vector<8x32xf32>, vector<32x32xf32>, vector<8x32xf32> -> vector<8x32xf32>
    %1040 = arith.addf %1036, %1039 : vector<8x32xf32>
    %c16_i32_670 = arith.constant 16 : i32
    %1041 = arith.addi %c16_i32_670, %1015 : i32
    %1042 = arith.index_cast %1041 : i32 to index
    %c0_671 = arith.constant 0 : index
    %c0_672 = arith.constant 0 : index
    %1043 = vector.load %arg13[%1042, %c0_671, %c0_672] : memref<32x8x32xf32, #tpu.memory_space<vmem>>, vector<1x8x32xf32>
    %1044 = vector.shape_cast %1043 : vector<1x8x32xf32> to vector<8x32xf32>
    %c2_673 = arith.constant 2 : index
    %c0_674 = arith.constant 0 : index
    %c0_675 = arith.constant 0 : index
    %1045 = vector.load %arg9[%c2_673, %c0_674, %c0_675] : memref<4x32x32xf32, #tpu.memory_space<vmem>>, vector<1x32x32xf32>
    %1046 = vector.shape_cast %1045 : vector<1x32x32xf32> to vector<32x32xf32>
    %cst_676 = arith.constant dense<0.000000e+00> : vector<8x32xf32>
    %1047 = tpu.matmul %1023, %1046, %cst_676 {dimension_numbers = #tpu.dot_dimension_numbers<[1], [0], [0], [1], [0, 0, 1, 1], [], []>} : vector<8x32xf32>, vector<32x32xf32>, vector<8x32xf32> -> vector<8x32xf32>
    %1048 = arith.addf %1044, %1047 : vector<8x32xf32>
    %c24_i32_677 = arith.constant 24 : i32
    %1049 = arith.addi %c24_i32_677, %1015 : i32
    %1050 = arith.index_cast %1049 : i32 to index
    %c0_678 = arith.constant 0 : index
    %c0_679 = arith.constant 0 : index
    %1051 = vector.load %arg13[%1050, %c0_678, %c0_679] : memref<32x8x32xf32, #tpu.memory_space<vmem>>, vector<1x8x32xf32>
    %1052 = vector.shape_cast %1051 : vector<1x8x32xf32> to vector<8x32xf32>
    %c3_680 = arith.constant 3 : index
    %c0_681 = arith.constant 0 : index
    %c0_682 = arith.constant 0 : index
    %1053 = vector.load %arg9[%c3_680, %c0_681, %c0_682] : memref<4x32x32xf32, #tpu.memory_space<vmem>>, vector<1x32x32xf32>
    %1054 = vector.shape_cast %1053 : vector<1x32x32xf32> to vector<32x32xf32>
    %cst_683 = arith.constant dense<0.000000e+00> : vector<8x32xf32>
    %1055 = tpu.matmul %1023, %1054, %cst_683 {dimension_numbers = #tpu.dot_dimension_numbers<[1], [0], [0], [1], [0, 0, 1, 1], [], []>} : vector<8x32xf32>, vector<32x32xf32>, vector<8x32xf32> -> vector<8x32xf32>
    %1056 = arith.addf %1052, %1055 : vector<8x32xf32>
    %1057 = arith.negf %1040 : vector<8x32xf32>
    %1058 = math.exp %1057 : vector<8x32xf32>
    %cst_684 = arith.constant 1.000000e+00 : f32
    %1059 = vector.broadcast %cst_684 : f32 to vector<8x32xf32>
    %1060 = arith.addf %1059, %1058 : vector<8x32xf32>
    %1061 = arith.divf %1059, %1060 : vector<8x32xf32>
    %1062 = arith.mulf %1061, %1024 : vector<8x32xf32>
    %1063 = arith.negf %1032 : vector<8x32xf32>
    %1064 = math.exp %1063 : vector<8x32xf32>
    %cst_685 = arith.constant 1.000000e+00 : f32
    %1065 = vector.broadcast %cst_685 : f32 to vector<8x32xf32>
    %1066 = arith.addf %1065, %1064 : vector<8x32xf32>
    %1067 = arith.divf %1065, %1066 : vector<8x32xf32>
    %1068 = math.tanh %1048 : vector<8x32xf32>
    %1069 = arith.mulf %1067, %1068 : vector<8x32xf32>
    %1070 = arith.addf %1062, %1069 : vector<8x32xf32>
    %1071 = arith.negf %1056 : vector<8x32xf32>
    %1072 = math.exp %1071 : vector<8x32xf32>
    %cst_686 = arith.constant 1.000000e+00 : f32
    %1073 = vector.broadcast %cst_686 : f32 to vector<8x32xf32>
    %1074 = arith.addf %1073, %1072 : vector<8x32xf32>
    %1075 = arith.divf %1073, %1074 : vector<8x32xf32>
    %1076 = math.tanh %1070 : vector<8x32xf32>
    %1077 = arith.mulf %1075, %1076 : vector<8x32xf32>
    %1078 = arith.select %1022, %1077, %1023 : vector<8x32xi1>, vector<8x32xf32>
    %c0_687 = arith.constant 0 : index
    %c0_688 = arith.constant 0 : index
    %1079 = vector.load %arg16[%c0_687, %c0_688] : memref<8x32xf32, #tpu.memory_space<vmem>>, vector<8x32xf32>
    tpu.vector_store %arg16[%c0_687, %c0_688], %1078 {strides = array<i32>} : memref<8x32xf32, #tpu.memory_space<vmem>>, vector<8x32xf32>,
    %1080 = arith.select %1022, %1070, %1024 : vector<8x32xi1>, vector<8x32xf32>
    %c0_689 = arith.constant 0 : index
    %c0_690 = arith.constant 0 : index
    %1081 = vector.load %arg17[%c0_689, %c0_690] : memref<8x32xf32, #tpu.memory_space<vmem>>, vector<8x32xf32>
    tpu.vector_store %arg17[%c0_689, %c0_690], %1080 {strides = array<i32>} : memref<8x32xf32, #tpu.memory_space<vmem>>, vector<8x32xf32>,
    %cst_691 = arith.constant 0.000000e+00 : f32
    %1082 = vector.broadcast %cst_691 : f32 to vector<8x32xf32>
    %1083 = arith.select %1022, %1077, %1082 : vector<8x32xi1>, vector<8x32xf32>
    %1084 = arith.index_cast %1015 : i32 to index
    %c0_692 = arith.constant 0 : index
    %c0_693 = arith.constant 0 : index
    %1085 = vector.load %arg11[%1084, %c0_692, %c0_693] : memref<8x8x32xf32, #tpu.memory_space<vmem>>, vector<1x8x32xf32>
    %1086 = vector.shape_cast %1085 : vector<1x8x32xf32> to vector<8x32xf32>
    %1087 = vector.shape_cast %1083 : vector<8x32xf32> to vector<1x8x32xf32>
    tpu.vector_store %arg11[%1084, %c0_692, %c0_693], %1087 {strides = array<i32>} : memref<8x8x32xf32, #tpu.memory_space<vmem>>, vector<1x8x32xf32>,
    %c7_i32_694 = arith.constant 7 : i32
    %c8_i32_695 = arith.constant 8 : i32
    %1088 = arith.muli %arg0, %c8_i32_695 : i32
    %1089 = arith.addi %1088, %c7_i32_694 : i32
    %1090 = vector.broadcast %1089 : i32 to vector<8x1xi32>
    %1091 = arith.cmpi slt, %1090, %3 : vector<8x1xi32>
    %1092 = vector.shape_cast %1091 : vector<8x1xi1> to vector<8x1xi1>
    %1093 = vector.broadcast %1092 : vector<8x1xi1> to vector<8x32xi1>
    %c0_696 = arith.constant 0 : index
    %c0_697 = arith.constant 0 : index
    %1094 = vector.load %arg14[%c0_696, %c0_697] : memref<8x32xf32, #tpu.memory_space<vmem>>, vector<8x32xf32>
    %c0_698 = arith.constant 0 : index
    %c0_699 = arith.constant 0 : index
    %1095 = vector.load %arg15[%c0_698, %c0_699] : memref<8x32xf32, #tpu.memory_space<vmem>>, vector<8x32xf32>
    %c0_i32_700 = arith.constant 0 : i32
    %1096 = arith.addi %c0_i32_700, %c7_i32_694 : i32
    %1097 = arith.index_cast %1096 : i32 to index
    %c0_701 = arith.constant 0 : index
    %c0_702 = arith.constant 0 : index
    %1098 = vector.load %arg12[%1097, %c0_701, %c0_702] : memref<32x8x32xf32, #tpu.memory_space<vmem>>, vector<1x8x32xf32>
    %1099 = vector.shape_cast %1098 : vector<1x8x32xf32> to vector<8x32xf32>
    %c0_703 = arith.constant 0 : index
    %c0_704 = arith.constant 0 : index
    %c0_705 = arith.constant 0 : index
    %1100 = vector.load %arg8[%c0_703, %c0_704, %c0_705] : memref<4x32x32xf32, #tpu.memory_space<vmem>>, vector<1x32x32xf32>
    %1101 = vector.shape_cast %1100 : vector<1x32x32xf32> to vector<32x32xf32>
    %cst_706 = arith.constant dense<0.000000e+00> : vector<8x32xf32>
    %1102 = tpu.matmul %1094, %1101, %cst_706 {dimension_numbers = #tpu.dot_dimension_numbers<[1], [0], [0], [1], [0, 0, 1, 1], [], []>} : vector<8x32xf32>, vector<32x32xf32>, vector<8x32xf32> -> vector<8x32xf32>
    %1103 = arith.addf %1099, %1102 : vector<8x32xf32>
    %c8_i32_707 = arith.constant 8 : i32
    %1104 = arith.addi %c8_i32_707, %c7_i32_694 : i32
    %1105 = arith.index_cast %1104 : i32 to index
    %c0_708 = arith.constant 0 : index
    %c0_709 = arith.constant 0 : index
    %1106 = vector.load %arg12[%1105, %c0_708, %c0_709] : memref<32x8x32xf32, #tpu.memory_space<vmem>>, vector<1x8x32xf32>
    %1107 = vector.shape_cast %1106 : vector<1x8x32xf32> to vector<8x32xf32>
    %c1_710 = arith.constant 1 : index
    %c0_711 = arith.constant 0 : index
    %c0_712 = arith.constant 0 : index
    %1108 = vector.load %arg8[%c1_710, %c0_711, %c0_712] : memref<4x32x32xf32, #tpu.memory_space<vmem>>, vector<1x32x32xf32>
    %1109 = vector.shape_cast %1108 : vector<1x32x32xf32> to vector<32x32xf32>
    %cst_713 = arith.constant dense<0.000000e+00> : vector<8x32xf32>
    %1110 = tpu.matmul %1094, %1109, %cst_713 {dimension_numbers = #tpu.dot_dimension_numbers<[1], [0], [0], [1], [0, 0, 1, 1], [], []>} : vector<8x32xf32>, vector<32x32xf32>, vector<8x32xf32> -> vector<8x32xf32>
    %1111 = arith.addf %1107, %1110 : vector<8x32xf32>
    %c16_i32_714 = arith.constant 16 : i32
    %1112 = arith.addi %c16_i32_714, %c7_i32_694 : i32
    %1113 = arith.index_cast %1112 : i32 to index
    %c0_715 = arith.constant 0 : index
    %c0_716 = arith.constant 0 : index
    %1114 = vector.load %arg12[%1113, %c0_715, %c0_716] : memref<32x8x32xf32, #tpu.memory_space<vmem>>, vector<1x8x32xf32>
    %1115 = vector.shape_cast %1114 : vector<1x8x32xf32> to vector<8x32xf32>
    %c2_717 = arith.constant 2 : index
    %c0_718 = arith.constant 0 : index
    %c0_719 = arith.constant 0 : index
    %1116 = vector.load %arg8[%c2_717, %c0_718, %c0_719] : memref<4x32x32xf32, #tpu.memory_space<vmem>>, vector<1x32x32xf32>
    %1117 = vector.shape_cast %1116 : vector<1x32x32xf32> to vector<32x32xf32>
    %cst_720 = arith.constant dense<0.000000e+00> : vector<8x32xf32>
    %1118 = tpu.matmul %1094, %1117, %cst_720 {dimension_numbers = #tpu.dot_dimension_numbers<[1], [0], [0], [1], [0, 0, 1, 1], [], []>} : vector<8x32xf32>, vector<32x32xf32>, vector<8x32xf32> -> vector<8x32xf32>
    %1119 = arith.addf %1115, %1118 : vector<8x32xf32>
    %c24_i32_721 = arith.constant 24 : i32
    %1120 = arith.addi %c24_i32_721, %c7_i32_694 : i32
    %1121 = arith.index_cast %1120 : i32 to index
    %c0_722 = arith.constant 0 : index
    %c0_723 = arith.constant 0 : index
    %1122 = vector.load %arg12[%1121, %c0_722, %c0_723] : memref<32x8x32xf32, #tpu.memory_space<vmem>>, vector<1x8x32xf32>
    %1123 = vector.shape_cast %1122 : vector<1x8x32xf32> to vector<8x32xf32>
    %c3_724 = arith.constant 3 : index
    %c0_725 = arith.constant 0 : index
    %c0_726 = arith.constant 0 : index
    %1124 = vector.load %arg8[%c3_724, %c0_725, %c0_726] : memref<4x32x32xf32, #tpu.memory_space<vmem>>, vector<1x32x32xf32>
    %1125 = vector.shape_cast %1124 : vector<1x32x32xf32> to vector<32x32xf32>
    %cst_727 = arith.constant dense<0.000000e+00> : vector<8x32xf32>
    %1126 = tpu.matmul %1094, %1125, %cst_727 {dimension_numbers = #tpu.dot_dimension_numbers<[1], [0], [0], [1], [0, 0, 1, 1], [], []>} : vector<8x32xf32>, vector<32x32xf32>, vector<8x32xf32> -> vector<8x32xf32>
    %1127 = arith.addf %1123, %1126 : vector<8x32xf32>
    %1128 = arith.negf %1111 : vector<8x32xf32>
    %1129 = math.exp %1128 : vector<8x32xf32>
    %cst_728 = arith.constant 1.000000e+00 : f32
    %1130 = vector.broadcast %cst_728 : f32 to vector<8x32xf32>
    %1131 = arith.addf %1130, %1129 : vector<8x32xf32>
    %1132 = arith.divf %1130, %1131 : vector<8x32xf32>
    %1133 = arith.mulf %1132, %1095 : vector<8x32xf32>
    %1134 = arith.negf %1103 : vector<8x32xf32>
    %1135 = math.exp %1134 : vector<8x32xf32>
    %cst_729 = arith.constant 1.000000e+00 : f32
    %1136 = vector.broadcast %cst_729 : f32 to vector<8x32xf32>
    %1137 = arith.addf %1136, %1135 : vector<8x32xf32>
    %1138 = arith.divf %1136, %1137 : vector<8x32xf32>
    %1139 = math.tanh %1119 : vector<8x32xf32>
    %1140 = arith.mulf %1138, %1139 : vector<8x32xf32>
    %1141 = arith.addf %1133, %1140 : vector<8x32xf32>
    %1142 = arith.negf %1127 : vector<8x32xf32>
    %1143 = math.exp %1142 : vector<8x32xf32>
    %cst_730 = arith.constant 1.000000e+00 : f32
    %1144 = vector.broadcast %cst_730 : f32 to vector<8x32xf32>
    %1145 = arith.addf %1144, %1143 : vector<8x32xf32>
    %1146 = arith.divf %1144, %1145 : vector<8x32xf32>
    %1147 = math.tanh %1141 : vector<8x32xf32>
    %1148 = arith.mulf %1146, %1147 : vector<8x32xf32>
    %1149 = arith.select %1093, %1148, %1094 : vector<8x32xi1>, vector<8x32xf32>
    %c0_731 = arith.constant 0 : index
    %c0_732 = arith.constant 0 : index
    %1150 = vector.load %arg14[%c0_731, %c0_732] : memref<8x32xf32, #tpu.memory_space<vmem>>, vector<8x32xf32>
    tpu.vector_store %arg14[%c0_731, %c0_732], %1149 {strides = array<i32>} : memref<8x32xf32, #tpu.memory_space<vmem>>, vector<8x32xf32>,
    %1151 = arith.select %1093, %1141, %1095 : vector<8x32xi1>, vector<8x32xf32>
    %c0_733 = arith.constant 0 : index
    %c0_734 = arith.constant 0 : index
    %1152 = vector.load %arg15[%c0_733, %c0_734] : memref<8x32xf32, #tpu.memory_space<vmem>>, vector<8x32xf32>
    tpu.vector_store %arg15[%c0_733, %c0_734], %1151 {strides = array<i32>} : memref<8x32xf32, #tpu.memory_space<vmem>>, vector<8x32xf32>,
    %cst_735 = arith.constant 0.000000e+00 : f32
    %1153 = vector.broadcast %cst_735 : f32 to vector<8x32xf32>
    %1154 = arith.select %1093, %1148, %1153 : vector<8x32xi1>, vector<8x32xf32>
    %1155 = arith.index_cast %c7_i32_694 : i32 to index
    %c0_736 = arith.constant 0 : index
    %c0_737 = arith.constant 0 : index
    %1156 = vector.load %arg10[%1155, %c0_736, %c0_737] : memref<8x8x32xf32, #tpu.memory_space<vmem>>, vector<1x8x32xf32>
    %1157 = vector.shape_cast %1156 : vector<1x8x32xf32> to vector<8x32xf32>
    %1158 = vector.shape_cast %1154 : vector<8x32xf32> to vector<1x8x32xf32>
    tpu.vector_store %arg10[%1155, %c0_736, %c0_737], %1158 {strides = array<i32>} : memref<8x8x32xf32, #tpu.memory_space<vmem>>, vector<1x8x32xf32>,
    %c7_i32_738 = arith.constant 7 : i32
    %1159 = arith.subi %c7_i32_738, %c7_i32_694 : i32
    %c1_i32_739 = arith.constant 1 : i32
    %1160 = arith.subi %c1_i32_739, %arg0 : i32
    %c8_i32_740 = arith.constant 8 : i32
    %1161 = arith.muli %1160, %c8_i32_740 : i32
    %1162 = arith.addi %1161, %1159 : i32
    %1163 = vector.broadcast %1162 : i32 to vector<8x1xi32>
    %1164 = arith.cmpi slt, %1163, %3 : vector<8x1xi32>
    %1165 = vector.shape_cast %1164 : vector<8x1xi1> to vector<8x1xi1>
    %1166 = vector.broadcast %1165 : vector<8x1xi1> to vector<8x32xi1>
    %c0_741 = arith.constant 0 : index
    %c0_742 = arith.constant 0 : index
    %1167 = vector.load %arg16[%c0_741, %c0_742] : memref<8x32xf32, #tpu.memory_space<vmem>>, vector<8x32xf32>
    %c0_743 = arith.constant 0 : index
    %c0_744 = arith.constant 0 : index
    %1168 = vector.load %arg17[%c0_743, %c0_744] : memref<8x32xf32, #tpu.memory_space<vmem>>, vector<8x32xf32>
    %c0_i32_745 = arith.constant 0 : i32
    %1169 = arith.addi %c0_i32_745, %1159 : i32
    %1170 = arith.index_cast %1169 : i32 to index
    %c0_746 = arith.constant 0 : index
    %c0_747 = arith.constant 0 : index
    %1171 = vector.load %arg13[%1170, %c0_746, %c0_747] : memref<32x8x32xf32, #tpu.memory_space<vmem>>, vector<1x8x32xf32>
    %1172 = vector.shape_cast %1171 : vector<1x8x32xf32> to vector<8x32xf32>
    %c0_748 = arith.constant 0 : index
    %c0_749 = arith.constant 0 : index
    %c0_750 = arith.constant 0 : index
    %1173 = vector.load %arg9[%c0_748, %c0_749, %c0_750] : memref<4x32x32xf32, #tpu.memory_space<vmem>>, vector<1x32x32xf32>
    %1174 = vector.shape_cast %1173 : vector<1x32x32xf32> to vector<32x32xf32>
    %cst_751 = arith.constant dense<0.000000e+00> : vector<8x32xf32>
    %1175 = tpu.matmul %1167, %1174, %cst_751 {dimension_numbers = #tpu.dot_dimension_numbers<[1], [0], [0], [1], [0, 0, 1, 1], [], []>} : vector<8x32xf32>, vector<32x32xf32>, vector<8x32xf32> -> vector<8x32xf32>
    %1176 = arith.addf %1172, %1175 : vector<8x32xf32>
    %c8_i32_752 = arith.constant 8 : i32
    %1177 = arith.addi %c8_i32_752, %1159 : i32
    %1178 = arith.index_cast %1177 : i32 to index
    %c0_753 = arith.constant 0 : index
    %c0_754 = arith.constant 0 : index
    %1179 = vector.load %arg13[%1178, %c0_753, %c0_754] : memref<32x8x32xf32, #tpu.memory_space<vmem>>, vector<1x8x32xf32>
    %1180 = vector.shape_cast %1179 : vector<1x8x32xf32> to vector<8x32xf32>
    %c1_755 = arith.constant 1 : index
    %c0_756 = arith.constant 0 : index
    %c0_757 = arith.constant 0 : index
    %1181 = vector.load %arg9[%c1_755, %c0_756, %c0_757] : memref<4x32x32xf32, #tpu.memory_space<vmem>>, vector<1x32x32xf32>
    %1182 = vector.shape_cast %1181 : vector<1x32x32xf32> to vector<32x32xf32>
    %cst_758 = arith.constant dense<0.000000e+00> : vector<8x32xf32>
    %1183 = tpu.matmul %1167, %1182, %cst_758 {dimension_numbers = #tpu.dot_dimension_numbers<[1], [0], [0], [1], [0, 0, 1, 1], [], []>} : vector<8x32xf32>, vector<32x32xf32>, vector<8x32xf32> -> vector<8x32xf32>
    %1184 = arith.addf %1180, %1183 : vector<8x32xf32>
    %c16_i32_759 = arith.constant 16 : i32
    %1185 = arith.addi %c16_i32_759, %1159 : i32
    %1186 = arith.index_cast %1185 : i32 to index
    %c0_760 = arith.constant 0 : index
    %c0_761 = arith.constant 0 : index
    %1187 = vector.load %arg13[%1186, %c0_760, %c0_761] : memref<32x8x32xf32, #tpu.memory_space<vmem>>, vector<1x8x32xf32>
    %1188 = vector.shape_cast %1187 : vector<1x8x32xf32> to vector<8x32xf32>
    %c2_762 = arith.constant 2 : index
    %c0_763 = arith.constant 0 : index
    %c0_764 = arith.constant 0 : index
    %1189 = vector.load %arg9[%c2_762, %c0_763, %c0_764] : memref<4x32x32xf32, #tpu.memory_space<vmem>>, vector<1x32x32xf32>
    %1190 = vector.shape_cast %1189 : vector<1x32x32xf32> to vector<32x32xf32>
    %cst_765 = arith.constant dense<0.000000e+00> : vector<8x32xf32>
    %1191 = tpu.matmul %1167, %1190, %cst_765 {dimension_numbers = #tpu.dot_dimension_numbers<[1], [0], [0], [1], [0, 0, 1, 1], [], []>} : vector<8x32xf32>, vector<32x32xf32>, vector<8x32xf32> -> vector<8x32xf32>
    %1192 = arith.addf %1188, %1191 : vector<8x32xf32>
    %c24_i32_766 = arith.constant 24 : i32
    %1193 = arith.addi %c24_i32_766, %1159 : i32
    %1194 = arith.index_cast %1193 : i32 to index
    %c0_767 = arith.constant 0 : index
    %c0_768 = arith.constant 0 : index
    %1195 = vector.load %arg13[%1194, %c0_767, %c0_768] : memref<32x8x32xf32, #tpu.memory_space<vmem>>, vector<1x8x32xf32>
    %1196 = vector.shape_cast %1195 : vector<1x8x32xf32> to vector<8x32xf32>
    %c3_769 = arith.constant 3 : index
    %c0_770 = arith.constant 0 : index
    %c0_771 = arith.constant 0 : index
    %1197 = vector.load %arg9[%c3_769, %c0_770, %c0_771] : memref<4x32x32xf32, #tpu.memory_space<vmem>>, vector<1x32x32xf32>
    %1198 = vector.shape_cast %1197 : vector<1x32x32xf32> to vector<32x32xf32>
    %cst_772 = arith.constant dense<0.000000e+00> : vector<8x32xf32>
    %1199 = tpu.matmul %1167, %1198, %cst_772 {dimension_numbers = #tpu.dot_dimension_numbers<[1], [0], [0], [1], [0, 0, 1, 1], [], []>} : vector<8x32xf32>, vector<32x32xf32>, vector<8x32xf32> -> vector<8x32xf32>
    %1200 = arith.addf %1196, %1199 : vector<8x32xf32>
    %1201 = arith.negf %1184 : vector<8x32xf32>
    %1202 = math.exp %1201 : vector<8x32xf32>
    %cst_773 = arith.constant 1.000000e+00 : f32
    %1203 = vector.broadcast %cst_773 : f32 to vector<8x32xf32>
    %1204 = arith.addf %1203, %1202 : vector<8x32xf32>
    %1205 = arith.divf %1203, %1204 : vector<8x32xf32>
    %1206 = arith.mulf %1205, %1168 : vector<8x32xf32>
    %1207 = arith.negf %1176 : vector<8x32xf32>
    %1208 = math.exp %1207 : vector<8x32xf32>
    %cst_774 = arith.constant 1.000000e+00 : f32
    %1209 = vector.broadcast %cst_774 : f32 to vector<8x32xf32>
    %1210 = arith.addf %1209, %1208 : vector<8x32xf32>
    %1211 = arith.divf %1209, %1210 : vector<8x32xf32>
    %1212 = math.tanh %1192 : vector<8x32xf32>
    %1213 = arith.mulf %1211, %1212 : vector<8x32xf32>
    %1214 = arith.addf %1206, %1213 : vector<8x32xf32>
    %1215 = arith.negf %1200 : vector<8x32xf32>
    %1216 = math.exp %1215 : vector<8x32xf32>
    %cst_775 = arith.constant 1.000000e+00 : f32
    %1217 = vector.broadcast %cst_775 : f32 to vector<8x32xf32>
    %1218 = arith.addf %1217, %1216 : vector<8x32xf32>
    %1219 = arith.divf %1217, %1218 : vector<8x32xf32>
    %1220 = math.tanh %1214 : vector<8x32xf32>
    %1221 = arith.mulf %1219, %1220 : vector<8x32xf32>
    %1222 = arith.select %1166, %1221, %1167 : vector<8x32xi1>, vector<8x32xf32>
    %c0_776 = arith.constant 0 : index
    %c0_777 = arith.constant 0 : index
    %1223 = vector.load %arg16[%c0_776, %c0_777] : memref<8x32xf32, #tpu.memory_space<vmem>>, vector<8x32xf32>
    tpu.vector_store %arg16[%c0_776, %c0_777], %1222 {strides = array<i32>} : memref<8x32xf32, #tpu.memory_space<vmem>>, vector<8x32xf32>,
    %1224 = arith.select %1166, %1214, %1168 : vector<8x32xi1>, vector<8x32xf32>
    %c0_778 = arith.constant 0 : index
    %c0_779 = arith.constant 0 : index
    %1225 = vector.load %arg17[%c0_778, %c0_779] : memref<8x32xf32, #tpu.memory_space<vmem>>, vector<8x32xf32>
    tpu.vector_store %arg17[%c0_778, %c0_779], %1224 {strides = array<i32>} : memref<8x32xf32, #tpu.memory_space<vmem>>, vector<8x32xf32>,
    %cst_780 = arith.constant 0.000000e+00 : f32
    %1226 = vector.broadcast %cst_780 : f32 to vector<8x32xf32>
    %1227 = arith.select %1166, %1221, %1226 : vector<8x32xi1>, vector<8x32xf32>
    %1228 = arith.index_cast %1159 : i32 to index
    %c0_781 = arith.constant 0 : index
    %c0_782 = arith.constant 0 : index
    %1229 = vector.load %arg11[%1228, %c0_781, %c0_782] : memref<8x8x32xf32, #tpu.memory_space<vmem>>, vector<1x8x32xf32>
    %1230 = vector.shape_cast %1229 : vector<1x8x32xf32> to vector<8x32xf32>
    %1231 = vector.shape_cast %1227 : vector<8x32xf32> to vector<1x8x32xf32>
    tpu.vector_store %arg11[%1228, %c0_781, %c0_782], %1231 {strides = array<i32>} : memref<8x8x32xf32, #tpu.memory_space<vmem>>, vector<1x8x32xf32>,
    %c8_i32_783 = arith.constant 8 : i32
    return
  }
  func.func @transform_0(%arg0: i32) -> (i32, i32) {
    %c0_i32 = arith.constant 0 : i32
    %c0_i32_0 = arith.constant 0 : i32
    %c0_i32_1 = arith.constant 0 : i32
    return %c0_i32, %c0_i32_0 : i32, i32
  }
  func.func @transform_1(%arg0: i32) -> (i32, i32, i32) {
    %c0_i32 = arith.constant 0 : i32
    %c0_i32_0 = arith.constant 0 : i32
    %c0_i32_1 = arith.constant 0 : i32
    return %arg0, %c0_i32, %c0_i32_0 : i32, i32, i32
  }
  func.func @transform_2(%arg0: i32) -> (i32, i32, i32) {
    %c1_i32 = arith.constant 1 : i32
    %0 = arith.subi %c1_i32, %arg0 : i32
    %c0_i32 = arith.constant 0 : i32
    %c0_i32_0 = arith.constant 0 : i32
    %c0_i32_1 = arith.constant 0 : i32
    return %0, %c0_i32, %c0_i32_0 : i32, i32, i32
  }
  func.func @transform_3(%arg0: i32) -> (i32, i32, i32) {
    %c0_i32 = arith.constant 0 : i32
    %c0_i32_0 = arith.constant 0 : i32
    %c0_i32_1 = arith.constant 0 : i32
    %c0_i32_2 = arith.constant 0 : i32
    return %c0_i32, %c0_i32_0, %c0_i32_1 : i32, i32, i32
  }
  func.func @transform_4(%arg0: i32) -> (i32, i32, i32) {
    %c0_i32 = arith.constant 0 : i32
    %c0_i32_0 = arith.constant 0 : i32
    %c0_i32_1 = arith.constant 0 : i32
    %c0_i32_2 = arith.constant 0 : i32
    return %c0_i32, %c0_i32_0, %c0_i32_1 : i32, i32, i32
  }
  func.func @transform_5(%arg0: i32) -> (i32, i32, i32) {
    %c0_i32 = arith.constant 0 : i32
    %c0_i32_0 = arith.constant 0 : i32
    %c0_i32_1 = arith.constant 0 : i32
    %c0_i32_2 = arith.constant 0 : i32
    return %c0_i32, %c0_i32_0, %c0_i32_1 : i32, i32, i32
  }
  func.func @transform_6(%arg0: i32) -> (i32, i32, i32) {
    %c0_i32 = arith.constant 0 : i32
    %c0_i32_0 = arith.constant 0 : i32
    %c0_i32_1 = arith.constant 0 : i32
    %c0_i32_2 = arith.constant 0 : i32
    return %c0_i32, %c0_i32_0, %c0_i32_1 : i32, i32, i32
  }
  func.func @transform_7(%arg0: i32) -> (i32, i32, i32) {
    %c0_i32 = arith.constant 0 : i32
    %c0_i32_0 = arith.constant 0 : i32
    %c0_i32_1 = arith.constant 0 : i32
    %c0_i32_2 = arith.constant 0 : i32
    return %c0_i32, %c0_i32_0, %c0_i32_1 : i32, i32, i32
  }
  func.func @transform_8(%arg0: i32) -> (i32, i32, i32) {
    %c0_i32 = arith.constant 0 : i32
    %c0_i32_0 = arith.constant 0 : i32
    %c0_i32_1 = arith.constant 0 : i32
    %c0_i32_2 = arith.constant 0 : i32
    return %c0_i32, %c0_i32_0, %c0_i32_1 : i32, i32, i32
  }
  func.func @transform_9(%arg0: i32) -> (i32, i32, i32) {
    %c0_i32 = arith.constant 0 : i32
    %c0_i32_0 = arith.constant 0 : i32
    %c0_i32_1 = arith.constant 0 : i32
    return %arg0, %c0_i32, %c0_i32_0 : i32, i32, i32
  }
  func.func @transform_10(%arg0: i32) -> (i32, i32, i32) {
    %c1_i32 = arith.constant 1 : i32
    %0 = arith.subi %c1_i32, %arg0 : i32
    %c0_i32 = arith.constant 0 : i32
    %c0_i32_0 = arith.constant 0 : i32
    %c0_i32_1 = arith.constant 0 : i32
    return %0, %c0_i32, %c0_i32_0 : i32, i32, i32
  }
}

</mosaic_0001>

<llo_original>
// kernel: tpu_custom_call.1
$region0: #{tpu_custom_call.1}
  #allocation0 [shape = 'u32[]', space=smem, size = 0x4, offset = 0x4, fixed_abs, tag = 'smem constant byte address 0x4 - core index']
  #allocation1 [shape = 'u32[72,128]{1,0:T(1,128)}', space=vmem, size = 0x9000, scoped, tag = 'internal scratch']
  #allocation2 [shape = 'f32[32,8,32]{2,1,0:T(8,128)}', space=vmem, size = 0x20000, scoped, tag = 'scratch operand']
  #allocation3 [shape = 'f32[32,8,32]{2,1,0:T(8,128)}', space=vmem, size = 0x20000, scoped, tag = 'scratch operand']
  #allocation4 [shape = 'f32[8,32]{1,0:T(8,128)}', space=vmem, size = 0x1000, scoped, tag = 'scratch operand']
  #allocation5 [shape = 'f32[8,32]{1,0:T(8,128)}', space=vmem, size = 0x1000, scoped, tag = 'scratch operand']
  #allocation6 [shape = 'f32[8,32]{1,0:T(8,128)}', space=vmem, size = 0x1000, scoped, tag = 'scratch operand']
  #allocation7 [shape = 'f32[8,32]{1,0:T(8,128)}', space=vmem, size = 0x1000, scoped, tag = 'scratch operand']
  %s0 = inlined_call_operand.vmem [shape: s32[8,1], index: 0, kind: input, shape index: {}]
  %s1 = inlined_call_operand.hbm [shape: f32[16,8,32], index: 1, kind: input, shape index: {}]
  %s2 = inlined_call_operand.hbm [shape: f32[16,8,32], index: 2, kind: input, shape index: {}]
  %s3 = inlined_call_operand.hbm [shape: f32[4,32,32], index: 3, kind: input, shape index: {}]
  %s4 = inlined_call_operand.hbm [shape: f32[4,32,32], index: 4, kind: input, shape index: {}]
  %s5 = inlined_call_operand.vmem [shape: f32[4,1,32], index: 5, kind: input, shape index: {}]
  %s6 = inlined_call_operand.vmem [shape: f32[4,1,32], index: 6, kind: input, shape index: {}]
  %s7 = inlined_call_operand.hbm [shape: f32[4,32,32], index: 7, kind: input, shape index: {}]
  %s8 = inlined_call_operand.hbm [shape: f32[4,32,32], index: 8, kind: input, shape index: {}]
  %s9 = inlined_call_operand.hbm [shape: f32[16,8,32], index: 9, kind: output, shape index: {0}]
  %s10 = inlined_call_operand.hbm [shape: f32[16,8,32], index: 10, kind: output, shape index: {1}]
  %11 = xla_tuple %s9, %s10
  %s12 = sld [smem:[#allocation0]]
  $region105: #{tpu_custom_call.1} parent=0
    _
  %s14 = ssub.s32 1, %s12
  %s15 = scalar_select 0, %s14, %s12
  $region1: #{tpu_custom_call.1} parent=0
    #allocation8 [shape = 'u8[65536]{0}', space=vmem, size = 0x10000, scoped, tag = 'input window, operand 1']
    #allocation9 [shape = 's32[2]{0}', space=sflag, size = 0x8, scoped, tag = 'scoped memory for tpu_custom_call.1']
    #allocation10 [shape = 's32[2]{0}', space=sflag, size = 0x8, scoped, tag = 'scoped memory for tpu_custom_call.1']
    #allocation11 [shape = 'u8[65536]{0}', space=vmem, size = 0x10000, scoped, tag = 'input window, operand 2']
    #allocation12 [shape = 's32[2]{0}', space=sflag, size = 0x8, scoped, tag = 'scoped memory for tpu_custom_call.1']
    #allocation13 [shape = 'u8[65536]{0}', space=vmem, size = 0x10000, scoped, tag = 'input window, operand 3, single buffered']
    #allocation14 [shape = 'u8[65536]{0}', space=vmem, size = 0x10000, scoped, tag = 'input window, operand 4, single buffered']
    #allocation15 [shape = 's32[1]{0}', space=sflag, size = 0x4, scoped, tag = 'scoped memory for tpu_custom_call.1']
    #allocation16 [shape = 'u8[65536]{0}', space=vmem, size = 0x10000, scoped, tag = 'input window, operand 7, single buffered']
    #allocation17 [shape = 'u8[65536]{0}', space=vmem, size = 0x10000, scoped, tag = 'input window, operand 8, single buffered']
    #allocation18 [shape = 's32[1]{0}', space=sflag, size = 0x4, scoped, tag = 'scoped memory for tpu_custom_call.1']
    #allocation19 [shape = 'u8[65536]{0}', space=vmem, size = 0x10000, scoped, tag = 'output window, operand 0']
    #allocation20 [shape = 'u8[65536]{0}', space=vmem, size = 0x10000, scoped, tag = 'output window, operand 1']
    #allocation21 [shape = 's32[2]{0}', space=sflag, size = 0x8, scoped, tag = 'scoped memory for tpu_custom_call.1']
    %16 = vsyncpa [#allocation9], 0
    %s17 = scalar_lea.sflag [#allocation9], 1
    %18 = vsyncpa %s17, 0
    %19 = vsyncpa [#allocation12], 0
    %s20 = scalar_lea.sflag [#allocation12], 1
    %21 = vsyncpa %s20, 0
    %22 = vsyncpa [#allocation15], 0
    %23 = vsyncpa [#allocation18], 0
    %24 = vsyncpa [#allocation10], 0
    %s25 = scalar_lea.sflag [#allocation10], 1
    %26 = vsyncpa %s25, 0
    %27 = vsyncpa [#allocation21], 0
    %s28 = scalar_lea.sflag [#allocation21], 1
    %29 = vsyncpa %s28, 0
    loop: start=0, step=1, limit=4
    $region2: #{tpu_custom_call.1} parent=1 // loop_pre_header
      _
    $region3: #{tpu_custom_call.1} parent=1 // loop_header
      %s31 = sphi 0, %s35
      %p32 = scmp.ge.s32.totalorder %s31, 4
      %s39 = sphi 0, %s39
      %s41 = sphi 0, %s39
      %s42 = sphi 0, %s41
      %s56 = sphi 0, %s42
      %s62 = sphi 0, %s64
      %s65 = sphi 0, %s62
      %s66 = sphi 0, %s65
      %s82 = sphi 0, %s66
      %s90 = sphi 0, %s92
      %s93 = sphi 0, %s90
      %s94 = sphi 0, %s93
      %s110 = sphi 0, %s94
      %s114 = sphi 0, %s114
      %s116 = sphi 0, %s114
      %s117 = sphi 0, %s116
      %s131 = sphi 0, %s117
      %s135 = sphi 0, %s135
      %s137 = sphi 0, %s135
      %s138 = sphi 0, %s137
      %s152 = sphi 0, %s138
      %s156 = sphi 0, %s156
      %s158 = sphi 0, %s156
      %s159 = sphi 0, %s158
      %s173 = sphi 0, %s159
      %s177 = sphi 0, %s177
      %s179 = sphi 0, %s177
      %s180 = sphi 0, %s179
      %s194 = sphi 0, %s180
      %s198 = sphi 0, %s198
      %s200 = sphi 0, %s198
      %s201 = sphi 0, %s200
      %s215 = sphi 0, %s201
      %s219 = sphi 0, %s219
      %s221 = sphi 0, %s219
      %s222 = sphi 0, %s221
      %s236 = sphi 0, %s222
      %s242 = sphi 0, %s244
      %s245 = sphi 0, %s242
      %s246 = sphi 0, %s245
      %s262 = sphi 0, %s246
      %s270 = sphi 0, %s272
      %s273 = sphi 0, %s270
      %s274 = sphi 0, %s273
      %s290 = sphi 0, %s274
    $region4: #{tpu_custom_call.1} parent=1 // loop_header_branch
      %34 = sbr.rel (%p32) target = $region8
    $region5: #{tpu_custom_call.1} parent=1 // loop_body
      %s36 = ssub.s32 %s31, 1
      %s37 = ssub.s32 %s31, 2
      %s38 = sadd.s32 %s31, 1
      %s40 = sadd.s32 %s39, 1
      %p43 = scmp.eq.s32.totalorder %s31, 1
      %p44 = scmp.ne.s32.totalorder %s39, %s41
      %p45 = scmp.eq.s32.totalorder %s31, 0
      %p46 = por %p44, %p45
      %p47 = scmp.ne.s32.totalorder %s39, %s41
      %p48 = scmp.eq.s32.totalorder %s36, 1
      %p49 = por %p47, %p48
      %p50 = scmp.ne.s32.totalorder %s41, %s42
      %p51 = scmp.eq.s32.totalorder %s36, 0
      %p52 = por %p50, %p51
      %p53 = scmp.ne.s32.totalorder %s41, %s42
      %p54 = scmp.eq.s32.totalorder %s37, 1
      %p55 = por %p53, %p54
      %p57 = scmp.ne.s32.totalorder %s42, %s56
      %p58 = scmp.eq.s32.totalorder %s37, 0
      %p59 = por %p57, %p58
      %s60 = ssub.s32 %s31, %s38
      %p61 = scmp.eq.s32.totalorder %s60, 0
      %s63 = sadd.s32 %s62, 1
      %s64 = scalar_select %p61, %s62, %s63
      %p67 = pneg %p61
      %p68 = scmp.eq.s32.totalorder %s31, 1
      %p69 = por %p67, %p68
      %p70 = scmp.ne.s32.totalorder %s62, %s65
      %p71 = scmp.eq.s32.totalorder %s31, 0
      %p72 = por %p70, %p71
      %p73 = scmp.ne.s32.totalorder %s62, %s65
      %p74 = scmp.eq.s32.totalorder %s36, 1
      %p75 = por %p73, %p74
      %p76 = scmp.ne.s32.totalorder %s65, %s66
      %p77 = scmp.eq.s32.totalorder %s36, 0
      %p78 = por %p76, %p77
      %p79 = scmp.ne.s32.totalorder %s65, %s66
      %p80 = scmp.eq.s32.totalorder %s37, 1
      %p81 = por %p79, %p80
      %p83 = scmp.ne.s32.totalorder %s66, %s82
      %p84 = scmp.eq.s32.totalorder %s37, 0
      %p85 = por %p83, %p84
      %s86 = ssub.s32 1, %s31
      %s87 = ssub.s32 1, %s38
      %s88 = ssub.s32 %s86, %s87
      %p89 = scmp.eq.s32.totalorder %s88, 0
      %s91 = sadd.s32 %s90, 1
      %s92 = scalar_select %p89, %s90, %s91
      %p95 = pneg %p89
      %p96 = scmp.eq.s32.totalorder %s31, 1
      %p97 = por %p95, %p96
      %p98 = scmp.ne.s32.totalorder %s90, %s93
      %p99 = scmp.eq.s32.totalorder %s31, 0
      %p100 = por %p98, %p99
      %p101 = scmp.ne.s32.totalorder %s90, %s93
      %p102 = scmp.eq.s32.totalorder %s36, 1
      %p103 = por %p101, %p102
      %p104 = scmp.ne.s32.totalorder %s93, %s94
      %p105 = scmp.eq.s32.totalorder %s36, 0
      %p106 = por %p104, %p105
      %p107 = scmp.ne.s32.totalorder %s93, %s94
      %p108 = scmp.eq.s32.totalorder %s37, 1
      %p109 = por %p107, %p108
      %p111 = scmp.ne.s32.totalorder %s94, %s110
      %p112 = scmp.eq.s32.totalorder %s37, 0
      %p113 = por %p111, %p112
      %s115 = sadd.s32 %s114, 1
      %p118 = scmp.eq.s32.totalorder %s31, 1
      %p119 = scmp.ne.s32.totalorder %s114, %s116
      %p120 = scmp.eq.s32.totalorder %s31, 0
      %p121 = por %p119, %p120
      %p122 = scmp.ne.s32.totalorder %s114, %s116
      %p123 = scmp.eq.s32.totalorder %s36, 1
      %p124 = por %p122, %p123
      %p125 = scmp.ne.s32.totalorder %s116, %s117
      %p126 = scmp.eq.s32.totalorder %s36, 0
      %p127 = por %p125, %p126
      %p128 = scmp.ne.s32.totalorder %s116, %s117
      %p129 = scmp.eq.s32.totalorder %s37, 1
      %p130 = por %p128, %p129
      %p132 = scmp.ne.s32.totalorder %s117, %s131
      %p133 = scmp.eq.s32.totalorder %s37, 0
      %p134 = por %p132, %p133
      %s136 = sadd.s32 %s135, 1
      %p139 = scmp.eq.s32.totalorder %s31, 1
      %p140 = scmp.ne.s32.totalorder %s135, %s137
      %p141 = scmp.eq.s32.totalorder %s31, 0
      %p142 = por %p140, %p141
      %p143 = scmp.ne.s32.totalorder %s135, %s137
      %p144 = scmp.eq.s32.totalorder %s36, 1
      %p145 = por %p143, %p144
      %p146 = scmp.ne.s32.totalorder %s137, %s138
      %p147 = scmp.eq.s32.totalorder %s36, 0
      %p148 = por %p146, %p147
      %p149 = scmp.ne.s32.totalorder %s137, %s138
      %p150 = scmp.eq.s32.totalorder %s37, 1
      %p151 = por %p149, %p150
      %p153 = scmp.ne.s32.totalorder %s138, %s152
      %p154 = scmp.eq.s32.totalorder %s37, 0
      %p155 = por %p153, %p154
      %s157 = sadd.s32 %s156, 1
      %p160 = scmp.eq.s32.totalorder %s31, 1
      %p161 = scmp.ne.s32.totalorder %s156, %s158
      %p162 = scmp.eq.s32.totalorder %s31, 0
      %p163 = por %p161, %p162
      %p164 = scmp.ne.s32.totalorder %s156, %s158
      %p165 = scmp.eq.s32.totalorder %s36, 1
      %p166 = por %p164, %p165
      %p167 = scmp.ne.s32.totalorder %s158, %s159
      %p168 = scmp.eq.s32.totalorder %s36, 0
      %p169 = por %p167, %p168
      %p170 = scmp.ne.s32.totalorder %s158, %s159
      %p171 = scmp.eq.s32.totalorder %s37, 1
      %p172 = por %p170, %p171
      %p174 = scmp.ne.s32.totalorder %s159, %s173
      %p175 = scmp.eq.s32.totalorder %s37, 0
      %p176 = por %p174, %p175
      %s178 = sadd.s32 %s177, 1
      %p181 = scmp.eq.s32.totalorder %s31, 1
      %p182 = scmp.ne.s32.totalorder %s177, %s179
      %p183 = scmp.eq.s32.totalorder %s31, 0
      %p184 = por %p182, %p183
      %p185 = scmp.ne.s32.totalorder %s177, %s179
      %p186 = scmp.eq.s32.totalorder %s36, 1
      %p187 = por %p185, %p186
      %p188 = scmp.ne.s32.totalorder %s179, %s180
      %p189 = scmp.eq.s32.totalorder %s36, 0
      %p190 = por %p188, %p189
      %p191 = scmp.ne.s32.totalorder %s179, %s180
      %p192 = scmp.eq.s32.totalorder %s37, 1
      %p193 = por %p191, %p192
      %p195 = scmp.ne.s32.totalorder %s180, %s194
      %p196 = scmp.eq.s32.totalorder %s37, 0
      %p197 = por %p195, %p196
      %s199 = sadd.s32 %s198, 1
      %p202 = scmp.eq.s32.totalorder %s31, 1
      %p203 = scmp.ne.s32.totalorder %s198, %s200
      %p204 = scmp.eq.s32.totalorder %s31, 0
      %p205 = por %p203, %p204
      %p206 = scmp.ne.s32.totalorder %s198, %s200
      %p207 = scmp.eq.s32.totalorder %s36, 1
      %p208 = por %p206, %p207
      %p209 = scmp.ne.s32.totalorder %s200, %s201
      %p210 = scmp.eq.s32.totalorder %s36, 0
      %p211 = por %p209, %p210
      %p212 = scmp.ne.s32.totalorder %s200, %s201
      %p213 = scmp.eq.s32.totalorder %s37, 1
      %p214 = por %p212, %p213
      %p216 = scmp.ne.s32.totalorder %s201, %s215
      %p217 = scmp.eq.s32.totalorder %s37, 0
      %p218 = por %p216, %p217
      %s220 = sadd.s32 %s219, 1
      %p223 = scmp.eq.s32.totalorder %s31, 1
      %p224 = scmp.ne.s32.totalorder %s219, %s221
      %p225 = scmp.eq.s32.totalorder %s31, 0
      %p226 = por %p224, %p225
      %p227 = scmp.ne.s32.totalorder %s219, %s221
      %p228 = scmp.eq.s32.totalorder %s36, 1
      %p229 = por %p227, %p228
      %p230 = scmp.ne.s32.totalorder %s221, %s222
      %p231 = scmp.eq.s32.totalorder %s36, 0
      %p232 = por %p230, %p231
      %p233 = scmp.ne.s32.totalorder %s221, %s222
      %p234 = scmp.eq.s32.totalorder %s37, 1
      %p235 = por %p233, %p234
      %p237 = scmp.ne.s32.totalorder %s222, %s236
      %p238 = scmp.eq.s32.totalorder %s37, 0
      %p239 = por %p237, %p238
      %s240 = ssub.s32 %s31, %s38
      %p241 = scmp.eq.s32.totalorder %s240, 0
      %s243 = sadd.s32 %s242, 1
      %s244 = scalar_select %p241, %s242, %s243
      %p247 = pneg %p241
      %p248 = scmp.eq.s32.totalorder %s31, 1
      %p249 = por %p247, %p248
      %p250 = scmp.ne.s32.totalorder %s242, %s245
      %p251 = scmp.eq.s32.totalorder %s31, 0
      %p252 = por %p250, %p251
      %p253 = scmp.ne.s32.totalorder %s242, %s245
      %p254 = scmp.eq.s32.totalorder %s36, 1
      %p255 = por %p253, %p254
      %p256 = scmp.ne.s32.totalorder %s245, %s246
      %p257 = scmp.eq.s32.totalorder %s36, 0
      %p258 = por %p256, %p257
      %p259 = scmp.ne.s32.totalorder %s245, %s246
      %p260 = scmp.eq.s32.totalorder %s37, 1
      %p261 = por %p259, %p260
      %p263 = scmp.ne.s32.totalorder %s246, %s262
      %p264 = scmp.eq.s32.totalorder %s37, 0
      %p265 = por %p263, %p264
      %s266 = ssub.s32 1, %s31
      %s267 = ssub.s32 1, %s38
      %s268 = ssub.s32 %s266, %s267
      %p269 = scmp.eq.s32.totalorder %s268, 0
      %s271 = sadd.s32 %s270, 1
      %s272 = scalar_select %p269, %s270, %s271
      %p275 = pneg %p269
      %p276 = scmp.eq.s32.totalorder %s31, 1
      %p277 = por %p275, %p276
      %p278 = scmp.ne.s32.totalorder %s270, %s273
      %p279 = scmp.eq.s32.totalorder %s31, 0
      %p280 = por %p278, %p279
      %p281 = scmp.ne.s32.totalorder %s270, %s273
      %p282 = scmp.eq.s32.totalorder %s36, 1
      %p283 = por %p281, %p282
      %p284 = scmp.ne.s32.totalorder %s273, %s274
      %p285 = scmp.eq.s32.totalorder %s36, 0
      %p286 = por %p284, %p285
      %p287 = scmp.ne.s32.totalorder %s273, %s274
      %p288 = scmp.eq.s32.totalorder %s37, 1
      %p289 = por %p287, %p288
      %p291 = scmp.ne.s32.totalorder %s274, %s290
      %p292 = scmp.eq.s32.totalorder %s37, 0
      %p293 = por %p291, %p292
      %p294 = scmp.le.s32.totalorder 1, %s31
      %p295 = scmp.lt.s32.totalorder %s31, 3
      %p296 = pnand %p294, %p295
      %p297 = pneg %p296
      // Predicated region
      $region9: #{tpu_custom_call.1} parent=5 // pred_check
        _
      $region10: #{tpu_custom_call.1} parent=5 // pred_check_branch
        %299 = sbr.rel (%p296) target = $region12
      $region11: #{tpu_custom_call.1} parent=5 // pred_region
        %s300 = ssub.s32 %s31, 1
        // Predicated region
        $region13: #{tpu_custom_call.1} parent=11 // pred_check
          %p301 = pneg %p52
        $region14: #{tpu_custom_call.1} parent=11 // pred_check_branch
          %303 = sbr.rel (%p301) target = $region16
        $region15: #{tpu_custom_call.1} parent=11 // pred_region
          _
        $region16: #{tpu_custom_call.1} parent=11 // pred_fallthru
          _
        // Predicated region
        $region17: #{tpu_custom_call.1} parent=11 // pred_check
          %p304 = pneg %p127
        $region18: #{tpu_custom_call.1} parent=11 // pred_check_branch
          %306 = sbr.rel (%p304) target = $region20
        $region19: #{tpu_custom_call.1} parent=11 // pred_region
          %308 = vsyncadd [#allocation12], 0
          %s309 = sshll.u32 %s3, 4
          %s310 = int_to_ptr.hbm [resolvable:$true] %s309
          %s311 = sshll.u32 [#allocation13], 4
          %s312 = int_to_ptr.vmem [resolvable:$true] %s311
          %317 = dma.hbm_to_vmem [thread:$0]  %s310, 2048, %s312, [#allocation12], 128, 128, 8
        $region20: #{tpu_custom_call.1} parent=11 // pred_fallthru
          _
        // Predicated region
        $region21: #{tpu_custom_call.1} parent=11 // pred_check
          %p318 = pneg %p148
        $region22: #{tpu_custom_call.1} parent=11 // pred_check_branch
          %320 = sbr.rel (%p318) target = $region24
        $region23: #{tpu_custom_call.1} parent=11 // pred_region
          %322 = vsyncadd [#allocation15], 0
          %s323 = sshll.u32 %s4, 4
          %s324 = int_to_ptr.hbm [resolvable:$true] %s323
          %s325 = sshll.u32 [#allocation14], 4
          %s326 = int_to_ptr.vmem [resolvable:$true] %s325
          %331 = dma.hbm_to_vmem [thread:$0]  %s324, 2048, %s326, [#allocation15], 128, 128, 8
        $region24: #{tpu_custom_call.1} parent=11 // pred_fallthru
          _
        // Predicated region
        $region25: #{tpu_custom_call.1} parent=11 // pred_check
          %p332 = pneg %p169
        $region26: #{tpu_custom_call.1} parent=11 // pred_check_branch
          %334 = sbr.rel (%p332) target = $region28
        $region27: #{tpu_custom_call.1} parent=11 // pred_region
          _
        $region28: #{tpu_custom_call.1} parent=11 // pred_fallthru
          _
        // Predicated region
        $region29: #{tpu_custom_call.1} parent=11 // pred_check
          %p335 = pneg %p190
        $region30: #{tpu_custom_call.1} parent=11 // pred_check_branch
          %337 = sbr.rel (%p335) target = $region32
        $region31: #{tpu_custom_call.1} parent=11 // pred_region
          _
        $region32: #{tpu_custom_call.1} parent=11 // pred_fallthru
          _
        // Predicated region
        $region33: #{tpu_custom_call.1} parent=11 // pred_check
          %p338 = pneg %p211
        $region34: #{tpu_custom_call.1} parent=11 // pred_check_branch
          %340 = sbr.rel (%p338) target = $region36
        $region35: #{tpu_custom_call.1} parent=11 // pred_region
          %342 = vsyncadd [#allocation15], 0
          %s343 = sshll.u32 %s7, 4
          %s344 = int_to_ptr.hbm [resolvable:$true] %s343
          %s345 = sshll.u32 [#allocation16], 4
          %s346 = int_to_ptr.vmem [resolvable:$true] %s345
          %351 = dma.hbm_to_vmem [thread:$0]  %s344, 2048, %s346, [#allocation15], 128, 128, 8
        $region36: #{tpu_custom_call.1} parent=11 // pred_fallthru
          _
        // Predicated region
        $region37: #{tpu_custom_call.1} parent=11 // pred_check
          %p352 = pneg %p232
        $region38: #{tpu_custom_call.1} parent=11 // pred_check_branch
          %354 = sbr.rel (%p352) target = $region40
        $region39: #{tpu_custom_call.1} parent=11 // pred_region
          %356 = vsyncadd [#allocation18], 0
          %s357 = sshll.u32 %s8, 4
          %s358 = int_to_ptr.hbm [resolvable:$true] %s357
          %s359 = sshll.u32 [#allocation17], 4
          %s360 = int_to_ptr.vmem [resolvable:$true] %s359
          %365 = dma.hbm_to_vmem [thread:$0]  %s358, 2048, %s360, [#allocation18], 128, 128, 8
        $region40: #{tpu_custom_call.1} parent=11 // pred_fallthru
          _
      $region12: #{tpu_custom_call.1} parent=5 // pred_fallthru
        _
      %p366 = scmp.lt.s32.totalorder %s31, 2
      // Predicated region
      $region41: #{tpu_custom_call.1} parent=5 // pred_check
        %p367 = pneg %p366
      $region42: #{tpu_custom_call.1} parent=5 // pred_check_branch
        %369 = sbr.rel (%p367) target = $region44
      $region43: #{tpu_custom_call.1} parent=5 // pred_region
        // Predicated region
        $region45: #{tpu_custom_call.1} parent=43 // pred_check
          %p370 = pneg %p72
        $region46: #{tpu_custom_call.1} parent=43 // pred_check_branch
          %372 = sbr.rel (%p370) target = $region48
        $region47: #{tpu_custom_call.1} parent=43 // pred_region
          %s373 = sand.u32 %s62, 1
          %s374 = scalar_lea.sflag [#allocation9], %s373
          %s375 = sand.u32 %s62, 1
          %s376 = smul.addr %s375, 64
          %s377 = scalar_lea.vmem [#allocation8], %s376
          %s378 = smul.u32 8, %s31
          %380 = vsyncadd %s374, 0
          %s381 = smul.addr %s378, 8
          %s382 = scalar_lea.hbm %s1, %s381
          %s383 = sshll.u32 %s382, 4
          %s384 = int_to_ptr.hbm [resolvable:$true] %s383
          %s385 = sshll.u32 %s377, 4
          %s386 = int_to_ptr.vmem [resolvable:$true] %s385
          %391 = dma.hbm_to_vmem [thread:$0]  %s384, 1024, %s386, %s374, 128, 128, 8
        $region48: #{tpu_custom_call.1} parent=43 // pred_fallthru
          _
        // Predicated region
        $region49: #{tpu_custom_call.1} parent=43 // pred_check
          %p392 = pneg %p100
        $region50: #{tpu_custom_call.1} parent=43 // pred_check_branch
          %394 = sbr.rel (%p392) target = $region52
        $region51: #{tpu_custom_call.1} parent=43 // pred_region
          %s395 = sand.u32 %s31, 1
          %s396 = scalar_lea.sflag [#allocation12], %s395
          %s397 = sand.u32 %s90, 1
          %s398 = smul.addr %s397, 64
          %s399 = scalar_lea.vmem [#allocation11], %s398
          %s400 = ssub.s32 1, %s31
          %s401 = smul.u32 8, %s400
          %403 = vsyncadd %s396, 0
          %s404 = smul.addr %s401, 8
          %s405 = scalar_lea.hbm %s2, %s404
          %s406 = sshll.u32 %s405, 4
          %s407 = int_to_ptr.hbm [resolvable:$true] %s406
          %s408 = sshll.u32 %s399, 4
          %s409 = int_to_ptr.vmem [resolvable:$true] %s408
          %414 = dma.hbm_to_vmem [thread:$0]  %s407, 1024, %s409, %s396, 128, 128, 8
        $region52: #{tpu_custom_call.1} parent=43 // pred_fallthru
          _
      $region44: #{tpu_custom_call.1} parent=5 // pred_fallthru
        _
      %p415 = scmp.le.s32.totalorder 1, %s31
      %p416 = scmp.lt.s32.totalorder %s31, 3
      %p417 = pnand %p415, %p416
      %p418 = pneg %p417
      // Predicated region
      $region53: #{tpu_custom_call.1} parent=5 // pred_check
        _
      $region54: #{tpu_custom_call.1} parent=5 // pred_check_branch
        %420 = sbr.rel (%p417) target = $region56
      $region55: #{tpu_custom_call.1} parent=5 // pred_region
        %s421 = ssub.s32 %s31, 1
        %s422 = sand.u32 %s65, 1
        %s423 = scalar_lea.sflag [#allocation9], %s422
        %s424 = sand.u32 %s65, 1
        %s425 = smul.addr %s424, 64
        %s426 = scalar_lea.vmem [#allocation8], %s425
        // Predicated region
        $region57: #{tpu_custom_call.1} parent=55 // pred_check
          %p427 = pneg %p78
        $region58: #{tpu_custom_call.1} parent=55 // pred_check_branch
          %429 = sbr.rel (%p427) target = $region60
        $region59: #{tpu_custom_call.1} parent=55 // pred_region
          %431 = dma.done %s423, 1024
        $region60: #{tpu_custom_call.1} parent=55 // pred_fallthru
          _
        %s432 = sand.u32 %s36, 1
        %s433 = scalar_lea.sflag [#allocation12], %s432
        %s434 = sand.u32 %s93, 1
        %s435 = smul.addr %s434, 64
        %s436 = scalar_lea.vmem [#allocation11], %s435
        // Predicated region
        $region61: #{tpu_custom_call.1} parent=55 // pred_check
          %p437 = pneg %p106
        $region62: #{tpu_custom_call.1} parent=55 // pred_check_branch
          %439 = sbr.rel (%p437) target = $region64
        $region63: #{tpu_custom_call.1} parent=55 // pred_region
          %441 = dma.done %s433, 1024
        $region64: #{tpu_custom_call.1} parent=55 // pred_fallthru
          _
        // Predicated region
        $region65: #{tpu_custom_call.1} parent=55 // pred_check
          %p442 = pneg %p127
        $region66: #{tpu_custom_call.1} parent=55 // pred_check_branch
          %444 = sbr.rel (%p442) target = $region68
        $region67: #{tpu_custom_call.1} parent=55 // pred_region
          %446 = dma.done [#allocation12], 2048
        $region68: #{tpu_custom_call.1} parent=55 // pred_fallthru
          _
        // Predicated region
        $region69: #{tpu_custom_call.1} parent=55 // pred_check
          %p447 = pneg %p148
        $region70: #{tpu_custom_call.1} parent=55 // pred_check_branch
          %449 = sbr.rel (%p447) target = $region72
        $region71: #{tpu_custom_call.1} parent=55 // pred_region
          %451 = dma.done [#allocation15], 2048
        $region72: #{tpu_custom_call.1} parent=55 // pred_fallthru
          _
        // Predicated region
        $region73: #{tpu_custom_call.1} parent=55 // pred_check
          %p452 = pneg %p211
        $region74: #{tpu_custom_call.1} parent=55 // pred_check_branch
          %454 = sbr.rel (%p452) target = $region76
        $region75: #{tpu_custom_call.1} parent=55 // pred_region
          %456 = dma.done [#allocation15], 2048
        $region76: #{tpu_custom_call.1} parent=55 // pred_fallthru
          _
        // Predicated region
        $region77: #{tpu_custom_call.1} parent=55 // pred_check
          %p457 = pneg %p232
        $region78: #{tpu_custom_call.1} parent=55 // pred_check_branch
          %459 = sbr.rel (%p457) target = $region80
        $region79: #{tpu_custom_call.1} parent=55 // pred_region
          %461 = dma.done [#allocation18], 2048
        $region80: #{tpu_custom_call.1} parent=55 // pred_fallthru
          _
        %p462 = pneg %p52
        %p463 = pneg %p49
        %s464 = sand.u32 %s65, 1
        %s465 = scalar_lea.sflag [#allocation9], %s464
        %s466 = sand.u32 %s65, 1
        %s467 = smul.addr %s466, 64
        %s468 = scalar_lea.vmem [#allocation8], %s467
        %p469 = pneg %p78
        %p470 = pneg %p75
        %s471 = sand.u32 %s36, 1
        %s472 = scalar_lea.sflag [#allocation12], %s471
        %s473 = sand.u32 %s93, 1
        %s474 = smul.addr %s473, 64
        %s475 = scalar_lea.vmem [#allocation11], %s474
        %p476 = pneg %p106
        %p477 = pneg %p103
        %p478 = pneg %p127
        %p479 = pneg %p124
        %p480 = pneg %p148
        %p481 = pneg %p145
        %p482 = pneg %p169
        %p483 = pneg %p166
        %p484 = pneg %p190
        %p485 = pneg %p187
        %p486 = pneg %p211
        %p487 = pneg %p208
        %p488 = pneg %p232
        %p489 = pneg %p229
        %p490 = pneg %p258
        %p491 = pneg %p255
        %s492 = sand.u32 %s245, 1
        %s493 = scalar_lea.sflag [#allocation10], %s492
        %s494 = sand.u32 %s245, 1
        %s495 = smul.addr %s494, 64
        %s496 = scalar_lea.vmem [#allocation19], %s495
        %p497 = pneg %p286
        %p498 = pneg %p283
        %s499 = sand.u32 %s273, 1
        %s500 = scalar_lea.sflag [#allocation21], %s499
        %s501 = sand.u32 %s273, 1
        %s502 = smul.addr %s501, 64
        %s503 = scalar_lea.vmem [#allocation20], %s502
        %s504 = smul.u32 8, %s36
        %s505 = ssub.s32 1, %s36
        %s506 = smul.u32 8, %s505
        %s507 = smul.u32 8, %s36
        %s508 = ssub.s32 1, %s36
        %s509 = smul.u32 8, %s508
        %p510 = scmp.eq.s32.totalorder %s36, 0
        // Predicated region
        $region81: #{tpu_custom_call.1} parent=55 // pred_check
          %p511 = pneg %p510
        $region82: #{tpu_custom_call.1} parent=55 // pred_check_branch
          %513 = sbr.rel (%p511) target = $region84
        $region83: #{tpu_custom_call.1} parent=55 // pred_region
          %vm514 = vcmask 261120
          %515 = vst.msk [vmem:[#allocation4] sm:$0xff] %vm514, 0.0
          %516 = vst.msk [vmem:[#allocation5] sm:$0xff] %vm514, 0.0
          %517 = vst.msk [vmem:[#allocation6] sm:$0xff] %vm514, 0.0
          %518 = vst.msk [vmem:[#allocation7] sm:$0xff] %vm514, 0.0
        $region84: #{tpu_custom_call.1} parent=55 // pred_fallthru
          _
        %v519 = vld [vmem:[%s0] sm:$0xff]
        %v520 = vld [vmem:[%s426] sm:$0xff]
        %v521 = vld [vmem:[%s426 + $0x8] sm:$0xff]
        %v522 = vld [vmem:[%s426 + $0x10] sm:$0xff]
        %v523 = vld [vmem:[%s426 + $0x18] sm:$0xff]
        %v524 = vld [vmem:[%s426 + $0x20] sm:$0xff]
        %v525 = vld [vmem:[%s426 + $0x28] sm:$0xff]
        %v526 = vld [vmem:[%s426 + $0x30] sm:$0xff]
        %v527 = vld [vmem:[%s426 + $0x38] sm:$0xff]
        %v528 = vld [vmem:[#allocation13] sm:$0xff]
        %v529 = vld [vmem:[#allocation13 + $0x8] sm:$0xff]
        %v530 = vld [vmem:[#allocation13 + $0x10] sm:$0xff]
        %v531 = vld [vmem:[#allocation13 + $0x18] sm:$0xff]
        %v532 = vld [vmem:[%s5] sm:$0x1]
        %v534 = vperm.slane %v532, 0
        %vm536 = vcmask 261120
        %v538 = vsel %vm536, %v520, 0
        %v541 = vsel %vm536, %v521, 0
        %v544 = vsel %vm536, %v522, 0
        %v547 = vsel %vm536, %v523, 0
        %v550 = vsel %vm536, %v524, 0
        %v553 = vsel %vm536, %v525, 0
        %v556 = vsel %vm536, %v526, 0
        %v559 = vsel %vm536, %v527, 0
        %561 = vmatpush.msra.mxu0 0.0
        %562 = vmatpush.msra.mxu0 0.0
        %563 = vmatpush.msra.mxu0 0.0
        %564 = vmatpush.msra.mxu0 0.0
        %565 = vmatpush.msra.mxu0 0.0
        %566 = vmatpush.msra.mxu0 0.0
        %567 = vmatpush.msra.mxu0 0.0
        %568 = vmatpush.msra.mxu0 0.0
        %569 = vmatpush.msra.mxu0 0.0
        %570 = vmatpush.msra.mxu0 0.0
        %571 = vmatpush.msra.mxu0 0.0
        %572 = vmatpush.msra.mxu0 0.0
        %573 = vmatpush.msra.mxu0 %v531
        %574 = vmatpush.msra.mxu0 %v530
        %575 = vmatpush.msra.mxu0 %v529
        %576 = vmatpush.msra.mxu0 %v528
        %577 = vmatmul.f32.gmra.mxu0 %v538
        %v578 = vpop.f32.mrf.mxu0
        %v579 = vadd.f32 %v534, %v578
        %580 = vmatmul.f32.gmra.mxu0 %v541
        %v581 = vpop.f32.mrf.mxu0
        %v582 = vadd.f32 %v534, %v581
        %583 = vmatmul.f32.gmra.mxu0 %v544
        %v584 = vpop.f32.mrf.mxu0
        %v585 = vadd.f32 %v534, %v584
        %586 = vmatmul.f32.gmra.mxu0 %v547
        %v587 = vpop.f32.mrf.mxu0
        %v588 = vadd.f32 %v534, %v587
        %589 = vmatmul.f32.gmra.mxu0 %v550
        %v590 = vpop.f32.mrf.mxu0
        %v591 = vadd.f32 %v534, %v590
        %592 = vmatmul.f32.gmra.mxu0 %v553
        %v593 = vpop.f32.mrf.mxu0
        %v594 = vadd.f32 %v534, %v593
        %595 = vmatmul.f32.gmra.mxu0 %v556
        %v596 = vpop.f32.mrf.mxu0
        %v597 = vadd.f32 %v534, %v596
        %598 = vmatmul.f32.gmra.mxu0 %v559
        %v599 = vpop.f32.mrf.mxu0
        %v600 = vadd.f32 %v534, %v599
        %601 = vdwg.mxu0
        %602 = vst.msk [vmem:[#allocation2] sm:$0xff] %vm536, %v579
        %603 = vst.msk [vmem:[#allocation2 + $0x8] sm:$0xff] %vm536, %v582
        %604 = vst.msk [vmem:[#allocation2 + $0x10] sm:$0xff] %vm536, %v585
        %605 = vst.msk [vmem:[#allocation2 + $0x18] sm:$0xff] %vm536, %v588
        %606 = vst.msk [vmem:[#allocation2 + $0x20] sm:$0xff] %vm536, %v591
        %607 = vst.msk [vmem:[#allocation2 + $0x28] sm:$0xff] %vm536, %v594
        %608 = vst.msk [vmem:[#allocation2 + $0x30] sm:$0xff] %vm536, %v597
        %609 = vst.msk [vmem:[#allocation2 + $0x38] sm:$0xff] %vm536, %v600
        %s610 = scalar_lea.vmem [#allocation13], 32
        %v611 = vld [vmem:[%s610] sm:$0xff]
        %v612 = vld [vmem:[%s610 + $0x8] sm:$0xff]
        %v613 = vld [vmem:[%s610 + $0x10] sm:$0xff]
        %v614 = vld [vmem:[%s610 + $0x18] sm:$0xff]
        %s615 = scalar_lea.vmem %s5, 1
        %v616 = vld [vmem:[%s615] sm:$0x1]
        %v618 = vperm.slane %v616, 0
        %620 = vmatpush.msra.mxu0 0.0
        %621 = vmatpush.msra.mxu0 0.0
        %622 = vmatpush.msra.mxu0 0.0
        %623 = vmatpush.msra.mxu0 0.0
        %624 = vmatpush.msra.mxu0 0.0
        %625 = vmatpush.msra.mxu0 0.0
        %626 = vmatpush.msra.mxu0 0.0
        %627 = vmatpush.msra.mxu0 0.0
        %628 = vmatpush.msra.mxu0 0.0
        %629 = vmatpush.msra.mxu0 0.0
        %630 = vmatpush.msra.mxu0 0.0
        %631 = vmatpush.msra.mxu0 0.0
        %632 = vmatpush.msra.mxu0 %v614
        %633 = vmatpush.msra.mxu0 %v613
        %634 = vmatpush.msra.mxu0 %v612
        %635 = vmatpush.msra.mxu0 %v611
        %636 = vmatmul.f32.gmra.mxu0 %v538
        %v637 = vpop.f32.mrf.mxu0
        %v638 = vadd.f32 %v618, %v637
        %639 = vmatmul.f32.gmra.mxu0 %v541
        %v640 = vpop.f32.mrf.mxu0
        %v641 = vadd.f32 %v618, %v640
        %642 = vmatmul.f32.gmra.mxu0 %v544
        %v643 = vpop.f32.mrf.mxu0
        %v644 = vadd.f32 %v618, %v643
        %645 = vmatmul.f32.gmra.mxu0 %v547
        %v646 = vpop.f32.mrf.mxu0
        %v647 = vadd.f32 %v618, %v646
        %648 = vmatmul.f32.gmra.mxu0 %v550
        %v649 = vpop.f32.mrf.mxu0
        %v650 = vadd.f32 %v618, %v649
        %651 = vmatmul.f32.gmra.mxu0 %v553
        %v652 = vpop.f32.mrf.mxu0
        %v653 = vadd.f32 %v618, %v652
        %654 = vmatmul.f32.gmra.mxu0 %v556
        %v655 = vpop.f32.mrf.mxu0
        %v656 = vadd.f32 %v618, %v655
        %657 = vmatmul.f32.gmra.mxu0 %v559
        %v658 = vpop.f32.mrf.mxu0
        %v659 = vadd.f32 %v618, %v658
        %660 = vdwg.mxu0
        %s661 = scalar_lea.vmem [#allocation2], 64
        %662 = vst.msk [vmem:[%s661] sm:$0xff] %vm536, %v638
        %663 = vst.msk [vmem:[%s661 + $0x8] sm:$0xff] %vm536, %v641
        %664 = vst.msk [vmem:[%s661 + $0x10] sm:$0xff] %vm536, %v644
        %665 = vst.msk [vmem:[%s661 + $0x18] sm:$0xff] %vm536, %v647
        %666 = vst.msk [vmem:[%s661 + $0x20] sm:$0xff] %vm536, %v650
        %667 = vst.msk [vmem:[%s661 + $0x28] sm:$0xff] %vm536, %v653
        %668 = vst.msk [vmem:[%s661 + $0x30] sm:$0xff] %vm536, %v656
        %669 = vst.msk [vmem:[%s661 + $0x38] sm:$0xff] %vm536, %v659
        %s670 = scalar_lea.vmem [#allocation13], 64
        %v671 = vld [vmem:[%s670] sm:$0xff]
        %v672 = vld [vmem:[%s670 + $0x8] sm:$0xff]
        %v673 = vld [vmem:[%s670 + $0x10] sm:$0xff]
        %v674 = vld [vmem:[%s670 + $0x18] sm:$0xff]
        %s675 = scalar_lea.vmem %s5, 2
        %v676 = vld [vmem:[%s675] sm:$0x1]
        %v678 = vperm.slane %v676, 0
        %680 = vmatpush.msra.mxu0 0.0
        %681 = vmatpush.msra.mxu0 0.0
        %682 = vmatpush.msra.mxu0 0.0
        %683 = vmatpush.msra.mxu0 0.0
        %684 = vmatpush.msra.mxu0 0.0
        %685 = vmatpush.msra.mxu0 0.0
        %686 = vmatpush.msra.mxu0 0.0
        %687 = vmatpush.msra.mxu0 0.0
        %688 = vmatpush.msra.mxu0 0.0
        %689 = vmatpush.msra.mxu0 0.0
        %690 = vmatpush.msra.mxu0 0.0
        %691 = vmatpush.msra.mxu0 0.0
        %692 = vmatpush.msra.mxu0 %v674
        %693 = vmatpush.msra.mxu0 %v673
        %694 = vmatpush.msra.mxu0 %v672
        %695 = vmatpush.msra.mxu0 %v671
        %696 = vmatmul.f32.gmra.mxu0 %v538
        %v697 = vpop.f32.mrf.mxu0
        %v698 = vadd.f32 %v678, %v697
        %699 = vmatmul.f32.gmra.mxu0 %v541
        %v700 = vpop.f32.mrf.mxu0
        %v701 = vadd.f32 %v678, %v700
        %702 = vmatmul.f32.gmra.mxu0 %v544
        %v703 = vpop.f32.mrf.mxu0
        %v704 = vadd.f32 %v678, %v703
        %705 = vmatmul.f32.gmra.mxu0 %v547
        %v706 = vpop.f32.mrf.mxu0
        %v707 = vadd.f32 %v678, %v706
        %708 = vmatmul.f32.gmra.mxu0 %v550
        %v709 = vpop.f32.mrf.mxu0
        %v710 = vadd.f32 %v678, %v709
        %711 = vmatmul.f32.gmra.mxu0 %v553
        %v712 = vpop.f32.mrf.mxu0
        %v713 = vadd.f32 %v678, %v712
        %714 = vmatmul.f32.gmra.mxu0 %v556
        %v715 = vpop.f32.mrf.mxu0
        %v716 = vadd.f32 %v678, %v715
        %717 = vmatmul.f32.gmra.mxu0 %v559
        %v718 = vpop.f32.mrf.mxu0
        %v719 = vadd.f32 %v678, %v718
        %720 = vdwg.mxu0
        %s721 = scalar_lea.vmem [#allocation2], 128
        %722 = vst.msk [vmem:[%s721] sm:$0xff] %vm536, %v698
        %723 = vst.msk [vmem:[%s721 + $0x8] sm:$0xff] %vm536, %v701
        %724 = vst.msk [vmem:[%s721 + $0x10] sm:$0xff] %vm536, %v704
        %725 = vst.msk [vmem:[%s721 + $0x18] sm:$0xff] %vm536, %v707
        %726 = vst.msk [vmem:[%s721 + $0x20] sm:$0xff] %vm536, %v710
        %727 = vst.msk [vmem:[%s721 + $0x28] sm:$0xff] %vm536, %v713
        %728 = vst.msk [vmem:[%s721 + $0x30] sm:$0xff] %vm536, %v716
        %729 = vst.msk [vmem:[%s721 + $0x38] sm:$0xff] %vm536, %v719
        %s730 = scalar_lea.vmem [#allocation13], 96
        %v731 = vld [vmem:[%s730] sm:$0xff]
        %v732 = vld [vmem:[%s730 + $0x8] sm:$0xff]
        %v733 = vld [vmem:[%s730 + $0x10] sm:$0xff]
        %v734 = vld [vmem:[%s730 + $0x18] sm:$0xff]
        %s735 = scalar_lea.vmem %s5, 3
        %v736 = vld [vmem:[%s735] sm:$0x1]
        %v738 = vperm.slane %v736, 0
        %740 = vmatpush.msra.mxu0 0.0
        %741 = vmatpush.msra.mxu0 0.0
        %742 = vmatpush.msra.mxu0 0.0
        %743 = vmatpush.msra.mxu0 0.0
        %744 = vmatpush.msra.mxu0 0.0
        %745 = vmatpush.msra.mxu0 0.0
        %746 = vmatpush.msra.mxu0 0.0
        %747 = vmatpush.msra.mxu0 0.0
        %748 = vmatpush.msra.mxu0 0.0
        %749 = vmatpush.msra.mxu0 0.0
        %750 = vmatpush.msra.mxu0 0.0
        %751 = vmatpush.msra.mxu0 0.0
        %752 = vmatpush.msra.mxu0 %v734
        %753 = vmatpush.msra.mxu0 %v733
        %754 = vmatpush.msra.mxu0 %v732
        %755 = vmatpush.msra.mxu0 %v731
        %756 = vmatmul.f32.gmra.mxu0 %v538
        %v757 = vpop.f32.mrf.mxu0
        %v758 = vadd.f32 %v738, %v757
        %759 = vmatmul.f32.gmra.mxu0 %v541
        %v760 = vpop.f32.mrf.mxu0
        %v761 = vadd.f32 %v738, %v760
        %762 = vmatmul.f32.gmra.mxu0 %v544
        %v763 = vpop.f32.mrf.mxu0
        %v764 = vadd.f32 %v738, %v763
        %765 = vmatmul.f32.gmra.mxu0 %v547
        %v766 = vpop.f32.mrf.mxu0
        %v767 = vadd.f32 %v738, %v766
        %768 = vmatmul.f32.gmra.mxu0 %v550
        %v769 = vpop.f32.mrf.mxu0
        %v770 = vadd.f32 %v738, %v769
        %771 = vmatmul.f32.gmra.mxu0 %v553
        %v772 = vpop.f32.mrf.mxu0
        %v773 = vadd.f32 %v738, %v772
        %774 = vmatmul.f32.gmra.mxu0 %v556
        %v775 = vpop.f32.mrf.mxu0
        %v776 = vadd.f32 %v738, %v775
        %777 = vmatmul.f32.gmra.mxu0 %v559
        %v778 = vpop.f32.mrf.mxu0
        %v779 = vadd.f32 %v738, %v778
        %780 = vdwg.mxu0
        %s781 = scalar_lea.vmem [#allocation2], 192
        %782 = vst.msk [vmem:[%s781] sm:$0xff] %vm536, %v758
        %783 = vst.msk [vmem:[%s781 + $0x8] sm:$0xff] %vm536, %v761
        %784 = vst.msk [vmem:[%s781 + $0x10] sm:$0xff] %vm536, %v764
        %785 = vst.msk [vmem:[%s781 + $0x18] sm:$0xff] %vm536, %v767
        %786 = vst.msk [vmem:[%s781 + $0x20] sm:$0xff] %vm536, %v770
        %787 = vst.msk [vmem:[%s781 + $0x28] sm:$0xff] %vm536, %v773
        %788 = vst.msk [vmem:[%s781 + $0x30] sm:$0xff] %vm536, %v776
        %789 = vst.msk [vmem:[%s781 + $0x38] sm:$0xff] %vm536, %v779
        %v790 = vld [vmem:[%s436] sm:$0xff]
        %v791 = vld [vmem:[%s436 + $0x8] sm:$0xff]
        %v792 = vld [vmem:[%s436 + $0x10] sm:$0xff]
        %v793 = vld [vmem:[%s436 + $0x18] sm:$0xff]
        %v794 = vld [vmem:[%s436 + $0x20] sm:$0xff]
        %v795 = vld [vmem:[%s436 + $0x28] sm:$0xff]
        %v796 = vld [vmem:[%s436 + $0x30] sm:$0xff]
        %v797 = vld [vmem:[%s436 + $0x38] sm:$0xff]
        %v798 = vld [vmem:[#allocation14] sm:$0xff]
        %v799 = vld [vmem:[#allocation14 + $0x8] sm:$0xff]
        %v800 = vld [vmem:[#allocation14 + $0x10] sm:$0xff]
        %v801 = vld [vmem:[#allocation14 + $0x18] sm:$0xff]
        %v802 = vld [vmem:[%s6] sm:$0x1]
        %v804 = vperm.slane %v802, 0
        %v807 = vsel %vm536, %v790, 0
        %v810 = vsel %vm536, %v791, 0
        %v813 = vsel %vm536, %v792, 0
        %v816 = vsel %vm536, %v793, 0
        %v819 = vsel %vm536, %v794, 0
        %v822 = vsel %vm536, %v795, 0
        %v825 = vsel %vm536, %v796, 0
        %v828 = vsel %vm536, %v797, 0
        %830 = vmatpush.msra.mxu0 0.0
        %831 = vmatpush.msra.mxu0 0.0
        %832 = vmatpush.msra.mxu0 0.0
        %833 = vmatpush.msra.mxu0 0.0
        %834 = vmatpush.msra.mxu0 0.0
        %835 = vmatpush.msra.mxu0 0.0
        %836 = vmatpush.msra.mxu0 0.0
        %837 = vmatpush.msra.mxu0 0.0
        %838 = vmatpush.msra.mxu0 0.0
        %839 = vmatpush.msra.mxu0 0.0
        %840 = vmatpush.msra.mxu0 0.0
        %841 = vmatpush.msra.mxu0 0.0
        %842 = vmatpush.msra.mxu0 %v801
        %843 = vmatpush.msra.mxu0 %v800
        %844 = vmatpush.msra.mxu0 %v799
        %845 = vmatpush.msra.mxu0 %v798
        %846 = vmatmul.f32.gmra.mxu0 %v807
        %v847 = vpop.f32.mrf.mxu0
        %v848 = vadd.f32 %v804, %v847
        %849 = vmatmul.f32.gmra.mxu0 %v810
        %v850 = vpop.f32.mrf.mxu0
        %v851 = vadd.f32 %v804, %v850
        %852 = vmatmul.f32.gmra.mxu0 %v813
        %v853 = vpop.f32.mrf.mxu0
        %v854 = vadd.f32 %v804, %v853
        %855 = vmatmul.f32.gmra.mxu0 %v816
        %v856 = vpop.f32.mrf.mxu0
        %v857 = vadd.f32 %v804, %v856
        %858 = vmatmul.f32.gmra.mxu0 %v819
        %v859 = vpop.f32.mrf.mxu0
        %v860 = vadd.f32 %v804, %v859
        %861 = vmatmul.f32.gmra.mxu0 %v822
        %v862 = vpop.f32.mrf.mxu0
        %v863 = vadd.f32 %v804, %v862
        %864 = vmatmul.f32.gmra.mxu0 %v825
        %v865 = vpop.f32.mrf.mxu0
        %v866 = vadd.f32 %v804, %v865
        %867 = vmatmul.f32.gmra.mxu0 %v828
        %v868 = vpop.f32.mrf.mxu0
        %v869 = vadd.f32 %v804, %v868
        %870 = vdwg.mxu0
        %871 = vst.msk [vmem:[#allocation3] sm:$0xff] %vm536, %v848
        %872 = vst.msk [vmem:[#allocation3 + $0x8] sm:$0xff] %vm536, %v851
        %873 = vst.msk [vmem:[#allocation3 + $0x10] sm:$0xff] %vm536, %v854
        %874 = vst.msk [vmem:[#allocation3 + $0x18] sm:$0xff] %vm536, %v857
        %875 = vst.msk [vmem:[#allocation3 + $0x20] sm:$0xff] %vm536, %v860
        %876 = vst.msk [vmem:[#allocation3 + $0x28] sm:$0xff] %vm536, %v863
        %877 = vst.msk [vmem:[#allocation3 + $0x30] sm:$0xff] %vm536, %v866
        %878 = vst.msk [vmem:[#allocation3 + $0x38] sm:$0xff] %vm536, %v869
        %s879 = scalar_lea.vmem [#allocation14], 32
        %v880 = vld [vmem:[%s879] sm:$0xff]
        %v881 = vld [vmem:[%s879 + $0x8] sm:$0xff]
        %v882 = vld [vmem:[%s879 + $0x10] sm:$0xff]
        %v883 = vld [vmem:[%s879 + $0x18] sm:$0xff]
        %s884 = scalar_lea.vmem %s6, 1
        %v885 = vld [vmem:[%s884] sm:$0x1]
        %v887 = vperm.slane %v885, 0
        %889 = vmatpush.msra.mxu0 0.0
        %890 = vmatpush.msra.mxu0 0.0
        %891 = vmatpush.msra.mxu0 0.0
        %892 = vmatpush.msra.mxu0 0.0
        %893 = vmatpush.msra.mxu0 0.0
        %894 = vmatpush.msra.mxu0 0.0
        %895 = vmatpush.msra.mxu0 0.0
        %896 = vmatpush.msra.mxu0 0.0
        %897 = vmatpush.msra.mxu0 0.0
        %898 = vmatpush.msra.mxu0 0.0
        %899 = vmatpush.msra.mxu0 0.0
        %900 = vmatpush.msra.mxu0 0.0
        %901 = vmatpush.msra.mxu0 %v883
        %902 = vmatpush.msra.mxu0 %v882
        %903 = vmatpush.msra.mxu0 %v881
        %904 = vmatpush.msra.mxu0 %v880
        %905 = vmatmul.f32.gmra.mxu0 %v807
        %v906 = vpop.f32.mrf.mxu0
        %v907 = vadd.f32 %v887, %v906
        %908 = vmatmul.f32.gmra.mxu0 %v810
        %v909 = vpop.f32.mrf.mxu0
        %v910 = vadd.f32 %v887, %v909
        %911 = vmatmul.f32.gmra.mxu0 %v813
        %v912 = vpop.f32.mrf.mxu0
        %v913 = vadd.f32 %v887, %v912
        %914 = vmatmul.f32.gmra.mxu0 %v816
        %v915 = vpop.f32.mrf.mxu0
        %v916 = vadd.f32 %v887, %v915
        %917 = vmatmul.f32.gmra.mxu0 %v819
        %v918 = vpop.f32.mrf.mxu0
        %v919 = vadd.f32 %v887, %v918
        %920 = vmatmul.f32.gmra.mxu0 %v822
        %v921 = vpop.f32.mrf.mxu0
        %v922 = vadd.f32 %v887, %v921
        %923 = vmatmul.f32.gmra.mxu0 %v825
        %v924 = vpop.f32.mrf.mxu0
        %v925 = vadd.f32 %v887, %v924
        %926 = vmatmul.f32.gmra.mxu0 %v828
        %v927 = vpop.f32.mrf.mxu0
        %v928 = vadd.f32 %v887, %v927
        %929 = vdwg.mxu0
        %s930 = scalar_lea.vmem [#allocation3], 64
        %931 = vst.msk [vmem:[%s930] sm:$0xff] %vm536, %v907
        %932 = vst.msk [vmem:[%s930 + $0x8] sm:$0xff] %vm536, %v910
        %933 = vst.msk [vmem:[%s930 + $0x10] sm:$0xff] %vm536, %v913
        %934 = vst.msk [vmem:[%s930 + $0x18] sm:$0xff] %vm536, %v916
        %935 = vst.msk [vmem:[%s930 + $0x20] sm:$0xff] %vm536, %v919
        %936 = vst.msk [vmem:[%s930 + $0x28] sm:$0xff] %vm536, %v922
        %937 = vst.msk [vmem:[%s930 + $0x30] sm:$0xff] %vm536, %v925
        %938 = vst.msk [vmem:[%s930 + $0x38] sm:$0xff] %vm536, %v928
        %s939 = scalar_lea.vmem [#allocation14], 64
        %v940 = vld [vmem:[%s939] sm:$0xff]
        %v941 = vld [vmem:[%s939 + $0x8] sm:$0xff]
        %v942 = vld [vmem:[%s939 + $0x10] sm:$0xff]
        %v943 = vld [vmem:[%s939 + $0x18] sm:$0xff]
        %s944 = scalar_lea.vmem %s6, 2
        %v945 = vld [vmem:[%s944] sm:$0x1]
        %v947 = vperm.slane %v945, 0
        %949 = vmatpush.msra.mxu0 0.0
        %950 = vmatpush.msra.mxu0 0.0
        %951 = vmatpush.msra.mxu0 0.0
        %952 = vmatpush.msra.mxu0 0.0
        %953 = vmatpush.msra.mxu0 0.0
        %954 = vmatpush.msra.mxu0 0.0
        %955 = vmatpush.msra.mxu0 0.0
        %956 = vmatpush.msra.mxu0 0.0
        %957 = vmatpush.msra.mxu0 0.0
        %958 = vmatpush.msra.mxu0 0.0
        %959 = vmatpush.msra.mxu0 0.0
        %960 = vmatpush.msra.mxu0 0.0
        %961 = vmatpush.msra.mxu0 %v943
        %962 = vmatpush.msra.mxu0 %v942
        %963 = vmatpush.msra.mxu0 %v941
        %964 = vmatpush.msra.mxu0 %v940
        %965 = vmatmul.f32.gmra.mxu0 %v807
        %v966 = vpop.f32.mrf.mxu0
        %v967 = vadd.f32 %v947, %v966
        %968 = vmatmul.f32.gmra.mxu0 %v810
        %v969 = vpop.f32.mrf.mxu0
        %v970 = vadd.f32 %v947, %v969
        %971 = vmatmul.f32.gmra.mxu0 %v813
        %v972 = vpop.f32.mrf.mxu0
        %v973 = vadd.f32 %v947, %v972
        %974 = vmatmul.f32.gmra.mxu0 %v816
        %v975 = vpop.f32.mrf.mxu0
        %v976 = vadd.f32 %v947, %v975
        %977 = vmatmul.f32.gmra.mxu0 %v819
        %v978 = vpop.f32.mrf.mxu0
        %v979 = vadd.f32 %v947, %v978
        %980 = vmatmul.f32.gmra.mxu0 %v822
        %v981 = vpop.f32.mrf.mxu0
        %v982 = vadd.f32 %v947, %v981
        %983 = vmatmul.f32.gmra.mxu0 %v825
        %v984 = vpop.f32.mrf.mxu0
        %v985 = vadd.f32 %v947, %v984
        %986 = vmatmul.f32.gmra.mxu0 %v828
        %v987 = vpop.f32.mrf.mxu0
        %v988 = vadd.f32 %v947, %v987
        %989 = vdwg.mxu0
        %s990 = scalar_lea.vmem [#allocation3], 128
        %991 = vst.msk [vmem:[%s990] sm:$0xff] %vm536, %v967
        %992 = vst.msk [vmem:[%s990 + $0x8] sm:$0xff] %vm536, %v970
        %993 = vst.msk [vmem:[%s990 + $0x10] sm:$0xff] %vm536, %v973
        %994 = vst.msk [vmem:[%s990 + $0x18] sm:$0xff] %vm536, %v976
        %995 = vst.msk [vmem:[%s990 + $0x20] sm:$0xff] %vm536, %v979
        %996 = vst.msk [vmem:[%s990 + $0x28] sm:$0xff] %vm536, %v982
        %997 = vst.msk [vmem:[%s990 + $0x30] sm:$0xff] %vm536, %v985
        %998 = vst.msk [vmem:[%s990 + $0x38] sm:$0xff] %vm536, %v988
        %s999 = scalar_lea.vmem [#allocation14], 96
        %v1000 = vld [vmem:[%s999] sm:$0xff]
        %v1001 = vld [vmem:[%s999 + $0x8] sm:$0xff]
        %v1002 = vld [vmem:[%s999 + $0x10] sm:$0xff]
        %v1003 = vld [vmem:[%s999 + $0x18] sm:$0xff]
        %s1004 = scalar_lea.vmem %s6, 3
        %v1005 = vld [vmem:[%s1004] sm:$0x1]
        %v1007 = vperm.slane %v1005, 0
        %1009 = vmatpush.msra.mxu0 0.0
        %1010 = vmatpush.msra.mxu0 0.0
        %1011 = vmatpush.msra.mxu0 0.0
        %1012 = vmatpush.msra.mxu0 0.0
        %1013 = vmatpush.msra.mxu0 0.0
        %1014 = vmatpush.msra.mxu0 0.0
        %1015 = vmatpush.msra.mxu0 0.0
        %1016 = vmatpush.msra.mxu0 0.0
        %1017 = vmatpush.msra.mxu0 0.0
        %1018 = vmatpush.msra.mxu0 0.0
        %1019 = vmatpush.msra.mxu0 0.0
        %1020 = vmatpush.msra.mxu0 0.0
        %1021 = vmatpush.msra.mxu0 %v1003
        %1022 = vmatpush.msra.mxu0 %v1002
        %1023 = vmatpush.msra.mxu0 %v1001
        %1024 = vmatpush.msra.mxu0 %v1000
        %1025 = vmatmul.f32.gmra.mxu0 %v807
        %v1026 = vpop.f32.mrf.mxu0
        %v1027 = vadd.f32 %v1007, %v1026
        %1028 = vmatmul.f32.gmra.mxu0 %v810
        %v1029 = vpop.f32.mrf.mxu0
        %v1030 = vadd.f32 %v1007, %v1029
        %1031 = vmatmul.f32.gmra.mxu0 %v813
        %v1032 = vpop.f32.mrf.mxu0
        %v1033 = vadd.f32 %v1007, %v1032
        %1034 = vmatmul.f32.gmra.mxu0 %v816
        %v1035 = vpop.f32.mrf.mxu0
        %v1036 = vadd.f32 %v1007, %v1035
        %1037 = vmatmul.f32.gmra.mxu0 %v819
        %v1038 = vpop.f32.mrf.mxu0
        %v1039 = vadd.f32 %v1007, %v1038
        %1040 = vmatmul.f32.gmra.mxu0 %v822
        %v1041 = vpop.f32.mrf.mxu0
        %v1042 = vadd.f32 %v1007, %v1041
        %1043 = vmatmul.f32.gmra.mxu0 %v825
        %v1044 = vpop.f32.mrf.mxu0
        %v1045 = vadd.f32 %v1007, %v1044
        %1046 = vmatmul.f32.gmra.mxu0 %v828
        %v1047 = vpop.f32.mrf.mxu0
        %v1048 = vadd.f32 %v1007, %v1047
        %1049 = vdwg.mxu0
        %s1050 = scalar_lea.vmem [#allocation3], 192
        %1051 = vst.msk [vmem:[%s1050] sm:$0xff] %vm536, %v1027
        %1052 = vst.msk [vmem:[%s1050 + $0x8] sm:$0xff] %vm536, %v1030
        %1053 = vst.msk [vmem:[%s1050 + $0x10] sm:$0xff] %vm536, %v1033
        %1054 = vst.msk [vmem:[%s1050 + $0x18] sm:$0xff] %vm536, %v1036
        %1055 = vst.msk [vmem:[%s1050 + $0x20] sm:$0xff] %vm536, %v1039
        %1056 = vst.msk [vmem:[%s1050 + $0x28] sm:$0xff] %vm536, %v1042
        %1057 = vst.msk [vmem:[%s1050 + $0x30] sm:$0xff] %vm536, %v1045
        %1058 = vst.msk [vmem:[%s1050 + $0x38] sm:$0xff] %vm536, %v1048
        %s1059 = smul.u32 %s36, 8
        %v1060 = vstv %s1059
        %vm1061 = vcmp.lt.s32.totalorder %v1060, %v519
        %v1062 = vsel %vm1061, 1, 0
        %1063 = vset.pattern.permute.xlu0 0
        %1064 = vperm.xlu0 %1063, %v1062
        %v1065 = vpop.permute.xlu0 %1064
        %vm1066 = vcmp.eq.s32.totalorder %v1065, 1
        %v1067 = vld [vmem:[#allocation4] sm:$0xff]
        %v1068 = vld [vmem:[#allocation5] sm:$0xff]
        %v1069 = vld [vmem:[#allocation2] sm:$0xff]
        %v1070 = vld [vmem:[#allocation16] sm:$0xff]
        %v1071 = vld [vmem:[#allocation16 + $0x8] sm:$0xff]
        %v1072 = vld [vmem:[#allocation16 + $0x10] sm:$0xff]
        %v1073 = vld [vmem:[#allocation16 + $0x18] sm:$0xff]
        %v1075 = vsel %vm536, %v1067, 0
        %1077 = vmatpush.msra.mxu0 0.0
        %1078 = vmatpush.msra.mxu0 0.0
        %1079 = vmatpush.msra.mxu0 0.0
        %1080 = vmatpush.msra.mxu0 0.0
        %1081 = vmatpush.msra.mxu0 0.0
        %1082 = vmatpush.msra.mxu0 0.0
        %1083 = vmatpush.msra.mxu0 0.0
        %1084 = vmatpush.msra.mxu0 0.0
        %1085 = vmatpush.msra.mxu0 0.0
        %1086 = vmatpush.msra.mxu0 0.0
        %1087 = vmatpush.msra.mxu0 0.0
        %1088 = vmatpush.msra.mxu0 0.0
        %1089 = vmatpush.msra.mxu0 %v1073
        %1090 = vmatpush.msra.mxu0 %v1072
        %1091 = vmatpush.msra.mxu0 %v1071
        %1092 = vmatpush.msra.mxu0 %v1070
        %1093 = vmatmul.f32.gmra.mxu0 %v1075
        %v1094 = vpop.f32.mrf.mxu0
        %v1095 = vadd.f32 0.0, %v1094
        %1096 = vdwg.mxu0
        %v1097 = vadd.f32 %v1069, %v1095
        %v1098 = vld [vmem:[%s661] sm:$0xff]
        %s1099 = scalar_lea.vmem [#allocation16], 32
        %v1100 = vld [vmem:[%s1099] sm:$0xff]
        %v1101 = vld [vmem:[%s1099 + $0x8] sm:$0xff]
        %v1102 = vld [vmem:[%s1099 + $0x10] sm:$0xff]
        %v1103 = vld [vmem:[%s1099 + $0x18] sm:$0xff]
        %1104 = vmatpush.msra.mxu0 0.0
        %1105 = vmatpush.msra.mxu0 0.0
        %1106 = vmatpush.msra.mxu0 0.0
        %1107 = vmatpush.msra.mxu0 0.0
        %1108 = vmatpush.msra.mxu0 0.0
        %1109 = vmatpush.msra.mxu0 0.0
        %1110 = vmatpush.msra.mxu0 0.0
        %1111 = vmatpush.msra.mxu0 0.0
        %1112 = vmatpush.msra.mxu0 0.0
        %1113 = vmatpush.msra.mxu0 0.0
        %1114 = vmatpush.msra.mxu0 0.0
        %1115 = vmatpush.msra.mxu0 0.0
        %1116 = vmatpush.msra.mxu0 %v1103
        %1117 = vmatpush.msra.mxu0 %v1102
        %1118 = vmatpush.msra.mxu0 %v1101
        %1119 = vmatpush.msra.mxu0 %v1100
        %1120 = vmatmul.f32.gmra.mxu0 %v1075
        %v1121 = vpop.f32.mrf.mxu0
        %v1122 = vadd.f32 0.0, %v1121
        %1123 = vdwg.mxu0
        %v1124 = vadd.f32 %v1098, %v1122
        %v1125 = vld [vmem:[%s721] sm:$0xff]
        %s1126 = scalar_lea.vmem [#allocation16], 64
        %v1127 = vld [vmem:[%s1126] sm:$0xff]
        %v1128 = vld [vmem:[%s1126 + $0x8] sm:$0xff]
        %v1129 = vld [vmem:[%s1126 + $0x10] sm:$0xff]
        %v1130 = vld [vmem:[%s1126 + $0x18] sm:$0xff]
        %1131 = vmatpush.msra.mxu0 0.0
        %1132 = vmatpush.msra.mxu0 0.0
        %1133 = vmatpush.msra.mxu0 0.0
        %1134 = vmatpush.msra.mxu0 0.0
        %1135 = vmatpush.msra.mxu0 0.0
        %1136 = vmatpush.msra.mxu0 0.0
        %1137 = vmatpush.msra.mxu0 0.0
        %1138 = vmatpush.msra.mxu0 0.0
        %1139 = vmatpush.msra.mxu0 0.0
        %1140 = vmatpush.msra.mxu0 0.0
        %1141 = vmatpush.msra.mxu0 0.0
        %1142 = vmatpush.msra.mxu0 0.0
        %1143 = vmatpush.msra.mxu0 %v1130
        %1144 = vmatpush.msra.mxu0 %v1129
        %1145 = vmatpush.msra.mxu0 %v1128
        %1146 = vmatpush.msra.mxu0 %v1127
        %1147 = vmatmul.f32.gmra.mxu0 %v1075
        %v1148 = vpop.f32.mrf.mxu0
        %v1149 = vadd.f32 0.0, %v1148
        %1150 = vdwg.mxu0
        %v1151 = vadd.f32 %v1125, %v1149
        %v1152 = vld [vmem:[%s781] sm:$0xff]
        %s1153 = scalar_lea.vmem [#allocation16], 96
        %v1154 = vld [vmem:[%s1153] sm:$0xff]
        %v1155 = vld [vmem:[%s1153 + $0x8] sm:$0xff]
        %v1156 = vld [vmem:[%s1153 + $0x10] sm:$0xff]
        %v1157 = vld [vmem:[%s1153 + $0x18] sm:$0xff]
        %1158 = vmatpush.msra.mxu0 0.0
        %1159 = vmatpush.msra.mxu0 0.0
        %1160 = vmatpush.msra.mxu0 0.0
        %1161 = vmatpush.msra.mxu0 0.0
        %1162 = vmatpush.msra.mxu0 0.0
        %1163 = vmatpush.msra.mxu0 0.0
        %1164 = vmatpush.msra.mxu0 0.0
        %1165 = vmatpush.msra.mxu0 0.0
        %1166 = vmatpush.msra.mxu0 0.0
        %1167 = vmatpush.msra.mxu0 0.0
        %1168 = vmatpush.msra.mxu0 0.0
        %1169 = vmatpush.msra.mxu0 0.0
        %1170 = vmatpush.msra.mxu0 %v1157
        %1171 = vmatpush.msra.mxu0 %v1156
        %1172 = vmatpush.msra.mxu0 %v1155
        %1173 = vmatpush.msra.mxu0 %v1154
        %1174 = vmatmul.f32.gmra.mxu0 %v1075
        %v1175 = vpop.f32.mrf.mxu0
        %v1176 = vadd.f32 0.0, %v1175
        %1177 = vdwg.mxu0
        %v1178 = vadd.f32 %v1152, %v1176
        %v1179 = vxor.u32 %v1124, 2147483648
        %v1180 = vmul.f32 %v1179, 1.442695
        %v1181 = vpow.pop %v1180
        %v1182 = vadd.f32 %v1181, 1.0
        %v1183 = vrcp.pop %v1182
        %v1184 = vmul.f32 %v1182, %v1183
        %v1185 = vsub.f32 1.0, %v1184
        %v1186 = vmul.f32 %v1183, %v1185
        %v1187 = vadd.f32 %v1183, %v1186
        %vm1188 = vweird.f32 %v1182
        %vm1189 = vweird.f32 %v1183
        %vm1190 = vmor %vm1188, %vm1189
        %v1191 = vsel %vm1190, %v1183, %v1187
        %v1192 = vand.u32 2147483647, %v1182
        %vm1193 = vcmp.eq.f32.partialorder %v1192, 8.507059e+37
        %v1194 = vand.u32 %v1182, 2147483648
        %v1195 = vor.u32 1.1754944e-38, %v1194
        %v1196 = vsel %vm1193, %v1195, %v1191
        %v1197 = vmul.f32 1.0, %v1196
        %v1198 = vmul.f32 %v1197, %v1068
        %v1199 = vxor.u32 %v1097, 2147483648
        %v1200 = vmul.f32 %v1199, 1.442695
        %v1201 = vpow.pop %v1200
        %v1202 = vadd.f32 %v1201, 1.0
        %v1203 = vrcp.pop %v1202
        %v1204 = vmul.f32 %v1202, %v1203
        %v1205 = vsub.f32 1.0, %v1204
        %v1206 = vmul.f32 %v1203, %v1205
        %v1207 = vadd.f32 %v1203, %v1206
        %vm1208 = vweird.f32 %v1202
        %vm1209 = vweird.f32 %v1203
        %vm1210 = vmor %vm1208, %vm1209
        %v1211 = vsel %vm1210, %v1203, %v1207
        %v1212 = vand.u32 2147483647, %v1202
        %vm1213 = vcmp.eq.f32.partialorder %v1212, 8.507059e+37
        %v1214 = vand.u32 %v1202, 2147483648
        %v1215 = vor.u32 1.1754944e-38, %v1214
        %v1216 = vsel %vm1213, %v1215, %v1211
        %v1217 = vmul.f32 1.0, %v1216
        %v1218 = vtanh.pop %v1151
        %v1219 = vmul.f32 %v1217, %v1218
        %v1220 = vadd.f32 %v1198, %v1219
        %v1221 = vxor.u32 %v1178, 2147483648
        %v1222 = vmul.f32 %v1221, 1.442695
        %v1223 = vpow.pop %v1222
        %v1224 = vadd.f32 %v1223, 1.0
        %v1225 = vrcp.pop %v1224
        %v1226 = vmul.f32 %v1224, %v1225
        %v1227 = vsub.f32 1.0, %v1226
        %v1228 = vmul.f32 %v1225, %v1227
        %v1229 = vadd.f32 %v1225, %v1228
        %vm1230 = vweird.f32 %v1224
        %vm1231 = vweird.f32 %v1225
        %vm1232 = vmor %vm1230, %vm1231
        %v1233 = vsel %vm1232, %v1225, %v1229
        %v1234 = vand.u32 2147483647, %v1224
        %vm1235 = vcmp.eq.f32.partialorder %v1234, 8.507059e+37
        %v1236 = vand.u32 %v1224, 2147483648
        %v1237 = vor.u32 1.1754944e-38, %v1236
        %v1238 = vsel %vm1235, %v1237, %v1233
        %v1239 = vmul.f32 1.0, %v1238
        %v1240 = vtanh.pop %v1220
        %v1241 = vmul.f32 %v1239, %v1240
        %v1242 = vsel %vm1066, %v1241, %v1067
        %1243 = vst.msk [vmem:[#allocation4] sm:$0xff] %vm536, %v1242
        %v1244 = vsel %vm1066, %v1220, %v1068
        %1245 = vst.msk [vmem:[#allocation5] sm:$0xff] %vm536, %v1244
        %v1246 = vsel %vm1066, %v1241, 0.0
        %1247 = vst.msk [vmem:[%s496] sm:$0xff] %vm536, %v1246
        %s1248 = ssub.s32 1, %s36
        %s1249 = smul.u32 %s1248, 8
        %s1250 = sadd.s32 %s1249, 7
        %v1251 = vstv %s1250
        %vm1252 = vcmp.lt.s32.totalorder %v1251, %v519
        %v1253 = vsel %vm1252, 1, 0
        %1254 = vset.pattern.permute.xlu0 0
        %1255 = vperm.xlu0 %1254, %v1253
        %v1256 = vpop.permute.xlu0 %1255
        %vm1257 = vcmp.eq.s32.totalorder %v1256, 1
        %v1258 = vld [vmem:[#allocation6] sm:$0xff]
        %v1259 = vld [vmem:[#allocation7] sm:$0xff]
        %s1260 = scalar_lea.vmem [#allocation3], 56
        %v1261 = vld [vmem:[%s1260] sm:$0xff]
        %v1262 = vld [vmem:[#allocation17] sm:$0xff]
        %v1263 = vld [vmem:[#allocation17 + $0x8] sm:$0xff]
        %v1264 = vld [vmem:[#allocation17 + $0x10] sm:$0xff]
        %v1265 = vld [vmem:[#allocation17 + $0x18] sm:$0xff]
        %v1267 = vsel %vm536, %v1258, 0
        %1269 = vmatpush.msra.mxu0 0.0
        %1270 = vmatpush.msra.mxu0 0.0
        %1271 = vmatpush.msra.mxu0 0.0
        %1272 = vmatpush.msra.mxu0 0.0
        %1273 = vmatpush.msra.mxu0 0.0
        %1274 = vmatpush.msra.mxu0 0.0
        %1275 = vmatpush.msra.mxu0 0.0
        %1276 = vmatpush.msra.mxu0 0.0
        %1277 = vmatpush.msra.mxu0 0.0
        %1278 = vmatpush.msra.mxu0 0.0
        %1279 = vmatpush.msra.mxu0 0.0
        %1280 = vmatpush.msra.mxu0 0.0
        %1281 = vmatpush.msra.mxu0 %v1265
        %1282 = vmatpush.msra.mxu0 %v1264
        %1283 = vmatpush.msra.mxu0 %v1263
        %1284 = vmatpush.msra.mxu0 %v1262
        %1285 = vmatmul.f32.gmra.mxu0 %v1267
        %v1286 = vpop.f32.mrf.mxu0
        %v1287 = vadd.f32 0.0, %v1286
        %1288 = vdwg.mxu0
        %v1289 = vadd.f32 %v1261, %v1287
        %s1290 = scalar_lea.vmem [#allocation3], 120
        %v1291 = vld [vmem:[%s1290] sm:$0xff]
        %s1292 = scalar_lea.vmem [#allocation17], 32
        %v1293 = vld [vmem:[%s1292] sm:$0xff]
        %v1294 = vld [vmem:[%s1292 + $0x8] sm:$0xff]
        %v1295 = vld [vmem:[%s1292 + $0x10] sm:$0xff]
        %v1296 = vld [vmem:[%s1292 + $0x18] sm:$0xff]
        %1297 = vmatpush.msra.mxu0 0.0
        %1298 = vmatpush.msra.mxu0 0.0
        %1299 = vmatpush.msra.mxu0 0.0
        %1300 = vmatpush.msra.mxu0 0.0
        %1301 = vmatpush.msra.mxu0 0.0
        %1302 = vmatpush.msra.mxu0 0.0
        %1303 = vmatpush.msra.mxu0 0.0
        %1304 = vmatpush.msra.mxu0 0.0
        %1305 = vmatpush.msra.mxu0 0.0
        %1306 = vmatpush.msra.mxu0 0.0
        %1307 = vmatpush.msra.mxu0 0.0
        %1308 = vmatpush.msra.mxu0 0.0
        %1309 = vmatpush.msra.mxu0 %v1296
        %1310 = vmatpush.msra.mxu0 %v1295
        %1311 = vmatpush.msra.mxu0 %v1294
        %1312 = vmatpush.msra.mxu0 %v1293
        %1313 = vmatmul.f32.gmra.mxu0 %v1267
        %v1314 = vpop.f32.mrf.mxu0
        %v1315 = vadd.f32 0.0, %v1314
        %1316 = vdwg.mxu0
        %v1317 = vadd.f32 %v1291, %v1315
        %s1318 = scalar_lea.vmem [#allocation3], 184
        %v1319 = vld [vmem:[%s1318] sm:$0xff]
        %s1320 = scalar_lea.vmem [#allocation17], 64
        %v1321 = vld [vmem:[%s1320] sm:$0xff]
        %v1322 = vld [vmem:[%s1320 + $0x8] sm:$0xff]
        %v1323 = vld [vmem:[%s1320 + $0x10] sm:$0xff]
        %v1324 = vld [vmem:[%s1320 + $0x18] sm:$0xff]
        %1325 = vmatpush.msra.mxu0 0.0
        %1326 = vmatpush.msra.mxu0 0.0
        %1327 = vmatpush.msra.mxu0 0.0
        %1328 = vmatpush.msra.mxu0 0.0
        %1329 = vmatpush.msra.mxu0 0.0
        %1330 = vmatpush.msra.mxu0 0.0
        %1331 = vmatpush.msra.mxu0 0.0
        %1332 = vmatpush.msra.mxu0 0.0
        %1333 = vmatpush.msra.mxu0 0.0
        %1334 = vmatpush.msra.mxu0 0.0
        %1335 = vmatpush.msra.mxu0 0.0
        %1336 = vmatpush.msra.mxu0 0.0
        %1337 = vmatpush.msra.mxu0 %v1324
        %1338 = vmatpush.msra.mxu0 %v1323
        %1339 = vmatpush.msra.mxu0 %v1322
        %1340 = vmatpush.msra.mxu0 %v1321
        %1341 = vmatmul.f32.gmra.mxu0 %v1267
        %v1342 = vpop.f32.mrf.mxu0
        %v1343 = vadd.f32 0.0, %v1342
        %1344 = vdwg.mxu0
        %v1345 = vadd.f32 %v1319, %v1343
        %s1346 = scalar_lea.vmem [#allocation3], 248
        %v1347 = vld [vmem:[%s1346] sm:$0xff]
        %s1348 = scalar_lea.vmem [#allocation17], 96
        %v1349 = vld [vmem:[%s1348] sm:$0xff]
        %v1350 = vld [vmem:[%s1348 + $0x8] sm:$0xff]
        %v1351 = vld [vmem:[%s1348 + $0x10] sm:$0xff]
        %v1352 = vld [vmem:[%s1348 + $0x18] sm:$0xff]
        %1353 = vmatpush.msra.mxu0 0.0
        %1354 = vmatpush.msra.mxu0 0.0
        %1355 = vmatpush.msra.mxu0 0.0
        %1356 = vmatpush.msra.mxu0 0.0
        %1357 = vmatpush.msra.mxu0 0.0
        %1358 = vmatpush.msra.mxu0 0.0
        %1359 = vmatpush.msra.mxu0 0.0
        %1360 = vmatpush.msra.mxu0 0.0
        %1361 = vmatpush.msra.mxu0 0.0
        %1362 = vmatpush.msra.mxu0 0.0
        %1363 = vmatpush.msra.mxu0 0.0
        %1364 = vmatpush.msra.mxu0 0.0
        %1365 = vmatpush.msra.mxu0 %v1352
        %1366 = vmatpush.msra.mxu0 %v1351
        %1367 = vmatpush.msra.mxu0 %v1350
        %1368 = vmatpush.msra.mxu0 %v1349
        %1369 = vmatmul.f32.gmra.mxu0 %v1267
        %v1370 = vpop.f32.mrf.mxu0
        %v1371 = vadd.f32 0.0, %v1370
        %1372 = vdwg.mxu0
        %v1373 = vadd.f32 %v1347, %v1371
        %v1374 = vxor.u32 %v1317, 2147483648
        %v1375 = vmul.f32 %v1374, 1.442695
        %v1376 = vpow.pop %v1375
        %v1377 = vadd.f32 %v1376, 1.0
        %v1378 = vrcp.pop %v1377
        %v1379 = vmul.f32 %v1377, %v1378
        %v1380 = vsub.f32 1.0, %v1379
        %v1381 = vmul.f32 %v1378, %v1380
        %v1382 = vadd.f32 %v1378, %v1381
        %vm1383 = vweird.f32 %v1377
        %vm1384 = vweird.f32 %v1378
        %vm1385 = vmor %vm1383, %vm1384
        %v1386 = vsel %vm1385, %v1378, %v1382
        %v1387 = vand.u32 2147483647, %v1377
        %vm1388 = vcmp.eq.f32.partialorder %v1387, 8.507059e+37
        %v1389 = vand.u32 %v1377, 2147483648
        %v1390 = vor.u32 1.1754944e-38, %v1389
        %v1391 = vsel %vm1388, %v1390, %v1386
        %v1392 = vmul.f32 1.0, %v1391
        %v1393 = vmul.f32 %v1392, %v1259
        %v1394 = vxor.u32 %v1289, 2147483648
        %v1395 = vmul.f32 %v1394, 1.442695
        %v1396 = vpow.pop %v1395
        %v1397 = vadd.f32 %v1396, 1.0
        %v1398 = vrcp.pop %v1397
        %v1399 = vmul.f32 %v1397, %v1398
        %v1400 = vsub.f32 1.0, %v1399
        %v1401 = vmul.f32 %v1398, %v1400
        %v1402 = vadd.f32 %v1398, %v1401
        %vm1403 = vweird.f32 %v1397
        %vm1404 = vweird.f32 %v1398
        %vm1405 = vmor %vm1403, %vm1404
        %v1406 = vsel %vm1405, %v1398, %v1402
        %v1407 = vand.u32 2147483647, %v1397
        %vm1408 = vcmp.eq.f32.partialorder %v1407, 8.507059e+37
        %v1409 = vand.u32 %v1397, 2147483648
        %v1410 = vor.u32 1.1754944e-38, %v1409
        %v1411 = vsel %vm1408, %v1410, %v1406
        %v1412 = vmul.f32 1.0, %v1411
        %v1413 = vtanh.pop %v1345
        %v1414 = vmul.f32 %v1412, %v1413
        %v1415 = vadd.f32 %v1393, %v1414
        %v1416 = vxor.u32 %v1373, 2147483648
        %v1417 = vmul.f32 %v1416, 1.442695
        %v1418 = vpow.pop %v1417
        %v1419 = vadd.f32 %v1418, 1.0
        %v1420 = vrcp.pop %v1419
        %v1421 = vmul.f32 %v1419, %v1420
        %v1422 = vsub.f32 1.0, %v1421
        %v1423 = vmul.f32 %v1420, %v1422
        %v1424 = vadd.f32 %v1420, %v1423
        %vm1425 = vweird.f32 %v1419
        %vm1426 = vweird.f32 %v1420
        %vm1427 = vmor %vm1425, %vm1426
        %v1428 = vsel %vm1427, %v1420, %v1424
        %v1429 = vand.u32 2147483647, %v1419
        %vm1430 = vcmp.eq.f32.partialorder %v1429, 8.507059e+37
        %v1431 = vand.u32 %v1419, 2147483648
        %v1432 = vor.u32 1.1754944e-38, %v1431
        %v1433 = vsel %vm1430, %v1432, %v1428
        %v1434 = vmul.f32 1.0, %v1433
        %v1435 = vtanh.pop %v1415
        %v1436 = vmul.f32 %v1434, %v1435
        %v1437 = vsel %vm1257, %v1436, %v1258
        %1438 = vst.msk [vmem:[#allocation6] sm:$0xff] %vm536, %v1437
        %v1439 = vsel %vm1257, %v1415, %v1259
        %1440 = vst.msk [vmem:[#allocation7] sm:$0xff] %vm536, %v1439
        %v1441 = vsel %vm1257, %v1436, 0.0
        %s1442 = scalar_lea.vmem %s503, 56 [#allocation20]
        %1443 = vst.msk [vmem:[%s1442] sm:$0xff] %vm536, %v1441
        %s1444 = sadd.s32 %s1059, 1
        %v1445 = vstv %s1444
        %vm1446 = vcmp.lt.s32.totalorder %v1445, %v519
        %v1447 = vsel %vm1446, 1, 0
        %1448 = vset.pattern.permute.xlu0 0
        %1449 = vperm.xlu0 %1448, %v1447
        %v1450 = vpop.permute.xlu0 %1449
        %vm1451 = vcmp.eq.s32.totalorder %v1450, 1
        %v1452 = vld [vmem:[#allocation4] sm:$0xff]
        %v1453 = vld [vmem:[#allocation5] sm:$0xff]
        %s1454 = scalar_lea.vmem [#allocation2], 8
        %v1455 = vld [vmem:[%s1454] sm:$0xff]
        %v1456 = vld [vmem:[#allocation16] sm:$0xff]
        %v1457 = vld [vmem:[#allocation16 + $0x8] sm:$0xff]
        %v1458 = vld [vmem:[#allocation16 + $0x10] sm:$0xff]
        %v1459 = vld [vmem:[#allocation16 + $0x18] sm:$0xff]
        %v1461 = vsel %vm536, %v1452, 0
        %1463 = vmatpush.msra.mxu0 0.0
        %1464 = vmatpush.msra.mxu0 0.0
        %1465 = vmatpush.msra.mxu0 0.0
        %1466 = vmatpush.msra.mxu0 0.0
        %1467 = vmatpush.msra.mxu0 0.0
        %1468 = vmatpush.msra.mxu0 0.0
        %1469 = vmatpush.msra.mxu0 0.0
        %1470 = vmatpush.msra.mxu0 0.0
        %1471 = vmatpush.msra.mxu0 0.0
        %1472 = vmatpush.msra.mxu0 0.0
        %1473 = vmatpush.msra.mxu0 0.0
        %1474 = vmatpush.msra.mxu0 0.0
        %1475 = vmatpush.msra.mxu0 %v1459
        %1476 = vmatpush.msra.mxu0 %v1458
        %1477 = vmatpush.msra.mxu0 %v1457
        %1478 = vmatpush.msra.mxu0 %v1456
        %1479 = vmatmul.f32.gmra.mxu0 %v1461
        %v1480 = vpop.f32.mrf.mxu0
        %v1481 = vadd.f32 0.0, %v1480
        %1482 = vdwg.mxu0
        %v1483 = vadd.f32 %v1455, %v1481
        %s1484 = scalar_lea.vmem [#allocation2], 72
        %v1485 = vld [vmem:[%s1484] sm:$0xff]
        %v1486 = vld [vmem:[%s1099] sm:$0xff]
        %v1487 = vld [vmem:[%s1099 + $0x8] sm:$0xff]
        %v1488 = vld [vmem:[%s1099 + $0x10] sm:$0xff]
        %v1489 = vld [vmem:[%s1099 + $0x18] sm:$0xff]
        %1490 = vmatpush.msra.mxu0 0.0
        %1491 = vmatpush.msra.mxu0 0.0
        %1492 = vmatpush.msra.mxu0 0.0
        %1493 = vmatpush.msra.mxu0 0.0
        %1494 = vmatpush.msra.mxu0 0.0
        %1495 = vmatpush.msra.mxu0 0.0
        %1496 = vmatpush.msra.mxu0 0.0
        %1497 = vmatpush.msra.mxu0 0.0
        %1498 = vmatpush.msra.mxu0 0.0
        %1499 = vmatpush.msra.mxu0 0.0
        %1500 = vmatpush.msra.mxu0 0.0
        %1501 = vmatpush.msra.mxu0 0.0
        %1502 = vmatpush.msra.mxu0 %v1489
        %1503 = vmatpush.msra.mxu0 %v1488
        %1504 = vmatpush.msra.mxu0 %v1487
        %1505 = vmatpush.msra.mxu0 %v1486
        %1506 = vmatmul.f32.gmra.mxu0 %v1461
        %v1507 = vpop.f32.mrf.mxu0
        %v1508 = vadd.f32 0.0, %v1507
        %1509 = vdwg.mxu0
        %v1510 = vadd.f32 %v1485, %v1508
        %s1511 = scalar_lea.vmem [#allocation2], 136
        %v1512 = vld [vmem:[%s1511] sm:$0xff]
        %v1513 = vld [vmem:[%s1126] sm:$0xff]
        %v1514 = vld [vmem:[%s1126 + $0x8] sm:$0xff]
        %v1515 = vld [vmem:[%s1126 + $0x10] sm:$0xff]
        %v1516 = vld [vmem:[%s1126 + $0x18] sm:$0xff]
        %1517 = vmatpush.msra.mxu0 0.0
        %1518 = vmatpush.msra.mxu0 0.0
        %1519 = vmatpush.msra.mxu0 0.0
        %1520 = vmatpush.msra.mxu0 0.0
        %1521 = vmatpush.msra.mxu0 0.0
        %1522 = vmatpush.msra.mxu0 0.0
        %1523 = vmatpush.msra.mxu0 0.0
        %1524 = vmatpush.msra.mxu0 0.0
        %1525 = vmatpush.msra.mxu0 0.0
        %1526 = vmatpush.msra.mxu0 0.0
        %1527 = vmatpush.msra.mxu0 0.0
        %1528 = vmatpush.msra.mxu0 0.0
        %1529 = vmatpush.msra.mxu0 %v1516
        %1530 = vmatpush.msra.mxu0 %v1515
        %1531 = vmatpush.msra.mxu0 %v1514
        %1532 = vmatpush.msra.mxu0 %v1513
        %1533 = vmatmul.f32.gmra.mxu0 %v1461
        %v1534 = vpop.f32.mrf.mxu0
        %v1535 = vadd.f32 0.0, %v1534
        %1536 = vdwg.mxu0
        %v1537 = vadd.f32 %v1512, %v1535
        %s1538 = scalar_lea.vmem [#allocation2], 200
        %v1539 = vld [vmem:[%s1538] sm:$0xff]
        %v1540 = vld [vmem:[%s1153] sm:$0xff]
        %v1541 = vld [vmem:[%s1153 + $0x8] sm:$0xff]
        %v1542 = vld [vmem:[%s1153 + $0x10] sm:$0xff]
        %v1543 = vld [vmem:[%s1153 + $0x18] sm:$0xff]
        %1544 = vmatpush.msra.mxu0 0.0
        %1545 = vmatpush.msra.mxu0 0.0
        %1546 = vmatpush.msra.mxu0 0.0
        %1547 = vmatpush.msra.mxu0 0.0
        %1548 = vmatpush.msra.mxu0 0.0
        %1549 = vmatpush.msra.mxu0 0.0
        %1550 = vmatpush.msra.mxu0 0.0
        %1551 = vmatpush.msra.mxu0 0.0
        %1552 = vmatpush.msra.mxu0 0.0
        %1553 = vmatpush.msra.mxu0 0.0
        %1554 = vmatpush.msra.mxu0 0.0
        %1555 = vmatpush.msra.mxu0 0.0
        %1556 = vmatpush.msra.mxu0 %v1543
        %1557 = vmatpush.msra.mxu0 %v1542
        %1558 = vmatpush.msra.mxu0 %v1541
        %1559 = vmatpush.msra.mxu0 %v1540
        %1560 = vmatmul.f32.gmra.mxu0 %v1461
        %v1561 = vpop.f32.mrf.mxu0
        %v1562 = vadd.f32 0.0, %v1561
        %1563 = vdwg.mxu0
        %v1564 = vadd.f32 %v1539, %v1562
        %v1565 = vxor.u32 %v1510, 2147483648
        %v1566 = vmul.f32 %v1565, 1.442695
        %v1567 = vpow.pop %v1566
        %v1568 = vadd.f32 %v1567, 1.0
        %v1569 = vrcp.pop %v1568
        %v1570 = vmul.f32 %v1568, %v1569
        %v1571 = vsub.f32 1.0, %v1570
        %v1572 = vmul.f32 %v1569, %v1571
        %v1573 = vadd.f32 %v1569, %v1572
        %vm1574 = vweird.f32 %v1568
        %vm1575 = vweird.f32 %v1569
        %vm1576 = vmor %vm1574, %vm1575
        %v1577 = vsel %vm1576, %v1569, %v1573
        %v1578 = vand.u32 2147483647, %v1568
        %vm1579 = vcmp.eq.f32.partialorder %v1578, 8.507059e+37
        %v1580 = vand.u32 %v1568, 2147483648
        %v1581 = vor.u32 1.1754944e-38, %v1580
        %v1582 = vsel %vm1579, %v1581, %v1577
        %v1583 = vmul.f32 1.0, %v1582
        %v1584 = vmul.f32 %v1583, %v1453
        %v1585 = vxor.u32 %v1483, 2147483648
        %v1586 = vmul.f32 %v1585, 1.442695
        %v1587 = vpow.pop %v1586
        %v1588 = vadd.f32 %v1587, 1.0
        %v1589 = vrcp.pop %v1588
        %v1590 = vmul.f32 %v1588, %v1589
        %v1591 = vsub.f32 1.0, %v1590
        %v1592 = vmul.f32 %v1589, %v1591
        %v1593 = vadd.f32 %v1589, %v1592
        %vm1594 = vweird.f32 %v1588
        %vm1595 = vweird.f32 %v1589
        %vm1596 = vmor %vm1594, %vm1595
        %v1597 = vsel %vm1596, %v1589, %v1593
        %v1598 = vand.u32 2147483647, %v1588
        %vm1599 = vcmp.eq.f32.partialorder %v1598, 8.507059e+37
        %v1600 = vand.u32 %v1588, 2147483648
        %v1601 = vor.u32 1.1754944e-38, %v1600
        %v1602 = vsel %vm1599, %v1601, %v1597
        %v1603 = vmul.f32 1.0, %v1602
        %v1604 = vtanh.pop %v1537
        %v1605 = vmul.f32 %v1603, %v1604
        %v1606 = vadd.f32 %v1584, %v1605
        %v1607 = vxor.u32 %v1564, 2147483648
        %v1608 = vmul.f32 %v1607, 1.442695
        %v1609 = vpow.pop %v1608
        %v1610 = vadd.f32 %v1609, 1.0
        %v1611 = vrcp.pop %v1610
        %v1612 = vmul.f32 %v1610, %v1611
        %v1613 = vsub.f32 1.0, %v1612
        %v1614 = vmul.f32 %v1611, %v1613
        %v1615 = vadd.f32 %v1611, %v1614
        %vm1616 = vweird.f32 %v1610
        %vm1617 = vweird.f32 %v1611
        %vm1618 = vmor %vm1616, %vm1617
        %v1619 = vsel %vm1618, %v1611, %v1615
        %v1620 = vand.u32 2147483647, %v1610
        %vm1621 = vcmp.eq.f32.partialorder %v1620, 8.507059e+37
        %v1622 = vand.u32 %v1610, 2147483648
        %v1623 = vor.u32 1.1754944e-38, %v1622
        %v1624 = vsel %vm1621, %v1623, %v1619
        %v1625 = vmul.f32 1.0, %v1624
        %v1626 = vtanh.pop %v1606
        %v1627 = vmul.f32 %v1625, %v1626
        %v1628 = vsel %vm1451, %v1627, %v1452
        %1629 = vst.msk [vmem:[#allocation4] sm:$0xff] %vm536, %v1628
        %v1630 = vsel %vm1451, %v1606, %v1453
        %1631 = vst.msk [vmem:[#allocation5] sm:$0xff] %vm536, %v1630
        %v1632 = vsel %vm1451, %v1627, 0.0
        %s1633 = scalar_lea.vmem %s496, 8 [#allocation19]
        %1634 = vst.msk [vmem:[%s1633] sm:$0xff] %vm536, %v1632
        %s1635 = sadd.s32 %s1249, 6
        %v1636 = vstv %s1635
        %vm1637 = vcmp.lt.s32.totalorder %v1636, %v519
        %v1638 = vsel %vm1637, 1, 0
        %1639 = vset.pattern.permute.xlu0 0
        %1640 = vperm.xlu0 %1639, %v1638
        %v1641 = vpop.permute.xlu0 %1640
        %vm1642 = vcmp.eq.s32.totalorder %v1641, 1
        %v1643 = vld [vmem:[#allocation6] sm:$0xff]
        %v1644 = vld [vmem:[#allocation7] sm:$0xff]
        %s1645 = scalar_lea.vmem [#allocation3], 48
        %v1646 = vld [vmem:[%s1645] sm:$0xff]
        %v1647 = vld [vmem:[#allocation17] sm:$0xff]
        %v1648 = vld [vmem:[#allocation17 + $0x8] sm:$0xff]
        %v1649 = vld [vmem:[#allocation17 + $0x10] sm:$0xff]
        %v1650 = vld [vmem:[#allocation17 + $0x18] sm:$0xff]
        %v1652 = vsel %vm536, %v1643, 0
        %1654 = vmatpush.msra.mxu0 0.0
        %1655 = vmatpush.msra.mxu0 0.0
        %1656 = vmatpush.msra.mxu0 0.0
        %1657 = vmatpush.msra.mxu0 0.0
        %1658 = vmatpush.msra.mxu0 0.0
        %1659 = vmatpush.msra.mxu0 0.0
        %1660 = vmatpush.msra.mxu0 0.0
        %1661 = vmatpush.msra.mxu0 0.0
        %1662 = vmatpush.msra.mxu0 0.0
        %1663 = vmatpush.msra.mxu0 0.0
        %1664 = vmatpush.msra.mxu0 0.0
        %1665 = vmatpush.msra.mxu0 0.0
        %1666 = vmatpush.msra.mxu0 %v1650
        %1667 = vmatpush.msra.mxu0 %v1649
        %1668 = vmatpush.msra.mxu0 %v1648
        %1669 = vmatpush.msra.mxu0 %v1647
        %1670 = vmatmul.f32.gmra.mxu0 %v1652
        %v1671 = vpop.f32.mrf.mxu0
        %v1672 = vadd.f32 0.0, %v1671
        %1673 = vdwg.mxu0
        %v1674 = vadd.f32 %v1646, %v1672
        %s1675 = scalar_lea.vmem [#allocation3], 112
        %v1676 = vld [vmem:[%s1675] sm:$0xff]
        %v1677 = vld [vmem:[%s1292] sm:$0xff]
        %v1678 = vld [vmem:[%s1292 + $0x8] sm:$0xff]
        %v1679 = vld [vmem:[%s1292 + $0x10] sm:$0xff]
        %v1680 = vld [vmem:[%s1292 + $0x18] sm:$0xff]
        %1681 = vmatpush.msra.mxu0 0.0
        %1682 = vmatpush.msra.mxu0 0.0
        %1683 = vmatpush.msra.mxu0 0.0
        %1684 = vmatpush.msra.mxu0 0.0
        %1685 = vmatpush.msra.mxu0 0.0
        %1686 = vmatpush.msra.mxu0 0.0
        %1687 = vmatpush.msra.mxu0 0.0
        %1688 = vmatpush.msra.mxu0 0.0
        %1689 = vmatpush.msra.mxu0 0.0
        %1690 = vmatpush.msra.mxu0 0.0
        %1691 = vmatpush.msra.mxu0 0.0
        %1692 = vmatpush.msra.mxu0 0.0
        %1693 = vmatpush.msra.mxu0 %v1680
        %1694 = vmatpush.msra.mxu0 %v1679
        %1695 = vmatpush.msra.mxu0 %v1678
        %1696 = vmatpush.msra.mxu0 %v1677
        %1697 = vmatmul.f32.gmra.mxu0 %v1652
        %v1698 = vpop.f32.mrf.mxu0
        %v1699 = vadd.f32 0.0, %v1698
        %1700 = vdwg.mxu0
        %v1701 = vadd.f32 %v1676, %v1699
        %s1702 = scalar_lea.vmem [#allocation3], 176
        %v1703 = vld [vmem:[%s1702] sm:$0xff]
        %v1704 = vld [vmem:[%s1320] sm:$0xff]
        %v1705 = vld [vmem:[%s1320 + $0x8] sm:$0xff]
        %v1706 = vld [vmem:[%s1320 + $0x10] sm:$0xff]
        %v1707 = vld [vmem:[%s1320 + $0x18] sm:$0xff]
        %1708 = vmatpush.msra.mxu0 0.0
        %1709 = vmatpush.msra.mxu0 0.0
        %1710 = vmatpush.msra.mxu0 0.0
        %1711 = vmatpush.msra.mxu0 0.0
        %1712 = vmatpush.msra.mxu0 0.0
        %1713 = vmatpush.msra.mxu0 0.0
        %1714 = vmatpush.msra.mxu0 0.0
        %1715 = vmatpush.msra.mxu0 0.0
        %1716 = vmatpush.msra.mxu0 0.0
        %1717 = vmatpush.msra.mxu0 0.0
        %1718 = vmatpush.msra.mxu0 0.0
        %1719 = vmatpush.msra.mxu0 0.0
        %1720 = vmatpush.msra.mxu0 %v1707
        %1721 = vmatpush.msra.mxu0 %v1706
        %1722 = vmatpush.msra.mxu0 %v1705
        %1723 = vmatpush.msra.mxu0 %v1704
        %1724 = vmatmul.f32.gmra.mxu0 %v1652
        %v1725 = vpop.f32.mrf.mxu0
        %v1726 = vadd.f32 0.0, %v1725
        %1727 = vdwg.mxu0
        %v1728 = vadd.f32 %v1703, %v1726
        %s1729 = scalar_lea.vmem [#allocation3], 240
        %v1730 = vld [vmem:[%s1729] sm:$0xff]
        %v1731 = vld [vmem:[%s1348] sm:$0xff]
        %v1732 = vld [vmem:[%s1348 + $0x8] sm:$0xff]
        %v1733 = vld [vmem:[%s1348 + $0x10] sm:$0xff]
        %v1734 = vld [vmem:[%s1348 + $0x18] sm:$0xff]
        %1735 = vmatpush.msra.mxu0 0.0
        %1736 = vmatpush.msra.mxu0 0.0
        %1737 = vmatpush.msra.mxu0 0.0
        %1738 = vmatpush.msra.mxu0 0.0
        %1739 = vmatpush.msra.mxu0 0.0
        %1740 = vmatpush.msra.mxu0 0.0
        %1741 = vmatpush.msra.mxu0 0.0
        %1742 = vmatpush.msra.mxu0 0.0
        %1743 = vmatpush.msra.mxu0 0.0
        %1744 = vmatpush.msra.mxu0 0.0
        %1745 = vmatpush.msra.mxu0 0.0
        %1746 = vmatpush.msra.mxu0 0.0
        %1747 = vmatpush.msra.mxu0 %v1734
        %1748 = vmatpush.msra.mxu0 %v1733
        %1749 = vmatpush.msra.mxu0 %v1732
        %1750 = vmatpush.msra.mxu0 %v1731
        %1751 = vmatmul.f32.gmra.mxu0 %v1652
        %v1752 = vpop.f32.mrf.mxu0
        %v1753 = vadd.f32 0.0, %v1752
        %1754 = vdwg.mxu0
        %v1755 = vadd.f32 %v1730, %v1753
        %v1756 = vxor.u32 %v1701, 2147483648
        %v1757 = vmul.f32 %v1756, 1.442695
        %v1758 = vpow.pop %v1757
        %v1759 = vadd.f32 %v1758, 1.0
        %v1760 = vrcp.pop %v1759
        %v1761 = vmul.f32 %v1759, %v1760
        %v1762 = vsub.f32 1.0, %v1761
        %v1763 = vmul.f32 %v1760, %v1762
        %v1764 = vadd.f32 %v1760, %v1763
        %vm1765 = vweird.f32 %v1759
        %vm1766 = vweird.f32 %v1760
        %vm1767 = vmor %vm1765, %vm1766
        %v1768 = vsel %vm1767, %v1760, %v1764
        %v1769 = vand.u32 2147483647, %v1759
        %vm1770 = vcmp.eq.f32.partialorder %v1769, 8.507059e+37
        %v1771 = vand.u32 %v1759, 2147483648
        %v1772 = vor.u32 1.1754944e-38, %v1771
        %v1773 = vsel %vm1770, %v1772, %v1768
        %v1774 = vmul.f32 1.0, %v1773
        %v1775 = vmul.f32 %v1774, %v1644
        %v1776 = vxor.u32 %v1674, 2147483648
        %v1777 = vmul.f32 %v1776, 1.442695
        %v1778 = vpow.pop %v1777
        %v1779 = vadd.f32 %v1778, 1.0
        %v1780 = vrcp.pop %v1779
        %v1781 = vmul.f32 %v1779, %v1780
        %v1782 = vsub.f32 1.0, %v1781
        %v1783 = vmul.f32 %v1780, %v1782
        %v1784 = vadd.f32 %v1780, %v1783
        %vm1785 = vweird.f32 %v1779
        %vm1786 = vweird.f32 %v1780
        %vm1787 = vmor %vm1785, %vm1786
        %v1788 = vsel %vm1787, %v1780, %v1784
        %v1789 = vand.u32 2147483647, %v1779
        %vm1790 = vcmp.eq.f32.partialorder %v1789, 8.507059e+37
        %v1791 = vand.u32 %v1779, 2147483648
        %v1792 = vor.u32 1.1754944e-38, %v1791
        %v1793 = vsel %vm1790, %v1792, %v1788
        %v1794 = vmul.f32 1.0, %v1793
        %v1795 = vtanh.pop %v1728
        %v1796 = vmul.f32 %v1794, %v1795
        %v1797 = vadd.f32 %v1775, %v1796
        %v1798 = vxor.u32 %v1755, 2147483648
        %v1799 = vmul.f32 %v1798, 1.442695
        %v1800 = vpow.pop %v1799
        %v1801 = vadd.f32 %v1800, 1.0
        %v1802 = vrcp.pop %v1801
        %v1803 = vmul.f32 %v1801, %v1802
        %v1804 = vsub.f32 1.0, %v1803
        %v1805 = vmul.f32 %v1802, %v1804
        %v1806 = vadd.f32 %v1802, %v1805
        %vm1807 = vweird.f32 %v1801
        %vm1808 = vweird.f32 %v1802
        %vm1809 = vmor %vm1807, %vm1808
        %v1810 = vsel %vm1809, %v1802, %v1806
        %v1811 = vand.u32 2147483647, %v1801
        %vm1812 = vcmp.eq.f32.partialorder %v1811, 8.507059e+37
        %v1813 = vand.u32 %v1801, 2147483648
        %v1814 = vor.u32 1.1754944e-38, %v1813
        %v1815 = vsel %vm1812, %v1814, %v1810
        %v1816 = vmul.f32 1.0, %v1815
        %v1817 = vtanh.pop %v1797
        %v1818 = vmul.f32 %v1816, %v1817
        %v1819 = vsel %vm1642, %v1818, %v1643
        %1820 = vst.msk [vmem:[#allocation6] sm:$0xff] %vm536, %v1819
        %v1821 = vsel %vm1642, %v1797, %v1644
        %1822 = vst.msk [vmem:[#allocation7] sm:$0xff] %vm536, %v1821
        %v1823 = vsel %vm1642, %v1818, 0.0
        %s1824 = scalar_lea.vmem %s503, 48 [#allocation20]
        %1825 = vst.msk [vmem:[%s1824] sm:$0xff] %vm536, %v1823
        %s1826 = sadd.s32 %s1059, 2
        %v1827 = vstv %s1826
        %vm1828 = vcmp.lt.s32.totalorder %v1827, %v519
        %v1829 = vsel %vm1828, 1, 0
        %1830 = vset.pattern.permute.xlu0 0
        %1831 = vperm.xlu0 %1830, %v1829
        %v1832 = vpop.permute.xlu0 %1831
        %vm1833 = vcmp.eq.s32.totalorder %v1832, 1
        %v1834 = vld [vmem:[#allocation4] sm:$0xff]
        %v1835 = vld [vmem:[#allocation5] sm:$0xff]
        %s1836 = scalar_lea.vmem [#allocation2], 16
        %v1837 = vld [vmem:[%s1836] sm:$0xff]
        %v1838 = vld [vmem:[#allocation16] sm:$0xff]
        %v1839 = vld [vmem:[#allocation16 + $0x8] sm:$0xff]
        %v1840 = vld [vmem:[#allocation16 + $0x10] sm:$0xff]
        %v1841 = vld [vmem:[#allocation16 + $0x18] sm:$0xff]
        %v1843 = vsel %vm536, %v1834, 0
        %1845 = vmatpush.msra.mxu0 0.0
        %1846 = vmatpush.msra.mxu0 0.0
        %1847 = vmatpush.msra.mxu0 0.0
        %1848 = vmatpush.msra.mxu0 0.0
        %1849 = vmatpush.msra.mxu0 0.0
        %1850 = vmatpush.msra.mxu0 0.0
        %1851 = vmatpush.msra.mxu0 0.0
        %1852 = vmatpush.msra.mxu0 0.0
        %1853 = vmatpush.msra.mxu0 0.0
        %1854 = vmatpush.msra.mxu0 0.0
        %1855 = vmatpush.msra.mxu0 0.0
        %1856 = vmatpush.msra.mxu0 0.0
        %1857 = vmatpush.msra.mxu0 %v1841
        %1858 = vmatpush.msra.mxu0 %v1840
        %1859 = vmatpush.msra.mxu0 %v1839
        %1860 = vmatpush.msra.mxu0 %v1838
        %1861 = vmatmul.f32.gmra.mxu0 %v1843
        %v1862 = vpop.f32.mrf.mxu0
        %v1863 = vadd.f32 0.0, %v1862
        %1864 = vdwg.mxu0
        %v1865 = vadd.f32 %v1837, %v1863
        %s1866 = scalar_lea.vmem [#allocation2], 80
        %v1867 = vld [vmem:[%s1866] sm:$0xff]
        %v1868 = vld [vmem:[%s1099] sm:$0xff]
        %v1869 = vld [vmem:[%s1099 + $0x8] sm:$0xff]
        %v1870 = vld [vmem:[%s1099 + $0x10] sm:$0xff]
        %v1871 = vld [vmem:[%s1099 + $0x18] sm:$0xff]
        %1872 = vmatpush.msra.mxu0 0.0
        %1873 = vmatpush.msra.mxu0 0.0
        %1874 = vmatpush.msra.mxu0 0.0
        %1875 = vmatpush.msra.mxu0 0.0
        %1876 = vmatpush.msra.mxu0 0.0
        %1877 = vmatpush.msra.mxu0 0.0
        %1878 = vmatpush.msra.mxu0 0.0
        %1879 = vmatpush.msra.mxu0 0.0
        %1880 = vmatpush.msra.mxu0 0.0
        %1881 = vmatpush.msra.mxu0 0.0
        %1882 = vmatpush.msra.mxu0 0.0
        %1883 = vmatpush.msra.mxu0 0.0
        %1884 = vmatpush.msra.mxu0 %v1871
        %1885 = vmatpush.msra.mxu0 %v1870
        %1886 = vmatpush.msra.mxu0 %v1869
        %1887 = vmatpush.msra.mxu0 %v1868
        %1888 = vmatmul.f32.gmra.mxu0 %v1843
        %v1889 = vpop.f32.mrf.mxu0
        %v1890 = vadd.f32 0.0, %v1889
        %1891 = vdwg.mxu0
        %v1892 = vadd.f32 %v1867, %v1890
        %s1893 = scalar_lea.vmem [#allocation2], 144
        %v1894 = vld [vmem:[%s1893] sm:$0xff]
        %v1895 = vld [vmem:[%s1126] sm:$0xff]
        %v1896 = vld [vmem:[%s1126 + $0x8] sm:$0xff]
        %v1897 = vld [vmem:[%s1126 + $0x10] sm:$0xff]
        %v1898 = vld [vmem:[%s1126 + $0x18] sm:$0xff]
        %1899 = vmatpush.msra.mxu0 0.0
        %1900 = vmatpush.msra.mxu0 0.0
        %1901 = vmatpush.msra.mxu0 0.0
        %1902 = vmatpush.msra.mxu0 0.0
        %1903 = vmatpush.msra.mxu0 0.0
        %1904 = vmatpush.msra.mxu0 0.0
        %1905 = vmatpush.msra.mxu0 0.0
        %1906 = vmatpush.msra.mxu0 0.0
        %1907 = vmatpush.msra.mxu0 0.0
        %1908 = vmatpush.msra.mxu0 0.0
        %1909 = vmatpush.msra.mxu0 0.0
        %1910 = vmatpush.msra.mxu0 0.0
        %1911 = vmatpush.msra.mxu0 %v1898
        %1912 = vmatpush.msra.mxu0 %v1897
        %1913 = vmatpush.msra.mxu0 %v1896
        %1914 = vmatpush.msra.mxu0 %v1895
        %1915 = vmatmul.f32.gmra.mxu0 %v1843
        %v1916 = vpop.f32.mrf.mxu0
        %v1917 = vadd.f32 0.0, %v1916
        %1918 = vdwg.mxu0
        %v1919 = vadd.f32 %v1894, %v1917
        %s1920 = scalar_lea.vmem [#allocation2], 208
        %v1921 = vld [vmem:[%s1920] sm:$0xff]
        %v1922 = vld [vmem:[%s1153] sm:$0xff]
        %v1923 = vld [vmem:[%s1153 + $0x8] sm:$0xff]
        %v1924 = vld [vmem:[%s1153 + $0x10] sm:$0xff]
        %v1925 = vld [vmem:[%s1153 + $0x18] sm:$0xff]
        %1926 = vmatpush.msra.mxu0 0.0
        %1927 = vmatpush.msra.mxu0 0.0
        %1928 = vmatpush.msra.mxu0 0.0
        %1929 = vmatpush.msra.mxu0 0.0
        %1930 = vmatpush.msra.mxu0 0.0
        %1931 = vmatpush.msra.mxu0 0.0
        %1932 = vmatpush.msra.mxu0 0.0
        %1933 = vmatpush.msra.mxu0 0.0
        %1934 = vmatpush.msra.mxu0 0.0
        %1935 = vmatpush.msra.mxu0 0.0
        %1936 = vmatpush.msra.mxu0 0.0
        %1937 = vmatpush.msra.mxu0 0.0
        %1938 = vmatpush.msra.mxu0 %v1925
        %1939 = vmatpush.msra.mxu0 %v1924
        %1940 = vmatpush.msra.mxu0 %v1923
        %1941 = vmatpush.msra.mxu0 %v1922
        %1942 = vmatmul.f32.gmra.mxu0 %v1843
        %v1943 = vpop.f32.mrf.mxu0
        %v1944 = vadd.f32 0.0, %v1943
        %1945 = vdwg.mxu0
        %v1946 = vadd.f32 %v1921, %v1944
        %v1947 = vxor.u32 %v1892, 2147483648
        %v1948 = vmul.f32 %v1947, 1.442695
        %v1949 = vpow.pop %v1948
        %v1950 = vadd.f32 %v1949, 1.0
        %v1951 = vrcp.pop %v1950
        %v1952 = vmul.f32 %v1950, %v1951
        %v1953 = vsub.f32 1.0, %v1952
        %v1954 = vmul.f32 %v1951, %v1953
        %v1955 = vadd.f32 %v1951, %v1954
        %vm1956 = vweird.f32 %v1950
        %vm1957 = vweird.f32 %v1951
        %vm1958 = vmor %vm1956, %vm1957
        %v1959 = vsel %vm1958, %v1951, %v1955
        %v1960 = vand.u32 2147483647, %v1950
        %vm1961 = vcmp.eq.f32.partialorder %v1960, 8.507059e+37
        %v1962 = vand.u32 %v1950, 2147483648
        %v1963 = vor.u32 1.1754944e-38, %v1962
        %v1964 = vsel %vm1961, %v1963, %v1959
        %v1965 = vmul.f32 1.0, %v1964
        %v1966 = vmul.f32 %v1965, %v1835
        %v1967 = vxor.u32 %v1865, 2147483648
        %v1968 = vmul.f32 %v1967, 1.442695
        %v1969 = vpow.pop %v1968
        %v1970 = vadd.f32 %v1969, 1.0
        %v1971 = vrcp.pop %v1970
        %v1972 = vmul.f32 %v1970, %v1971
        %v1973 = vsub.f32 1.0, %v1972
        %v1974 = vmul.f32 %v1971, %v1973
        %v1975 = vadd.f32 %v1971, %v1974
        %vm1976 = vweird.f32 %v1970
        %vm1977 = vweird.f32 %v1971
        %vm1978 = vmor %vm1976, %vm1977
        %v1979 = vsel %vm1978, %v1971, %v1975
        %v1980 = vand.u32 2147483647, %v1970
        %vm1981 = vcmp.eq.f32.partialorder %v1980, 8.507059e+37
        %v1982 = vand.u32 %v1970, 2147483648
        %v1983 = vor.u32 1.1754944e-38, %v1982
        %v1984 = vsel %vm1981, %v1983, %v1979
        %v1985 = vmul.f32 1.0, %v1984
        %v1986 = vtanh.pop %v1919
        %v1987 = vmul.f32 %v1985, %v1986
        %v1988 = vadd.f32 %v1966, %v1987
        %v1989 = vxor.u32 %v1946, 2147483648
        %v1990 = vmul.f32 %v1989, 1.442695
        %v1991 = vpow.pop %v1990
        %v1992 = vadd.f32 %v1991, 1.0
        %v1993 = vrcp.pop %v1992
        %v1994 = vmul.f32 %v1992, %v1993
        %v1995 = vsub.f32 1.0, %v1994
        %v1996 = vmul.f32 %v1993, %v1995
        %v1997 = vadd.f32 %v1993, %v1996
        %vm1998 = vweird.f32 %v1992
        %vm1999 = vweird.f32 %v1993
        %vm2000 = vmor %vm1998, %vm1999
        %v2001 = vsel %vm2000, %v1993, %v1997
        %v2002 = vand.u32 2147483647, %v1992
        %vm2003 = vcmp.eq.f32.partialorder %v2002, 8.507059e+37
        %v2004 = vand.u32 %v1992, 2147483648
        %v2005 = vor.u32 1.1754944e-38, %v2004
        %v2006 = vsel %vm2003, %v2005, %v2001
        %v2007 = vmul.f32 1.0, %v2006
        %v2008 = vtanh.pop %v1988
        %v2009 = vmul.f32 %v2007, %v2008
        %v2010 = vsel %vm1833, %v2009, %v1834
        %2011 = vst.msk [vmem:[#allocation4] sm:$0xff] %vm536, %v2010
        %v2012 = vsel %vm1833, %v1988, %v1835
        %2013 = vst.msk [vmem:[#allocation5] sm:$0xff] %vm536, %v2012
        %v2014 = vsel %vm1833, %v2009, 0.0
        %s2015 = scalar_lea.vmem %s496, 16 [#allocation19]
        %2016 = vst.msk [vmem:[%s2015] sm:$0xff] %vm536, %v2014
        %s2017 = sadd.s32 %s1249, 5
        %v2018 = vstv %s2017
        %vm2019 = vcmp.lt.s32.totalorder %v2018, %v519
        %v2020 = vsel %vm2019, 1, 0
        %2021 = vset.pattern.permute.xlu0 0
        %2022 = vperm.xlu0 %2021, %v2020
        %v2023 = vpop.permute.xlu0 %2022
        %vm2024 = vcmp.eq.s32.totalorder %v2023, 1
        %v2025 = vld [vmem:[#allocation6] sm:$0xff]
        %v2026 = vld [vmem:[#allocation7] sm:$0xff]
        %s2027 = scalar_lea.vmem [#allocation3], 40
        %v2028 = vld [vmem:[%s2027] sm:$0xff]
        %v2029 = vld [vmem:[#allocation17] sm:$0xff]
        %v2030 = vld [vmem:[#allocation17 + $0x8] sm:$0xff]
        %v2031 = vld [vmem:[#allocation17 + $0x10] sm:$0xff]
        %v2032 = vld [vmem:[#allocation17 + $0x18] sm:$0xff]
        %v2034 = vsel %vm536, %v2025, 0
        %2036 = vmatpush.msra.mxu0 0.0
        %2037 = vmatpush.msra.mxu0 0.0
        %2038 = vmatpush.msra.mxu0 0.0
        %2039 = vmatpush.msra.mxu0 0.0
        %2040 = vmatpush.msra.mxu0 0.0
        %2041 = vmatpush.msra.mxu0 0.0
        %2042 = vmatpush.msra.mxu0 0.0
        %2043 = vmatpush.msra.mxu0 0.0
        %2044 = vmatpush.msra.mxu0 0.0
        %2045 = vmatpush.msra.mxu0 0.0
        %2046 = vmatpush.msra.mxu0 0.0
        %2047 = vmatpush.msra.mxu0 0.0
        %2048 = vmatpush.msra.mxu0 %v2032
        %2049 = vmatpush.msra.mxu0 %v2031
        %2050 = vmatpush.msra.mxu0 %v2030
        %2051 = vmatpush.msra.mxu0 %v2029
        %2052 = vmatmul.f32.gmra.mxu0 %v2034
        %v2053 = vpop.f32.mrf.mxu0
        %v2054 = vadd.f32 0.0, %v2053
        %2055 = vdwg.mxu0
        %v2056 = vadd.f32 %v2028, %v2054
        %s2057 = scalar_lea.vmem [#allocation3], 104
        %v2058 = vld [vmem:[%s2057] sm:$0xff]
        %v2059 = vld [vmem:[%s1292] sm:$0xff]
        %v2060 = vld [vmem:[%s1292 + $0x8] sm:$0xff]
        %v2061 = vld [vmem:[%s1292 + $0x10] sm:$0xff]
        %v2062 = vld [vmem:[%s1292 + $0x18] sm:$0xff]
        %2063 = vmatpush.msra.mxu0 0.0
        %2064 = vmatpush.msra.mxu0 0.0
        %2065 = vmatpush.msra.mxu0 0.0
        %2066 = vmatpush.msra.mxu0 0.0
        %2067 = vmatpush.msra.mxu0 0.0
        %2068 = vmatpush.msra.mxu0 0.0
        %2069 = vmatpush.msra.mxu0 0.0
        %2070 = vmatpush.msra.mxu0 0.0
        %2071 = vmatpush.msra.mxu0 0.0
        %2072 = vmatpush.msra.mxu0 0.0
        %2073 = vmatpush.msra.mxu0 0.0
        %2074 = vmatpush.msra.mxu0 0.0
        %2075 = vmatpush.msra.mxu0 %v2062
        %2076 = vmatpush.msra.mxu0 %v2061
        %2077 = vmatpush.msra.mxu0 %v2060
        %2078 = vmatpush.msra.mxu0 %v2059
        %2079 = vmatmul.f32.gmra.mxu0 %v2034
        %v2080 = vpop.f32.mrf.mxu0
        %v2081 = vadd.f32 0.0, %v2080
        %2082 = vdwg.mxu0
        %v2083 = vadd.f32 %v2058, %v2081
        %s2084 = scalar_lea.vmem [#allocation3], 168
        %v2085 = vld [vmem:[%s2084] sm:$0xff]
        %v2086 = vld [vmem:[%s1320] sm:$0xff]
        %v2087 = vld [vmem:[%s1320 + $0x8] sm:$0xff]
        %v2088 = vld [vmem:[%s1320 + $0x10] sm:$0xff]
        %v2089 = vld [vmem:[%s1320 + $0x18] sm:$0xff]
        %2090 = vmatpush.msra.mxu0 0.0
        %2091 = vmatpush.msra.mxu0 0.0
        %2092 = vmatpush.msra.mxu0 0.0
        %2093 = vmatpush.msra.mxu0 0.0
        %2094 = vmatpush.msra.mxu0 0.0
        %2095 = vmatpush.msra.mxu0 0.0
        %2096 = vmatpush.msra.mxu0 0.0
        %2097 = vmatpush.msra.mxu0 0.0
        %2098 = vmatpush.msra.mxu0 0.0
        %2099 = vmatpush.msra.mxu0 0.0
        %2100 = vmatpush.msra.mxu0 0.0
        %2101 = vmatpush.msra.mxu0 0.0
        %2102 = vmatpush.msra.mxu0 %v2089
        %2103 = vmatpush.msra.mxu0 %v2088
        %2104 = vmatpush.msra.mxu0 %v2087
        %2105 = vmatpush.msra.mxu0 %v2086
        %2106 = vmatmul.f32.gmra.mxu0 %v2034
        %v2107 = vpop.f32.mrf.mxu0
        %v2108 = vadd.f32 0.0, %v2107
        %2109 = vdwg.mxu0
        %v2110 = vadd.f32 %v2085, %v2108
        %s2111 = scalar_lea.vmem [#allocation3], 232
        %v2112 = vld [vmem:[%s2111] sm:$0xff]
        %v2113 = vld [vmem:[%s1348] sm:$0xff]
        %v2114 = vld [vmem:[%s1348 + $0x8] sm:$0xff]
        %v2115 = vld [vmem:[%s1348 + $0x10] sm:$0xff]
        %v2116 = vld [vmem:[%s1348 + $0x18] sm:$0xff]
        %2117 = vmatpush.msra.mxu0 0.0
        %2118 = vmatpush.msra.mxu0 0.0
        %2119 = vmatpush.msra.mxu0 0.0
        %2120 = vmatpush.msra.mxu0 0.0
        %2121 = vmatpush.msra.mxu0 0.0
        %2122 = vmatpush.msra.mxu0 0.0
        %2123 = vmatpush.msra.mxu0 0.0
        %2124 = vmatpush.msra.mxu0 0.0
        %2125 = vmatpush.msra.mxu0 0.0
        %2126 = vmatpush.msra.mxu0 0.0
        %2127 = vmatpush.msra.mxu0 0.0
        %2128 = vmatpush.msra.mxu0 0.0
        %2129 = vmatpush.msra.mxu0 %v2116
        %2130 = vmatpush.msra.mxu0 %v2115
        %2131 = vmatpush.msra.mxu0 %v2114
        %2132 = vmatpush.msra.mxu0 %v2113
        %2133 = vmatmul.f32.gmra.mxu0 %v2034
        %v2134 = vpop.f32.mrf.mxu0
        %v2135 = vadd.f32 0.0, %v2134
        %2136 = vdwg.mxu0
        %v2137 = vadd.f32 %v2112, %v2135
        %v2138 = vxor.u32 %v2083, 2147483648
        %v2139 = vmul.f32 %v2138, 1.442695
        %v2140 = vpow.pop %v2139
        %v2141 = vadd.f32 %v2140, 1.0
        %v2142 = vrcp.pop %v2141
        %v2143 = vmul.f32 %v2141, %v2142
        %v2144 = vsub.f32 1.0, %v2143
        %v2145 = vmul.f32 %v2142, %v2144
        %v2146 = vadd.f32 %v2142, %v2145
        %vm2147 = vweird.f32 %v2141
        %vm2148 = vweird.f32 %v2142
        %vm2149 = vmor %vm2147, %vm2148
        %v2150 = vsel %vm2149, %v2142, %v2146
        %v2151 = vand.u32 2147483647, %v2141
        %vm2152 = vcmp.eq.f32.partialorder %v2151, 8.507059e+37
        %v2153 = vand.u32 %v2141, 2147483648
        %v2154 = vor.u32 1.1754944e-38, %v2153
        %v2155 = vsel %vm2152, %v2154, %v2150
        %v2156 = vmul.f32 1.0, %v2155
        %v2157 = vmul.f32 %v2156, %v2026
        %v2158 = vxor.u32 %v2056, 2147483648
        %v2159 = vmul.f32 %v2158, 1.442695
        %v2160 = vpow.pop %v2159
        %v2161 = vadd.f32 %v2160, 1.0
        %v2162 = vrcp.pop %v2161
        %v2163 = vmul.f32 %v2161, %v2162
        %v2164 = vsub.f32 1.0, %v2163
        %v2165 = vmul.f32 %v2162, %v2164
        %v2166 = vadd.f32 %v2162, %v2165
        %vm2167 = vweird.f32 %v2161
        %vm2168 = vweird.f32 %v2162
        %vm2169 = vmor %vm2167, %vm2168
        %v2170 = vsel %vm2169, %v2162, %v2166
        %v2171 = vand.u32 2147483647, %v2161
        %vm2172 = vcmp.eq.f32.partialorder %v2171, 8.507059e+37
        %v2173 = vand.u32 %v2161, 2147483648
        %v2174 = vor.u32 1.1754944e-38, %v2173
        %v2175 = vsel %vm2172, %v2174, %v2170
        %v2176 = vmul.f32 1.0, %v2175
        %v2177 = vtanh.pop %v2110
        %v2178 = vmul.f32 %v2176, %v2177
        %v2179 = vadd.f32 %v2157, %v2178
        %v2180 = vxor.u32 %v2137, 2147483648
        %v2181 = vmul.f32 %v2180, 1.442695
        %v2182 = vpow.pop %v2181
        %v2183 = vadd.f32 %v2182, 1.0
        %v2184 = vrcp.pop %v2183
        %v2185 = vmul.f32 %v2183, %v2184
        %v2186 = vsub.f32 1.0, %v2185
        %v2187 = vmul.f32 %v2184, %v2186
        %v2188 = vadd.f32 %v2184, %v2187
        %vm2189 = vweird.f32 %v2183
        %vm2190 = vweird.f32 %v2184
        %vm2191 = vmor %vm2189, %vm2190
        %v2192 = vsel %vm2191, %v2184, %v2188
        %v2193 = vand.u32 2147483647, %v2183
        %vm2194 = vcmp.eq.f32.partialorder %v2193, 8.507059e+37
        %v2195 = vand.u32 %v2183, 2147483648
        %v2196 = vor.u32 1.1754944e-38, %v2195
        %v2197 = vsel %vm2194, %v2196, %v2192
        %v2198 = vmul.f32 1.0, %v2197
        %v2199 = vtanh.pop %v2179
        %v2200 = vmul.f32 %v2198, %v2199
        %v2201 = vsel %vm2024, %v2200, %v2025
        %2202 = vst.msk [vmem:[#allocation6] sm:$0xff] %vm536, %v2201
        %v2203 = vsel %vm2024, %v2179, %v2026
        %2204 = vst.msk [vmem:[#allocation7] sm:$0xff] %vm536, %v2203
        %v2205 = vsel %vm2024, %v2200, 0.0
        %s2206 = scalar_lea.vmem %s503, 40 [#allocation20]
        %2207 = vst.msk [vmem:[%s2206] sm:$0xff] %vm536, %v2205
        %s2208 = sadd.s32 %s1059, 3
        %v2209 = vstv %s2208
        %vm2210 = vcmp.lt.s32.totalorder %v2209, %v519
        %v2211 = vsel %vm2210, 1, 0
        %2212 = vset.pattern.permute.xlu0 0
        %2213 = vperm.xlu0 %2212, %v2211
        %v2214 = vpop.permute.xlu0 %2213
        %vm2215 = vcmp.eq.s32.totalorder %v2214, 1
        %v2216 = vld [vmem:[#allocation4] sm:$0xff]
        %v2217 = vld [vmem:[#allocation5] sm:$0xff]
        %s2218 = scalar_lea.vmem [#allocation2], 24
        %v2219 = vld [vmem:[%s2218] sm:$0xff]
        %v2220 = vld [vmem:[#allocation16] sm:$0xff]
        %v2221 = vld [vmem:[#allocation16 + $0x8] sm:$0xff]
        %v2222 = vld [vmem:[#allocation16 + $0x10] sm:$0xff]
        %v2223 = vld [vmem:[#allocation16 + $0x18] sm:$0xff]
        %v2225 = vsel %vm536, %v2216, 0
        %2227 = vmatpush.msra.mxu0 0.0
        %2228 = vmatpush.msra.mxu0 0.0
        %2229 = vmatpush.msra.mxu0 0.0
        %2230 = vmatpush.msra.mxu0 0.0
        %2231 = vmatpush.msra.mxu0 0.0
        %2232 = vmatpush.msra.mxu0 0.0
        %2233 = vmatpush.msra.mxu0 0.0
        %2234 = vmatpush.msra.mxu0 0.0
        %2235 = vmatpush.msra.mxu0 0.0
        %2236 = vmatpush.msra.mxu0 0.0
        %2237 = vmatpush.msra.mxu0 0.0
        %2238 = vmatpush.msra.mxu0 0.0
        %2239 = vmatpush.msra.mxu0 %v2223
        %2240 = vmatpush.msra.mxu0 %v2222
        %2241 = vmatpush.msra.mxu0 %v2221
        %2242 = vmatpush.msra.mxu0 %v2220
        %2243 = vmatmul.f32.gmra.mxu0 %v2225
        %v2244 = vpop.f32.mrf.mxu0
        %v2245 = vadd.f32 0.0, %v2244
        %2246 = vdwg.mxu0
        %v2247 = vadd.f32 %v2219, %v2245
        %s2248 = scalar_lea.vmem [#allocation2], 88
        %v2249 = vld [vmem:[%s2248] sm:$0xff]
        %v2250 = vld [vmem:[%s1099] sm:$0xff]
        %v2251 = vld [vmem:[%s1099 + $0x8] sm:$0xff]
        %v2252 = vld [vmem:[%s1099 + $0x10] sm:$0xff]
        %v2253 = vld [vmem:[%s1099 + $0x18] sm:$0xff]
        %2254 = vmatpush.msra.mxu0 0.0
        %2255 = vmatpush.msra.mxu0 0.0
        %2256 = vmatpush.msra.mxu0 0.0
        %2257 = vmatpush.msra.mxu0 0.0
        %2258 = vmatpush.msra.mxu0 0.0
        %2259 = vmatpush.msra.mxu0 0.0
        %2260 = vmatpush.msra.mxu0 0.0
        %2261 = vmatpush.msra.mxu0 0.0
        %2262 = vmatpush.msra.mxu0 0.0
        %2263 = vmatpush.msra.mxu0 0.0
        %2264 = vmatpush.msra.mxu0 0.0
        %2265 = vmatpush.msra.mxu0 0.0
        %2266 = vmatpush.msra.mxu0 %v2253
        %2267 = vmatpush.msra.mxu0 %v2252
        %2268 = vmatpush.msra.mxu0 %v2251
        %2269 = vmatpush.msra.mxu0 %v2250
        %2270 = vmatmul.f32.gmra.mxu0 %v2225
        %v2271 = vpop.f32.mrf.mxu0
        %v2272 = vadd.f32 0.0, %v2271
        %2273 = vdwg.mxu0
        %v2274 = vadd.f32 %v2249, %v2272
        %s2275 = scalar_lea.vmem [#allocation2], 152
        %v2276 = vld [vmem:[%s2275] sm:$0xff]
        %v2277 = vld [vmem:[%s1126] sm:$0xff]
        %v2278 = vld [vmem:[%s1126 + $0x8] sm:$0xff]
        %v2279 = vld [vmem:[%s1126 + $0x10] sm:$0xff]
        %v2280 = vld [vmem:[%s1126 + $0x18] sm:$0xff]
        %2281 = vmatpush.msra.mxu0 0.0
        %2282 = vmatpush.msra.mxu0 0.0
        %2283 = vmatpush.msra.mxu0 0.0
        %2284 = vmatpush.msra.mxu0 0.0
        %2285 = vmatpush.msra.mxu0 0.0
        %2286 = vmatpush.msra.mxu0 0.0
        %2287 = vmatpush.msra.mxu0 0.0
        %2288 = vmatpush.msra.mxu0 0.0
        %2289 = vmatpush.msra.mxu0 0.0
        %2290 = vmatpush.msra.mxu0 0.0
        %2291 = vmatpush.msra.mxu0 0.0
        %2292 = vmatpush.msra.mxu0 0.0
        %2293 = vmatpush.msra.mxu0 %v2280
        %2294 = vmatpush.msra.mxu0 %v2279
        %2295 = vmatpush.msra.mxu0 %v2278
        %2296 = vmatpush.msra.mxu0 %v2277
        %2297 = vmatmul.f32.gmra.mxu0 %v2225
        %v2298 = vpop.f32.mrf.mxu0
        %v2299 = vadd.f32 0.0, %v2298
        %2300 = vdwg.mxu0
        %v2301 = vadd.f32 %v2276, %v2299
        %s2302 = scalar_lea.vmem [#allocation2], 216
        %v2303 = vld [vmem:[%s2302] sm:$0xff]
        %v2304 = vld [vmem:[%s1153] sm:$0xff]
        %v2305 = vld [vmem:[%s1153 + $0x8] sm:$0xff]
        %v2306 = vld [vmem:[%s1153 + $0x10] sm:$0xff]
        %v2307 = vld [vmem:[%s1153 + $0x18] sm:$0xff]
        %2308 = vmatpush.msra.mxu0 0.0
        %2309 = vmatpush.msra.mxu0 0.0
        %2310 = vmatpush.msra.mxu0 0.0
        %2311 = vmatpush.msra.mxu0 0.0
        %2312 = vmatpush.msra.mxu0 0.0
        %2313 = vmatpush.msra.mxu0 0.0
        %2314 = vmatpush.msra.mxu0 0.0
        %2315 = vmatpush.msra.mxu0 0.0
        %2316 = vmatpush.msra.mxu0 0.0
        %2317 = vmatpush.msra.mxu0 0.0
        %2318 = vmatpush.msra.mxu0 0.0
        %2319 = vmatpush.msra.mxu0 0.0
        %2320 = vmatpush.msra.mxu0 %v2307
        %2321 = vmatpush.msra.mxu0 %v2306
        %2322 = vmatpush.msra.mxu0 %v2305
        %2323 = vmatpush.msra.mxu0 %v2304
        %2324 = vmatmul.f32.gmra.mxu0 %v2225
        %v2325 = vpop.f32.mrf.mxu0
        %v2326 = vadd.f32 0.0, %v2325
        %2327 = vdwg.mxu0
        %v2328 = vadd.f32 %v2303, %v2326
        %v2329 = vxor.u32 %v2274, 2147483648
        %v2330 = vmul.f32 %v2329, 1.442695
        %v2331 = vpow.pop %v2330
        %v2332 = vadd.f32 %v2331, 1.0
        %v2333 = vrcp.pop %v2332
        %v2334 = vmul.f32 %v2332, %v2333
        %v2335 = vsub.f32 1.0, %v2334
        %v2336 = vmul.f32 %v2333, %v2335
        %v2337 = vadd.f32 %v2333, %v2336
        %vm2338 = vweird.f32 %v2332
        %vm2339 = vweird.f32 %v2333
        %vm2340 = vmor %vm2338, %vm2339
        %v2341 = vsel %vm2340, %v2333, %v2337
        %v2342 = vand.u32 2147483647, %v2332
        %vm2343 = vcmp.eq.f32.partialorder %v2342, 8.507059e+37
        %v2344 = vand.u32 %v2332, 2147483648
        %v2345 = vor.u32 1.1754944e-38, %v2344
        %v2346 = vsel %vm2343, %v2345, %v2341
        %v2347 = vmul.f32 1.0, %v2346
        %v2348 = vmul.f32 %v2347, %v2217
        %v2349 = vxor.u32 %v2247, 2147483648
        %v2350 = vmul.f32 %v2349, 1.442695
        %v2351 = vpow.pop %v2350
        %v2352 = vadd.f32 %v2351, 1.0
        %v2353 = vrcp.pop %v2352
        %v2354 = vmul.f32 %v2352, %v2353
        %v2355 = vsub.f32 1.0, %v2354
        %v2356 = vmul.f32 %v2353, %v2355
        %v2357 = vadd.f32 %v2353, %v2356
        %vm2358 = vweird.f32 %v2352
        %vm2359 = vweird.f32 %v2353
        %vm2360 = vmor %vm2358, %vm2359
        %v2361 = vsel %vm2360, %v2353, %v2357
        %v2362 = vand.u32 2147483647, %v2352
        %vm2363 = vcmp.eq.f32.partialorder %v2362, 8.507059e+37
        %v2364 = vand.u32 %v2352, 2147483648
        %v2365 = vor.u32 1.1754944e-38, %v2364
        %v2366 = vsel %vm2363, %v2365, %v2361
        %v2367 = vmul.f32 1.0, %v2366
        %v2368 = vtanh.pop %v2301
        %v2369 = vmul.f32 %v2367, %v2368
        %v2370 = vadd.f32 %v2348, %v2369
        %v2371 = vxor.u32 %v2328, 2147483648
        %v2372 = vmul.f32 %v2371, 1.442695
        %v2373 = vpow.pop %v2372
        %v2374 = vadd.f32 %v2373, 1.0
        %v2375 = vrcp.pop %v2374
        %v2376 = vmul.f32 %v2374, %v2375
        %v2377 = vsub.f32 1.0, %v2376
        %v2378 = vmul.f32 %v2375, %v2377
        %v2379 = vadd.f32 %v2375, %v2378
        %vm2380 = vweird.f32 %v2374
        %vm2381 = vweird.f32 %v2375
        %vm2382 = vmor %vm2380, %vm2381
        %v2383 = vsel %vm2382, %v2375, %v2379
        %v2384 = vand.u32 2147483647, %v2374
        %vm2385 = vcmp.eq.f32.partialorder %v2384, 8.507059e+37
        %v2386 = vand.u32 %v2374, 2147483648
        %v2387 = vor.u32 1.1754944e-38, %v2386
        %v2388 = vsel %vm2385, %v2387, %v2383
        %v2389 = vmul.f32 1.0, %v2388
        %v2390 = vtanh.pop %v2370
        %v2391 = vmul.f32 %v2389, %v2390
        %v2392 = vsel %vm2215, %v2391, %v2216
        %2393 = vst.msk [vmem:[#allocation4] sm:$0xff] %vm536, %v2392
        %v2394 = vsel %vm2215, %v2370, %v2217
        %2395 = vst.msk [vmem:[#allocation5] sm:$0xff] %vm536, %v2394
        %v2396 = vsel %vm2215, %v2391, 0.0
        %s2397 = scalar_lea.vmem %s496, 24 [#allocation19]
        %2398 = vst.msk [vmem:[%s2397] sm:$0xff] %vm536, %v2396
        %s2399 = sadd.s32 %s1249, 4
        %v2400 = vstv %s2399
        %vm2401 = vcmp.lt.s32.totalorder %v2400, %v519
        %v2402 = vsel %vm2401, 1, 0
        %2403 = vset.pattern.permute.xlu0 0
        %2404 = vperm.xlu0 %2403, %v2402
        %v2405 = vpop.permute.xlu0 %2404
        %vm2406 = vcmp.eq.s32.totalorder %v2405, 1
        %v2407 = vld [vmem:[#allocation6] sm:$0xff]
        %v2408 = vld [vmem:[#allocation7] sm:$0xff]
        %s2409 = scalar_lea.vmem [#allocation3], 32
        %v2410 = vld [vmem:[%s2409] sm:$0xff]
        %v2411 = vld [vmem:[#allocation17] sm:$0xff]
        %v2412 = vld [vmem:[#allocation17 + $0x8] sm:$0xff]
        %v2413 = vld [vmem:[#allocation17 + $0x10] sm:$0xff]
        %v2414 = vld [vmem:[#allocation17 + $0x18] sm:$0xff]
        %v2416 = vsel %vm536, %v2407, 0
        %2418 = vmatpush.msra.mxu0 0.0
        %2419 = vmatpush.msra.mxu0 0.0
        %2420 = vmatpush.msra.mxu0 0.0
        %2421 = vmatpush.msra.mxu0 0.0
        %2422 = vmatpush.msra.mxu0 0.0
        %2423 = vmatpush.msra.mxu0 0.0
        %2424 = vmatpush.msra.mxu0 0.0
        %2425 = vmatpush.msra.mxu0 0.0
        %2426 = vmatpush.msra.mxu0 0.0
        %2427 = vmatpush.msra.mxu0 0.0
        %2428 = vmatpush.msra.mxu0 0.0
        %2429 = vmatpush.msra.mxu0 0.0
        %2430 = vmatpush.msra.mxu0 %v2414
        %2431 = vmatpush.msra.mxu0 %v2413
        %2432 = vmatpush.msra.mxu0 %v2412
        %2433 = vmatpush.msra.mxu0 %v2411
        %2434 = vmatmul.f32.gmra.mxu0 %v2416
        %v2435 = vpop.f32.mrf.mxu0
        %v2436 = vadd.f32 0.0, %v2435
        %2437 = vdwg.mxu0
        %v2438 = vadd.f32 %v2410, %v2436
        %s2439 = scalar_lea.vmem [#allocation3], 96
        %v2440 = vld [vmem:[%s2439] sm:$0xff]
        %v2441 = vld [vmem:[%s1292] sm:$0xff]
        %v2442 = vld [vmem:[%s1292 + $0x8] sm:$0xff]
        %v2443 = vld [vmem:[%s1292 + $0x10] sm:$0xff]
        %v2444 = vld [vmem:[%s1292 + $0x18] sm:$0xff]
        %2445 = vmatpush.msra.mxu0 0.0
        %2446 = vmatpush.msra.mxu0 0.0
        %2447 = vmatpush.msra.mxu0 0.0
        %2448 = vmatpush.msra.mxu0 0.0
        %2449 = vmatpush.msra.mxu0 0.0
        %2450 = vmatpush.msra.mxu0 0.0
        %2451 = vmatpush.msra.mxu0 0.0
        %2452 = vmatpush.msra.mxu0 0.0
        %2453 = vmatpush.msra.mxu0 0.0
        %2454 = vmatpush.msra.mxu0 0.0
        %2455 = vmatpush.msra.mxu0 0.0
        %2456 = vmatpush.msra.mxu0 0.0
        %2457 = vmatpush.msra.mxu0 %v2444
        %2458 = vmatpush.msra.mxu0 %v2443
        %2459 = vmatpush.msra.mxu0 %v2442
        %2460 = vmatpush.msra.mxu0 %v2441
        %2461 = vmatmul.f32.gmra.mxu0 %v2416
        %v2462 = vpop.f32.mrf.mxu0
        %v2463 = vadd.f32 0.0, %v2462
        %2464 = vdwg.mxu0
        %v2465 = vadd.f32 %v2440, %v2463
        %s2466 = scalar_lea.vmem [#allocation3], 160
        %v2467 = vld [vmem:[%s2466] sm:$0xff]
        %v2468 = vld [vmem:[%s1320] sm:$0xff]
        %v2469 = vld [vmem:[%s1320 + $0x8] sm:$0xff]
        %v2470 = vld [vmem:[%s1320 + $0x10] sm:$0xff]
        %v2471 = vld [vmem:[%s1320 + $0x18] sm:$0xff]
        %2472 = vmatpush.msra.mxu0 0.0
        %2473 = vmatpush.msra.mxu0 0.0
        %2474 = vmatpush.msra.mxu0 0.0
        %2475 = vmatpush.msra.mxu0 0.0
        %2476 = vmatpush.msra.mxu0 0.0
        %2477 = vmatpush.msra.mxu0 0.0
        %2478 = vmatpush.msra.mxu0 0.0
        %2479 = vmatpush.msra.mxu0 0.0
        %2480 = vmatpush.msra.mxu0 0.0
        %2481 = vmatpush.msra.mxu0 0.0
        %2482 = vmatpush.msra.mxu0 0.0
        %2483 = vmatpush.msra.mxu0 0.0
        %2484 = vmatpush.msra.mxu0 %v2471
        %2485 = vmatpush.msra.mxu0 %v2470
        %2486 = vmatpush.msra.mxu0 %v2469
        %2487 = vmatpush.msra.mxu0 %v2468
        %2488 = vmatmul.f32.gmra.mxu0 %v2416
        %v2489 = vpop.f32.mrf.mxu0
        %v2490 = vadd.f32 0.0, %v2489
        %2491 = vdwg.mxu0
        %v2492 = vadd.f32 %v2467, %v2490
        %s2493 = scalar_lea.vmem [#allocation3], 224
        %v2494 = vld [vmem:[%s2493] sm:$0xff]
        %v2495 = vld [vmem:[%s1348] sm:$0xff]
        %v2496 = vld [vmem:[%s1348 + $0x8] sm:$0xff]
        %v2497 = vld [vmem:[%s1348 + $0x10] sm:$0xff]
        %v2498 = vld [vmem:[%s1348 + $0x18] sm:$0xff]
        %2499 = vmatpush.msra.mxu0 0.0
        %2500 = vmatpush.msra.mxu0 0.0
        %2501 = vmatpush.msra.mxu0 0.0
        %2502 = vmatpush.msra.mxu0 0.0
        %2503 = vmatpush.msra.mxu0 0.0
        %2504 = vmatpush.msra.mxu0 0.0
        %2505 = vmatpush.msra.mxu0 0.0
        %2506 = vmatpush.msra.mxu0 0.0
        %2507 = vmatpush.msra.mxu0 0.0
        %2508 = vmatpush.msra.mxu0 0.0
        %2509 = vmatpush.msra.mxu0 0.0
        %2510 = vmatpush.msra.mxu0 0.0
        %2511 = vmatpush.msra.mxu0 %v2498
        %2512 = vmatpush.msra.mxu0 %v2497
        %2513 = vmatpush.msra.mxu0 %v2496
        %2514 = vmatpush.msra.mxu0 %v2495
        %2515 = vmatmul.f32.gmra.mxu0 %v2416
        %v2516 = vpop.f32.mrf.mxu0
        %v2517 = vadd.f32 0.0, %v2516
        %2518 = vdwg.mxu0
        %v2519 = vadd.f32 %v2494, %v2517
        %v2520 = vxor.u32 %v2465, 2147483648
        %v2521 = vmul.f32 %v2520, 1.442695
        %v2522 = vpow.pop %v2521
        %v2523 = vadd.f32 %v2522, 1.0
        %v2524 = vrcp.pop %v2523
        %v2525 = vmul.f32 %v2523, %v2524
        %v2526 = vsub.f32 1.0, %v2525
        %v2527 = vmul.f32 %v2524, %v2526
        %v2528 = vadd.f32 %v2524, %v2527
        %vm2529 = vweird.f32 %v2523
        %vm2530 = vweird.f32 %v2524
        %vm2531 = vmor %vm2529, %vm2530
        %v2532 = vsel %vm2531, %v2524, %v2528
        %v2533 = vand.u32 2147483647, %v2523
        %vm2534 = vcmp.eq.f32.partialorder %v2533, 8.507059e+37
        %v2535 = vand.u32 %v2523, 2147483648
        %v2536 = vor.u32 1.1754944e-38, %v2535
        %v2537 = vsel %vm2534, %v2536, %v2532
        %v2538 = vmul.f32 1.0, %v2537
        %v2539 = vmul.f32 %v2538, %v2408
        %v2540 = vxor.u32 %v2438, 2147483648
        %v2541 = vmul.f32 %v2540, 1.442695
        %v2542 = vpow.pop %v2541
        %v2543 = vadd.f32 %v2542, 1.0
        %v2544 = vrcp.pop %v2543
        %v2545 = vmul.f32 %v2543, %v2544
        %v2546 = vsub.f32 1.0, %v2545
        %v2547 = vmul.f32 %v2544, %v2546
        %v2548 = vadd.f32 %v2544, %v2547
        %vm2549 = vweird.f32 %v2543
        %vm2550 = vweird.f32 %v2544
        %vm2551 = vmor %vm2549, %vm2550
        %v2552 = vsel %vm2551, %v2544, %v2548
        %v2553 = vand.u32 2147483647, %v2543
        %vm2554 = vcmp.eq.f32.partialorder %v2553, 8.507059e+37
        %v2555 = vand.u32 %v2543, 2147483648
        %v2556 = vor.u32 1.1754944e-38, %v2555
        %v2557 = vsel %vm2554, %v2556, %v2552
        %v2558 = vmul.f32 1.0, %v2557
        %v2559 = vtanh.pop %v2492
        %v2560 = vmul.f32 %v2558, %v2559
        %v2561 = vadd.f32 %v2539, %v2560
        %v2562 = vxor.u32 %v2519, 2147483648
        %v2563 = vmul.f32 %v2562, 1.442695
        %v2564 = vpow.pop %v2563
        %v2565 = vadd.f32 %v2564, 1.0
        %v2566 = vrcp.pop %v2565
        %v2567 = vmul.f32 %v2565, %v2566
        %v2568 = vsub.f32 1.0, %v2567
        %v2569 = vmul.f32 %v2566, %v2568
        %v2570 = vadd.f32 %v2566, %v2569
        %vm2571 = vweird.f32 %v2565
        %vm2572 = vweird.f32 %v2566
        %vm2573 = vmor %vm2571, %vm2572
        %v2574 = vsel %vm2573, %v2566, %v2570
        %v2575 = vand.u32 2147483647, %v2565
        %vm2576 = vcmp.eq.f32.partialorder %v2575, 8.507059e+37
        %v2577 = vand.u32 %v2565, 2147483648
        %v2578 = vor.u32 1.1754944e-38, %v2577
        %v2579 = vsel %vm2576, %v2578, %v2574
        %v2580 = vmul.f32 1.0, %v2579
        %v2581 = vtanh.pop %v2561
        %v2582 = vmul.f32 %v2580, %v2581
        %v2583 = vsel %vm2406, %v2582, %v2407
        %2584 = vst.msk [vmem:[#allocation6] sm:$0xff] %vm536, %v2583
        %v2585 = vsel %vm2406, %v2561, %v2408
        %2586 = vst.msk [vmem:[#allocation7] sm:$0xff] %vm536, %v2585
        %v2587 = vsel %vm2406, %v2582, 0.0
        %s2588 = scalar_lea.vmem %s503, 32 [#allocation20]
        %2589 = vst.msk [vmem:[%s2588] sm:$0xff] %vm536, %v2587
        %s2590 = sadd.s32 %s1059, 4
        %v2591 = vstv %s2590
        %vm2592 = vcmp.lt.s32.totalorder %v2591, %v519
        %v2593 = vsel %vm2592, 1, 0
        %2594 = vset.pattern.permute.xlu0 0
        %2595 = vperm.xlu0 %2594, %v2593
        %v2596 = vpop.permute.xlu0 %2595
        %vm2597 = vcmp.eq.s32.totalorder %v2596, 1
        %v2598 = vld [vmem:[#allocation4] sm:$0xff]
        %v2599 = vld [vmem:[#allocation5] sm:$0xff]
        %s2600 = scalar_lea.vmem [#allocation2], 32
        %v2601 = vld [vmem:[%s2600] sm:$0xff]
        %v2602 = vld [vmem:[#allocation16] sm:$0xff]
        %v2603 = vld [vmem:[#allocation16 + $0x8] sm:$0xff]
        %v2604 = vld [vmem:[#allocation16 + $0x10] sm:$0xff]
        %v2605 = vld [vmem:[#allocation16 + $0x18] sm:$0xff]
        %v2607 = vsel %vm536, %v2598, 0
        %2609 = vmatpush.msra.mxu0 0.0
        %2610 = vmatpush.msra.mxu0 0.0
        %2611 = vmatpush.msra.mxu0 0.0
        %2612 = vmatpush.msra.mxu0 0.0
        %2613 = vmatpush.msra.mxu0 0.0
        %2614 = vmatpush.msra.mxu0 0.0
        %2615 = vmatpush.msra.mxu0 0.0
        %2616 = vmatpush.msra.mxu0 0.0
        %2617 = vmatpush.msra.mxu0 0.0
        %2618 = vmatpush.msra.mxu0 0.0
        %2619 = vmatpush.msra.mxu0 0.0
        %2620 = vmatpush.msra.mxu0 0.0
        %2621 = vmatpush.msra.mxu0 %v2605
        %2622 = vmatpush.msra.mxu0 %v2604
        %2623 = vmatpush.msra.mxu0 %v2603
        %2624 = vmatpush.msra.mxu0 %v2602
        %2625 = vmatmul.f32.gmra.mxu0 %v2607
        %v2626 = vpop.f32.mrf.mxu0
        %v2627 = vadd.f32 0.0, %v2626
        %2628 = vdwg.mxu0
        %v2629 = vadd.f32 %v2601, %v2627
        %s2630 = scalar_lea.vmem [#allocation2], 96
        %v2631 = vld [vmem:[%s2630] sm:$0xff]
        %v2632 = vld [vmem:[%s1099] sm:$0xff]
        %v2633 = vld [vmem:[%s1099 + $0x8] sm:$0xff]
        %v2634 = vld [vmem:[%s1099 + $0x10] sm:$0xff]
        %v2635 = vld [vmem:[%s1099 + $0x18] sm:$0xff]
        %2636 = vmatpush.msra.mxu0 0.0
        %2637 = vmatpush.msra.mxu0 0.0
        %2638 = vmatpush.msra.mxu0 0.0
        %2639 = vmatpush.msra.mxu0 0.0
        %2640 = vmatpush.msra.mxu0 0.0
        %2641 = vmatpush.msra.mxu0 0.0
        %2642 = vmatpush.msra.mxu0 0.0
        %2643 = vmatpush.msra.mxu0 0.0
        %2644 = vmatpush.msra.mxu0 0.0
        %2645 = vmatpush.msra.mxu0 0.0
        %2646 = vmatpush.msra.mxu0 0.0
        %2647 = vmatpush.msra.mxu0 0.0
        %2648 = vmatpush.msra.mxu0 %v2635
        %2649 = vmatpush.msra.mxu0 %v2634
        %2650 = vmatpush.msra.mxu0 %v2633
        %2651 = vmatpush.msra.mxu0 %v2632
        %2652 = vmatmul.f32.gmra.mxu0 %v2607
        %v2653 = vpop.f32.mrf.mxu0
        %v2654 = vadd.f32 0.0, %v2653
        %2655 = vdwg.mxu0
        %v2656 = vadd.f32 %v2631, %v2654
        %s2657 = scalar_lea.vmem [#allocation2], 160
        %v2658 = vld [vmem:[%s2657] sm:$0xff]
        %v2659 = vld [vmem:[%s1126] sm:$0xff]
        %v2660 = vld [vmem:[%s1126 + $0x8] sm:$0xff]
        %v2661 = vld [vmem:[%s1126 + $0x10] sm:$0xff]
        %v2662 = vld [vmem:[%s1126 + $0x18] sm:$0xff]
        %2663 = vmatpush.msra.mxu0 0.0
        %2664 = vmatpush.msra.mxu0 0.0
        %2665 = vmatpush.msra.mxu0 0.0
        %2666 = vmatpush.msra.mxu0 0.0
        %2667 = vmatpush.msra.mxu0 0.0
        %2668 = vmatpush.msra.mxu0 0.0
        %2669 = vmatpush.msra.mxu0 0.0
        %2670 = vmatpush.msra.mxu0 0.0
        %2671 = vmatpush.msra.mxu0 0.0
        %2672 = vmatpush.msra.mxu0 0.0
        %2673 = vmatpush.msra.mxu0 0.0
        %2674 = vmatpush.msra.mxu0 0.0
        %2675 = vmatpush.msra.mxu0 %v2662
        %2676 = vmatpush.msra.mxu0 %v2661
        %2677 = vmatpush.msra.mxu0 %v2660
        %2678 = vmatpush.msra.mxu0 %v2659
        %2679 = vmatmul.f32.gmra.mxu0 %v2607
        %v2680 = vpop.f32.mrf.mxu0
        %v2681 = vadd.f32 0.0, %v2680
        %2682 = vdwg.mxu0
        %v2683 = vadd.f32 %v2658, %v2681
        %s2684 = scalar_lea.vmem [#allocation2], 224
        %v2685 = vld [vmem:[%s2684] sm:$0xff]
        %v2686 = vld [vmem:[%s1153] sm:$0xff]
        %v2687 = vld [vmem:[%s1153 + $0x8] sm:$0xff]
        %v2688 = vld [vmem:[%s1153 + $0x10] sm:$0xff]
        %v2689 = vld [vmem:[%s1153 + $0x18] sm:$0xff]
        %2690 = vmatpush.msra.mxu0 0.0
        %2691 = vmatpush.msra.mxu0 0.0
        %2692 = vmatpush.msra.mxu0 0.0
        %2693 = vmatpush.msra.mxu0 0.0
        %2694 = vmatpush.msra.mxu0 0.0
        %2695 = vmatpush.msra.mxu0 0.0
        %2696 = vmatpush.msra.mxu0 0.0
        %2697 = vmatpush.msra.mxu0 0.0
        %2698 = vmatpush.msra.mxu0 0.0
        %2699 = vmatpush.msra.mxu0 0.0
        %2700 = vmatpush.msra.mxu0 0.0
        %2701 = vmatpush.msra.mxu0 0.0
        %2702 = vmatpush.msra.mxu0 %v2689
        %2703 = vmatpush.msra.mxu0 %v2688
        %2704 = vmatpush.msra.mxu0 %v2687
        %2705 = vmatpush.msra.mxu0 %v2686
        %2706 = vmatmul.f32.gmra.mxu0 %v2607
        %v2707 = vpop.f32.mrf.mxu0
        %v2708 = vadd.f32 0.0, %v2707
        %2709 = vdwg.mxu0
        %v2710 = vadd.f32 %v2685, %v2708
        %v2711 = vxor.u32 %v2656, 2147483648
        %v2712 = vmul.f32 %v2711, 1.442695
        %v2713 = vpow.pop %v2712
        %v2714 = vadd.f32 %v2713, 1.0
        %v2715 = vrcp.pop %v2714
        %v2716 = vmul.f32 %v2714, %v2715
        %v2717 = vsub.f32 1.0, %v2716
        %v2718 = vmul.f32 %v2715, %v2717
        %v2719 = vadd.f32 %v2715, %v2718
        %vm2720 = vweird.f32 %v2714
        %vm2721 = vweird.f32 %v2715
        %vm2722 = vmor %vm2720, %vm2721
        %v2723 = vsel %vm2722, %v2715, %v2719
        %v2724 = vand.u32 2147483647, %v2714
        %vm2725 = vcmp.eq.f32.partialorder %v2724, 8.507059e+37
        %v2726 = vand.u32 %v2714, 2147483648
        %v2727 = vor.u32 1.1754944e-38, %v2726
        %v2728 = vsel %vm2725, %v2727, %v2723
        %v2729 = vmul.f32 1.0, %v2728
        %v2730 = vmul.f32 %v2729, %v2599
        %v2731 = vxor.u32 %v2629, 2147483648
        %v2732 = vmul.f32 %v2731, 1.442695
        %v2733 = vpow.pop %v2732
        %v2734 = vadd.f32 %v2733, 1.0
        %v2735 = vrcp.pop %v2734
        %v2736 = vmul.f32 %v2734, %v2735
        %v2737 = vsub.f32 1.0, %v2736
        %v2738 = vmul.f32 %v2735, %v2737
        %v2739 = vadd.f32 %v2735, %v2738
        %vm2740 = vweird.f32 %v2734
        %vm2741 = vweird.f32 %v2735
        %vm2742 = vmor %vm2740, %vm2741
        %v2743 = vsel %vm2742, %v2735, %v2739
        %v2744 = vand.u32 2147483647, %v2734
        %vm2745 = vcmp.eq.f32.partialorder %v2744, 8.507059e+37
        %v2746 = vand.u32 %v2734, 2147483648
        %v2747 = vor.u32 1.1754944e-38, %v2746
        %v2748 = vsel %vm2745, %v2747, %v2743
        %v2749 = vmul.f32 1.0, %v2748
        %v2750 = vtanh.pop %v2683
        %v2751 = vmul.f32 %v2749, %v2750
        %v2752 = vadd.f32 %v2730, %v2751
        %v2753 = vxor.u32 %v2710, 2147483648
        %v2754 = vmul.f32 %v2753, 1.442695
        %v2755 = vpow.pop %v2754
        %v2756 = vadd.f32 %v2755, 1.0
        %v2757 = vrcp.pop %v2756
        %v2758 = vmul.f32 %v2756, %v2757
        %v2759 = vsub.f32 1.0, %v2758
        %v2760 = vmul.f32 %v2757, %v2759
        %v2761 = vadd.f32 %v2757, %v2760
        %vm2762 = vweird.f32 %v2756
        %vm2763 = vweird.f32 %v2757
        %vm2764 = vmor %vm2762, %vm2763
        %v2765 = vsel %vm2764, %v2757, %v2761
        %v2766 = vand.u32 2147483647, %v2756
        %vm2767 = vcmp.eq.f32.partialorder %v2766, 8.507059e+37
        %v2768 = vand.u32 %v2756, 2147483648
        %v2769 = vor.u32 1.1754944e-38, %v2768
        %v2770 = vsel %vm2767, %v2769, %v2765
        %v2771 = vmul.f32 1.0, %v2770
        %v2772 = vtanh.pop %v2752
        %v2773 = vmul.f32 %v2771, %v2772
        %v2774 = vsel %vm2597, %v2773, %v2598
        %2775 = vst.msk [vmem:[#allocation4] sm:$0xff] %vm536, %v2774
        %v2776 = vsel %vm2597, %v2752, %v2599
        %2777 = vst.msk [vmem:[#allocation5] sm:$0xff] %vm536, %v2776
        %v2778 = vsel %vm2597, %v2773, 0.0
        %s2779 = scalar_lea.vmem %s496, 32 [#allocation19]
        %2780 = vst.msk [vmem:[%s2779] sm:$0xff] %vm536, %v2778
        %s2781 = sadd.s32 %s1249, 3
        %v2782 = vstv %s2781
        %vm2783 = vcmp.lt.s32.totalorder %v2782, %v519
        %v2784 = vsel %vm2783, 1, 0
        %2785 = vset.pattern.permute.xlu0 0
        %2786 = vperm.xlu0 %2785, %v2784
        %v2787 = vpop.permute.xlu0 %2786
        %vm2788 = vcmp.eq.s32.totalorder %v2787, 1
        %v2789 = vld [vmem:[#allocation6] sm:$0xff]
        %v2790 = vld [vmem:[#allocation7] sm:$0xff]
        %s2791 = scalar_lea.vmem [#allocation3], 24
        %v2792 = vld [vmem:[%s2791] sm:$0xff]
        %v2793 = vld [vmem:[#allocation17] sm:$0xff]
        %v2794 = vld [vmem:[#allocation17 + $0x8] sm:$0xff]
        %v2795 = vld [vmem:[#allocation17 + $0x10] sm:$0xff]
        %v2796 = vld [vmem:[#allocation17 + $0x18] sm:$0xff]
        %v2798 = vsel %vm536, %v2789, 0
        %2800 = vmatpush.msra.mxu0 0.0
        %2801 = vmatpush.msra.mxu0 0.0
        %2802 = vmatpush.msra.mxu0 0.0
        %2803 = vmatpush.msra.mxu0 0.0
        %2804 = vmatpush.msra.mxu0 0.0
        %2805 = vmatpush.msra.mxu0 0.0
        %2806 = vmatpush.msra.mxu0 0.0
        %2807 = vmatpush.msra.mxu0 0.0
        %2808 = vmatpush.msra.mxu0 0.0
        %2809 = vmatpush.msra.mxu0 0.0
        %2810 = vmatpush.msra.mxu0 0.0
        %2811 = vmatpush.msra.mxu0 0.0
        %2812 = vmatpush.msra.mxu0 %v2796
        %2813 = vmatpush.msra.mxu0 %v2795
        %2814 = vmatpush.msra.mxu0 %v2794
        %2815 = vmatpush.msra.mxu0 %v2793
        %2816 = vmatmul.f32.gmra.mxu0 %v2798
        %v2817 = vpop.f32.mrf.mxu0
        %v2818 = vadd.f32 0.0, %v2817
        %2819 = vdwg.mxu0
        %v2820 = vadd.f32 %v2792, %v2818
        %s2821 = scalar_lea.vmem [#allocation3], 88
        %v2822 = vld [vmem:[%s2821] sm:$0xff]
        %v2823 = vld [vmem:[%s1292] sm:$0xff]
        %v2824 = vld [vmem:[%s1292 + $0x8] sm:$0xff]
        %v2825 = vld [vmem:[%s1292 + $0x10] sm:$0xff]
        %v2826 = vld [vmem:[%s1292 + $0x18] sm:$0xff]
        %2827 = vmatpush.msra.mxu0 0.0
        %2828 = vmatpush.msra.mxu0 0.0
        %2829 = vmatpush.msra.mxu0 0.0
        %2830 = vmatpush.msra.mxu0 0.0
        %2831 = vmatpush.msra.mxu0 0.0
        %2832 = vmatpush.msra.mxu0 0.0
        %2833 = vmatpush.msra.mxu0 0.0
        %2834 = vmatpush.msra.mxu0 0.0
        %2835 = vmatpush.msra.mxu0 0.0
        %2836 = vmatpush.msra.mxu0 0.0
        %2837 = vmatpush.msra.mxu0 0.0
        %2838 = vmatpush.msra.mxu0 0.0
        %2839 = vmatpush.msra.mxu0 %v2826
        %2840 = vmatpush.msra.mxu0 %v2825
        %2841 = vmatpush.msra.mxu0 %v2824
        %2842 = vmatpush.msra.mxu0 %v2823
        %2843 = vmatmul.f32.gmra.mxu0 %v2798
        %v2844 = vpop.f32.mrf.mxu0
        %v2845 = vadd.f32 0.0, %v2844
        %2846 = vdwg.mxu0
        %v2847 = vadd.f32 %v2822, %v2845
        %s2848 = scalar_lea.vmem [#allocation3], 152
        %v2849 = vld [vmem:[%s2848] sm:$0xff]
        %v2850 = vld [vmem:[%s1320] sm:$0xff]
        %v2851 = vld [vmem:[%s1320 + $0x8] sm:$0xff]
        %v2852 = vld [vmem:[%s1320 + $0x10] sm:$0xff]
        %v2853 = vld [vmem:[%s1320 + $0x18] sm:$0xff]
        %2854 = vmatpush.msra.mxu0 0.0
        %2855 = vmatpush.msra.mxu0 0.0
        %2856 = vmatpush.msra.mxu0 0.0
        %2857 = vmatpush.msra.mxu0 0.0
        %2858 = vmatpush.msra.mxu0 0.0
        %2859 = vmatpush.msra.mxu0 0.0
        %2860 = vmatpush.msra.mxu0 0.0
        %2861 = vmatpush.msra.mxu0 0.0
        %2862 = vmatpush.msra.mxu0 0.0
        %2863 = vmatpush.msra.mxu0 0.0
        %2864 = vmatpush.msra.mxu0 0.0
        %2865 = vmatpush.msra.mxu0 0.0
        %2866 = vmatpush.msra.mxu0 %v2853
        %2867 = vmatpush.msra.mxu0 %v2852
        %2868 = vmatpush.msra.mxu0 %v2851
        %2869 = vmatpush.msra.mxu0 %v2850
        %2870 = vmatmul.f32.gmra.mxu0 %v2798
        %v2871 = vpop.f32.mrf.mxu0
        %v2872 = vadd.f32 0.0, %v2871
        %2873 = vdwg.mxu0
        %v2874 = vadd.f32 %v2849, %v2872
        %s2875 = scalar_lea.vmem [#allocation3], 216
        %v2876 = vld [vmem:[%s2875] sm:$0xff]
        %v2877 = vld [vmem:[%s1348] sm:$0xff]
        %v2878 = vld [vmem:[%s1348 + $0x8] sm:$0xff]
        %v2879 = vld [vmem:[%s1348 + $0x10] sm:$0xff]
        %v2880 = vld [vmem:[%s1348 + $0x18] sm:$0xff]
        %2881 = vmatpush.msra.mxu0 0.0
        %2882 = vmatpush.msra.mxu0 0.0
        %2883 = vmatpush.msra.mxu0 0.0
        %2884 = vmatpush.msra.mxu0 0.0
        %2885 = vmatpush.msra.mxu0 0.0
        %2886 = vmatpush.msra.mxu0 0.0
        %2887 = vmatpush.msra.mxu0 0.0
        %2888 = vmatpush.msra.mxu0 0.0
        %2889 = vmatpush.msra.mxu0 0.0
        %2890 = vmatpush.msra.mxu0 0.0
        %2891 = vmatpush.msra.mxu0 0.0
        %2892 = vmatpush.msra.mxu0 0.0
        %2893 = vmatpush.msra.mxu0 %v2880
        %2894 = vmatpush.msra.mxu0 %v2879
        %2895 = vmatpush.msra.mxu0 %v2878
        %2896 = vmatpush.msra.mxu0 %v2877
        %2897 = vmatmul.f32.gmra.mxu0 %v2798
        %v2898 = vpop.f32.mrf.mxu0
        %v2899 = vadd.f32 0.0, %v2898
        %2900 = vdwg.mxu0
        %v2901 = vadd.f32 %v2876, %v2899
        %v2902 = vxor.u32 %v2847, 2147483648
        %v2903 = vmul.f32 %v2902, 1.442695
        %v2904 = vpow.pop %v2903
        %v2905 = vadd.f32 %v2904, 1.0
        %v2906 = vrcp.pop %v2905
        %v2907 = vmul.f32 %v2905, %v2906
        %v2908 = vsub.f32 1.0, %v2907
        %v2909 = vmul.f32 %v2906, %v2908
        %v2910 = vadd.f32 %v2906, %v2909
        %vm2911 = vweird.f32 %v2905
        %vm2912 = vweird.f32 %v2906
        %vm2913 = vmor %vm2911, %vm2912
        %v2914 = vsel %vm2913, %v2906, %v2910
        %v2915 = vand.u32 2147483647, %v2905
        %vm2916 = vcmp.eq.f32.partialorder %v2915, 8.507059e+37
        %v2917 = vand.u32 %v2905, 2147483648
        %v2918 = vor.u32 1.1754944e-38, %v2917
        %v2919 = vsel %vm2916, %v2918, %v2914
        %v2920 = vmul.f32 1.0, %v2919
        %v2921 = vmul.f32 %v2920, %v2790
        %v2922 = vxor.u32 %v2820, 2147483648
        %v2923 = vmul.f32 %v2922, 1.442695
        %v2924 = vpow.pop %v2923
        %v2925 = vadd.f32 %v2924, 1.0
        %v2926 = vrcp.pop %v2925
        %v2927 = vmul.f32 %v2925, %v2926
        %v2928 = vsub.f32 1.0, %v2927
        %v2929 = vmul.f32 %v2926, %v2928
        %v2930 = vadd.f32 %v2926, %v2929
        %vm2931 = vweird.f32 %v2925
        %vm2932 = vweird.f32 %v2926
        %vm2933 = vmor %vm2931, %vm2932
        %v2934 = vsel %vm2933, %v2926, %v2930
        %v2935 = vand.u32 2147483647, %v2925
        %vm2936 = vcmp.eq.f32.partialorder %v2935, 8.507059e+37
        %v2937 = vand.u32 %v2925, 2147483648
        %v2938 = vor.u32 1.1754944e-38, %v2937
        %v2939 = vsel %vm2936, %v2938, %v2934
        %v2940 = vmul.f32 1.0, %v2939
        %v2941 = vtanh.pop %v2874
        %v2942 = vmul.f32 %v2940, %v2941
        %v2943 = vadd.f32 %v2921, %v2942
        %v2944 = vxor.u32 %v2901, 2147483648
        %v2945 = vmul.f32 %v2944, 1.442695
        %v2946 = vpow.pop %v2945
        %v2947 = vadd.f32 %v2946, 1.0
        %v2948 = vrcp.pop %v2947
        %v2949 = vmul.f32 %v2947, %v2948
        %v2950 = vsub.f32 1.0, %v2949
        %v2951 = vmul.f32 %v2948, %v2950
        %v2952 = vadd.f32 %v2948, %v2951
        %vm2953 = vweird.f32 %v2947
        %vm2954 = vweird.f32 %v2948
        %vm2955 = vmor %vm2953, %vm2954
        %v2956 = vsel %vm2955, %v2948, %v2952
        %v2957 = vand.u32 2147483647, %v2947
        %vm2958 = vcmp.eq.f32.partialorder %v2957, 8.507059e+37
        %v2959 = vand.u32 %v2947, 2147483648
        %v2960 = vor.u32 1.1754944e-38, %v2959
        %v2961 = vsel %vm2958, %v2960, %v2956
        %v2962 = vmul.f32 1.0, %v2961
        %v2963 = vtanh.pop %v2943
        %v2964 = vmul.f32 %v2962, %v2963
        %v2965 = vsel %vm2788, %v2964, %v2789
        %2966 = vst.msk [vmem:[#allocation6] sm:$0xff] %vm536, %v2965
        %v2967 = vsel %vm2788, %v2943, %v2790
        %2968 = vst.msk [vmem:[#allocation7] sm:$0xff] %vm536, %v2967
        %v2969 = vsel %vm2788, %v2964, 0.0
        %s2970 = scalar_lea.vmem %s503, 24 [#allocation20]
        %2971 = vst.msk [vmem:[%s2970] sm:$0xff] %vm536, %v2969
        %s2972 = sadd.s32 %s1059, 5
        %v2973 = vstv %s2972
        %vm2974 = vcmp.lt.s32.totalorder %v2973, %v519
        %v2975 = vsel %vm2974, 1, 0
        %2976 = vset.pattern.permute.xlu0 0
        %2977 = vperm.xlu0 %2976, %v2975
        %v2978 = vpop.permute.xlu0 %2977
        %vm2979 = vcmp.eq.s32.totalorder %v2978, 1
        %v2980 = vld [vmem:[#allocation4] sm:$0xff]
        %v2981 = vld [vmem:[#allocation5] sm:$0xff]
        %s2982 = scalar_lea.vmem [#allocation2], 40
        %v2983 = vld [vmem:[%s2982] sm:$0xff]
        %v2984 = vld [vmem:[#allocation16] sm:$0xff]
        %v2985 = vld [vmem:[#allocation16 + $0x8] sm:$0xff]
        %v2986 = vld [vmem:[#allocation16 + $0x10] sm:$0xff]
        %v2987 = vld [vmem:[#allocation16 + $0x18] sm:$0xff]
        %v2989 = vsel %vm536, %v2980, 0
        %2991 = vmatpush.msra.mxu0 0.0
        %2992 = vmatpush.msra.mxu0 0.0
        %2993 = vmatpush.msra.mxu0 0.0
        %2994 = vmatpush.msra.mxu0 0.0
        %2995 = vmatpush.msra.mxu0 0.0
        %2996 = vmatpush.msra.mxu0 0.0
        %2997 = vmatpush.msra.mxu0 0.0
        %2998 = vmatpush.msra.mxu0 0.0
        %2999 = vmatpush.msra.mxu0 0.0
        %3000 = vmatpush.msra.mxu0 0.0
        %3001 = vmatpush.msra.mxu0 0.0
        %3002 = vmatpush.msra.mxu0 0.0
        %3003 = vmatpush.msra.mxu0 %v2987
        %3004 = vmatpush.msra.mxu0 %v2986
        %3005 = vmatpush.msra.mxu0 %v2985
        %3006 = vmatpush.msra.mxu0 %v2984
        %3007 = vmatmul.f32.gmra.mxu0 %v2989
        %v3008 = vpop.f32.mrf.mxu0
        %v3009 = vadd.f32 0.0, %v3008
        %3010 = vdwg.mxu0
        %v3011 = vadd.f32 %v2983, %v3009
        %s3012 = scalar_lea.vmem [#allocation2], 104
        %v3013 = vld [vmem:[%s3012] sm:$0xff]
        %v3014 = vld [vmem:[%s1099] sm:$0xff]
        %v3015 = vld [vmem:[%s1099 + $0x8] sm:$0xff]
        %v3016 = vld [vmem:[%s1099 + $0x10] sm:$0xff]
        %v3017 = vld [vmem:[%s1099 + $0x18] sm:$0xff]
        %3018 = vmatpush.msra.mxu0 0.0
        %3019 = vmatpush.msra.mxu0 0.0
        %3020 = vmatpush.msra.mxu0 0.0
        %3021 = vmatpush.msra.mxu0 0.0
        %3022 = vmatpush.msra.mxu0 0.0
        %3023 = vmatpush.msra.mxu0 0.0
        %3024 = vmatpush.msra.mxu0 0.0
        %3025 = vmatpush.msra.mxu0 0.0
        %3026 = vmatpush.msra.mxu0 0.0
        %3027 = vmatpush.msra.mxu0 0.0
        %3028 = vmatpush.msra.mxu0 0.0
        %3029 = vmatpush.msra.mxu0 0.0
        %3030 = vmatpush.msra.mxu0 %v3017
        %3031 = vmatpush.msra.mxu0 %v3016
        %3032 = vmatpush.msra.mxu0 %v3015
        %3033 = vmatpush.msra.mxu0 %v3014
        %3034 = vmatmul.f32.gmra.mxu0 %v2989
        %v3035 = vpop.f32.mrf.mxu0
        %v3036 = vadd.f32 0.0, %v3035
        %3037 = vdwg.mxu0
        %v3038 = vadd.f32 %v3013, %v3036
        %s3039 = scalar_lea.vmem [#allocation2], 168
        %v3040 = vld [vmem:[%s3039] sm:$0xff]
        %v3041 = vld [vmem:[%s1126] sm:$0xff]
        %v3042 = vld [vmem:[%s1126 + $0x8] sm:$0xff]
        %v3043 = vld [vmem:[%s1126 + $0x10] sm:$0xff]
        %v3044 = vld [vmem:[%s1126 + $0x18] sm:$0xff]
        %3045 = vmatpush.msra.mxu0 0.0
        %3046 = vmatpush.msra.mxu0 0.0
        %3047 = vmatpush.msra.mxu0 0.0
        %3048 = vmatpush.msra.mxu0 0.0
        %3049 = vmatpush.msra.mxu0 0.0
        %3050 = vmatpush.msra.mxu0 0.0
        %3051 = vmatpush.msra.mxu0 0.0
        %3052 = vmatpush.msra.mxu0 0.0
        %3053 = vmatpush.msra.mxu0 0.0
        %3054 = vmatpush.msra.mxu0 0.0
        %3055 = vmatpush.msra.mxu0 0.0
        %3056 = vmatpush.msra.mxu0 0.0
        %3057 = vmatpush.msra.mxu0 %v3044
        %3058 = vmatpush.msra.mxu0 %v3043
        %3059 = vmatpush.msra.mxu0 %v3042
        %3060 = vmatpush.msra.mxu0 %v3041
        %3061 = vmatmul.f32.gmra.mxu0 %v2989
        %v3062 = vpop.f32.mrf.mxu0
        %v3063 = vadd.f32 0.0, %v3062
        %3064 = vdwg.mxu0
        %v3065 = vadd.f32 %v3040, %v3063
        %s3066 = scalar_lea.vmem [#allocation2], 232
        %v3067 = vld [vmem:[%s3066] sm:$0xff]
        %v3068 = vld [vmem:[%s1153] sm:$0xff]
        %v3069 = vld [vmem:[%s1153 + $0x8] sm:$0xff]
        %v3070 = vld [vmem:[%s1153 + $0x10] sm:$0xff]
        %v3071 = vld [vmem:[%s1153 + $0x18] sm:$0xff]
        %3072 = vmatpush.msra.mxu0 0.0
        %3073 = vmatpush.msra.mxu0 0.0
        %3074 = vmatpush.msra.mxu0 0.0
        %3075 = vmatpush.msra.mxu0 0.0
        %3076 = vmatpush.msra.mxu0 0.0
        %3077 = vmatpush.msra.mxu0 0.0
        %3078 = vmatpush.msra.mxu0 0.0
        %3079 = vmatpush.msra.mxu0 0.0
        %3080 = vmatpush.msra.mxu0 0.0
        %3081 = vmatpush.msra.mxu0 0.0
        %3082 = vmatpush.msra.mxu0 0.0
        %3083 = vmatpush.msra.mxu0 0.0
        %3084 = vmatpush.msra.mxu0 %v3071
        %3085 = vmatpush.msra.mxu0 %v3070
        %3086 = vmatpush.msra.mxu0 %v3069
        %3087 = vmatpush.msra.mxu0 %v3068
        %3088 = vmatmul.f32.gmra.mxu0 %v2989
        %v3089 = vpop.f32.mrf.mxu0
        %v3090 = vadd.f32 0.0, %v3089
        %3091 = vdwg.mxu0
        %v3092 = vadd.f32 %v3067, %v3090
        %v3093 = vxor.u32 %v3038, 2147483648
        %v3094 = vmul.f32 %v3093, 1.442695
        %v3095 = vpow.pop %v3094
        %v3096 = vadd.f32 %v3095, 1.0
        %v3097 = vrcp.pop %v3096
        %v3098 = vmul.f32 %v3096, %v3097
        %v3099 = vsub.f32 1.0, %v3098
        %v3100 = vmul.f32 %v3097, %v3099
        %v3101 = vadd.f32 %v3097, %v3100
        %vm3102 = vweird.f32 %v3096
        %vm3103 = vweird.f32 %v3097
        %vm3104 = vmor %vm3102, %vm3103
        %v3105 = vsel %vm3104, %v3097, %v3101
        %v3106 = vand.u32 2147483647, %v3096
        %vm3107 = vcmp.eq.f32.partialorder %v3106, 8.507059e+37
        %v3108 = vand.u32 %v3096, 2147483648
        %v3109 = vor.u32 1.1754944e-38, %v3108
        %v3110 = vsel %vm3107, %v3109, %v3105
        %v3111 = vmul.f32 1.0, %v3110
        %v3112 = vmul.f32 %v3111, %v2981
        %v3113 = vxor.u32 %v3011, 2147483648
        %v3114 = vmul.f32 %v3113, 1.442695
        %v3115 = vpow.pop %v3114
        %v3116 = vadd.f32 %v3115, 1.0
        %v3117 = vrcp.pop %v3116
        %v3118 = vmul.f32 %v3116, %v3117
        %v3119 = vsub.f32 1.0, %v3118
        %v3120 = vmul.f32 %v3117, %v3119
        %v3121 = vadd.f32 %v3117, %v3120
        %vm3122 = vweird.f32 %v3116
        %vm3123 = vweird.f32 %v3117
        %vm3124 = vmor %vm3122, %vm3123
        %v3125 = vsel %vm3124, %v3117, %v3121
        %v3126 = vand.u32 2147483647, %v3116
        %vm3127 = vcmp.eq.f32.partialorder %v3126, 8.507059e+37
        %v3128 = vand.u32 %v3116, 2147483648
        %v3129 = vor.u32 1.1754944e-38, %v3128
        %v3130 = vsel %vm3127, %v3129, %v3125
        %v3131 = vmul.f32 1.0, %v3130
        %v3132 = vtanh.pop %v3065
        %v3133 = vmul.f32 %v3131, %v3132
        %v3134 = vadd.f32 %v3112, %v3133
        %v3135 = vxor.u32 %v3092, 2147483648
        %v3136 = vmul.f32 %v3135, 1.442695
        %v3137 = vpow.pop %v3136
        %v3138 = vadd.f32 %v3137, 1.0
        %v3139 = vrcp.pop %v3138
        %v3140 = vmul.f32 %v3138, %v3139
        %v3141 = vsub.f32 1.0, %v3140
        %v3142 = vmul.f32 %v3139, %v3141
        %v3143 = vadd.f32 %v3139, %v3142
        %vm3144 = vweird.f32 %v3138
        %vm3145 = vweird.f32 %v3139
        %vm3146 = vmor %vm3144, %vm3145
        %v3147 = vsel %vm3146, %v3139, %v3143
        %v3148 = vand.u32 2147483647, %v3138
        %vm3149 = vcmp.eq.f32.partialorder %v3148, 8.507059e+37
        %v3150 = vand.u32 %v3138, 2147483648
        %v3151 = vor.u32 1.1754944e-38, %v3150
        %v3152 = vsel %vm3149, %v3151, %v3147
        %v3153 = vmul.f32 1.0, %v3152
        %v3154 = vtanh.pop %v3134
        %v3155 = vmul.f32 %v3153, %v3154
        %v3156 = vsel %vm2979, %v3155, %v2980
        %3157 = vst.msk [vmem:[#allocation4] sm:$0xff] %vm536, %v3156
        %v3158 = vsel %vm2979, %v3134, %v2981
        %3159 = vst.msk [vmem:[#allocation5] sm:$0xff] %vm536, %v3158
        %v3160 = vsel %vm2979, %v3155, 0.0
        %s3161 = scalar_lea.vmem %s496, 40 [#allocation19]
        %3162 = vst.msk [vmem:[%s3161] sm:$0xff] %vm536, %v3160
        %s3163 = sadd.s32 %s1249, 2
        %v3164 = vstv %s3163
        %vm3165 = vcmp.lt.s32.totalorder %v3164, %v519
        %v3166 = vsel %vm3165, 1, 0
        %3167 = vset.pattern.permute.xlu0 0
        %3168 = vperm.xlu0 %3167, %v3166
        %v3169 = vpop.permute.xlu0 %3168
        %vm3170 = vcmp.eq.s32.totalorder %v3169, 1
        %v3171 = vld [vmem:[#allocation6] sm:$0xff]
        %v3172 = vld [vmem:[#allocation7] sm:$0xff]
        %s3173 = scalar_lea.vmem [#allocation3], 16
        %v3174 = vld [vmem:[%s3173] sm:$0xff]
        %v3175 = vld [vmem:[#allocation17] sm:$0xff]
        %v3176 = vld [vmem:[#allocation17 + $0x8] sm:$0xff]
        %v3177 = vld [vmem:[#allocation17 + $0x10] sm:$0xff]
        %v3178 = vld [vmem:[#allocation17 + $0x18] sm:$0xff]
        %v3180 = vsel %vm536, %v3171, 0
        %3182 = vmatpush.msra.mxu0 0.0
        %3183 = vmatpush.msra.mxu0 0.0
        %3184 = vmatpush.msra.mxu0 0.0
        %3185 = vmatpush.msra.mxu0 0.0
        %3186 = vmatpush.msra.mxu0 0.0
        %3187 = vmatpush.msra.mxu0 0.0
        %3188 = vmatpush.msra.mxu0 0.0
        %3189 = vmatpush.msra.mxu0 0.0
        %3190 = vmatpush.msra.mxu0 0.0
        %3191 = vmatpush.msra.mxu0 0.0
        %3192 = vmatpush.msra.mxu0 0.0
        %3193 = vmatpush.msra.mxu0 0.0
        %3194 = vmatpush.msra.mxu0 %v3178
        %3195 = vmatpush.msra.mxu0 %v3177
        %3196 = vmatpush.msra.mxu0 %v3176
        %3197 = vmatpush.msra.mxu0 %v3175
        %3198 = vmatmul.f32.gmra.mxu0 %v3180
        %v3199 = vpop.f32.mrf.mxu0
        %v3200 = vadd.f32 0.0, %v3199
        %3201 = vdwg.mxu0
        %v3202 = vadd.f32 %v3174, %v3200
        %s3203 = scalar_lea.vmem [#allocation3], 80
        %v3204 = vld [vmem:[%s3203] sm:$0xff]
        %v3205 = vld [vmem:[%s1292] sm:$0xff]
        %v3206 = vld [vmem:[%s1292 + $0x8] sm:$0xff]
        %v3207 = vld [vmem:[%s1292 + $0x10] sm:$0xff]
        %v3208 = vld [vmem:[%s1292 + $0x18] sm:$0xff]
        %3209 = vmatpush.msra.mxu0 0.0
        %3210 = vmatpush.msra.mxu0 0.0
        %3211 = vmatpush.msra.mxu0 0.0
        %3212 = vmatpush.msra.mxu0 0.0
        %3213 = vmatpush.msra.mxu0 0.0
        %3214 = vmatpush.msra.mxu0 0.0
        %3215 = vmatpush.msra.mxu0 0.0
        %3216 = vmatpush.msra.mxu0 0.0
        %3217 = vmatpush.msra.mxu0 0.0
        %3218 = vmatpush.msra.mxu0 0.0
        %3219 = vmatpush.msra.mxu0 0.0
        %3220 = vmatpush.msra.mxu0 0.0
        %3221 = vmatpush.msra.mxu0 %v3208
        %3222 = vmatpush.msra.mxu0 %v3207
        %3223 = vmatpush.msra.mxu0 %v3206
        %3224 = vmatpush.msra.mxu0 %v3205
        %3225 = vmatmul.f32.gmra.mxu0 %v3180
        %v3226 = vpop.f32.mrf.mxu0
        %v3227 = vadd.f32 0.0, %v3226
        %3228 = vdwg.mxu0
        %v3229 = vadd.f32 %v3204, %v3227
        %s3230 = scalar_lea.vmem [#allocation3], 144
        %v3231 = vld [vmem:[%s3230] sm:$0xff]
        %v3232 = vld [vmem:[%s1320] sm:$0xff]
        %v3233 = vld [vmem:[%s1320 + $0x8] sm:$0xff]
        %v3234 = vld [vmem:[%s1320 + $0x10] sm:$0xff]
        %v3235 = vld [vmem:[%s1320 + $0x18] sm:$0xff]
        %3236 = vmatpush.msra.mxu0 0.0
        %3237 = vmatpush.msra.mxu0 0.0
        %3238 = vmatpush.msra.mxu0 0.0
        %3239 = vmatpush.msra.mxu0 0.0
        %3240 = vmatpush.msra.mxu0 0.0
        %3241 = vmatpush.msra.mxu0 0.0
        %3242 = vmatpush.msra.mxu0 0.0
        %3243 = vmatpush.msra.mxu0 0.0
        %3244 = vmatpush.msra.mxu0 0.0
        %3245 = vmatpush.msra.mxu0 0.0
        %3246 = vmatpush.msra.mxu0 0.0
        %3247 = vmatpush.msra.mxu0 0.0
        %3248 = vmatpush.msra.mxu0 %v3235
        %3249 = vmatpush.msra.mxu0 %v3234
        %3250 = vmatpush.msra.mxu0 %v3233
        %3251 = vmatpush.msra.mxu0 %v3232
        %3252 = vmatmul.f32.gmra.mxu0 %v3180
        %v3253 = vpop.f32.mrf.mxu0
        %v3254 = vadd.f32 0.0, %v3253
        %3255 = vdwg.mxu0
        %v3256 = vadd.f32 %v3231, %v3254
        %s3257 = scalar_lea.vmem [#allocation3], 208
        %v3258 = vld [vmem:[%s3257] sm:$0xff]
        %v3259 = vld [vmem:[%s1348] sm:$0xff]
        %v3260 = vld [vmem:[%s1348 + $0x8] sm:$0xff]
        %v3261 = vld [vmem:[%s1348 + $0x10] sm:$0xff]
        %v3262 = vld [vmem:[%s1348 + $0x18] sm:$0xff]
        %3263 = vmatpush.msra.mxu0 0.0
        %3264 = vmatpush.msra.mxu0 0.0
        %3265 = vmatpush.msra.mxu0 0.0
        %3266 = vmatpush.msra.mxu0 0.0
        %3267 = vmatpush.msra.mxu0 0.0
        %3268 = vmatpush.msra.mxu0 0.0
        %3269 = vmatpush.msra.mxu0 0.0
        %3270 = vmatpush.msra.mxu0 0.0
        %3271 = vmatpush.msra.mxu0 0.0
        %3272 = vmatpush.msra.mxu0 0.0
        %3273 = vmatpush.msra.mxu0 0.0
        %3274 = vmatpush.msra.mxu0 0.0
        %3275 = vmatpush.msra.mxu0 %v3262
        %3276 = vmatpush.msra.mxu0 %v3261
        %3277 = vmatpush.msra.mxu0 %v3260
        %3278 = vmatpush.msra.mxu0 %v3259
        %3279 = vmatmul.f32.gmra.mxu0 %v3180
        %v3280 = vpop.f32.mrf.mxu0
        %v3281 = vadd.f32 0.0, %v3280
        %3282 = vdwg.mxu0
        %v3283 = vadd.f32 %v3258, %v3281
        %v3284 = vxor.u32 %v3229, 2147483648
        %v3285 = vmul.f32 %v3284, 1.442695
        %v3286 = vpow.pop %v3285
        %v3287 = vadd.f32 %v3286, 1.0
        %v3288 = vrcp.pop %v3287
        %v3289 = vmul.f32 %v3287, %v3288
        %v3290 = vsub.f32 1.0, %v3289
        %v3291 = vmul.f32 %v3288, %v3290
        %v3292 = vadd.f32 %v3288, %v3291
        %vm3293 = vweird.f32 %v3287
        %vm3294 = vweird.f32 %v3288
        %vm3295 = vmor %vm3293, %vm3294
        %v3296 = vsel %vm3295, %v3288, %v3292
        %v3297 = vand.u32 2147483647, %v3287
        %vm3298 = vcmp.eq.f32.partialorder %v3297, 8.507059e+37
        %v3299 = vand.u32 %v3287, 2147483648
        %v3300 = vor.u32 1.1754944e-38, %v3299
        %v3301 = vsel %vm3298, %v3300, %v3296
        %v3302 = vmul.f32 1.0, %v3301
        %v3303 = vmul.f32 %v3302, %v3172
        %v3304 = vxor.u32 %v3202, 2147483648
        %v3305 = vmul.f32 %v3304, 1.442695
        %v3306 = vpow.pop %v3305
        %v3307 = vadd.f32 %v3306, 1.0
        %v3308 = vrcp.pop %v3307
        %v3309 = vmul.f32 %v3307, %v3308
        %v3310 = vsub.f32 1.0, %v3309
        %v3311 = vmul.f32 %v3308, %v3310
        %v3312 = vadd.f32 %v3308, %v3311
        %vm3313 = vweird.f32 %v3307
        %vm3314 = vweird.f32 %v3308
        %vm3315 = vmor %vm3313, %vm3314
        %v3316 = vsel %vm3315, %v3308, %v3312
        %v3317 = vand.u32 2147483647, %v3307
        %vm3318 = vcmp.eq.f32.partialorder %v3317, 8.507059e+37
        %v3319 = vand.u32 %v3307, 2147483648
        %v3320 = vor.u32 1.1754944e-38, %v3319
        %v3321 = vsel %vm3318, %v3320, %v3316
        %v3322 = vmul.f32 1.0, %v3321
        %v3323 = vtanh.pop %v3256
        %v3324 = vmul.f32 %v3322, %v3323
        %v3325 = vadd.f32 %v3303, %v3324
        %v3326 = vxor.u32 %v3283, 2147483648
        %v3327 = vmul.f32 %v3326, 1.442695
        %v3328 = vpow.pop %v3327
        %v3329 = vadd.f32 %v3328, 1.0
        %v3330 = vrcp.pop %v3329
        %v3331 = vmul.f32 %v3329, %v3330
        %v3332 = vsub.f32 1.0, %v3331
        %v3333 = vmul.f32 %v3330, %v3332
        %v3334 = vadd.f32 %v3330, %v3333
        %vm3335 = vweird.f32 %v3329
        %vm3336 = vweird.f32 %v3330
        %vm3337 = vmor %vm3335, %vm3336
        %v3338 = vsel %vm3337, %v3330, %v3334
        %v3339 = vand.u32 2147483647, %v3329
        %vm3340 = vcmp.eq.f32.partialorder %v3339, 8.507059e+37
        %v3341 = vand.u32 %v3329, 2147483648
        %v3342 = vor.u32 1.1754944e-38, %v3341
        %v3343 = vsel %vm3340, %v3342, %v3338
        %v3344 = vmul.f32 1.0, %v3343
        %v3345 = vtanh.pop %v3325
        %v3346 = vmul.f32 %v3344, %v3345
        %v3347 = vsel %vm3170, %v3346, %v3171
        %3348 = vst.msk [vmem:[#allocation6] sm:$0xff] %vm536, %v3347
        %v3349 = vsel %vm3170, %v3325, %v3172
        %3350 = vst.msk [vmem:[#allocation7] sm:$0xff] %vm536, %v3349
        %v3351 = vsel %vm3170, %v3346, 0.0
        %s3352 = scalar_lea.vmem %s503, 16 [#allocation20]
        %3353 = vst.msk [vmem:[%s3352] sm:$0xff] %vm536, %v3351
        %s3354 = sadd.s32 %s1059, 6
        %v3355 = vstv %s3354
        %vm3356 = vcmp.lt.s32.totalorder %v3355, %v519
        %v3357 = vsel %vm3356, 1, 0
        %3358 = vset.pattern.permute.xlu0 0
        %3359 = vperm.xlu0 %3358, %v3357
        %v3360 = vpop.permute.xlu0 %3359
        %vm3361 = vcmp.eq.s32.totalorder %v3360, 1
        %v3362 = vld [vmem:[#allocation4] sm:$0xff]
        %v3363 = vld [vmem:[#allocation5] sm:$0xff]
        %s3364 = scalar_lea.vmem [#allocation2], 48
        %v3365 = vld [vmem:[%s3364] sm:$0xff]
        %v3366 = vld [vmem:[#allocation16] sm:$0xff]
        %v3367 = vld [vmem:[#allocation16 + $0x8] sm:$0xff]
        %v3368 = vld [vmem:[#allocation16 + $0x10] sm:$0xff]
        %v3369 = vld [vmem:[#allocation16 + $0x18] sm:$0xff]
        %v3371 = vsel %vm536, %v3362, 0
        %3373 = vmatpush.msra.mxu0 0.0
        %3374 = vmatpush.msra.mxu0 0.0
        %3375 = vmatpush.msra.mxu0 0.0
        %3376 = vmatpush.msra.mxu0 0.0
        %3377 = vmatpush.msra.mxu0 0.0
        %3378 = vmatpush.msra.mxu0 0.0
        %3379 = vmatpush.msra.mxu0 0.0
        %3380 = vmatpush.msra.mxu0 0.0
        %3381 = vmatpush.msra.mxu0 0.0
        %3382 = vmatpush.msra.mxu0 0.0
        %3383 = vmatpush.msra.mxu0 0.0
        %3384 = vmatpush.msra.mxu0 0.0
        %3385 = vmatpush.msra.mxu0 %v3369
        %3386 = vmatpush.msra.mxu0 %v3368
        %3387 = vmatpush.msra.mxu0 %v3367
        %3388 = vmatpush.msra.mxu0 %v3366
        %3389 = vmatmul.f32.gmra.mxu0 %v3371
        %v3390 = vpop.f32.mrf.mxu0
        %v3391 = vadd.f32 0.0, %v3390
        %3392 = vdwg.mxu0
        %v3393 = vadd.f32 %v3365, %v3391
        %s3394 = scalar_lea.vmem [#allocation2], 112
        %v3395 = vld [vmem:[%s3394] sm:$0xff]
        %v3396 = vld [vmem:[%s1099] sm:$0xff]
        %v3397 = vld [vmem:[%s1099 + $0x8] sm:$0xff]
        %v3398 = vld [vmem:[%s1099 + $0x10] sm:$0xff]
        %v3399 = vld [vmem:[%s1099 + $0x18] sm:$0xff]
        %3400 = vmatpush.msra.mxu0 0.0
        %3401 = vmatpush.msra.mxu0 0.0
        %3402 = vmatpush.msra.mxu0 0.0
        %3403 = vmatpush.msra.mxu0 0.0
        %3404 = vmatpush.msra.mxu0 0.0
        %3405 = vmatpush.msra.mxu0 0.0
        %3406 = vmatpush.msra.mxu0 0.0
        %3407 = vmatpush.msra.mxu0 0.0
        %3408 = vmatpush.msra.mxu0 0.0
        %3409 = vmatpush.msra.mxu0 0.0
        %3410 = vmatpush.msra.mxu0 0.0
        %3411 = vmatpush.msra.mxu0 0.0
        %3412 = vmatpush.msra.mxu0 %v3399
        %3413 = vmatpush.msra.mxu0 %v3398
        %3414 = vmatpush.msra.mxu0 %v3397
        %3415 = vmatpush.msra.mxu0 %v3396
        %3416 = vmatmul.f32.gmra.mxu0 %v3371
        %v3417 = vpop.f32.mrf.mxu0
        %v3418 = vadd.f32 0.0, %v3417
        %3419 = vdwg.mxu0
        %v3420 = vadd.f32 %v3395, %v3418
        %s3421 = scalar_lea.vmem [#allocation2], 176
        %v3422 = vld [vmem:[%s3421] sm:$0xff]
        %v3423 = vld [vmem:[%s1126] sm:$0xff]
        %v3424 = vld [vmem:[%s1126 + $0x8] sm:$0xff]
        %v3425 = vld [vmem:[%s1126 + $0x10] sm:$0xff]
        %v3426 = vld [vmem:[%s1126 + $0x18] sm:$0xff]
        %3427 = vmatpush.msra.mxu0 0.0
        %3428 = vmatpush.msra.mxu0 0.0
        %3429 = vmatpush.msra.mxu0 0.0
        %3430 = vmatpush.msra.mxu0 0.0
        %3431 = vmatpush.msra.mxu0 0.0
        %3432 = vmatpush.msra.mxu0 0.0
        %3433 = vmatpush.msra.mxu0 0.0
        %3434 = vmatpush.msra.mxu0 0.0
        %3435 = vmatpush.msra.mxu0 0.0
        %3436 = vmatpush.msra.mxu0 0.0
        %3437 = vmatpush.msra.mxu0 0.0
        %3438 = vmatpush.msra.mxu0 0.0
        %3439 = vmatpush.msra.mxu0 %v3426
        %3440 = vmatpush.msra.mxu0 %v3425
        %3441 = vmatpush.msra.mxu0 %v3424
        %3442 = vmatpush.msra.mxu0 %v3423
        %3443 = vmatmul.f32.gmra.mxu0 %v3371
        %v3444 = vpop.f32.mrf.mxu0
        %v3445 = vadd.f32 0.0, %v3444
        %3446 = vdwg.mxu0
        %v3447 = vadd.f32 %v3422, %v3445
        %s3448 = scalar_lea.vmem [#allocation2], 240
        %v3449 = vld [vmem:[%s3448] sm:$0xff]
        %v3450 = vld [vmem:[%s1153] sm:$0xff]
        %v3451 = vld [vmem:[%s1153 + $0x8] sm:$0xff]
        %v3452 = vld [vmem:[%s1153 + $0x10] sm:$0xff]
        %v3453 = vld [vmem:[%s1153 + $0x18] sm:$0xff]
        %3454 = vmatpush.msra.mxu0 0.0
        %3455 = vmatpush.msra.mxu0 0.0
        %3456 = vmatpush.msra.mxu0 0.0
        %3457 = vmatpush.msra.mxu0 0.0
        %3458 = vmatpush.msra.mxu0 0.0
        %3459 = vmatpush.msra.mxu0 0.0
        %3460 = vmatpush.msra.mxu0 0.0
        %3461 = vmatpush.msra.mxu0 0.0
        %3462 = vmatpush.msra.mxu0 0.0
        %3463 = vmatpush.msra.mxu0 0.0
        %3464 = vmatpush.msra.mxu0 0.0
        %3465 = vmatpush.msra.mxu0 0.0
        %3466 = vmatpush.msra.mxu0 %v3453
        %3467 = vmatpush.msra.mxu0 %v3452
        %3468 = vmatpush.msra.mxu0 %v3451
        %3469 = vmatpush.msra.mxu0 %v3450
        %3470 = vmatmul.f32.gmra.mxu0 %v3371
        %v3471 = vpop.f32.mrf.mxu0
        %v3472 = vadd.f32 0.0, %v3471
        %3473 = vdwg.mxu0
        %v3474 = vadd.f32 %v3449, %v3472
        %v3475 = vxor.u32 %v3420, 2147483648
        %v3476 = vmul.f32 %v3475, 1.442695
        %v3477 = vpow.pop %v3476
        %v3478 = vadd.f32 %v3477, 1.0
        %v3479 = vrcp.pop %v3478
        %v3480 = vmul.f32 %v3478, %v3479
        %v3481 = vsub.f32 1.0, %v3480
        %v3482 = vmul.f32 %v3479, %v3481
        %v3483 = vadd.f32 %v3479, %v3482
        %vm3484 = vweird.f32 %v3478
        %vm3485 = vweird.f32 %v3479
        %vm3486 = vmor %vm3484, %vm3485
        %v3487 = vsel %vm3486, %v3479, %v3483
        %v3488 = vand.u32 2147483647, %v3478
        %vm3489 = vcmp.eq.f32.partialorder %v3488, 8.507059e+37
        %v3490 = vand.u32 %v3478, 2147483648
        %v3491 = vor.u32 1.1754944e-38, %v3490
        %v3492 = vsel %vm3489, %v3491, %v3487
        %v3493 = vmul.f32 1.0, %v3492
        %v3494 = vmul.f32 %v3493, %v3363
        %v3495 = vxor.u32 %v3393, 2147483648
        %v3496 = vmul.f32 %v3495, 1.442695
        %v3497 = vpow.pop %v3496
        %v3498 = vadd.f32 %v3497, 1.0
        %v3499 = vrcp.pop %v3498
        %v3500 = vmul.f32 %v3498, %v3499
        %v3501 = vsub.f32 1.0, %v3500
        %v3502 = vmul.f32 %v3499, %v3501
        %v3503 = vadd.f32 %v3499, %v3502
        %vm3504 = vweird.f32 %v3498
        %vm3505 = vweird.f32 %v3499
        %vm3506 = vmor %vm3504, %vm3505
        %v3507 = vsel %vm3506, %v3499, %v3503
        %v3508 = vand.u32 2147483647, %v3498
        %vm3509 = vcmp.eq.f32.partialorder %v3508, 8.507059e+37
        %v3510 = vand.u32 %v3498, 2147483648
        %v3511 = vor.u32 1.1754944e-38, %v3510
        %v3512 = vsel %vm3509, %v3511, %v3507
        %v3513 = vmul.f32 1.0, %v3512
        %v3514 = vtanh.pop %v3447
        %v3515 = vmul.f32 %v3513, %v3514
        %v3516 = vadd.f32 %v3494, %v3515
        %v3517 = vxor.u32 %v3474, 2147483648
        %v3518 = vmul.f32 %v3517, 1.442695
        %v3519 = vpow.pop %v3518
        %v3520 = vadd.f32 %v3519, 1.0
        %v3521 = vrcp.pop %v3520
        %v3522 = vmul.f32 %v3520, %v3521
        %v3523 = vsub.f32 1.0, %v3522
        %v3524 = vmul.f32 %v3521, %v3523
        %v3525 = vadd.f32 %v3521, %v3524
        %vm3526 = vweird.f32 %v3520
        %vm3527 = vweird.f32 %v3521
        %vm3528 = vmor %vm3526, %vm3527
        %v3529 = vsel %vm3528, %v3521, %v3525
        %v3530 = vand.u32 2147483647, %v3520
        %vm3531 = vcmp.eq.f32.partialorder %v3530, 8.507059e+37
        %v3532 = vand.u32 %v3520, 2147483648
        %v3533 = vor.u32 1.1754944e-38, %v3532
        %v3534 = vsel %vm3531, %v3533, %v3529
        %v3535 = vmul.f32 1.0, %v3534
        %v3536 = vtanh.pop %v3516
        %v3537 = vmul.f32 %v3535, %v3536
        %v3538 = vsel %vm3361, %v3537, %v3362
        %3539 = vst.msk [vmem:[#allocation4] sm:$0xff] %vm536, %v3538
        %v3540 = vsel %vm3361, %v3516, %v3363
        %3541 = vst.msk [vmem:[#allocation5] sm:$0xff] %vm536, %v3540
        %v3542 = vsel %vm3361, %v3537, 0.0
        %s3543 = scalar_lea.vmem %s496, 48 [#allocation19]
        %3544 = vst.msk [vmem:[%s3543] sm:$0xff] %vm536, %v3542
        %s3545 = sadd.s32 %s1249, 1
        %v3546 = vstv %s3545
        %vm3547 = vcmp.lt.s32.totalorder %v3546, %v519
        %v3548 = vsel %vm3547, 1, 0
        %3549 = vset.pattern.permute.xlu0 0
        %3550 = vperm.xlu0 %3549, %v3548
        %v3551 = vpop.permute.xlu0 %3550
        %vm3552 = vcmp.eq.s32.totalorder %v3551, 1
        %v3553 = vld [vmem:[#allocation6] sm:$0xff]
        %v3554 = vld [vmem:[#allocation7] sm:$0xff]
        %s3555 = scalar_lea.vmem [#allocation3], 8
        %v3556 = vld [vmem:[%s3555] sm:$0xff]
        %v3557 = vld [vmem:[#allocation17] sm:$0xff]
        %v3558 = vld [vmem:[#allocation17 + $0x8] sm:$0xff]
        %v3559 = vld [vmem:[#allocation17 + $0x10] sm:$0xff]
        %v3560 = vld [vmem:[#allocation17 + $0x18] sm:$0xff]
        %v3562 = vsel %vm536, %v3553, 0
        %3564 = vmatpush.msra.mxu0 0.0
        %3565 = vmatpush.msra.mxu0 0.0
        %3566 = vmatpush.msra.mxu0 0.0
        %3567 = vmatpush.msra.mxu0 0.0
        %3568 = vmatpush.msra.mxu0 0.0
        %3569 = vmatpush.msra.mxu0 0.0
        %3570 = vmatpush.msra.mxu0 0.0
        %3571 = vmatpush.msra.mxu0 0.0
        %3572 = vmatpush.msra.mxu0 0.0
        %3573 = vmatpush.msra.mxu0 0.0
        %3574 = vmatpush.msra.mxu0 0.0
        %3575 = vmatpush.msra.mxu0 0.0
        %3576 = vmatpush.msra.mxu0 %v3560
        %3577 = vmatpush.msra.mxu0 %v3559
        %3578 = vmatpush.msra.mxu0 %v3558
        %3579 = vmatpush.msra.mxu0 %v3557
        %3580 = vmatmul.f32.gmra.mxu0 %v3562
        %v3581 = vpop.f32.mrf.mxu0
        %v3582 = vadd.f32 0.0, %v3581
        %3583 = vdwg.mxu0
        %v3584 = vadd.f32 %v3556, %v3582
        %s3585 = scalar_lea.vmem [#allocation3], 72
        %v3586 = vld [vmem:[%s3585] sm:$0xff]
        %v3587 = vld [vmem:[%s1292] sm:$0xff]
        %v3588 = vld [vmem:[%s1292 + $0x8] sm:$0xff]
        %v3589 = vld [vmem:[%s1292 + $0x10] sm:$0xff]
        %v3590 = vld [vmem:[%s1292 + $0x18] sm:$0xff]
        %3591 = vmatpush.msra.mxu0 0.0
        %3592 = vmatpush.msra.mxu0 0.0
        %3593 = vmatpush.msra.mxu0 0.0
        %3594 = vmatpush.msra.mxu0 0.0
        %3595 = vmatpush.msra.mxu0 0.0
        %3596 = vmatpush.msra.mxu0 0.0
        %3597 = vmatpush.msra.mxu0 0.0
        %3598 = vmatpush.msra.mxu0 0.0
        %3599 = vmatpush.msra.mxu0 0.0
        %3600 = vmatpush.msra.mxu0 0.0
        %3601 = vmatpush.msra.mxu0 0.0
        %3602 = vmatpush.msra.mxu0 0.0
        %3603 = vmatpush.msra.mxu0 %v3590
        %3604 = vmatpush.msra.mxu0 %v3589
        %3605 = vmatpush.msra.mxu0 %v3588
        %3606 = vmatpush.msra.mxu0 %v3587
        %3607 = vmatmul.f32.gmra.mxu0 %v3562
        %v3608 = vpop.f32.mrf.mxu0
        %v3609 = vadd.f32 0.0, %v3608
        %3610 = vdwg.mxu0
        %v3611 = vadd.f32 %v3586, %v3609
        %s3612 = scalar_lea.vmem [#allocation3], 136
        %v3613 = vld [vmem:[%s3612] sm:$0xff]
        %v3614 = vld [vmem:[%s1320] sm:$0xff]
        %v3615 = vld [vmem:[%s1320 + $0x8] sm:$0xff]
        %v3616 = vld [vmem:[%s1320 + $0x10] sm:$0xff]
        %v3617 = vld [vmem:[%s1320 + $0x18] sm:$0xff]
        %3618 = vmatpush.msra.mxu0 0.0
        %3619 = vmatpush.msra.mxu0 0.0
        %3620 = vmatpush.msra.mxu0 0.0
        %3621 = vmatpush.msra.mxu0 0.0
        %3622 = vmatpush.msra.mxu0 0.0
        %3623 = vmatpush.msra.mxu0 0.0
        %3624 = vmatpush.msra.mxu0 0.0
        %3625 = vmatpush.msra.mxu0 0.0
        %3626 = vmatpush.msra.mxu0 0.0
        %3627 = vmatpush.msra.mxu0 0.0
        %3628 = vmatpush.msra.mxu0 0.0
        %3629 = vmatpush.msra.mxu0 0.0
        %3630 = vmatpush.msra.mxu0 %v3617
        %3631 = vmatpush.msra.mxu0 %v3616
        %3632 = vmatpush.msra.mxu0 %v3615
        %3633 = vmatpush.msra.mxu0 %v3614
        %3634 = vmatmul.f32.gmra.mxu0 %v3562
        %v3635 = vpop.f32.mrf.mxu0
        %v3636 = vadd.f32 0.0, %v3635
        %3637 = vdwg.mxu0
        %v3638 = vadd.f32 %v3613, %v3636
        %s3639 = scalar_lea.vmem [#allocation3], 200
        %v3640 = vld [vmem:[%s3639] sm:$0xff]
        %v3641 = vld [vmem:[%s1348] sm:$0xff]
        %v3642 = vld [vmem:[%s1348 + $0x8] sm:$0xff]
        %v3643 = vld [vmem:[%s1348 + $0x10] sm:$0xff]
        %v3644 = vld [vmem:[%s1348 + $0x18] sm:$0xff]
        %3645 = vmatpush.msra.mxu0 0.0
        %3646 = vmatpush.msra.mxu0 0.0
        %3647 = vmatpush.msra.mxu0 0.0
        %3648 = vmatpush.msra.mxu0 0.0
        %3649 = vmatpush.msra.mxu0 0.0
        %3650 = vmatpush.msra.mxu0 0.0
        %3651 = vmatpush.msra.mxu0 0.0
        %3652 = vmatpush.msra.mxu0 0.0
        %3653 = vmatpush.msra.mxu0 0.0
        %3654 = vmatpush.msra.mxu0 0.0
        %3655 = vmatpush.msra.mxu0 0.0
        %3656 = vmatpush.msra.mxu0 0.0
        %3657 = vmatpush.msra.mxu0 %v3644
        %3658 = vmatpush.msra.mxu0 %v3643
        %3659 = vmatpush.msra.mxu0 %v3642
        %3660 = vmatpush.msra.mxu0 %v3641
        %3661 = vmatmul.f32.gmra.mxu0 %v3562
        %v3662 = vpop.f32.mrf.mxu0
        %v3663 = vadd.f32 0.0, %v3662
        %3664 = vdwg.mxu0
        %v3665 = vadd.f32 %v3640, %v3663
        %v3666 = vxor.u32 %v3611, 2147483648
        %v3667 = vmul.f32 %v3666, 1.442695
        %v3668 = vpow.pop %v3667
        %v3669 = vadd.f32 %v3668, 1.0
        %v3670 = vrcp.pop %v3669
        %v3671 = vmul.f32 %v3669, %v3670
        %v3672 = vsub.f32 1.0, %v3671
        %v3673 = vmul.f32 %v3670, %v3672
        %v3674 = vadd.f32 %v3670, %v3673
        %vm3675 = vweird.f32 %v3669
        %vm3676 = vweird.f32 %v3670
        %vm3677 = vmor %vm3675, %vm3676
        %v3678 = vsel %vm3677, %v3670, %v3674
        %v3679 = vand.u32 2147483647, %v3669
        %vm3680 = vcmp.eq.f32.partialorder %v3679, 8.507059e+37
        %v3681 = vand.u32 %v3669, 2147483648
        %v3682 = vor.u32 1.1754944e-38, %v3681
        %v3683 = vsel %vm3680, %v3682, %v3678
        %v3684 = vmul.f32 1.0, %v3683
        %v3685 = vmul.f32 %v3684, %v3554
        %v3686 = vxor.u32 %v3584, 2147483648
        %v3687 = vmul.f32 %v3686, 1.442695
        %v3688 = vpow.pop %v3687
        %v3689 = vadd.f32 %v3688, 1.0
        %v3690 = vrcp.pop %v3689
        %v3691 = vmul.f32 %v3689, %v3690
        %v3692 = vsub.f32 1.0, %v3691
        %v3693 = vmul.f32 %v3690, %v3692
        %v3694 = vadd.f32 %v3690, %v3693
        %vm3695 = vweird.f32 %v3689
        %vm3696 = vweird.f32 %v3690
        %vm3697 = vmor %vm3695, %vm3696
        %v3698 = vsel %vm3697, %v3690, %v3694
        %v3699 = vand.u32 2147483647, %v3689
        %vm3700 = vcmp.eq.f32.partialorder %v3699, 8.507059e+37
        %v3701 = vand.u32 %v3689, 2147483648
        %v3702 = vor.u32 1.1754944e-38, %v3701
        %v3703 = vsel %vm3700, %v3702, %v3698
        %v3704 = vmul.f32 1.0, %v3703
        %v3705 = vtanh.pop %v3638
        %v3706 = vmul.f32 %v3704, %v3705
        %v3707 = vadd.f32 %v3685, %v3706
        %v3708 = vxor.u32 %v3665, 2147483648
        %v3709 = vmul.f32 %v3708, 1.442695
        %v3710 = vpow.pop %v3709
        %v3711 = vadd.f32 %v3710, 1.0
        %v3712 = vrcp.pop %v3711
        %v3713 = vmul.f32 %v3711, %v3712
        %v3714 = vsub.f32 1.0, %v3713
        %v3715 = vmul.f32 %v3712, %v3714
        %v3716 = vadd.f32 %v3712, %v3715
        %vm3717 = vweird.f32 %v3711
        %vm3718 = vweird.f32 %v3712
        %vm3719 = vmor %vm3717, %vm3718
        %v3720 = vsel %vm3719, %v3712, %v3716
        %v3721 = vand.u32 2147483647, %v3711
        %vm3722 = vcmp.eq.f32.partialorder %v3721, 8.507059e+37
        %v3723 = vand.u32 %v3711, 2147483648
        %v3724 = vor.u32 1.1754944e-38, %v3723
        %v3725 = vsel %vm3722, %v3724, %v3720
        %v3726 = vmul.f32 1.0, %v3725
        %v3727 = vtanh.pop %v3707
        %v3728 = vmul.f32 %v3726, %v3727
        %v3729 = vsel %vm3552, %v3728, %v3553
        %3730 = vst.msk [vmem:[#allocation6] sm:$0xff] %vm536, %v3729
        %v3731 = vsel %vm3552, %v3707, %v3554
        %3732 = vst.msk [vmem:[#allocation7] sm:$0xff] %vm536, %v3731
        %v3733 = vsel %vm3552, %v3728, 0.0
        %s3734 = scalar_lea.vmem %s503, 8 [#allocation20]
        %3735 = vst.msk [vmem:[%s3734] sm:$0xff] %vm536, %v3733
        %s3736 = sadd.s32 %s1059, 7
        %v3737 = vstv %s3736
        %vm3738 = vcmp.lt.s32.totalorder %v3737, %v519
        %v3739 = vsel %vm3738, 1, 0
        %3740 = vset.pattern.permute.xlu0 0
        %3741 = vperm.xlu0 %3740, %v3739
        %v3742 = vpop.permute.xlu0 %3741
        %vm3743 = vcmp.eq.s32.totalorder %v3742, 1
        %v3744 = vld [vmem:[#allocation4] sm:$0xff]
        %v3745 = vld [vmem:[#allocation5] sm:$0xff]
        %s3746 = scalar_lea.vmem [#allocation2], 56
        %v3747 = vld [vmem:[%s3746] sm:$0xff]
        %v3748 = vld [vmem:[#allocation16] sm:$0xff]
        %v3749 = vld [vmem:[#allocation16 + $0x8] sm:$0xff]
        %v3750 = vld [vmem:[#allocation16 + $0x10] sm:$0xff]
        %v3751 = vld [vmem:[#allocation16 + $0x18] sm:$0xff]
        %v3753 = vsel %vm536, %v3744, 0
        %3755 = vmatpush.msra.mxu0 0.0
        %3756 = vmatpush.msra.mxu0 0.0
        %3757 = vmatpush.msra.mxu0 0.0
        %3758 = vmatpush.msra.mxu0 0.0
        %3759 = vmatpush.msra.mxu0 0.0
        %3760 = vmatpush.msra.mxu0 0.0
        %3761 = vmatpush.msra.mxu0 0.0
        %3762 = vmatpush.msra.mxu0 0.0
        %3763 = vmatpush.msra.mxu0 0.0
        %3764 = vmatpush.msra.mxu0 0.0
        %3765 = vmatpush.msra.mxu0 0.0
        %3766 = vmatpush.msra.mxu0 0.0
        %3767 = vmatpush.msra.mxu0 %v3751
        %3768 = vmatpush.msra.mxu0 %v3750
        %3769 = vmatpush.msra.mxu0 %v3749
        %3770 = vmatpush.msra.mxu0 %v3748
        %3771 = vmatmul.f32.gmra.mxu0 %v3753
        %v3772 = vpop.f32.mrf.mxu0
        %v3773 = vadd.f32 0.0, %v3772
        %3774 = vdwg.mxu0
        %v3775 = vadd.f32 %v3747, %v3773
        %s3776 = scalar_lea.vmem [#allocation2], 120
        %v3777 = vld [vmem:[%s3776] sm:$0xff]
        %v3778 = vld [vmem:[%s1099] sm:$0xff]
        %v3779 = vld [vmem:[%s1099 + $0x8] sm:$0xff]
        %v3780 = vld [vmem:[%s1099 + $0x10] sm:$0xff]
        %v3781 = vld [vmem:[%s1099 + $0x18] sm:$0xff]
        %3782 = vmatpush.msra.mxu0 0.0
        %3783 = vmatpush.msra.mxu0 0.0
        %3784 = vmatpush.msra.mxu0 0.0
        %3785 = vmatpush.msra.mxu0 0.0
        %3786 = vmatpush.msra.mxu0 0.0
        %3787 = vmatpush.msra.mxu0 0.0
        %3788 = vmatpush.msra.mxu0 0.0
        %3789 = vmatpush.msra.mxu0 0.0
        %3790 = vmatpush.msra.mxu0 0.0
        %3791 = vmatpush.msra.mxu0 0.0
        %3792 = vmatpush.msra.mxu0 0.0
        %3793 = vmatpush.msra.mxu0 0.0
        %3794 = vmatpush.msra.mxu0 %v3781
        %3795 = vmatpush.msra.mxu0 %v3780
        %3796 = vmatpush.msra.mxu0 %v3779
        %3797 = vmatpush.msra.mxu0 %v3778
        %3798 = vmatmul.f32.gmra.mxu0 %v3753
        %v3799 = vpop.f32.mrf.mxu0
        %v3800 = vadd.f32 0.0, %v3799
        %3801 = vdwg.mxu0
        %v3802 = vadd.f32 %v3777, %v3800
        %s3803 = scalar_lea.vmem [#allocation2], 184
        %v3804 = vld [vmem:[%s3803] sm:$0xff]
        %v3805 = vld [vmem:[%s1126] sm:$0xff]
        %v3806 = vld [vmem:[%s1126 + $0x8] sm:$0xff]
        %v3807 = vld [vmem:[%s1126 + $0x10] sm:$0xff]
        %v3808 = vld [vmem:[%s1126 + $0x18] sm:$0xff]
        %3809 = vmatpush.msra.mxu0 0.0
        %3810 = vmatpush.msra.mxu0 0.0
        %3811 = vmatpush.msra.mxu0 0.0
        %3812 = vmatpush.msra.mxu0 0.0
        %3813 = vmatpush.msra.mxu0 0.0
        %3814 = vmatpush.msra.mxu0 0.0
        %3815 = vmatpush.msra.mxu0 0.0
        %3816 = vmatpush.msra.mxu0 0.0
        %3817 = vmatpush.msra.mxu0 0.0
        %3818 = vmatpush.msra.mxu0 0.0
        %3819 = vmatpush.msra.mxu0 0.0
        %3820 = vmatpush.msra.mxu0 0.0
        %3821 = vmatpush.msra.mxu0 %v3808
        %3822 = vmatpush.msra.mxu0 %v3807
        %3823 = vmatpush.msra.mxu0 %v3806
        %3824 = vmatpush.msra.mxu0 %v3805
        %3825 = vmatmul.f32.gmra.mxu0 %v3753
        %v3826 = vpop.f32.mrf.mxu0
        %v3827 = vadd.f32 0.0, %v3826
        %3828 = vdwg.mxu0
        %v3829 = vadd.f32 %v3804, %v3827
        %s3830 = scalar_lea.vmem [#allocation2], 248
        %v3831 = vld [vmem:[%s3830] sm:$0xff]
        %v3832 = vld [vmem:[%s1153] sm:$0xff]
        %v3833 = vld [vmem:[%s1153 + $0x8] sm:$0xff]
        %v3834 = vld [vmem:[%s1153 + $0x10] sm:$0xff]
        %v3835 = vld [vmem:[%s1153 + $0x18] sm:$0xff]
        %3836 = vmatpush.msra.mxu0 0.0
        %3837 = vmatpush.msra.mxu0 0.0
        %3838 = vmatpush.msra.mxu0 0.0
        %3839 = vmatpush.msra.mxu0 0.0
        %3840 = vmatpush.msra.mxu0 0.0
        %3841 = vmatpush.msra.mxu0 0.0
        %3842 = vmatpush.msra.mxu0 0.0
        %3843 = vmatpush.msra.mxu0 0.0
        %3844 = vmatpush.msra.mxu0 0.0
        %3845 = vmatpush.msra.mxu0 0.0
        %3846 = vmatpush.msra.mxu0 0.0
        %3847 = vmatpush.msra.mxu0 0.0
        %3848 = vmatpush.msra.mxu0 %v3835
        %3849 = vmatpush.msra.mxu0 %v3834
        %3850 = vmatpush.msra.mxu0 %v3833
        %3851 = vmatpush.msra.mxu0 %v3832
        %3852 = vmatmul.f32.gmra.mxu0 %v3753
        %v3853 = vpop.f32.mrf.mxu0
        %v3854 = vadd.f32 0.0, %v3853
        %3855 = vdwg.mxu0
        %v3856 = vadd.f32 %v3831, %v3854
        %v3857 = vxor.u32 %v3802, 2147483648
        %v3858 = vmul.f32 %v3857, 1.442695
        %v3859 = vpow.pop %v3858
        %v3860 = vadd.f32 %v3859, 1.0
        %v3861 = vrcp.pop %v3860
        %v3862 = vmul.f32 %v3860, %v3861
        %v3863 = vsub.f32 1.0, %v3862
        %v3864 = vmul.f32 %v3861, %v3863
        %v3865 = vadd.f32 %v3861, %v3864
        %vm3866 = vweird.f32 %v3860
        %vm3867 = vweird.f32 %v3861
        %vm3868 = vmor %vm3866, %vm3867
        %v3869 = vsel %vm3868, %v3861, %v3865
        %v3870 = vand.u32 2147483647, %v3860
        %vm3871 = vcmp.eq.f32.partialorder %v3870, 8.507059e+37
        %v3872 = vand.u32 %v3860, 2147483648
        %v3873 = vor.u32 1.1754944e-38, %v3872
        %v3874 = vsel %vm3871, %v3873, %v3869
        %v3875 = vmul.f32 1.0, %v3874
        %v3876 = vmul.f32 %v3875, %v3745
        %v3877 = vxor.u32 %v3775, 2147483648
        %v3878 = vmul.f32 %v3877, 1.442695
        %v3879 = vpow.pop %v3878
        %v3880 = vadd.f32 %v3879, 1.0
        %v3881 = vrcp.pop %v3880
        %v3882 = vmul.f32 %v3880, %v3881
        %v3883 = vsub.f32 1.0, %v3882
        %v3884 = vmul.f32 %v3881, %v3883
        %v3885 = vadd.f32 %v3881, %v3884
        %vm3886 = vweird.f32 %v3880
        %vm3887 = vweird.f32 %v3881
        %vm3888 = vmor %vm3886, %vm3887
        %v3889 = vsel %vm3888, %v3881, %v3885
        %v3890 = vand.u32 2147483647, %v3880
        %vm3891 = vcmp.eq.f32.partialorder %v3890, 8.507059e+37
        %v3892 = vand.u32 %v3880, 2147483648
        %v3893 = vor.u32 1.1754944e-38, %v3892
        %v3894 = vsel %vm3891, %v3893, %v3889
        %v3895 = vmul.f32 1.0, %v3894
        %v3896 = vtanh.pop %v3829
        %v3897 = vmul.f32 %v3895, %v3896
        %v3898 = vadd.f32 %v3876, %v3897
        %v3899 = vxor.u32 %v3856, 2147483648
        %v3900 = vmul.f32 %v3899, 1.442695
        %v3901 = vpow.pop %v3900
        %v3902 = vadd.f32 %v3901, 1.0
        %v3903 = vrcp.pop %v3902
        %v3904 = vmul.f32 %v3902, %v3903
        %v3905 = vsub.f32 1.0, %v3904
        %v3906 = vmul.f32 %v3903, %v3905
        %v3907 = vadd.f32 %v3903, %v3906
        %vm3908 = vweird.f32 %v3902
        %vm3909 = vweird.f32 %v3903
        %vm3910 = vmor %vm3908, %vm3909
        %v3911 = vsel %vm3910, %v3903, %v3907
        %v3912 = vand.u32 2147483647, %v3902
        %vm3913 = vcmp.eq.f32.partialorder %v3912, 8.507059e+37
        %v3914 = vand.u32 %v3902, 2147483648
        %v3915 = vor.u32 1.1754944e-38, %v3914
        %v3916 = vsel %vm3913, %v3915, %v3911
        %v3917 = vmul.f32 1.0, %v3916
        %v3918 = vtanh.pop %v3898
        %v3919 = vmul.f32 %v3917, %v3918
        %v3920 = vsel %vm3743, %v3919, %v3744
        %3921 = vst.msk [vmem:[#allocation4] sm:$0xff] %vm536, %v3920
        %v3922 = vsel %vm3743, %v3898, %v3745
        %3923 = vst.msk [vmem:[#allocation5] sm:$0xff] %vm536, %v3922
        %v3924 = vsel %vm3743, %v3919, 0.0
        %s3925 = scalar_lea.vmem %s496, 56 [#allocation19]
        %3926 = vst.msk [vmem:[%s3925] sm:$0xff] %vm536, %v3924
        %v3927 = vstv %s1249
        %vm3928 = vcmp.lt.s32.totalorder %v3927, %v519
        %v3929 = vsel %vm3928, 1, 0
        %3930 = vset.pattern.permute.xlu0 0
        %3931 = vperm.xlu0 %3930, %v3929
        %v3932 = vpop.permute.xlu0 %3931
        %vm3933 = vcmp.eq.s32.totalorder %v3932, 1
        %v3934 = vld [vmem:[#allocation6] sm:$0xff]
        %v3935 = vld [vmem:[#allocation7] sm:$0xff]
        %v3936 = vld [vmem:[#allocation3] sm:$0xff]
        %v3937 = vld [vmem:[#allocation17] sm:$0xff]
        %v3938 = vld [vmem:[#allocation17 + $0x8] sm:$0xff]
        %v3939 = vld [vmem:[#allocation17 + $0x10] sm:$0xff]
        %v3940 = vld [vmem:[#allocation17 + $0x18] sm:$0xff]
        %v3942 = vsel %vm536, %v3934, 0
        %3944 = vmatpush.msra.mxu0 0.0
        %3945 = vmatpush.msra.mxu0 0.0
        %3946 = vmatpush.msra.mxu0 0.0
        %3947 = vmatpush.msra.mxu0 0.0
        %3948 = vmatpush.msra.mxu0 0.0
        %3949 = vmatpush.msra.mxu0 0.0
        %3950 = vmatpush.msra.mxu0 0.0
        %3951 = vmatpush.msra.mxu0 0.0
        %3952 = vmatpush.msra.mxu0 0.0
        %3953 = vmatpush.msra.mxu0 0.0
        %3954 = vmatpush.msra.mxu0 0.0
        %3955 = vmatpush.msra.mxu0 0.0
        %3956 = vmatpush.msra.mxu0 %v3940
        %3957 = vmatpush.msra.mxu0 %v3939
        %3958 = vmatpush.msra.mxu0 %v3938
        %3959 = vmatpush.msra.mxu0 %v3937
        %3960 = vmatmul.f32.gmra.mxu0 %v3942
        %v3961 = vpop.f32.mrf.mxu0
        %v3962 = vadd.f32 0.0, %v3961
        %3963 = vdwg.mxu0
        %v3964 = vadd.f32 %v3936, %v3962
        %v3965 = vld [vmem:[%s930] sm:$0xff]
        %v3966 = vld [vmem:[%s1292] sm:$0xff]
        %v3967 = vld [vmem:[%s1292 + $0x8] sm:$0xff]
        %v3968 = vld [vmem:[%s1292 + $0x10] sm:$0xff]
        %v3969 = vld [vmem:[%s1292 + $0x18] sm:$0xff]
        %3970 = vmatpush.msra.mxu0 0.0
        %3971 = vmatpush.msra.mxu0 0.0
        %3972 = vmatpush.msra.mxu0 0.0
        %3973 = vmatpush.msra.mxu0 0.0
        %3974 = vmatpush.msra.mxu0 0.0
        %3975 = vmatpush.msra.mxu0 0.0
        %3976 = vmatpush.msra.mxu0 0.0
        %3977 = vmatpush.msra.mxu0 0.0
        %3978 = vmatpush.msra.mxu0 0.0
        %3979 = vmatpush.msra.mxu0 0.0
        %3980 = vmatpush.msra.mxu0 0.0
        %3981 = vmatpush.msra.mxu0 0.0
        %3982 = vmatpush.msra.mxu0 %v3969
        %3983 = vmatpush.msra.mxu0 %v3968
        %3984 = vmatpush.msra.mxu0 %v3967
        %3985 = vmatpush.msra.mxu0 %v3966
        %3986 = vmatmul.f32.gmra.mxu0 %v3942
        %v3987 = vpop.f32.mrf.mxu0
        %v3988 = vadd.f32 0.0, %v3987
        %3989 = vdwg.mxu0
        %v3990 = vadd.f32 %v3965, %v3988
        %v3991 = vld [vmem:[%s990] sm:$0xff]
        %v3992 = vld [vmem:[%s1320] sm:$0xff]
        %v3993 = vld [vmem:[%s1320 + $0x8] sm:$0xff]
        %v3994 = vld [vmem:[%s1320 + $0x10] sm:$0xff]
        %v3995 = vld [vmem:[%s1320 + $0x18] sm:$0xff]
        %3996 = vmatpush.msra.mxu0 0.0
        %3997 = vmatpush.msra.mxu0 0.0
        %3998 = vmatpush.msra.mxu0 0.0
        %3999 = vmatpush.msra.mxu0 0.0
        %4000 = vmatpush.msra.mxu0 0.0
        %4001 = vmatpush.msra.mxu0 0.0
        %4002 = vmatpush.msra.mxu0 0.0
        %4003 = vmatpush.msra.mxu0 0.0
        %4004 = vmatpush.msra.mxu0 0.0
        %4005 = vmatpush.msra.mxu0 0.0
        %4006 = vmatpush.msra.mxu0 0.0
        %4007 = vmatpush.msra.mxu0 0.0
        %4008 = vmatpush.msra.mxu0 %v3995
        %4009 = vmatpush.msra.mxu0 %v3994
        %4010 = vmatpush.msra.mxu0 %v3993
        %4011 = vmatpush.msra.mxu0 %v3992
        %4012 = vmatmul.f32.gmra.mxu0 %v3942
        %v4013 = vpop.f32.mrf.mxu0
        %v4014 = vadd.f32 0.0, %v4013
        %4015 = vdwg.mxu0
        %v4016 = vadd.f32 %v3991, %v4014
        %v4017 = vld [vmem:[%s1050] sm:$0xff]
        %v4018 = vld [vmem:[%s1348] sm:$0xff]
        %v4019 = vld [vmem:[%s1348 + $0x8] sm:$0xff]
        %v4020 = vld [vmem:[%s1348 + $0x10] sm:$0xff]
        %v4021 = vld [vmem:[%s1348 + $0x18] sm:$0xff]
        %4022 = vmatpush.msra.mxu0 0.0
        %4023 = vmatpush.msra.mxu0 0.0
        %4024 = vmatpush.msra.mxu0 0.0
        %4025 = vmatpush.msra.mxu0 0.0
        %4026 = vmatpush.msra.mxu0 0.0
        %4027 = vmatpush.msra.mxu0 0.0
        %4028 = vmatpush.msra.mxu0 0.0
        %4029 = vmatpush.msra.mxu0 0.0
        %4030 = vmatpush.msra.mxu0 0.0
        %4031 = vmatpush.msra.mxu0 0.0
        %4032 = vmatpush.msra.mxu0 0.0
        %4033 = vmatpush.msra.mxu0 0.0
        %4034 = vmatpush.msra.mxu0 %v4021
        %4035 = vmatpush.msra.mxu0 %v4020
        %4036 = vmatpush.msra.mxu0 %v4019
        %4037 = vmatpush.msra.mxu0 %v4018
        %4038 = vmatmul.f32.gmra.mxu0 %v3942
        %v4039 = vpop.f32.mrf.mxu0
        %v4040 = vadd.f32 0.0, %v4039
        %4041 = vdwg.mxu0
        %v4042 = vadd.f32 %v4017, %v4040
        %v4043 = vxor.u32 %v3990, 2147483648
        %v4044 = vmul.f32 %v4043, 1.442695
        %v4045 = vpow.pop %v4044
        %v4046 = vadd.f32 %v4045, 1.0
        %v4047 = vrcp.pop %v4046
        %v4048 = vmul.f32 %v4046, %v4047
        %v4049 = vsub.f32 1.0, %v4048
        %v4050 = vmul.f32 %v4047, %v4049
        %v4051 = vadd.f32 %v4047, %v4050
        %vm4052 = vweird.f32 %v4046
        %vm4053 = vweird.f32 %v4047
        %vm4054 = vmor %vm4052, %vm4053
        %v4055 = vsel %vm4054, %v4047, %v4051
        %v4056 = vand.u32 2147483647, %v4046
        %vm4057 = vcmp.eq.f32.partialorder %v4056, 8.507059e+37
        %v4058 = vand.u32 %v4046, 2147483648
        %v4059 = vor.u32 1.1754944e-38, %v4058
        %v4060 = vsel %vm4057, %v4059, %v4055
        %v4061 = vmul.f32 1.0, %v4060
        %v4062 = vmul.f32 %v4061, %v3935
        %v4063 = vxor.u32 %v3964, 2147483648
        %v4064 = vmul.f32 %v4063, 1.442695
        %v4065 = vpow.pop %v4064
        %v4066 = vadd.f32 %v4065, 1.0
        %v4067 = vrcp.pop %v4066
        %v4068 = vmul.f32 %v4066, %v4067
        %v4069 = vsub.f32 1.0, %v4068
        %v4070 = vmul.f32 %v4067, %v4069
        %v4071 = vadd.f32 %v4067, %v4070
        %vm4072 = vweird.f32 %v4066
        %vm4073 = vweird.f32 %v4067
        %vm4074 = vmor %vm4072, %vm4073
        %v4075 = vsel %vm4074, %v4067, %v4071
        %v4076 = vand.u32 2147483647, %v4066
        %vm4077 = vcmp.eq.f32.partialorder %v4076, 8.507059e+37
        %v4078 = vand.u32 %v4066, 2147483648
        %v4079 = vor.u32 1.1754944e-38, %v4078
        %v4080 = vsel %vm4077, %v4079, %v4075
        %v4081 = vmul.f32 1.0, %v4080
        %v4082 = vtanh.pop %v4016
        %v4083 = vmul.f32 %v4081, %v4082
        %v4084 = vadd.f32 %v4062, %v4083
        %v4085 = vxor.u32 %v4042, 2147483648
        %v4086 = vmul.f32 %v4085, 1.442695
        %v4087 = vpow.pop %v4086
        %v4088 = vadd.f32 %v4087, 1.0
        %v4089 = vrcp.pop %v4088
        %v4090 = vmul.f32 %v4088, %v4089
        %v4091 = vsub.f32 1.0, %v4090
        %v4092 = vmul.f32 %v4089, %v4091
        %v4093 = vadd.f32 %v4089, %v4092
        %vm4094 = vweird.f32 %v4088
        %vm4095 = vweird.f32 %v4089
        %vm4096 = vmor %vm4094, %vm4095
        %v4097 = vsel %vm4096, %v4089, %v4093
        %v4098 = vand.u32 2147483647, %v4088
        %vm4099 = vcmp.eq.f32.partialorder %v4098, 8.507059e+37
        %v4100 = vand.u32 %v4088, 2147483648
        %v4101 = vor.u32 1.1754944e-38, %v4100
        %v4102 = vsel %vm4099, %v4101, %v4097
        %v4103 = vmul.f32 1.0, %v4102
        %v4104 = vtanh.pop %v4084
        %v4105 = vmul.f32 %v4103, %v4104
        %v4106 = vsel %vm3933, %v4105, %v3934
        %4107 = vst.msk [vmem:[#allocation6] sm:$0xff] %vm536, %v4106
        %v4108 = vsel %vm3933, %v4084, %v3935
        %4109 = vst.msk [vmem:[#allocation7] sm:$0xff] %vm536, %v4108
        %v4110 = vsel %vm3933, %v4105, 0.0
        %4111 = vst.msk [vmem:[%s503] sm:$0xff] %vm536, %v4110
        %s4112 = sand.u32 %s245, 1
        %s4113 = scalar_lea.sflag [#allocation10], %s4112
        %s4114 = sand.u32 %s245, 1
        %s4115 = smul.addr %s4114, 64
        %s4116 = scalar_lea.vmem [#allocation19], %s4115
        %s4117 = sand.u32 %s273, 1
        %s4118 = scalar_lea.sflag [#allocation21], %s4117
        %s4119 = sand.u32 %s273, 1
        %s4120 = smul.addr %s4119, 64
        %s4121 = scalar_lea.vmem [#allocation20], %s4120
        // Predicated region
        $region85: #{tpu_custom_call.1} parent=55 // pred_check
          %p4122 = pneg %p255
        $region86: #{tpu_custom_call.1} parent=55 // pred_check_branch
          %4124 = sbr.rel (%p4122) target = $region88
        $region87: #{tpu_custom_call.1} parent=55 // pred_region
          %s4125 = smul.u32 8, %s36
          %4127 = vsyncadd %s4113, 0
          %s4128 = smul.addr %s4125, 8
          %s4129 = scalar_lea.hbm %s9, %s4128
          %s4130 = sshll.u32 %s4116, 4
          %s4131 = int_to_ptr.vmem [resolvable:$true] %s4130
          %s4132 = sshll.u32 %s4129, 4
          %s4133 = int_to_ptr.hbm [resolvable:$true] %s4132
          %4138 = dma.vmem_to_hbm [thread:$0]  %s4131, 1024, %s4133, %s4113, 128, 128, 8
        $region88: #{tpu_custom_call.1} parent=55 // pred_fallthru
          _
        // Predicated region
        $region89: #{tpu_custom_call.1} parent=55 // pred_check
          %p4139 = pneg %p283
        $region90: #{tpu_custom_call.1} parent=55 // pred_check_branch
          %4141 = sbr.rel (%p4139) target = $region92
        $region91: #{tpu_custom_call.1} parent=55 // pred_region
          %s4142 = ssub.s32 1, %s36
          %s4143 = smul.u32 8, %s4142
          %4145 = vsyncadd %s4118, 0
          %s4146 = smul.addr %s4143, 8
          %s4147 = scalar_lea.hbm %s10, %s4146
          %s4148 = sshll.u32 %s4121, 4
          %s4149 = int_to_ptr.vmem [resolvable:$true] %s4148
          %s4150 = sshll.u32 %s4147, 4
          %s4151 = int_to_ptr.hbm [resolvable:$true] %s4150
          %4156 = dma.vmem_to_hbm [thread:$0]  %s4149, 1024, %s4151, %s4118, 128, 128, 8
        $region92: #{tpu_custom_call.1} parent=55 // pred_fallthru
          _
      $region56: #{tpu_custom_call.1} parent=5 // pred_fallthru
        _
      %p4157 = scmp.le.s32.totalorder 2, %s31
      // Predicated region
      $region93: #{tpu_custom_call.1} parent=5 // pred_check
        %p4158 = pneg %p4157
      $region94: #{tpu_custom_call.1} parent=5 // pred_check_branch
        %4160 = sbr.rel (%p4158) target = $region96
      $region95: #{tpu_custom_call.1} parent=5 // pred_region
        %s4161 = ssub.s32 %s31, 2
        // Predicated region
        $region97: #{tpu_custom_call.1} parent=95 // pred_check
          %p4162 = pneg %p261
        $region98: #{tpu_custom_call.1} parent=95 // pred_check_branch
          %4164 = sbr.rel (%p4162) target = $region100
        $region99: #{tpu_custom_call.1} parent=95 // pred_region
          %s4165 = sand.u32 %s246, 1
          %s4166 = scalar_lea.sflag [#allocation10], %s4165
          %s4167 = sand.u32 %s246, 1
          %s4168 = smul.addr %s4167, 64
          %s4169 = scalar_lea.vmem [#allocation19], %s4168
          %4171 = dma.done %s4166, 1024
        $region100: #{tpu_custom_call.1} parent=95 // pred_fallthru
          _
        // Predicated region
        $region101: #{tpu_custom_call.1} parent=95 // pred_check
          %p4172 = pneg %p289
        $region102: #{tpu_custom_call.1} parent=95 // pred_check_branch
          %4174 = sbr.rel (%p4172) target = $region104
        $region103: #{tpu_custom_call.1} parent=95 // pred_region
          %s4175 = sand.u32 %s274, 1
          %s4176 = scalar_lea.sflag [#allocation21], %s4175
          %s4177 = sand.u32 %s274, 1
          %s4178 = smul.addr %s4177, 64
          %s4179 = scalar_lea.vmem [#allocation20], %s4178
          %4181 = dma.done %s4176, 1024
        $region104: #{tpu_custom_call.1} parent=95 // pred_fallthru
          _
      $region96: #{tpu_custom_call.1} parent=5 // pred_fallthru
        _
    $region6: #{tpu_custom_call.1} parent=1 // loop_footer
      %s35 = sadd.s32 1, %s31
    $region7: #{tpu_custom_call.1} parent=1 // loop_footer_branch
      %30 = sbr.rel target = $region3
    $region8: #{tpu_custom_call.1} parent=1 // loop_exit
      _
    %4182 = vsyncpa [#allocation9], 1
    %s4183 = scalar_lea.sflag [#allocation9], 1
    %4184 = vsyncpa %s4183, 1
    %4185 = vsyncpa [#allocation12], 1
    %s4186 = scalar_lea.sflag [#allocation12], 1
    %4187 = vsyncpa %s4186, 1
    %4188 = vsyncpa [#allocation15], 1
    %4189 = vsyncpa [#allocation18], 1
    %4190 = vsyncpa [#allocation10], 1
    %s4191 = scalar_lea.sflag [#allocation10], 1
    %4192 = vsyncpa %s4191, 1
    %4193 = vsyncpa [#allocation21], 1
    %s4194 = scalar_lea.sflag [#allocation21], 1
    %4195 = vsyncpa %s4194, 1

</llo_original>
